<compile_context>
chip_gen: v7x
topology: tpu7x:2x2x1
jax: 0.10.0
libtpu: 0.0.40
codegen_flags: <defaults>
</compile_context>

<pallas_src>
import numpy as np
import jax
import jax.numpy as jnp
from jax.experimental import pallas as pl
from jax.experimental.pallas import tpu as pltpu


# --------------------------- Host-side precomputation ----------------------------- #

def adaptive_pool_matrix(in_size, out_size):
    """Row-stochastic matrix reproducing torch.nn.AdaptiveAvgPool2d bins exactly."""
    P = np.zeros((out_size, in_size), dtype=np.float32)
    for i in range(out_size):
        start = (i * in_size) // out_size
        end = -(-((i + 1) * in_size) // out_size)  # ceil
        P[i, start:end] = 1.0 / (end - start)
    return P


def _build_rd(w_pt, stride, padding, out_pad, hin, win):
    """Separable form of ConvTranspose2d(k=3):  out = sum_kh  R[kh] @ X @ D[kh]
    with X:(Hin, Win*Cin) and out:(Ho, Wo*Cout), both channels-minor packed."""
    w = np.asarray(w_pt, np.float32)            # PyTorch layout (Cin, Cout, kH, kW)
    cin, cout, k, _ = w.shape
    pad_lo = k - 1 - padding
    ho = (hin - 1) * stride - 2 * padding + k + out_pad
    wo = (win - 1) * stride - 2 * padding + k + out_pad
    wf = w[:, :, ::-1, ::-1]                    # flipped kernel: wf[c, o, kh, kw]
    R = np.zeros((k, ho, hin), np.float32)
    for kh in range(k):
        for i in range(hin):
            y = pad_lo + stride * i - kh
            if 0 <= y < ho:
                R[kh, y, i] = 1.0
    D = np.zeros((k, win * cin, wo * cout), np.float32)
    for kh in range(k):
        for kw in range(k):
            for j in range(win):
                xo = pad_lo + stride * j - kw
                if 0 <= xo < wo:
                    D[kh, j * cin:(j + 1) * cin,
                      xo * cout:(xo + 1) * cout] += wf[:, :, kh, kw]
    return R, D, ho, wo, cout


_CONV_CFG = [("w1", "b1", 2, 1, 1, 4),   # (weight, bias, stride, pad, out_pad, Hin=Win)
             ("w2", "b2", 2, 1, 1, 8),
             ("w3", "b3", 2, 1, 1, 16),
             ("w4", "b4", 1, 1, 0, 32)]
_HPAD = 8   # the first (4-row) activation is zero-padded to 8 rows for friendly matmul K


def prepare_decoder(params, in_dim=128):
    """One-time weight-layout transform (host, numpy)."""
    # Linear(in_dim, 64*4*4) + Unflatten(64,4,4): column-permute to (h, w, c) order.
    lin_w = np.asarray(params["lin_w"], np.float32)              # (1024, in_dim); out idx = c*16+h*4+w
    lin_b = np.asarray(params["lin_b"], np.float32)
    wl = lin_w.reshape(64, 4, 4, in_dim).transpose(1, 2, 0, 3)    # (h, w, c, k)
    wl = wl.reshape(4, 4 * 64, in_dim).transpose(0, 2, 1)         # (4, in_dim, 256)
    bl = lin_b.reshape(64, 4, 4).transpose(1, 2, 0).reshape(4, 4 * 64)
    blp = np.zeros((_HPAD, 4 * 64), np.float32)
    blp[:4] = bl

    tabs = {"wl": wl, "bl": blp}
    for idx, (wn, bn, s, p, op, hin) in enumerate(_CONV_CFG, start=1):
        R, D, ho, wo, cout = _build_rd(params[wn], s, p, op, hin, hin)
        if idx == 1:                      # pad K: extra R columns hit the zero scratch rows
            Rp = np.zeros((3, ho, _HPAD), np.float32)
            Rp[:, :, :hin] = R
            R = Rp
        brow = np.tile(np.asarray(params[bn], np.float32), wo).reshape(1, wo * cout)
        tabs[f"r{idx}"], tabs[f"d{idx}"], tabs[f"c{idx}"] = R, D, brow
    tabs["ph"] = adaptive_pool_matrix(32, 34)             # (34, 32)
    tabs["pwt"] = adaptive_pool_matrix(32, 44).T.copy()   # (32, 44)
    return {k: jnp.asarray(v) for k, v in tabs.items()}


# --------------------------------- Pallas kernel ---------------------------------- #

def _decoder_kernel(x_ref, wl_ref, bl_ref,
                    r1_ref, d1_ref, c1_ref,
                    r2_ref, d2_ref, c2_ref,
                    r3_ref, d3_ref, c3_ref,
                    r4_ref, d4_ref, c4_ref,
                    ph_ref, pwt_ref,
                    o_ref, lin_scr):
    f32 = jnp.float32
    xb = x_ref[0]                                                   # (1, in_dim)

    # Linear -> (8, 4*64) activation in (H, W*C) layout (rows 4..7 stay zero).
    lin_scr[...] = jnp.zeros_like(lin_scr)
    for r in range(4):
        lin_scr[pl.ds(r, 1), :] = jnp.dot(xb, wl_ref[r], preferred_element_type=f32)
    h = lin_scr[...] + bl_ref[...]                                  # (8, 256)

    def convt(h, r_ref, d_ref, c_ref):
        out = None
        for kh in range(3):
            t = jnp.dot(h, d_ref[kh], preferred_element_type=f32)   # (Hin, Wo*Co)
            t = jnp.dot(r_ref[kh], t, preferred_element_type=f32)   # (Ho,  Wo*Co)
            out = t if out is None else out + t
        return out + c_ref[...]

    h = jnp.maximum(convt(h, r1_ref, d1_ref, c1_ref), 0.0)          # (8,  8*64)
    h = jnp.maximum(convt(h, r2_ref, d2_ref, c2_ref), 0.0)          # (16, 16*32)
    h = jnp.maximum(convt(h, r3_ref, d3_ref, c3_ref), 0.0)          # (32, 32*16)
    z = jax.nn.sigmoid(convt(h, r4_ref, d4_ref, c4_ref))            # (32, 32)  (C_out=1 folded)

    # AdaptiveAvgPool2d((34, 44)) == Ph @ Z @ Pw^T, fused in the same kernel.
    pooled = jnp.dot(jnp.dot(ph_ref[...], z, preferred_element_type=f32),
                     pwt_ref[...], preferred_element_type=f32)      # (34, 44)
    o_ref[0] = pooled


# ---------------------------------- Forward pass ----------------------------------- #

_TAB_ORDER = ("wl", "bl", "r1", "d1", "c1", "r2", "d2", "c2",
              "r3", "d3", "c3", "r4", "d4", "c4", "ph", "pwt")


def _const_spec(shape):
    n = len(shape)
    return pl.BlockSpec(tuple(shape), lambda b, _n=n: (0,) * _n)


def cnn_decoder_forward(x, tabs):
    """x: (B, in_dim) float32 -> (B, 1, 34, 44) float32 (NCHW, like the PyTorch module)."""
    B, in_dim = x.shape
    consts = [tabs[k] for k in _TAB_ORDER]
    x3 = x.reshape(B, 1, in_dim)

    in_specs = [pl.BlockSpec((1, 1, in_dim), lambda b: (b, 0, 0))]
    in_specs += [_const_spec(c.shape) for c in consts]

    out = pl.pallas_call(
        _decoder_kernel,
        out_shape=jax.ShapeDtypeStruct((B, 34, 44), jnp.float32),
        grid_spec=pltpu.PrefetchScalarGridSpec(
            num_scalar_prefetch=0,
            grid=(B,),
            in_specs=in_specs,
            out_specs=pl.BlockSpec((1, 34, 44), lambda b: (b, 0, 0)),
            scratch_shapes=[pltpu.VMEM((_HPAD, 4 * 64), jnp.float32)],
        ),
        compiler_params=pltpu.CompilerParams(
            dimension_semantics=("parallel",),
            vmem_limit_bytes=48 * 1024 * 1024,
        ),
    )(x3, *consts)
    return out[:, None, :, :]                                       # (B, 1, 34, 44) NCHW


# ------------------------- Pure-JAX reference (correctness) ------------------------ #

def reference_forward(x, params):
    B = x.shape[0]
    h = x @ params["lin_w"].T + params["lin_b"]
    h = h.reshape(B, 64, 4, 4)

    def convT_ref(x_nchw, w_pt, b, s, p, op):
        w = jnp.transpose(w_pt[:, :, ::-1, ::-1], (1, 0, 2, 3))       # OIHW
        out = jax.lax.conv_general_dilated(
            x_nchw, w, window_strides=(1, 1),
            padding=[(2 - p, 2 - p + op)] * 2,
            lhs_dilation=(s, s),
            dimension_numbers=("NCHW", "OIHW", "NCHW"),
            precision=jax.lax.Precision.HIGHEST)
        return out + b.reshape(1, -1, 1, 1)

    h = jax.nn.relu(convT_ref(h, params["w1"], params["b1"], 2, 1, 1))
    h = jax.nn.relu(convT_ref(h, params["w2"], params["b2"], 2, 1, 1))
    h = jax.nn.relu(convT_ref(h, params["w3"], params["b3"], 2, 1, 1))
    h = jax.nn.sigmoid(convT_ref(h, params["w4"], params["b4"], 1, 1, 0))
    Ph = adaptive_pool_matrix(32, 34)
    Pw = adaptive_pool_matrix(32, 44)
    return jnp.einsum("oi,bcij,pj->bcop", Ph, h, Pw,
                      precision=jax.lax.Precision.HIGHEST)


# ------------------------------------ Parameters ------------------------------------ #

def init_params(key, in_dim=128):
    ks = jax.random.split(key, 10)
    n = lambda k, s: jax.random.normal(k, s, jnp.float32) * 0.05
    return {
        "lin_w": n(ks[0], (64 * 4 * 4, in_dim)),   # nn.Linear: (out, in)
        "lin_b": n(ks[1], (64 * 4 * 4,)),
        "w1": n(ks[2], (64, 64, 3, 3)),            # ConvTranspose2d: (C_in, C_out, kH, kW)
        "b1": n(ks[3], (64,)),
        "w2": n(ks[4], (64, 32, 3, 3)),
        "b2": n(ks[5], (32,)),
        "w3": n(ks[6], (32, 16, 3, 3)),
        "b3": n(ks[7], (16,)),
        "w4": n(ks[8], (16, 1, 3, 3)),
        "b4": n(ks[9], (1,)),
    }


if __name__ == "__main__":
    key = jax.random.PRNGKey(0)
    kx, kp = jax.random.split(key)
    x = jax.random.normal(kx, (2, 128), jnp.float32)   # batch=2, in_dim=128
    params = init_params(kp, in_dim=128)

    tabs = prepare_decoder(params, in_dim=128)         # one-time weight-layout transform
    fwd = jax.jit(cnn_decoder_forward)

    out = jax.block_until_ready(fwd(x, tabs))
    assert out.shape == (2, 1, 34, 44), out.shape

    ref = jax.block_until_ready(reference_forward(x, params))
    err = float(np.max(np.abs(np.asarray(out) - np.asarray(ref))))
    assert np.allclose(np.asarray(out), np.asarray(ref), rtol=1e-3, atol=1e-3), err

    print("KERNEL_OK")
</pallas_src>

<mosaic_0001>
module attributes {stable_mosaic.version = 11 : i64} {
  func.func @_decoder_kernel(%arg0: i32, %arg1: memref<1x1x128xf32, #tpu.memory_space<vmem>>, %arg2: memref<4x128x256xf32, #tpu.memory_space<vmem>>, %arg3: memref<8x256xf32, #tpu.memory_space<vmem>>, %arg4: memref<3x8x8xf32, #tpu.memory_space<vmem>>, %arg5: memref<3x256x512xf32, #tpu.memory_space<vmem>>, %arg6: memref<1x512xf32, #tpu.memory_space<vmem>>, %arg7: memref<3x16x8xf32, #tpu.memory_space<vmem>>, %arg8: memref<3x512x512xf32, #tpu.memory_space<vmem>>, %arg9: memref<1x512xf32, #tpu.memory_space<vmem>>, %arg10: memref<3x32x16xf32, #tpu.memory_space<vmem>>, %arg11: memref<3x512x512xf32, #tpu.memory_space<vmem>>, %arg12: memref<1x512xf32, #tpu.memory_space<vmem>>, %arg13: memref<3x32x32xf32, #tpu.memory_space<vmem>>, %arg14: memref<3x512x32xf32, #tpu.memory_space<vmem>>, %arg15: memref<1x32xf32, #tpu.memory_space<vmem>>, %arg16: memref<34x32xf32, #tpu.memory_space<vmem>>, %arg17: memref<32x44xf32, #tpu.memory_space<vmem>>, %arg18: memref<1x34x44xf32, #tpu.memory_space<vmem>>, %arg19: memref<8x256xf32, #tpu.memory_space<vmem>>) attributes {dimension_semantics = [#tpu.dimension_semantics<parallel>], iteration_bounds = array<i64: 2>, scalar_prefetch = 0 : i64, scratch_operands = 1 : i64, tpu.core_type = #tpu.core_type<tc>, window_params = [{transform_indices = @transform_0, window_bounds = array<i64: 1, 1, 128>}, {pipeline_mode = #tpu.pipeline_mode<synchronous>, transform_indices = @transform_1, window_bounds = array<i64: 4, 128, 256>}, {pipeline_mode = #tpu.pipeline_mode<synchronous>, transform_indices = @transform_2, window_bounds = array<i64: 8, 256>}, {pipeline_mode = #tpu.pipeline_mode<synchronous>, transform_indices = @transform_3, window_bounds = array<i64: 3, 8, 8>}, {pipeline_mode = #tpu.pipeline_mode<synchronous>, transform_indices = @transform_4, window_bounds = array<i64: 3, 256, 512>}, {pipeline_mode = #tpu.pipeline_mode<synchronous>, transform_indices = @transform_5, window_bounds = array<i64: 1, 512>}, {pipeline_mode = #tpu.pipeline_mode<synchronous>, transform_indices = @transform_6, window_bounds = array<i64: 3, 16, 8>}, {pipeline_mode = #tpu.pipeline_mode<synchronous>, transform_indices = @transform_7, window_bounds = array<i64: 3, 512, 512>}, {pipeline_mode = #tpu.pipeline_mode<synchronous>, transform_indices = @transform_8, window_bounds = array<i64: 1, 512>}, {pipeline_mode = #tpu.pipeline_mode<synchronous>, transform_indices = @transform_9, window_bounds = array<i64: 3, 32, 16>}, {pipeline_mode = #tpu.pipeline_mode<synchronous>, transform_indices = @transform_10, window_bounds = array<i64: 3, 512, 512>}, {pipeline_mode = #tpu.pipeline_mode<synchronous>, transform_indices = @transform_11, window_bounds = array<i64: 1, 512>}, {pipeline_mode = #tpu.pipeline_mode<synchronous>, transform_indices = @transform_12, window_bounds = array<i64: 3, 32, 32>}, {pipeline_mode = #tpu.pipeline_mode<synchronous>, transform_indices = @transform_13, window_bounds = array<i64: 3, 512, 32>}, {pipeline_mode = #tpu.pipeline_mode<synchronous>, transform_indices = @transform_14, window_bounds = array<i64: 1, 32>}, {pipeline_mode = #tpu.pipeline_mode<synchronous>, transform_indices = @transform_15, window_bounds = array<i64: 34, 32>}, {pipeline_mode = #tpu.pipeline_mode<synchronous>, transform_indices = @transform_16, window_bounds = array<i64: 32, 44>}, {transform_indices = @transform_17, window_bounds = array<i64: 1, 34, 44>}]} {
    %c0 = arith.constant 0 : index
    %c0_0 = arith.constant 0 : index
    %c0_1 = arith.constant 0 : index
    %0 = vector.load %arg1[%c0, %c0_0, %c0_1] : memref<1x1x128xf32, #tpu.memory_space<vmem>>, vector<1x1x128xf32>
    %1 = vector.shape_cast %0 : vector<1x1x128xf32> to vector<1x128xf32>
    %cst = arith.constant 0.000000e+00 : f32
    %2 = vector.broadcast %cst : f32 to vector<8x256xf32>
    %c0_2 = arith.constant 0 : index
    %c0_3 = arith.constant 0 : index
    %3 = vector.load %arg19[%c0_2, %c0_3] : memref<8x256xf32, #tpu.memory_space<vmem>>, vector<8x256xf32>
    tpu.vector_store %arg19[%c0_2, %c0_3], %2 {strides = array<i32>} : memref<8x256xf32, #tpu.memory_space<vmem>>, vector<8x256xf32>,
    %c0_4 = arith.constant 0 : index
    %c0_5 = arith.constant 0 : index
    %c0_6 = arith.constant 0 : index
    %4 = vector.load %arg2[%c0_4, %c0_5, %c0_6] : memref<4x128x256xf32, #tpu.memory_space<vmem>>, vector<1x128x256xf32>
    %5 = vector.shape_cast %4 : vector<1x128x256xf32> to vector<128x256xf32>
    %cst_7 = arith.constant dense<0.000000e+00> : vector<1x256xf32>
    %6 = tpu.matmul %1, %5, %cst_7 {dimension_numbers = #tpu.dot_dimension_numbers<[1], [0], [0], [1], [0, 0, 1, 1], [], []>} : vector<1x128xf32>, vector<128x256xf32>, vector<1x256xf32> -> vector<1x256xf32>
    %c0_8 = arith.constant 0 : index
    %c0_9 = arith.constant 0 : index
    %7 = vector.load %arg19[%c0_8, %c0_9] : memref<8x256xf32, #tpu.memory_space<vmem>>, vector<1x256xf32>
    tpu.vector_store %arg19[%c0_8, %c0_9], %6 {strides = array<i32>} : memref<8x256xf32, #tpu.memory_space<vmem>>, vector<1x256xf32>,
    %c1 = arith.constant 1 : index
    %c0_10 = arith.constant 0 : index
    %c0_11 = arith.constant 0 : index
    %8 = vector.load %arg2[%c1, %c0_10, %c0_11] : memref<4x128x256xf32, #tpu.memory_space<vmem>>, vector<1x128x256xf32>
    %9 = vector.shape_cast %8 : vector<1x128x256xf32> to vector<128x256xf32>
    %cst_12 = arith.constant dense<0.000000e+00> : vector<1x256xf32>
    %10 = tpu.matmul %1, %9, %cst_12 {dimension_numbers = #tpu.dot_dimension_numbers<[1], [0], [0], [1], [0, 0, 1, 1], [], []>} : vector<1x128xf32>, vector<128x256xf32>, vector<1x256xf32> -> vector<1x256xf32>
    %c1_13 = arith.constant 1 : index
    %c0_14 = arith.constant 0 : index
    %11 = vector.load %arg19[%c1_13, %c0_14] : memref<8x256xf32, #tpu.memory_space<vmem>>, vector<1x256xf32>
    tpu.vector_store %arg19[%c1_13, %c0_14], %10 {strides = array<i32>} : memref<8x256xf32, #tpu.memory_space<vmem>>, vector<1x256xf32>,
    %c2 = arith.constant 2 : index
    %c0_15 = arith.constant 0 : index
    %c0_16 = arith.constant 0 : index
    %12 = vector.load %arg2[%c2, %c0_15, %c0_16] : memref<4x128x256xf32, #tpu.memory_space<vmem>>, vector<1x128x256xf32>
    %13 = vector.shape_cast %12 : vector<1x128x256xf32> to vector<128x256xf32>
    %cst_17 = arith.constant dense<0.000000e+00> : vector<1x256xf32>
    %14 = tpu.matmul %1, %13, %cst_17 {dimension_numbers = #tpu.dot_dimension_numbers<[1], [0], [0], [1], [0, 0, 1, 1], [], []>} : vector<1x128xf32>, vector<128x256xf32>, vector<1x256xf32> -> vector<1x256xf32>
    %c2_18 = arith.constant 2 : index
    %c0_19 = arith.constant 0 : index
    %15 = vector.load %arg19[%c2_18, %c0_19] : memref<8x256xf32, #tpu.memory_space<vmem>>, vector<1x256xf32>
    tpu.vector_store %arg19[%c2_18, %c0_19], %14 {strides = array<i32>} : memref<8x256xf32, #tpu.memory_space<vmem>>, vector<1x256xf32>,
    %c3 = arith.constant 3 : index
    %c0_20 = arith.constant 0 : index
    %c0_21 = arith.constant 0 : index
    %16 = vector.load %arg2[%c3, %c0_20, %c0_21] : memref<4x128x256xf32, #tpu.memory_space<vmem>>, vector<1x128x256xf32>
    %17 = vector.shape_cast %16 : vector<1x128x256xf32> to vector<128x256xf32>
    %cst_22 = arith.constant dense<0.000000e+00> : vector<1x256xf32>
    %18 = tpu.matmul %1, %17, %cst_22 {dimension_numbers = #tpu.dot_dimension_numbers<[1], [0], [0], [1], [0, 0, 1, 1], [], []>} : vector<1x128xf32>, vector<128x256xf32>, vector<1x256xf32> -> vector<1x256xf32>
    %c3_23 = arith.constant 3 : index
    %c0_24 = arith.constant 0 : index
    %19 = vector.load %arg19[%c3_23, %c0_24] : memref<8x256xf32, #tpu.memory_space<vmem>>, vector<1x256xf32>
    tpu.vector_store %arg19[%c3_23, %c0_24], %18 {strides = array<i32>} : memref<8x256xf32, #tpu.memory_space<vmem>>, vector<1x256xf32>,
    %c0_25 = arith.constant 0 : index
    %c0_26 = arith.constant 0 : index
    %20 = vector.load %arg19[%c0_25, %c0_26] : memref<8x256xf32, #tpu.memory_space<vmem>>, vector<8x256xf32>
    %c0_27 = arith.constant 0 : index
    %c0_28 = arith.constant 0 : index
    %21 = vector.load %arg3[%c0_27, %c0_28] : memref<8x256xf32, #tpu.memory_space<vmem>>, vector<8x256xf32>
    %22 = arith.addf %20, %21 : vector<8x256xf32>
    %c0_29 = arith.constant 0 : index
    %c0_30 = arith.constant 0 : index
    %c0_31 = arith.constant 0 : index
    %23 = vector.load %arg5[%c0_29, %c0_30, %c0_31] : memref<3x256x512xf32, #tpu.memory_space<vmem>>, vector<1x256x512xf32>
    %24 = vector.shape_cast %23 : vector<1x256x512xf32> to vector<256x512xf32>
    %cst_32 = arith.constant dense<0.000000e+00> : vector<8x512xf32>
    %25 = tpu.matmul %22, %24, %cst_32 {dimension_numbers = #tpu.dot_dimension_numbers<[1], [0], [0], [1], [0, 0, 1, 1], [], []>} : vector<8x256xf32>, vector<256x512xf32>, vector<8x512xf32> -> vector<8x512xf32>
    %c0_33 = arith.constant 0 : index
    %c0_34 = arith.constant 0 : index
    %c0_35 = arith.constant 0 : index
    %26 = vector.load %arg4[%c0_33, %c0_34, %c0_35] : memref<3x8x8xf32, #tpu.memory_space<vmem>>, vector<1x8x8xf32>
    %27 = vector.shape_cast %26 : vector<1x8x8xf32> to vector<8x8xf32>
    %cst_36 = arith.constant dense<0.000000e+00> : vector<8x512xf32>
    %28 = tpu.matmul %27, %25, %cst_36 {dimension_numbers = #tpu.dot_dimension_numbers<[1], [0], [0], [1], [0, 0, 1, 1], [], []>} : vector<8x8xf32>, vector<8x512xf32>, vector<8x512xf32> -> vector<8x512xf32>
    %c1_37 = arith.constant 1 : index
    %c0_38 = arith.constant 0 : index
    %c0_39 = arith.constant 0 : index
    %29 = vector.load %arg5[%c1_37, %c0_38, %c0_39] : memref<3x256x512xf32, #tpu.memory_space<vmem>>, vector<1x256x512xf32>
    %30 = vector.shape_cast %29 : vector<1x256x512xf32> to vector<256x512xf32>
    %cst_40 = arith.constant dense<0.000000e+00> : vector<8x512xf32>
    %31 = tpu.matmul %22, %30, %cst_40 {dimension_numbers = #tpu.dot_dimension_numbers<[1], [0], [0], [1], [0, 0, 1, 1], [], []>} : vector<8x256xf32>, vector<256x512xf32>, vector<8x512xf32> -> vector<8x512xf32>
    %c1_41 = arith.constant 1 : index
    %c0_42 = arith.constant 0 : index
    %c0_43 = arith.constant 0 : index
    %32 = vector.load %arg4[%c1_41, %c0_42, %c0_43] : memref<3x8x8xf32, #tpu.memory_space<vmem>>, vector<1x8x8xf32>
    %33 = vector.shape_cast %32 : vector<1x8x8xf32> to vector<8x8xf32>
    %cst_44 = arith.constant dense<0.000000e+00> : vector<8x512xf32>
    %34 = tpu.matmul %33, %31, %cst_44 {dimension_numbers = #tpu.dot_dimension_numbers<[1], [0], [0], [1], [0, 0, 1, 1], [], []>} : vector<8x8xf32>, vector<8x512xf32>, vector<8x512xf32> -> vector<8x512xf32>
    %35 = arith.addf %28, %34 : vector<8x512xf32>
    %c2_45 = arith.constant 2 : index
    %c0_46 = arith.constant 0 : index
    %c0_47 = arith.constant 0 : index
    %36 = vector.load %arg5[%c2_45, %c0_46, %c0_47] : memref<3x256x512xf32, #tpu.memory_space<vmem>>, vector<1x256x512xf32>
    %37 = vector.shape_cast %36 : vector<1x256x512xf32> to vector<256x512xf32>
    %cst_48 = arith.constant dense<0.000000e+00> : vector<8x512xf32>
    %38 = tpu.matmul %22, %37, %cst_48 {dimension_numbers = #tpu.dot_dimension_numbers<[1], [0], [0], [1], [0, 0, 1, 1], [], []>} : vector<8x256xf32>, vector<256x512xf32>, vector<8x512xf32> -> vector<8x512xf32>
    %c2_49 = arith.constant 2 : index
    %c0_50 = arith.constant 0 : index
    %c0_51 = arith.constant 0 : index
    %39 = vector.load %arg4[%c2_49, %c0_50, %c0_51] : memref<3x8x8xf32, #tpu.memory_space<vmem>>, vector<1x8x8xf32>
    %40 = vector.shape_cast %39 : vector<1x8x8xf32> to vector<8x8xf32>
    %cst_52 = arith.constant dense<0.000000e+00> : vector<8x512xf32>
    %41 = tpu.matmul %40, %38, %cst_52 {dimension_numbers = #tpu.dot_dimension_numbers<[1], [0], [0], [1], [0, 0, 1, 1], [], []>} : vector<8x8xf32>, vector<8x512xf32>, vector<8x512xf32> -> vector<8x512xf32>
    %42 = arith.addf %35, %41 : vector<8x512xf32>
    %c0_53 = arith.constant 0 : index
    %c0_54 = arith.constant 0 : index
    %43 = vector.load %arg6[%c0_53, %c0_54] : memref<1x512xf32, #tpu.memory_space<vmem>>, vector<1x512xf32>
    %44 = vector.broadcast %43 : vector<1x512xf32> to vector<8x512xf32>
    %45 = arith.addf %42, %44 : vector<8x512xf32>
    %cst_55 = arith.constant 0.000000e+00 : f32
    %46 = vector.broadcast %cst_55 : f32 to vector<8x512xf32>
    %47 = arith.maximumf %45, %46 : vector<8x512xf32>
    %c0_56 = arith.constant 0 : index
    %c0_57 = arith.constant 0 : index
    %c0_58 = arith.constant 0 : index
    %48 = vector.load %arg8[%c0_56, %c0_57, %c0_58] : memref<3x512x512xf32, #tpu.memory_space<vmem>>, vector<1x512x512xf32>
    %49 = vector.shape_cast %48 : vector<1x512x512xf32> to vector<512x512xf32>
    %cst_59 = arith.constant dense<0.000000e+00> : vector<8x512xf32>
    %50 = tpu.matmul %47, %49, %cst_59 {dimension_numbers = #tpu.dot_dimension_numbers<[1], [0], [0], [1], [0, 0, 1, 1], [], []>} : vector<8x512xf32>, vector<512x512xf32>, vector<8x512xf32> -> vector<8x512xf32>
    %c0_60 = arith.constant 0 : index
    %c0_61 = arith.constant 0 : index
    %c0_62 = arith.constant 0 : index
    %51 = vector.load %arg7[%c0_60, %c0_61, %c0_62] : memref<3x16x8xf32, #tpu.memory_space<vmem>>, vector<1x16x8xf32>
    %52 = vector.shape_cast %51 : vector<1x16x8xf32> to vector<16x8xf32>
    %cst_63 = arith.constant dense<0.000000e+00> : vector<16x512xf32>
    %53 = tpu.matmul %52, %50, %cst_63 {dimension_numbers = #tpu.dot_dimension_numbers<[1], [0], [0], [1], [0, 0, 1, 1], [], []>} : vector<16x8xf32>, vector<8x512xf32>, vector<16x512xf32> -> vector<16x512xf32>
    %c1_64 = arith.constant 1 : index
    %c0_65 = arith.constant 0 : index
    %c0_66 = arith.constant 0 : index
    %54 = vector.load %arg8[%c1_64, %c0_65, %c0_66] : memref<3x512x512xf32, #tpu.memory_space<vmem>>, vector<1x512x512xf32>
    %55 = vector.shape_cast %54 : vector<1x512x512xf32> to vector<512x512xf32>
    %cst_67 = arith.constant dense<0.000000e+00> : vector<8x512xf32>
    %56 = tpu.matmul %47, %55, %cst_67 {dimension_numbers = #tpu.dot_dimension_numbers<[1], [0], [0], [1], [0, 0, 1, 1], [], []>} : vector<8x512xf32>, vector<512x512xf32>, vector<8x512xf32> -> vector<8x512xf32>
    %c1_68 = arith.constant 1 : index
    %c0_69 = arith.constant 0 : index
    %c0_70 = arith.constant 0 : index
    %57 = vector.load %arg7[%c1_68, %c0_69, %c0_70] : memref<3x16x8xf32, #tpu.memory_space<vmem>>, vector<1x16x8xf32>
    %58 = vector.shape_cast %57 : vector<1x16x8xf32> to vector<16x8xf32>
    %cst_71 = arith.constant dense<0.000000e+00> : vector<16x512xf32>
    %59 = tpu.matmul %58, %56, %cst_71 {dimension_numbers = #tpu.dot_dimension_numbers<[1], [0], [0], [1], [0, 0, 1, 1], [], []>} : vector<16x8xf32>, vector<8x512xf32>, vector<16x512xf32> -> vector<16x512xf32>
    %60 = arith.addf %53, %59 : vector<16x512xf32>
    %c2_72 = arith.constant 2 : index
    %c0_73 = arith.constant 0 : index
    %c0_74 = arith.constant 0 : index
    %61 = vector.load %arg8[%c2_72, %c0_73, %c0_74] : memref<3x512x512xf32, #tpu.memory_space<vmem>>, vector<1x512x512xf32>
    %62 = vector.shape_cast %61 : vector<1x512x512xf32> to vector<512x512xf32>
    %cst_75 = arith.constant dense<0.000000e+00> : vector<8x512xf32>
    %63 = tpu.matmul %47, %62, %cst_75 {dimension_numbers = #tpu.dot_dimension_numbers<[1], [0], [0], [1], [0, 0, 1, 1], [], []>} : vector<8x512xf32>, vector<512x512xf32>, vector<8x512xf32> -> vector<8x512xf32>
    %c2_76 = arith.constant 2 : index
    %c0_77 = arith.constant 0 : index
    %c0_78 = arith.constant 0 : index
    %64 = vector.load %arg7[%c2_76, %c0_77, %c0_78] : memref<3x16x8xf32, #tpu.memory_space<vmem>>, vector<1x16x8xf32>
    %65 = vector.shape_cast %64 : vector<1x16x8xf32> to vector<16x8xf32>
    %cst_79 = arith.constant dense<0.000000e+00> : vector<16x512xf32>
    %66 = tpu.matmul %65, %63, %cst_79 {dimension_numbers = #tpu.dot_dimension_numbers<[1], [0], [0], [1], [0, 0, 1, 1], [], []>} : vector<16x8xf32>, vector<8x512xf32>, vector<16x512xf32> -> vector<16x512xf32>
    %67 = arith.addf %60, %66 : vector<16x512xf32>
    %c0_80 = arith.constant 0 : index
    %c0_81 = arith.constant 0 : index
    %68 = vector.load %arg9[%c0_80, %c0_81] : memref<1x512xf32, #tpu.memory_space<vmem>>, vector<1x512xf32>
    %69 = vector.broadcast %68 : vector<1x512xf32> to vector<16x512xf32>
    %70 = arith.addf %67, %69 : vector<16x512xf32>
    %cst_82 = arith.constant 0.000000e+00 : f32
    %71 = vector.broadcast %cst_82 : f32 to vector<16x512xf32>
    %72 = arith.maximumf %70, %71 : vector<16x512xf32>
    %c0_83 = arith.constant 0 : index
    %c0_84 = arith.constant 0 : index
    %c0_85 = arith.constant 0 : index
    %73 = vector.load %arg11[%c0_83, %c0_84, %c0_85] : memref<3x512x512xf32, #tpu.memory_space<vmem>>, vector<1x512x512xf32>
    %74 = vector.shape_cast %73 : vector<1x512x512xf32> to vector<512x512xf32>
    %cst_86 = arith.constant dense<0.000000e+00> : vector<16x512xf32>
    %75 = tpu.matmul %72, %74, %cst_86 {dimension_numbers = #tpu.dot_dimension_numbers<[1], [0], [0], [1], [0, 0, 1, 1], [], []>} : vector<16x512xf32>, vector<512x512xf32>, vector<16x512xf32> -> vector<16x512xf32>
    %c0_87 = arith.constant 0 : index
    %c0_88 = arith.constant 0 : index
    %c0_89 = arith.constant 0 : index
    %76 = vector.load %arg10[%c0_87, %c0_88, %c0_89] : memref<3x32x16xf32, #tpu.memory_space<vmem>>, vector<1x32x16xf32>
    %77 = vector.shape_cast %76 : vector<1x32x16xf32> to vector<32x16xf32>
    %cst_90 = arith.constant dense<0.000000e+00> : vector<32x512xf32>
    %78 = tpu.matmul %77, %75, %cst_90 {dimension_numbers = #tpu.dot_dimension_numbers<[1], [0], [0], [1], [0, 0, 1, 1], [], []>} : vector<32x16xf32>, vector<16x512xf32>, vector<32x512xf32> -> vector<32x512xf32>
    %c1_91 = arith.constant 1 : index
    %c0_92 = arith.constant 0 : index
    %c0_93 = arith.constant 0 : index
    %79 = vector.load %arg11[%c1_91, %c0_92, %c0_93] : memref<3x512x512xf32, #tpu.memory_space<vmem>>, vector<1x512x512xf32>
    %80 = vector.shape_cast %79 : vector<1x512x512xf32> to vector<512x512xf32>
    %cst_94 = arith.constant dense<0.000000e+00> : vector<16x512xf32>
    %81 = tpu.matmul %72, %80, %cst_94 {dimension_numbers = #tpu.dot_dimension_numbers<[1], [0], [0], [1], [0, 0, 1, 1], [], []>} : vector<16x512xf32>, vector<512x512xf32>, vector<16x512xf32> -> vector<16x512xf32>
    %c1_95 = arith.constant 1 : index
    %c0_96 = arith.constant 0 : index
    %c0_97 = arith.constant 0 : index
    %82 = vector.load %arg10[%c1_95, %c0_96, %c0_97] : memref<3x32x16xf32, #tpu.memory_space<vmem>>, vector<1x32x16xf32>
    %83 = vector.shape_cast %82 : vector<1x32x16xf32> to vector<32x16xf32>
    %cst_98 = arith.constant dense<0.000000e+00> : vector<32x512xf32>
    %84 = tpu.matmul %83, %81, %cst_98 {dimension_numbers = #tpu.dot_dimension_numbers<[1], [0], [0], [1], [0, 0, 1, 1], [], []>} : vector<32x16xf32>, vector<16x512xf32>, vector<32x512xf32> -> vector<32x512xf32>
    %85 = arith.addf %78, %84 : vector<32x512xf32>
    %c2_99 = arith.constant 2 : index
    %c0_100 = arith.constant 0 : index
    %c0_101 = arith.constant 0 : index
    %86 = vector.load %arg11[%c2_99, %c0_100, %c0_101] : memref<3x512x512xf32, #tpu.memory_space<vmem>>, vector<1x512x512xf32>
    %87 = vector.shape_cast %86 : vector<1x512x512xf32> to vector<512x512xf32>
    %cst_102 = arith.constant dense<0.000000e+00> : vector<16x512xf32>
    %88 = tpu.matmul %72, %87, %cst_102 {dimension_numbers = #tpu.dot_dimension_numbers<[1], [0], [0], [1], [0, 0, 1, 1], [], []>} : vector<16x512xf32>, vector<512x512xf32>, vector<16x512xf32> -> vector<16x512xf32>
    %c2_103 = arith.constant 2 : index
    %c0_104 = arith.constant 0 : index
    %c0_105 = arith.constant 0 : index
    %89 = vector.load %arg10[%c2_103, %c0_104, %c0_105] : memref<3x32x16xf32, #tpu.memory_space<vmem>>, vector<1x32x16xf32>
    %90 = vector.shape_cast %89 : vector<1x32x16xf32> to vector<32x16xf32>
    %cst_106 = arith.constant dense<0.000000e+00> : vector<32x512xf32>
    %91 = tpu.matmul %90, %88, %cst_106 {dimension_numbers = #tpu.dot_dimension_numbers<[1], [0], [0], [1], [0, 0, 1, 1], [], []>} : vector<32x16xf32>, vector<16x512xf32>, vector<32x512xf32> -> vector<32x512xf32>
    %92 = arith.addf %85, %91 : vector<32x512xf32>
    %c0_107 = arith.constant 0 : index
    %c0_108 = arith.constant 0 : index
    %93 = vector.load %arg12[%c0_107, %c0_108] : memref<1x512xf32, #tpu.memory_space<vmem>>, vector<1x512xf32>
    %94 = vector.broadcast %93 : vector<1x512xf32> to vector<32x512xf32>
    %95 = arith.addf %92, %94 : vector<32x512xf32>
    %cst_109 = arith.constant 0.000000e+00 : f32
    %96 = vector.broadcast %cst_109 : f32 to vector<32x512xf32>
    %97 = arith.maximumf %95, %96 : vector<32x512xf32>
    %c0_110 = arith.constant 0 : index
    %c0_111 = arith.constant 0 : index
    %c0_112 = arith.constant 0 : index
    %98 = vector.load %arg14[%c0_110, %c0_111, %c0_112] : memref<3x512x32xf32, #tpu.memory_space<vmem>>, vector<1x512x32xf32>
    %99 = vector.shape_cast %98 : vector<1x512x32xf32> to vector<512x32xf32>
    %cst_113 = arith.constant dense<0.000000e+00> : vector<32x32xf32>
    %100 = tpu.matmul %97, %99, %cst_113 {dimension_numbers = #tpu.dot_dimension_numbers<[1], [0], [0], [1], [0, 0, 1, 1], [], []>} : vector<32x512xf32>, vector<512x32xf32>, vector<32x32xf32> -> vector<32x32xf32>
    %c0_114 = arith.constant 0 : index
    %c0_115 = arith.constant 0 : index
    %c0_116 = arith.constant 0 : index
    %101 = vector.load %arg13[%c0_114, %c0_115, %c0_116] : memref<3x32x32xf32, #tpu.memory_space<vmem>>, vector<1x32x32xf32>
    %102 = vector.shape_cast %101 : vector<1x32x32xf32> to vector<32x32xf32>
    %cst_117 = arith.constant dense<0.000000e+00> : vector<32x32xf32>
    %103 = tpu.matmul %102, %100, %cst_117 {dimension_numbers = #tpu.dot_dimension_numbers<[1], [0], [0], [1], [0, 0, 1, 1], [], []>} : vector<32x32xf32>, vector<32x32xf32>, vector<32x32xf32> -> vector<32x32xf32>
    %c1_118 = arith.constant 1 : index
    %c0_119 = arith.constant 0 : index
    %c0_120 = arith.constant 0 : index
    %104 = vector.load %arg14[%c1_118, %c0_119, %c0_120] : memref<3x512x32xf32, #tpu.memory_space<vmem>>, vector<1x512x32xf32>
    %105 = vector.shape_cast %104 : vector<1x512x32xf32> to vector<512x32xf32>
    %cst_121 = arith.constant dense<0.000000e+00> : vector<32x32xf32>
    %106 = tpu.matmul %97, %105, %cst_121 {dimension_numbers = #tpu.dot_dimension_numbers<[1], [0], [0], [1], [0, 0, 1, 1], [], []>} : vector<32x512xf32>, vector<512x32xf32>, vector<32x32xf32> -> vector<32x32xf32>
    %c1_122 = arith.constant 1 : index
    %c0_123 = arith.constant 0 : index
    %c0_124 = arith.constant 0 : index
    %107 = vector.load %arg13[%c1_122, %c0_123, %c0_124] : memref<3x32x32xf32, #tpu.memory_space<vmem>>, vector<1x32x32xf32>
    %108 = vector.shape_cast %107 : vector<1x32x32xf32> to vector<32x32xf32>
    %cst_125 = arith.constant dense<0.000000e+00> : vector<32x32xf32>
    %109 = tpu.matmul %108, %106, %cst_125 {dimension_numbers = #tpu.dot_dimension_numbers<[1], [0], [0], [1], [0, 0, 1, 1], [], []>} : vector<32x32xf32>, vector<32x32xf32>, vector<32x32xf32> -> vector<32x32xf32>
    %110 = arith.addf %103, %109 : vector<32x32xf32>
    %c2_126 = arith.constant 2 : index
    %c0_127 = arith.constant 0 : index
    %c0_128 = arith.constant 0 : index
    %111 = vector.load %arg14[%c2_126, %c0_127, %c0_128] : memref<3x512x32xf32, #tpu.memory_space<vmem>>, vector<1x512x32xf32>
    %112 = vector.shape_cast %111 : vector<1x512x32xf32> to vector<512x32xf32>
    %cst_129 = arith.constant dense<0.000000e+00> : vector<32x32xf32>
    %113 = tpu.matmul %97, %112, %cst_129 {dimension_numbers = #tpu.dot_dimension_numbers<[1], [0], [0], [1], [0, 0, 1, 1], [], []>} : vector<32x512xf32>, vector<512x32xf32>, vector<32x32xf32> -> vector<32x32xf32>
    %c2_130 = arith.constant 2 : index
    %c0_131 = arith.constant 0 : index
    %c0_132 = arith.constant 0 : index
    %114 = vector.load %arg13[%c2_130, %c0_131, %c0_132] : memref<3x32x32xf32, #tpu.memory_space<vmem>>, vector<1x32x32xf32>
    %115 = vector.shape_cast %114 : vector<1x32x32xf32> to vector<32x32xf32>
    %cst_133 = arith.constant dense<0.000000e+00> : vector<32x32xf32>
    %116 = tpu.matmul %115, %113, %cst_133 {dimension_numbers = #tpu.dot_dimension_numbers<[1], [0], [0], [1], [0, 0, 1, 1], [], []>} : vector<32x32xf32>, vector<32x32xf32>, vector<32x32xf32> -> vector<32x32xf32>
    %117 = arith.addf %110, %116 : vector<32x32xf32>
    %c0_134 = arith.constant 0 : index
    %c0_135 = arith.constant 0 : index
    %118 = vector.load %arg15[%c0_134, %c0_135] : memref<1x32xf32, #tpu.memory_space<vmem>>, vector<1x32xf32>
    %119 = vector.broadcast %118 : vector<1x32xf32> to vector<32x32xf32>
    %120 = arith.addf %117, %119 : vector<32x32xf32>
    %121 = arith.negf %120 : vector<32x32xf32>
    %122 = math.exp %121 : vector<32x32xf32>
    %cst_136 = arith.constant 1.000000e+00 : f32
    %123 = vector.broadcast %cst_136 : f32 to vector<32x32xf32>
    %124 = arith.addf %123, %122 : vector<32x32xf32>
    %125 = arith.divf %123, %124 : vector<32x32xf32>
    %c0_137 = arith.constant 0 : index
    %c0_138 = arith.constant 0 : index
    %126 = vector.load %arg16[%c0_137, %c0_138] : memref<34x32xf32, #tpu.memory_space<vmem>>, vector<34x32xf32>
    %cst_139 = arith.constant dense<0.000000e+00> : vector<34x32xf32>
    %127 = tpu.matmul %126, %125, %cst_139 {dimension_numbers = #tpu.dot_dimension_numbers<[1], [0], [0], [1], [0, 0, 1, 1], [], []>} : vector<34x32xf32>, vector<32x32xf32>, vector<34x32xf32> -> vector<34x32xf32>
    %c0_140 = arith.constant 0 : index
    %c0_141 = arith.constant 0 : index
    %128 = vector.load %arg17[%c0_140, %c0_141] : memref<32x44xf32, #tpu.memory_space<vmem>>, vector<32x44xf32>
    %cst_142 = arith.constant dense<0.000000e+00> : vector<34x44xf32>
    %129 = tpu.matmul %127, %128, %cst_142 {dimension_numbers = #tpu.dot_dimension_numbers<[1], [0], [0], [1], [0, 0, 1, 1], [], []>} : vector<34x32xf32>, vector<32x44xf32>, vector<34x44xf32> -> vector<34x44xf32>
    %c0_143 = arith.constant 0 : index
    %c0_144 = arith.constant 0 : index
    %c0_145 = arith.constant 0 : index
    %130 = vector.load %arg18[%c0_143, %c0_144, %c0_145] : memref<1x34x44xf32, #tpu.memory_space<vmem>>, vector<1x34x44xf32>
    %131 = vector.shape_cast %130 : vector<1x34x44xf32> to vector<34x44xf32>
    %132 = vector.shape_cast %129 : vector<34x44xf32> to vector<1x34x44xf32>
    tpu.vector_store %arg18[%c0_143, %c0_144, %c0_145], %132 {strides = array<i32>} : memref<1x34x44xf32, #tpu.memory_space<vmem>>, vector<1x34x44xf32>,
    return
  }
  func.func @transform_0(%arg0: i32) -> (i32, i32, i32) {
    %c0_i32 = arith.constant 0 : i32
    %c0_i32_0 = arith.constant 0 : i32
    %c0_i32_1 = arith.constant 0 : i32
    return %arg0, %c0_i32, %c0_i32_0 : i32, i32, i32
  }
  func.func @transform_1(%arg0: i32) -> (i32, i32, i32) {
    %c0_i32 = arith.constant 0 : i32
    %c0_i32_0 = arith.constant 0 : i32
    %c0_i32_1 = arith.constant 0 : i32
    %c0_i32_2 = arith.constant 0 : i32
    return %c0_i32, %c0_i32_0, %c0_i32_1 : i32, i32, i32
  }
  func.func @transform_2(%arg0: i32) -> (i32, i32) {
    %c0_i32 = arith.constant 0 : i32
    %c0_i32_0 = arith.constant 0 : i32
    %c0_i32_1 = arith.constant 0 : i32
    return %c0_i32, %c0_i32_0 : i32, i32
  }
  func.func @transform_3(%arg0: i32) -> (i32, i32, i32) {
    %c0_i32 = arith.constant 0 : i32
    %c0_i32_0 = arith.constant 0 : i32
    %c0_i32_1 = arith.constant 0 : i32
    %c0_i32_2 = arith.constant 0 : i32
    return %c0_i32, %c0_i32_0, %c0_i32_1 : i32, i32, i32
  }
  func.func @transform_4(%arg0: i32) -> (i32, i32, i32) {
    %c0_i32 = arith.constant 0 : i32
    %c0_i32_0 = arith.constant 0 : i32
    %c0_i32_1 = arith.constant 0 : i32
    %c0_i32_2 = arith.constant 0 : i32
    return %c0_i32, %c0_i32_0, %c0_i32_1 : i32, i32, i32
  }
  func.func @transform_5(%arg0: i32) -> (i32, i32) {
    %c0_i32 = arith.constant 0 : i32
    %c0_i32_0 = arith.constant 0 : i32
    %c0_i32_1 = arith.constant 0 : i32
    return %c0_i32, %c0_i32_0 : i32, i32
  }
  func.func @transform_6(%arg0: i32) -> (i32, i32, i32) {
    %c0_i32 = arith.constant 0 : i32
    %c0_i32_0 = arith.constant 0 : i32
    %c0_i32_1 = arith.constant 0 : i32
    %c0_i32_2 = arith.constant 0 : i32
    return %c0_i32, %c0_i32_0, %c0_i32_1 : i32, i32, i32
  }
  func.func @transform_7(%arg0: i32) -> (i32, i32, i32) {
    %c0_i32 = arith.constant 0 : i32
    %c0_i32_0 = arith.constant 0 : i32
    %c0_i32_1 = arith.constant 0 : i32
    %c0_i32_2 = arith.constant 0 : i32
    return %c0_i32, %c0_i32_0, %c0_i32_1 : i32, i32, i32
  }
  func.func @transform_8(%arg0: i32) -> (i32, i32) {
    %c0_i32 = arith.constant 0 : i32
    %c0_i32_0 = arith.constant 0 : i32
    %c0_i32_1 = arith.constant 0 : i32
    return %c0_i32, %c0_i32_0 : i32, i32
  }
  func.func @transform_9(%arg0: i32) -> (i32, i32, i32) {
    %c0_i32 = arith.constant 0 : i32
    %c0_i32_0 = arith.constant 0 : i32
    %c0_i32_1 = arith.constant 0 : i32
    %c0_i32_2 = arith.constant 0 : i32
    return %c0_i32, %c0_i32_0, %c0_i32_1 : i32, i32, i32
  }
  func.func @transform_10(%arg0: i32) -> (i32, i32, i32) {
    %c0_i32 = arith.constant 0 : i32
    %c0_i32_0 = arith.constant 0 : i32
    %c0_i32_1 = arith.constant 0 : i32
    %c0_i32_2 = arith.constant 0 : i32
    return %c0_i32, %c0_i32_0, %c0_i32_1 : i32, i32, i32
  }
  func.func @transform_11(%arg0: i32) -> (i32, i32) {
    %c0_i32 = arith.constant 0 : i32
    %c0_i32_0 = arith.constant 0 : i32
    %c0_i32_1 = arith.constant 0 : i32
    return %c0_i32, %c0_i32_0 : i32, i32
  }
  func.func @transform_12(%arg0: i32) -> (i32, i32, i32) {
    %c0_i32 = arith.constant 0 : i32
    %c0_i32_0 = arith.constant 0 : i32
    %c0_i32_1 = arith.constant 0 : i32
    %c0_i32_2 = arith.constant 0 : i32
    return %c0_i32, %c0_i32_0, %c0_i32_1 : i32, i32, i32
  }
  func.func @transform_13(%arg0: i32) -> (i32, i32, i32) {
    %c0_i32 = arith.constant 0 : i32
    %c0_i32_0 = arith.constant 0 : i32
    %c0_i32_1 = arith.constant 0 : i32
    %c0_i32_2 = arith.constant 0 : i32
    return %c0_i32, %c0_i32_0, %c0_i32_1 : i32, i32, i32
  }
  func.func @transform_14(%arg0: i32) -> (i32, i32) {
    %c0_i32 = arith.constant 0 : i32
    %c0_i32_0 = arith.constant 0 : i32
    %c0_i32_1 = arith.constant 0 : i32
    return %c0_i32, %c0_i32_0 : i32, i32
  }
  func.func @transform_15(%arg0: i32) -> (i32, i32) {
    %c0_i32 = arith.constant 0 : i32
    %c0_i32_0 = arith.constant 0 : i32
    %c0_i32_1 = arith.constant 0 : i32
    return %c0_i32, %c0_i32_0 : i32, i32
  }
  func.func @transform_16(%arg0: i32) -> (i32, i32) {
    %c0_i32 = arith.constant 0 : i32
    %c0_i32_0 = arith.constant 0 : i32
    %c0_i32_1 = arith.constant 0 : i32
    return %c0_i32, %c0_i32_0 : i32, i32
  }
  func.func @transform_17(%arg0: i32) -> (i32, i32, i32) {
    %c0_i32 = arith.constant 0 : i32
    %c0_i32_0 = arith.constant 0 : i32
    %c0_i32_1 = arith.constant 0 : i32
    return %arg0, %c0_i32, %c0_i32_0 : i32, i32, i32
  }
}

</mosaic_0001>

<llo_original>
// kernel: cnn_decoder_forward.1
$region0: #{cnn_decoder_forward.1}
  #allocation0 [shape = 'u32[]', space=smem, size = 0x4, offset = 0x4, fixed_abs, tag = 'smem constant byte address 0x4 - core index']
  #allocation1 [shape = 'u32[144,128]{1,0:T(1,128)}', space=vmem, size = 0x12000, scoped, tag = 'internal scratch']
  #allocation2 [shape = 'f32[8,256]{1,0:T(8,128)}', space=vmem, size = 0x2000, scoped, tag = 'scratch operand']
  %s0 = inlined_call_operand.hbm [shape: f32[2,1,128], index: 0, kind: input, shape index: {}]
  %s1 = inlined_call_operand.hbm [shape: f32[4,128,256], index: 1, kind: input, shape index: {}]
  %s2 = inlined_call_operand.hbm [shape: f32[8,256], index: 2, kind: input, shape index: {}]
  %s3 = inlined_call_operand.hbm [shape: f32[3,8,8], index: 3, kind: input, shape index: {}]
  %s4 = inlined_call_operand.hbm [shape: f32[3,256,512], index: 4, kind: input, shape index: {}]
  %s5 = inlined_call_operand.hbm [shape: f32[1,512], index: 5, kind: input, shape index: {}]
  %s6 = inlined_call_operand.vmem [shape: f32[3,16,8], index: 6, kind: input, shape index: {}]
  %s7 = inlined_call_operand.hbm [shape: f32[3,512,512], index: 7, kind: input, shape index: {}]
  %s8 = inlined_call_operand.hbm [shape: f32[1,512], index: 8, kind: input, shape index: {}]
  %s9 = inlined_call_operand.vmem [shape: f32[3,32,16], index: 9, kind: input, shape index: {}]
  %s10 = inlined_call_operand.hbm [shape: f32[3,512,512], index: 10, kind: input, shape index: {}]
  %s11 = inlined_call_operand.hbm [shape: f32[1,512], index: 11, kind: input, shape index: {}]
  %s12 = inlined_call_operand.hbm [shape: f32[3,32,32], index: 12, kind: input, shape index: {}]
  %s13 = inlined_call_operand.vmem [shape: f32[3,512,32], index: 13, kind: input, shape index: {}]
  %s14 = inlined_call_operand.hbm [shape: f32[1,32], index: 14, kind: input, shape index: {}]
  %s15 = inlined_call_operand.vmem [shape: f32[34,32], index: 15, kind: input, shape index: {}]
  %s16 = inlined_call_operand.hbm [shape: f32[32,44], index: 16, kind: input, shape index: {}]
  %s17 = inlined_call_operand.vmem [shape: f32[2,34,44], index: 17, kind: output, shape index: {}]
  %s18 = sld [smem:[#allocation0]]
  $region153: #{cnn_decoder_forward.1} parent=0
    _
  %s20 = ssub.s32 1, %s18
  %s21 = scalar_select 0, %s20, %s18
  $region1: #{cnn_decoder_forward.1} parent=0
    #allocation3 [shape = 'u8[1024]{0}', space=vmem, size = 0x400, scoped, tag = 'input window, operand 0']
    #allocation4 [shape = 's32[2]{0}', space=sflag, size = 0x8, scoped, tag = 'scoped memory for cnn_decoder_forward.1']
    #allocation5 [shape = 'u8[524288]{0}', space=vmem, size = 0x80000, scoped, tag = 'input window, operand 1, single buffered']
    #allocation6 [shape = 's32[1]{0}', space=sflag, size = 0x4, scoped, tag = 'scoped memory for cnn_decoder_forward.1']
    #allocation7 [shape = 'u8[8192]{0}', space=vmem, size = 0x2000, scoped, tag = 'input window, operand 2, single buffered']
    #allocation8 [shape = 'u8[12288]{0}', space=vmem, size = 0x3000, scoped, tag = 'input window, operand 3, single buffered']
    #allocation9 [shape = 's32[1]{0}', space=sflag, size = 0x4, scoped, tag = 'scoped memory for cnn_decoder_forward.1']
    #allocation10 [shape = 'u8[1572864]{0}', space=vmem, size = 0x180000, scoped, tag = 'input window, operand 4, single buffered']
    #allocation11 [shape = 'u8[2048]{0}', space=vmem, size = 0x800, scoped, tag = 'input window, operand 5, single buffered']
    #allocation12 [shape = 's32[1]{0}', space=sflag, size = 0x4, scoped, tag = 'scoped memory for cnn_decoder_forward.1']
    #allocation13 [shape = 'u8[3145728]{0}', space=vmem, size = 0x300000, scoped, tag = 'input window, operand 7, single buffered']
    #allocation14 [shape = 'u8[2048]{0}', space=vmem, size = 0x800, scoped, tag = 'input window, operand 8, single buffered']
    #allocation15 [shape = 's32[1]{0}', space=sflag, size = 0x4, scoped, tag = 'scoped memory for cnn_decoder_forward.1']
    #allocation16 [shape = 'u8[3145728]{0}', space=vmem, size = 0x300000, scoped, tag = 'input window, operand 10, single buffered']
    #allocation17 [shape = 'u8[2048]{0}', space=vmem, size = 0x800, scoped, tag = 'input window, operand 11, single buffered']
    #allocation18 [shape = 's32[1]{0}', space=sflag, size = 0x4, scoped, tag = 'scoped memory for cnn_decoder_forward.1']
    #allocation19 [shape = 'u8[49152]{0}', space=vmem, size = 0xc000, scoped, tag = 'input window, operand 12, single buffered']
    #allocation20 [shape = 'u8[512]{0}', space=vmem, size = 0x400, scoped, tag = 'input window, operand 14, single buffered']
    #allocation21 [shape = 's32[1]{0}', space=sflag, size = 0x4, scoped, tag = 'scoped memory for cnn_decoder_forward.1']
    #allocation22 [shape = 'u8[16384]{0}', space=vmem, size = 0x4000, scoped, tag = 'input window, operand 16, single buffered']
    %22 = vsyncpa [#allocation4], 0
    %s23 = scalar_lea.sflag [#allocation4], 1
    %24 = vsyncpa %s23, 0
    %25 = vsyncpa [#allocation6], 0
    %26 = vsyncpa [#allocation9], 0
    %27 = vsyncpa [#allocation12], 0
    %28 = vsyncpa [#allocation15], 0
    %29 = vsyncpa [#allocation18], 0
    %30 = vsyncpa [#allocation21], 0
    loop: start=0, step=1, limit=4
    $region2: #{cnn_decoder_forward.1} parent=1 // loop_pre_header
      _
    $region3: #{cnn_decoder_forward.1} parent=1 // loop_header
      %s32 = sphi 0, %s36
      %p33 = scmp.ge.s32.totalorder %s32, 4
      %s42 = sphi 0, %s44
      %s45 = sphi 0, %s42
      %s46 = sphi 0, %s45
      %s62 = sphi 0, %s46
      %s66 = sphi 0, %s66
      %s68 = sphi 0, %s66
      %s69 = sphi 0, %s68
      %s83 = sphi 0, %s69
      %s87 = sphi 0, %s87
      %s89 = sphi 0, %s87
      %s90 = sphi 0, %s89
      %s104 = sphi 0, %s90
      %s108 = sphi 0, %s108
      %s110 = sphi 0, %s108
      %s111 = sphi 0, %s110
      %s125 = sphi 0, %s111
      %s129 = sphi 0, %s129
      %s131 = sphi 0, %s129
      %s132 = sphi 0, %s131
      %s146 = sphi 0, %s132
      %s150 = sphi 0, %s150
      %s152 = sphi 0, %s150
      %s153 = sphi 0, %s152
      %s167 = sphi 0, %s153
      %s171 = sphi 0, %s171
      %s173 = sphi 0, %s171
      %s174 = sphi 0, %s173
      %s188 = sphi 0, %s174
      %s192 = sphi 0, %s192
      %s194 = sphi 0, %s192
      %s195 = sphi 0, %s194
      %s209 = sphi 0, %s195
      %s213 = sphi 0, %s213
      %s215 = sphi 0, %s213
      %s216 = sphi 0, %s215
      %s230 = sphi 0, %s216
      %s234 = sphi 0, %s234
      %s236 = sphi 0, %s234
      %s237 = sphi 0, %s236
      %s251 = sphi 0, %s237
      %s255 = sphi 0, %s255
      %s257 = sphi 0, %s255
      %s258 = sphi 0, %s257
      %s272 = sphi 0, %s258
      %s276 = sphi 0, %s276
      %s278 = sphi 0, %s276
      %s279 = sphi 0, %s278
      %s293 = sphi 0, %s279
      %s297 = sphi 0, %s297
      %s299 = sphi 0, %s297
      %s300 = sphi 0, %s299
      %s314 = sphi 0, %s300
      %s318 = sphi 0, %s318
      %s320 = sphi 0, %s318
      %s321 = sphi 0, %s320
      %s335 = sphi 0, %s321
      %s339 = sphi 0, %s339
      %s341 = sphi 0, %s339
      %s342 = sphi 0, %s341
      %s356 = sphi 0, %s342
      %s360 = sphi 0, %s360
      %s362 = sphi 0, %s360
      %s363 = sphi 0, %s362
      %s377 = sphi 0, %s363
      %s381 = sphi 0, %s381
      %s383 = sphi 0, %s381
      %s384 = sphi 0, %s383
      %s398 = sphi 0, %s384
      %s404 = sphi 0, %s406
      %s407 = sphi 0, %s404
      %s408 = sphi 0, %s407
      %s424 = sphi 0, %s408
    $region4: #{cnn_decoder_forward.1} parent=1 // loop_header_branch
      %35 = sbr.rel (%p33) target = $region8
    $region5: #{cnn_decoder_forward.1} parent=1 // loop_body
      %s37 = ssub.s32 %s32, 1
      %s38 = ssub.s32 %s32, 2
      %s39 = sadd.s32 %s32, 1
      %s40 = ssub.s32 %s32, %s39
      %p41 = scmp.eq.s32.totalorder %s40, 0
      %s43 = sadd.s32 %s42, 1
      %s44 = scalar_select %p41, %s42, %s43
      %p47 = pneg %p41
      %p48 = scmp.eq.s32.totalorder %s32, 1
      %p49 = por %p47, %p48
      %p50 = scmp.ne.s32.totalorder %s42, %s45
      %p51 = scmp.eq.s32.totalorder %s32, 0
      %p52 = por %p50, %p51
      %p53 = scmp.ne.s32.totalorder %s42, %s45
      %p54 = scmp.eq.s32.totalorder %s37, 1
      %p55 = por %p53, %p54
      %p56 = scmp.ne.s32.totalorder %s45, %s46
      %p57 = scmp.eq.s32.totalorder %s37, 0
      %p58 = por %p56, %p57
      %p59 = scmp.ne.s32.totalorder %s45, %s46
      %p60 = scmp.eq.s32.totalorder %s38, 1
      %p61 = por %p59, %p60
      %p63 = scmp.ne.s32.totalorder %s46, %s62
      %p64 = scmp.eq.s32.totalorder %s38, 0
      %p65 = por %p63, %p64
      %s67 = sadd.s32 %s66, 1
      %p70 = scmp.eq.s32.totalorder %s32, 1
      %p71 = scmp.ne.s32.totalorder %s66, %s68
      %p72 = scmp.eq.s32.totalorder %s32, 0
      %p73 = por %p71, %p72
      %p74 = scmp.ne.s32.totalorder %s66, %s68
      %p75 = scmp.eq.s32.totalorder %s37, 1
      %p76 = por %p74, %p75
      %p77 = scmp.ne.s32.totalorder %s68, %s69
      %p78 = scmp.eq.s32.totalorder %s37, 0
      %p79 = por %p77, %p78
      %p80 = scmp.ne.s32.totalorder %s68, %s69
      %p81 = scmp.eq.s32.totalorder %s38, 1
      %p82 = por %p80, %p81
      %p84 = scmp.ne.s32.totalorder %s69, %s83
      %p85 = scmp.eq.s32.totalorder %s38, 0
      %p86 = por %p84, %p85
      %s88 = sadd.s32 %s87, 1
      %p91 = scmp.eq.s32.totalorder %s32, 1
      %p92 = scmp.ne.s32.totalorder %s87, %s89
      %p93 = scmp.eq.s32.totalorder %s32, 0
      %p94 = por %p92, %p93
      %p95 = scmp.ne.s32.totalorder %s87, %s89
      %p96 = scmp.eq.s32.totalorder %s37, 1
      %p97 = por %p95, %p96
      %p98 = scmp.ne.s32.totalorder %s89, %s90
      %p99 = scmp.eq.s32.totalorder %s37, 0
      %p100 = por %p98, %p99
      %p101 = scmp.ne.s32.totalorder %s89, %s90
      %p102 = scmp.eq.s32.totalorder %s38, 1
      %p103 = por %p101, %p102
      %p105 = scmp.ne.s32.totalorder %s90, %s104
      %p106 = scmp.eq.s32.totalorder %s38, 0
      %p107 = por %p105, %p106
      %s109 = sadd.s32 %s108, 1
      %p112 = scmp.eq.s32.totalorder %s32, 1
      %p113 = scmp.ne.s32.totalorder %s108, %s110
      %p114 = scmp.eq.s32.totalorder %s32, 0
      %p115 = por %p113, %p114
      %p116 = scmp.ne.s32.totalorder %s108, %s110
      %p117 = scmp.eq.s32.totalorder %s37, 1
      %p118 = por %p116, %p117
      %p119 = scmp.ne.s32.totalorder %s110, %s111
      %p120 = scmp.eq.s32.totalorder %s37, 0
      %p121 = por %p119, %p120
      %p122 = scmp.ne.s32.totalorder %s110, %s111
      %p123 = scmp.eq.s32.totalorder %s38, 1
      %p124 = por %p122, %p123
      %p126 = scmp.ne.s32.totalorder %s111, %s125
      %p127 = scmp.eq.s32.totalorder %s38, 0
      %p128 = por %p126, %p127
      %s130 = sadd.s32 %s129, 1
      %p133 = scmp.eq.s32.totalorder %s32, 1
      %p134 = scmp.ne.s32.totalorder %s129, %s131
      %p135 = scmp.eq.s32.totalorder %s32, 0
      %p136 = por %p134, %p135
      %p137 = scmp.ne.s32.totalorder %s129, %s131
      %p138 = scmp.eq.s32.totalorder %s37, 1
      %p139 = por %p137, %p138
      %p140 = scmp.ne.s32.totalorder %s131, %s132
      %p141 = scmp.eq.s32.totalorder %s37, 0
      %p142 = por %p140, %p141
      %p143 = scmp.ne.s32.totalorder %s131, %s132
      %p144 = scmp.eq.s32.totalorder %s38, 1
      %p145 = por %p143, %p144
      %p147 = scmp.ne.s32.totalorder %s132, %s146
      %p148 = scmp.eq.s32.totalorder %s38, 0
      %p149 = por %p147, %p148
      %s151 = sadd.s32 %s150, 1
      %p154 = scmp.eq.s32.totalorder %s32, 1
      %p155 = scmp.ne.s32.totalorder %s150, %s152
      %p156 = scmp.eq.s32.totalorder %s32, 0
      %p157 = por %p155, %p156
      %p158 = scmp.ne.s32.totalorder %s150, %s152
      %p159 = scmp.eq.s32.totalorder %s37, 1
      %p160 = por %p158, %p159
      %p161 = scmp.ne.s32.totalorder %s152, %s153
      %p162 = scmp.eq.s32.totalorder %s37, 0
      %p163 = por %p161, %p162
      %p164 = scmp.ne.s32.totalorder %s152, %s153
      %p165 = scmp.eq.s32.totalorder %s38, 1
      %p166 = por %p164, %p165
      %p168 = scmp.ne.s32.totalorder %s153, %s167
      %p169 = scmp.eq.s32.totalorder %s38, 0
      %p170 = por %p168, %p169
      %s172 = sadd.s32 %s171, 1
      %p175 = scmp.eq.s32.totalorder %s32, 1
      %p176 = scmp.ne.s32.totalorder %s171, %s173
      %p177 = scmp.eq.s32.totalorder %s32, 0
      %p178 = por %p176, %p177
      %p179 = scmp.ne.s32.totalorder %s171, %s173
      %p180 = scmp.eq.s32.totalorder %s37, 1
      %p181 = por %p179, %p180
      %p182 = scmp.ne.s32.totalorder %s173, %s174
      %p183 = scmp.eq.s32.totalorder %s37, 0
      %p184 = por %p182, %p183
      %p185 = scmp.ne.s32.totalorder %s173, %s174
      %p186 = scmp.eq.s32.totalorder %s38, 1
      %p187 = por %p185, %p186
      %p189 = scmp.ne.s32.totalorder %s174, %s188
      %p190 = scmp.eq.s32.totalorder %s38, 0
      %p191 = por %p189, %p190
      %s193 = sadd.s32 %s192, 1
      %p196 = scmp.eq.s32.totalorder %s32, 1
      %p197 = scmp.ne.s32.totalorder %s192, %s194
      %p198 = scmp.eq.s32.totalorder %s32, 0
      %p199 = por %p197, %p198
      %p200 = scmp.ne.s32.totalorder %s192, %s194
      %p201 = scmp.eq.s32.totalorder %s37, 1
      %p202 = por %p200, %p201
      %p203 = scmp.ne.s32.totalorder %s194, %s195
      %p204 = scmp.eq.s32.totalorder %s37, 0
      %p205 = por %p203, %p204
      %p206 = scmp.ne.s32.totalorder %s194, %s195
      %p207 = scmp.eq.s32.totalorder %s38, 1
      %p208 = por %p206, %p207
      %p210 = scmp.ne.s32.totalorder %s195, %s209
      %p211 = scmp.eq.s32.totalorder %s38, 0
      %p212 = por %p210, %p211
      %s214 = sadd.s32 %s213, 1
      %p217 = scmp.eq.s32.totalorder %s32, 1
      %p218 = scmp.ne.s32.totalorder %s213, %s215
      %p219 = scmp.eq.s32.totalorder %s32, 0
      %p220 = por %p218, %p219
      %p221 = scmp.ne.s32.totalorder %s213, %s215
      %p222 = scmp.eq.s32.totalorder %s37, 1
      %p223 = por %p221, %p222
      %p224 = scmp.ne.s32.totalorder %s215, %s216
      %p225 = scmp.eq.s32.totalorder %s37, 0
      %p226 = por %p224, %p225
      %p227 = scmp.ne.s32.totalorder %s215, %s216
      %p228 = scmp.eq.s32.totalorder %s38, 1
      %p229 = por %p227, %p228
      %p231 = scmp.ne.s32.totalorder %s216, %s230
      %p232 = scmp.eq.s32.totalorder %s38, 0
      %p233 = por %p231, %p232
      %s235 = sadd.s32 %s234, 1
      %p238 = scmp.eq.s32.totalorder %s32, 1
      %p239 = scmp.ne.s32.totalorder %s234, %s236
      %p240 = scmp.eq.s32.totalorder %s32, 0
      %p241 = por %p239, %p240
      %p242 = scmp.ne.s32.totalorder %s234, %s236
      %p243 = scmp.eq.s32.totalorder %s37, 1
      %p244 = por %p242, %p243
      %p245 = scmp.ne.s32.totalorder %s236, %s237
      %p246 = scmp.eq.s32.totalorder %s37, 0
      %p247 = por %p245, %p246
      %p248 = scmp.ne.s32.totalorder %s236, %s237
      %p249 = scmp.eq.s32.totalorder %s38, 1
      %p250 = por %p248, %p249
      %p252 = scmp.ne.s32.totalorder %s237, %s251
      %p253 = scmp.eq.s32.totalorder %s38, 0
      %p254 = por %p252, %p253
      %s256 = sadd.s32 %s255, 1
      %p259 = scmp.eq.s32.totalorder %s32, 1
      %p260 = scmp.ne.s32.totalorder %s255, %s257
      %p261 = scmp.eq.s32.totalorder %s32, 0
      %p262 = por %p260, %p261
      %p263 = scmp.ne.s32.totalorder %s255, %s257
      %p264 = scmp.eq.s32.totalorder %s37, 1
      %p265 = por %p263, %p264
      %p266 = scmp.ne.s32.totalorder %s257, %s258
      %p267 = scmp.eq.s32.totalorder %s37, 0
      %p268 = por %p266, %p267
      %p269 = scmp.ne.s32.totalorder %s257, %s258
      %p270 = scmp.eq.s32.totalorder %s38, 1
      %p271 = por %p269, %p270
      %p273 = scmp.ne.s32.totalorder %s258, %s272
      %p274 = scmp.eq.s32.totalorder %s38, 0
      %p275 = por %p273, %p274
      %s277 = sadd.s32 %s276, 1
      %p280 = scmp.eq.s32.totalorder %s32, 1
      %p281 = scmp.ne.s32.totalorder %s276, %s278
      %p282 = scmp.eq.s32.totalorder %s32, 0
      %p283 = por %p281, %p282
      %p284 = scmp.ne.s32.totalorder %s276, %s278
      %p285 = scmp.eq.s32.totalorder %s37, 1
      %p286 = por %p284, %p285
      %p287 = scmp.ne.s32.totalorder %s278, %s279
      %p288 = scmp.eq.s32.totalorder %s37, 0
      %p289 = por %p287, %p288
      %p290 = scmp.ne.s32.totalorder %s278, %s279
      %p291 = scmp.eq.s32.totalorder %s38, 1
      %p292 = por %p290, %p291
      %p294 = scmp.ne.s32.totalorder %s279, %s293
      %p295 = scmp.eq.s32.totalorder %s38, 0
      %p296 = por %p294, %p295
      %s298 = sadd.s32 %s297, 1
      %p301 = scmp.eq.s32.totalorder %s32, 1
      %p302 = scmp.ne.s32.totalorder %s297, %s299
      %p303 = scmp.eq.s32.totalorder %s32, 0
      %p304 = por %p302, %p303
      %p305 = scmp.ne.s32.totalorder %s297, %s299
      %p306 = scmp.eq.s32.totalorder %s37, 1
      %p307 = por %p305, %p306
      %p308 = scmp.ne.s32.totalorder %s299, %s300
      %p309 = scmp.eq.s32.totalorder %s37, 0
      %p310 = por %p308, %p309
      %p311 = scmp.ne.s32.totalorder %s299, %s300
      %p312 = scmp.eq.s32.totalorder %s38, 1
      %p313 = por %p311, %p312
      %p315 = scmp.ne.s32.totalorder %s300, %s314
      %p316 = scmp.eq.s32.totalorder %s38, 0
      %p317 = por %p315, %p316
      %s319 = sadd.s32 %s318, 1
      %p322 = scmp.eq.s32.totalorder %s32, 1
      %p323 = scmp.ne.s32.totalorder %s318, %s320
      %p324 = scmp.eq.s32.totalorder %s32, 0
      %p325 = por %p323, %p324
      %p326 = scmp.ne.s32.totalorder %s318, %s320
      %p327 = scmp.eq.s32.totalorder %s37, 1
      %p328 = por %p326, %p327
      %p329 = scmp.ne.s32.totalorder %s320, %s321
      %p330 = scmp.eq.s32.totalorder %s37, 0
      %p331 = por %p329, %p330
      %p332 = scmp.ne.s32.totalorder %s320, %s321
      %p333 = scmp.eq.s32.totalorder %s38, 1
      %p334 = por %p332, %p333
      %p336 = scmp.ne.s32.totalorder %s321, %s335
      %p337 = scmp.eq.s32.totalorder %s38, 0
      %p338 = por %p336, %p337
      %s340 = sadd.s32 %s339, 1
      %p343 = scmp.eq.s32.totalorder %s32, 1
      %p344 = scmp.ne.s32.totalorder %s339, %s341
      %p345 = scmp.eq.s32.totalorder %s32, 0
      %p346 = por %p344, %p345
      %p347 = scmp.ne.s32.totalorder %s339, %s341
      %p348 = scmp.eq.s32.totalorder %s37, 1
      %p349 = por %p347, %p348
      %p350 = scmp.ne.s32.totalorder %s341, %s342
      %p351 = scmp.eq.s32.totalorder %s37, 0
      %p352 = por %p350, %p351
      %p353 = scmp.ne.s32.totalorder %s341, %s342
      %p354 = scmp.eq.s32.totalorder %s38, 1
      %p355 = por %p353, %p354
      %p357 = scmp.ne.s32.totalorder %s342, %s356
      %p358 = scmp.eq.s32.totalorder %s38, 0
      %p359 = por %p357, %p358
      %s361 = sadd.s32 %s360, 1
      %p364 = scmp.eq.s32.totalorder %s32, 1
      %p365 = scmp.ne.s32.totalorder %s360, %s362
      %p366 = scmp.eq.s32.totalorder %s32, 0
      %p367 = por %p365, %p366
      %p368 = scmp.ne.s32.totalorder %s360, %s362
      %p369 = scmp.eq.s32.totalorder %s37, 1
      %p370 = por %p368, %p369
      %p371 = scmp.ne.s32.totalorder %s362, %s363
      %p372 = scmp.eq.s32.totalorder %s37, 0
      %p373 = por %p371, %p372
      %p374 = scmp.ne.s32.totalorder %s362, %s363
      %p375 = scmp.eq.s32.totalorder %s38, 1
      %p376 = por %p374, %p375
      %p378 = scmp.ne.s32.totalorder %s363, %s377
      %p379 = scmp.eq.s32.totalorder %s38, 0
      %p380 = por %p378, %p379
      %s382 = sadd.s32 %s381, 1
      %p385 = scmp.eq.s32.totalorder %s32, 1
      %p386 = scmp.ne.s32.totalorder %s381, %s383
      %p387 = scmp.eq.s32.totalorder %s32, 0
      %p388 = por %p386, %p387
      %p389 = scmp.ne.s32.totalorder %s381, %s383
      %p390 = scmp.eq.s32.totalorder %s37, 1
      %p391 = por %p389, %p390
      %p392 = scmp.ne.s32.totalorder %s383, %s384
      %p393 = scmp.eq.s32.totalorder %s37, 0
      %p394 = por %p392, %p393
      %p395 = scmp.ne.s32.totalorder %s383, %s384
      %p396 = scmp.eq.s32.totalorder %s38, 1
      %p397 = por %p395, %p396
      %p399 = scmp.ne.s32.totalorder %s384, %s398
      %p400 = scmp.eq.s32.totalorder %s38, 0
      %p401 = por %p399, %p400
      %s402 = ssub.s32 %s32, %s39
      %p403 = scmp.eq.s32.totalorder %s402, 0
      %s405 = sadd.s32 %s404, 1
      %s406 = scalar_select %p403, %s404, %s405
      %p409 = pneg %p403
      %p410 = scmp.eq.s32.totalorder %s32, 1
      %p411 = por %p409, %p410
      %p412 = scmp.ne.s32.totalorder %s404, %s407
      %p413 = scmp.eq.s32.totalorder %s32, 0
      %p414 = por %p412, %p413
      %p415 = scmp.ne.s32.totalorder %s404, %s407
      %p416 = scmp.eq.s32.totalorder %s37, 1
      %p417 = por %p415, %p416
      %p418 = scmp.ne.s32.totalorder %s407, %s408
      %p419 = scmp.eq.s32.totalorder %s37, 0
      %p420 = por %p418, %p419
      %p421 = scmp.ne.s32.totalorder %s407, %s408
      %p422 = scmp.eq.s32.totalorder %s38, 1
      %p423 = por %p421, %p422
      %p425 = scmp.ne.s32.totalorder %s408, %s424
      %p426 = scmp.eq.s32.totalorder %s38, 0
      %p427 = por %p425, %p426
      %p428 = scmp.le.s32.totalorder 1, %s32
      %p429 = scmp.lt.s32.totalorder %s32, 3
      %p430 = pnand %p428, %p429
      %p431 = pneg %p430
      // Predicated region
      $region9: #{cnn_decoder_forward.1} parent=5 // pred_check
        _
      $region10: #{cnn_decoder_forward.1} parent=5 // pred_check_branch
        %433 = sbr.rel (%p430) target = $region12
      $region11: #{cnn_decoder_forward.1} parent=5 // pred_region
        %s434 = ssub.s32 %s32, 1
        // Predicated region
        $region13: #{cnn_decoder_forward.1} parent=11 // pred_check
          %p435 = pneg %p79
        $region14: #{cnn_decoder_forward.1} parent=11 // pred_check_branch
          %437 = sbr.rel (%p435) target = $region16
        $region15: #{cnn_decoder_forward.1} parent=11 // pred_region
          %s439 = ssub.s32 16384, 16384
          %440 = vsyncadd [#allocation6], %s439
          %s441 = sshll.u32 [#allocation5], 4
          %s442 = int_to_ptr.vmem [resolvable:$true] %s441
          %447 = dma.hbm_to_vmem [thread:$0]  %s1, 16384, %s442, [#allocation6], 256, 256, 16
        $region16: #{cnn_decoder_forward.1} parent=11 // pred_fallthru
          _
        // Predicated region
        $region17: #{cnn_decoder_forward.1} parent=11 // pred_check
          %p448 = pneg %p100
        $region18: #{cnn_decoder_forward.1} parent=11 // pred_check_branch
          %450 = sbr.rel (%p448) target = $region20
        $region19: #{cnn_decoder_forward.1} parent=11 // pred_region
          %s452 = ssub.s32 256, 256
          %453 = vsyncadd [#allocation6], %s452
          %s455 = sshll.u32 [#allocation7], 4
          %s456 = int_to_ptr.vmem [resolvable:$true] %s455
          %458 = dma.hbm_to_vmem [thread:$0]  %s2, 256, %s456, [#allocation6]
        $region20: #{cnn_decoder_forward.1} parent=11 // pred_fallthru
          _
        // Predicated region
        $region21: #{cnn_decoder_forward.1} parent=11 // pred_check
          %p459 = pneg %p121
        $region22: #{cnn_decoder_forward.1} parent=11 // pred_check_branch
          %461 = sbr.rel (%p459) target = $region24
        $region23: #{cnn_decoder_forward.1} parent=11 // pred_region
          %s463 = ssub.s32 384, 384
          %464 = vsyncadd [#allocation9], %s463
          %s465 = sshll.u32 [#allocation8], 4
          %s466 = int_to_ptr.vmem [resolvable:$true] %s465
          %471 = dma.hbm_to_vmem [thread:$0]  %s3, 384, %s466, [#allocation9], 128, 128, 8
        $region24: #{cnn_decoder_forward.1} parent=11 // pred_fallthru
          _
        // Predicated region
        $region25: #{cnn_decoder_forward.1} parent=11 // pred_check
          %p472 = pneg %p142
        $region26: #{cnn_decoder_forward.1} parent=11 // pred_check_branch
          %474 = sbr.rel (%p472) target = $region28
        $region27: #{cnn_decoder_forward.1} parent=11 // pred_region
          %s476 = ssub.s32 49152, 49152
          %477 = vsyncadd [#allocation9], %s476
          %s478 = sshll.u32 [#allocation10], 4
          %s479 = int_to_ptr.vmem [resolvable:$true] %s478
          %484 = dma.hbm_to_vmem [thread:$0]  %s4, 49152, %s479, [#allocation9], 512, 512, 32
        $region28: #{cnn_decoder_forward.1} parent=11 // pred_fallthru
          _
        // Predicated region
        $region29: #{cnn_decoder_forward.1} parent=11 // pred_check
          %p485 = pneg %p163
        $region30: #{cnn_decoder_forward.1} parent=11 // pred_check_branch
          %487 = sbr.rel (%p485) target = $region32
        $region31: #{cnn_decoder_forward.1} parent=11 // pred_region
          %s489 = ssub.s32 64, 64
          %490 = vsyncadd [#allocation12], %s489
          %s492 = sshll.u32 [#allocation11], 4
          %s493 = int_to_ptr.vmem [resolvable:$true] %s492
          %495 = dma.hbm_to_vmem [thread:$0]  %s5, 64, %s493, [#allocation12]
        $region32: #{cnn_decoder_forward.1} parent=11 // pred_fallthru
          _
        // Predicated region
        $region33: #{cnn_decoder_forward.1} parent=11 // pred_check
          %p496 = pneg %p184
        $region34: #{cnn_decoder_forward.1} parent=11 // pred_check_branch
          %498 = sbr.rel (%p496) target = $region36
        $region35: #{cnn_decoder_forward.1} parent=11 // pred_region
          _
        $region36: #{cnn_decoder_forward.1} parent=11 // pred_fallthru
          _
        // Predicated region
        $region37: #{cnn_decoder_forward.1} parent=11 // pred_check
          %p499 = pneg %p205
        $region38: #{cnn_decoder_forward.1} parent=11 // pred_check_branch
          %501 = sbr.rel (%p499) target = $region40
        $region39: #{cnn_decoder_forward.1} parent=11 // pred_region
          %s503 = ssub.s32 98304, 98304
          %504 = vsyncadd [#allocation12], %s503
          %s505 = sshll.u32 [#allocation13], 4
          %s506 = int_to_ptr.vmem [resolvable:$true] %s505
          %511 = dma.hbm_to_vmem [thread:$0]  %s7, 98304, %s506, [#allocation12], 512, 512, 32
        $region40: #{cnn_decoder_forward.1} parent=11 // pred_fallthru
          _
        // Predicated region
        $region41: #{cnn_decoder_forward.1} parent=11 // pred_check
          %p512 = pneg %p226
        $region42: #{cnn_decoder_forward.1} parent=11 // pred_check_branch
          %514 = sbr.rel (%p512) target = $region44
        $region43: #{cnn_decoder_forward.1} parent=11 // pred_region
          %s516 = ssub.s32 64, 64
          %517 = vsyncadd [#allocation15], %s516
          %s519 = sshll.u32 [#allocation14], 4
          %s520 = int_to_ptr.vmem [resolvable:$true] %s519
          %522 = dma.hbm_to_vmem [thread:$0]  %s8, 64, %s520, [#allocation15]
        $region44: #{cnn_decoder_forward.1} parent=11 // pred_fallthru
          _
        // Predicated region
        $region45: #{cnn_decoder_forward.1} parent=11 // pred_check
          %p523 = pneg %p247
        $region46: #{cnn_decoder_forward.1} parent=11 // pred_check_branch
          %525 = sbr.rel (%p523) target = $region48
        $region47: #{cnn_decoder_forward.1} parent=11 // pred_region
          _
        $region48: #{cnn_decoder_forward.1} parent=11 // pred_fallthru
          _
        // Predicated region
        $region49: #{cnn_decoder_forward.1} parent=11 // pred_check
          %p526 = pneg %p268
        $region50: #{cnn_decoder_forward.1} parent=11 // pred_check_branch
          %528 = sbr.rel (%p526) target = $region52
        $region51: #{cnn_decoder_forward.1} parent=11 // pred_region
          %s530 = ssub.s32 98304, 98304
          %531 = vsyncadd [#allocation15], %s530
          %s532 = sshll.u32 [#allocation16], 4
          %s533 = int_to_ptr.vmem [resolvable:$true] %s532
          %538 = dma.hbm_to_vmem [thread:$0]  %s10, 98304, %s533, [#allocation15], 512, 512, 32
        $region52: #{cnn_decoder_forward.1} parent=11 // pred_fallthru
          _
        // Predicated region
        $region53: #{cnn_decoder_forward.1} parent=11 // pred_check
          %p539 = pneg %p289
        $region54: #{cnn_decoder_forward.1} parent=11 // pred_check_branch
          %541 = sbr.rel (%p539) target = $region56
        $region55: #{cnn_decoder_forward.1} parent=11 // pred_region
          %s543 = ssub.s32 64, 64
          %544 = vsyncadd [#allocation18], %s543
          %s546 = sshll.u32 [#allocation17], 4
          %s547 = int_to_ptr.vmem [resolvable:$true] %s546
          %549 = dma.hbm_to_vmem [thread:$0]  %s11, 64, %s547, [#allocation18]
        $region56: #{cnn_decoder_forward.1} parent=11 // pred_fallthru
          _
        // Predicated region
        $region57: #{cnn_decoder_forward.1} parent=11 // pred_check
          %p550 = pneg %p310
        $region58: #{cnn_decoder_forward.1} parent=11 // pred_check_branch
          %552 = sbr.rel (%p550) target = $region60
        $region59: #{cnn_decoder_forward.1} parent=11 // pred_region
          %s554 = ssub.s32 1536, 1536
          %555 = vsyncadd [#allocation18], %s554
          %s556 = sshll.u32 [#allocation19], 4
          %s557 = int_to_ptr.vmem [resolvable:$true] %s556
          %562 = dma.hbm_to_vmem [thread:$0]  %s12, 1536, %s557, [#allocation18], 128, 128, 8
        $region60: #{cnn_decoder_forward.1} parent=11 // pred_fallthru
          _
        // Predicated region
        $region61: #{cnn_decoder_forward.1} parent=11 // pred_check
          %p563 = pneg %p331
        $region62: #{cnn_decoder_forward.1} parent=11 // pred_check_branch
          %565 = sbr.rel (%p563) target = $region64
        $region63: #{cnn_decoder_forward.1} parent=11 // pred_region
          _
        $region64: #{cnn_decoder_forward.1} parent=11 // pred_fallthru
          _
        // Predicated region
        $region65: #{cnn_decoder_forward.1} parent=11 // pred_check
          %p566 = pneg %p352
        $region66: #{cnn_decoder_forward.1} parent=11 // pred_check_branch
          %568 = sbr.rel (%p566) target = $region68
        $region67: #{cnn_decoder_forward.1} parent=11 // pred_region
          %s570 = ssub.s32 16, 16
          %571 = vsyncadd [#allocation21], %s570
          %s573 = sshll.u32 [#allocation20], 4
          %s574 = int_to_ptr.vmem [resolvable:$true] %s573
          %576 = dma.hbm_to_vmem [thread:$0]  %s14, 16, %s574, [#allocation21]
        $region68: #{cnn_decoder_forward.1} parent=11 // pred_fallthru
          _
        // Predicated region
        $region69: #{cnn_decoder_forward.1} parent=11 // pred_check
          %p577 = pneg %p373
        $region70: #{cnn_decoder_forward.1} parent=11 // pred_check_branch
          %579 = sbr.rel (%p577) target = $region72
        $region71: #{cnn_decoder_forward.1} parent=11 // pred_region
          _
        $region72: #{cnn_decoder_forward.1} parent=11 // pred_fallthru
          _
        // Predicated region
        $region73: #{cnn_decoder_forward.1} parent=11 // pred_check
          %p580 = pneg %p394
        $region74: #{cnn_decoder_forward.1} parent=11 // pred_check_branch
          %582 = sbr.rel (%p580) target = $region76
        $region75: #{cnn_decoder_forward.1} parent=11 // pred_region
          %s584 = ssub.s32 512, 512
          %585 = vsyncadd [#allocation21], %s584
          %s586 = sshll.u32 [#allocation22], 4
          %s587 = int_to_ptr.vmem [resolvable:$true] %s586
          %592 = dma.hbm_to_vmem [thread:$0]  %s16, 512, %s587, [#allocation21], 128, 128, 8
        $region76: #{cnn_decoder_forward.1} parent=11 // pred_fallthru
          _
      $region12: #{cnn_decoder_forward.1} parent=5 // pred_fallthru
        _
      %p593 = scmp.lt.s32.totalorder %s32, 2
      // Predicated region
      $region77: #{cnn_decoder_forward.1} parent=5 // pred_check
        %p594 = pneg %p593
      $region78: #{cnn_decoder_forward.1} parent=5 // pred_check_branch
        %596 = sbr.rel (%p594) target = $region80
      $region79: #{cnn_decoder_forward.1} parent=5 // pred_region
        // Predicated region
        $region81: #{cnn_decoder_forward.1} parent=79 // pred_check
          %p597 = pneg %p52
        $region82: #{cnn_decoder_forward.1} parent=79 // pred_check_branch
          %599 = sbr.rel (%p597) target = $region84
        $region83: #{cnn_decoder_forward.1} parent=79 // pred_region
          %s600 = sand.u32 %s42, 1
          %s601 = scalar_lea.sflag [#allocation4], %s600
          %s602 = sand.u32 %s42, 1
          %s603 = scalar_lea.vmem [#allocation3], %s602
          %s605 = ssub.s32 16, 16
          %606 = vsyncadd %s601, %s605
          %s607 = smul.addr %s32, 16
          %s608 = scalar_lea.hbm %s0, %s607
          %s610 = sshll.u32 %s603, 4
          %s611 = int_to_ptr.vmem [resolvable:$true] %s610
          %613 = dma.hbm_to_vmem [thread:$0]  %s608, 16, %s611, %s601
        $region84: #{cnn_decoder_forward.1} parent=79 // pred_fallthru
          _
      $region80: #{cnn_decoder_forward.1} parent=5 // pred_fallthru
        _
      %p614 = scmp.le.s32.totalorder 1, %s32
      %p615 = scmp.lt.s32.totalorder %s32, 3
      %p616 = pnand %p614, %p615
      %p617 = pneg %p616
      // Predicated region
      $region85: #{cnn_decoder_forward.1} parent=5 // pred_check
        _
      $region86: #{cnn_decoder_forward.1} parent=5 // pred_check_branch
        %619 = sbr.rel (%p616) target = $region88
      $region87: #{cnn_decoder_forward.1} parent=5 // pred_region
        %s620 = ssub.s32 %s32, 1
        %s621 = sand.u32 %s45, 1
        %s622 = scalar_lea.sflag [#allocation4], %s621
        %s623 = sand.u32 %s45, 1
        %s624 = scalar_lea.vmem [#allocation3], %s623
        // Predicated region
        $region89: #{cnn_decoder_forward.1} parent=87 // pred_check
          %p625 = pneg %p58
        $region90: #{cnn_decoder_forward.1} parent=87 // pred_check_branch
          %627 = sbr.rel (%p625) target = $region92
        $region91: #{cnn_decoder_forward.1} parent=87 // pred_region
          %628 = dma.done %s622, 16
        $region92: #{cnn_decoder_forward.1} parent=87 // pred_fallthru
          _
        // Predicated region
        $region93: #{cnn_decoder_forward.1} parent=87 // pred_check
          %p629 = pneg %p79
        $region94: #{cnn_decoder_forward.1} parent=87 // pred_check_branch
          %631 = sbr.rel (%p629) target = $region96
        $region95: #{cnn_decoder_forward.1} parent=87 // pred_region
          %632 = dma.done [#allocation6], 16384
        $region96: #{cnn_decoder_forward.1} parent=87 // pred_fallthru
          _
        // Predicated region
        $region97: #{cnn_decoder_forward.1} parent=87 // pred_check
          %p633 = pneg %p100
        $region98: #{cnn_decoder_forward.1} parent=87 // pred_check_branch
          %635 = sbr.rel (%p633) target = $region100
        $region99: #{cnn_decoder_forward.1} parent=87 // pred_region
          %636 = dma.done [#allocation6], 256
        $region100: #{cnn_decoder_forward.1} parent=87 // pred_fallthru
          _
        // Predicated region
        $region101: #{cnn_decoder_forward.1} parent=87 // pred_check
          %p637 = pneg %p121
        $region102: #{cnn_decoder_forward.1} parent=87 // pred_check_branch
          %639 = sbr.rel (%p637) target = $region104
        $region103: #{cnn_decoder_forward.1} parent=87 // pred_region
          %640 = dma.done [#allocation9], 384
        $region104: #{cnn_decoder_forward.1} parent=87 // pred_fallthru
          _
        // Predicated region
        $region105: #{cnn_decoder_forward.1} parent=87 // pred_check
          %p641 = pneg %p142
        $region106: #{cnn_decoder_forward.1} parent=87 // pred_check_branch
          %643 = sbr.rel (%p641) target = $region108
        $region107: #{cnn_decoder_forward.1} parent=87 // pred_region
          %644 = dma.done [#allocation9], 49152
        $region108: #{cnn_decoder_forward.1} parent=87 // pred_fallthru
          _
        // Predicated region
        $region109: #{cnn_decoder_forward.1} parent=87 // pred_check
          %p645 = pneg %p163
        $region110: #{cnn_decoder_forward.1} parent=87 // pred_check_branch
          %647 = sbr.rel (%p645) target = $region112
        $region111: #{cnn_decoder_forward.1} parent=87 // pred_region
          %648 = dma.done [#allocation12], 64
        $region112: #{cnn_decoder_forward.1} parent=87 // pred_fallthru
          _
        // Predicated region
        $region113: #{cnn_decoder_forward.1} parent=87 // pred_check
          %p649 = pneg %p205
        $region114: #{cnn_decoder_forward.1} parent=87 // pred_check_branch
          %651 = sbr.rel (%p649) target = $region116
        $region115: #{cnn_decoder_forward.1} parent=87 // pred_region
          %652 = dma.done [#allocation12], 98304
        $region116: #{cnn_decoder_forward.1} parent=87 // pred_fallthru
          _
        // Predicated region
        $region117: #{cnn_decoder_forward.1} parent=87 // pred_check
          %p653 = pneg %p226
        $region118: #{cnn_decoder_forward.1} parent=87 // pred_check_branch
          %655 = sbr.rel (%p653) target = $region120
        $region119: #{cnn_decoder_forward.1} parent=87 // pred_region
          %656 = dma.done [#allocation15], 64
        $region120: #{cnn_decoder_forward.1} parent=87 // pred_fallthru
          _
        // Predicated region
        $region121: #{cnn_decoder_forward.1} parent=87 // pred_check
          %p657 = pneg %p268
        $region122: #{cnn_decoder_forward.1} parent=87 // pred_check_branch
          %659 = sbr.rel (%p657) target = $region124
        $region123: #{cnn_decoder_forward.1} parent=87 // pred_region
          %660 = dma.done [#allocation15], 98304
        $region124: #{cnn_decoder_forward.1} parent=87 // pred_fallthru
          _
        // Predicated region
        $region125: #{cnn_decoder_forward.1} parent=87 // pred_check
          %p661 = pneg %p289
        $region126: #{cnn_decoder_forward.1} parent=87 // pred_check_branch
          %663 = sbr.rel (%p661) target = $region128
        $region127: #{cnn_decoder_forward.1} parent=87 // pred_region
          %664 = dma.done [#allocation18], 64
        $region128: #{cnn_decoder_forward.1} parent=87 // pred_fallthru
          _
        // Predicated region
        $region129: #{cnn_decoder_forward.1} parent=87 // pred_check
          %p665 = pneg %p310
        $region130: #{cnn_decoder_forward.1} parent=87 // pred_check_branch
          %667 = sbr.rel (%p665) target = $region132
        $region131: #{cnn_decoder_forward.1} parent=87 // pred_region
          %668 = dma.done [#allocation18], 1536
        $region132: #{cnn_decoder_forward.1} parent=87 // pred_fallthru
          _
        // Predicated region
        $region133: #{cnn_decoder_forward.1} parent=87 // pred_check
          %p669 = pneg %p352
        $region134: #{cnn_decoder_forward.1} parent=87 // pred_check_branch
          %671 = sbr.rel (%p669) target = $region136
        $region135: #{cnn_decoder_forward.1} parent=87 // pred_region
          %672 = dma.done [#allocation21], 16
        $region136: #{cnn_decoder_forward.1} parent=87 // pred_fallthru
          _
        // Predicated region
        $region137: #{cnn_decoder_forward.1} parent=87 // pred_check
          %p673 = pneg %p394
        $region138: #{cnn_decoder_forward.1} parent=87 // pred_check_branch
          %675 = sbr.rel (%p673) target = $region140
        $region139: #{cnn_decoder_forward.1} parent=87 // pred_region
          %676 = dma.done [#allocation21], 512
        $region140: #{cnn_decoder_forward.1} parent=87 // pred_fallthru
          _
        %s677 = sand.u32 %s45, 1
        %s678 = scalar_lea.sflag [#allocation4], %s677
        %s679 = sand.u32 %s45, 1
        %s680 = scalar_lea.vmem [#allocation3], %s679
        %p681 = pneg %p58
        %p682 = pneg %p55
        %p683 = pneg %p79
        %p684 = pneg %p76
        %p685 = pneg %p100
        %p686 = pneg %p97
        %p687 = pneg %p121
        %p688 = pneg %p118
        %p689 = pneg %p142
        %p690 = pneg %p139
        %p691 = pneg %p163
        %p692 = pneg %p160
        %p693 = pneg %p184
        %p694 = pneg %p181
        %p695 = pneg %p205
        %p696 = pneg %p202
        %p697 = pneg %p226
        %p698 = pneg %p223
        %p699 = pneg %p247
        %p700 = pneg %p244
        %p701 = pneg %p268
        %p702 = pneg %p265
        %p703 = pneg %p289
        %p704 = pneg %p286
        %p705 = pneg %p310
        %p706 = pneg %p307
        %p707 = pneg %p331
        %p708 = pneg %p328
        %p709 = pneg %p352
        %p710 = pneg %p349
        %p711 = pneg %p373
        %p712 = pneg %p370
        %p713 = pneg %p394
        %p714 = pneg %p391
        %p715 = pneg %p420
        %p716 = pneg %p417
        %p717 = scmp.lt.s32.totalorder %s37, 1
        %s718 = scalar_select %p717, %s37, 1
        %s719 = smul.addr %s718, 5
        %s720 = smul.addr %s719, 8
        %s721 = scalar_lea.vmem %s17, %s720
        %p722 = scmp.lt.s32.totalorder %s37, 1
        %s723 = scalar_select %p722, %s37, 1
        %s724 = smul.addr %s723, 5
        %s725 = smul.addr %s724, 8
        %s726 = scalar_lea.vmem %s17, %s725
        %v727 = vld [vmem:[%s624] sm:$0x1]
        %728 = vst [vmem:[#allocation2] sm:$0xff] 0.0
        %729 = vst [vmem:[#allocation2 + $0x8] sm:$0xff] 0.0
        %v730 = vld [vmem:[#allocation5] sm:$0xff]
        %v731 = vld [vmem:[#allocation5 + $0x8] sm:$0xff]
        %v732 = vld [vmem:[#allocation5 + $0x10] sm:$0xff]
        %v733 = vld [vmem:[#allocation5 + $0x18] sm:$0xff]
        %v734 = vld [vmem:[#allocation5 + $0x20] sm:$0xff]
        %v735 = vld [vmem:[#allocation5 + $0x28] sm:$0xff]
        %v736 = vld [vmem:[#allocation5 + $0x30] sm:$0xff]
        %v737 = vld [vmem:[#allocation5 + $0x38] sm:$0xff]
        %v738 = vld [vmem:[#allocation5 + $0x40] sm:$0xff]
        %v739 = vld [vmem:[#allocation5 + $0x48] sm:$0xff]
        %v740 = vld [vmem:[#allocation5 + $0x50] sm:$0xff]
        %v741 = vld [vmem:[#allocation5 + $0x58] sm:$0xff]
        %v742 = vld [vmem:[#allocation5 + $0x60] sm:$0xff]
        %v743 = vld [vmem:[#allocation5 + $0x68] sm:$0xff]
        %v744 = vld [vmem:[#allocation5 + $0x70] sm:$0xff]
        %v745 = vld [vmem:[#allocation5 + $0x78] sm:$0xff]
        %v746 = vld [vmem:[#allocation5 + $0x80] sm:$0xff]
        %v747 = vld [vmem:[#allocation5 + $0x88] sm:$0xff]
        %v748 = vld [vmem:[#allocation5 + $0x90] sm:$0xff]
        %v749 = vld [vmem:[#allocation5 + $0x98] sm:$0xff]
        %v750 = vld [vmem:[#allocation5 + $0xa0] sm:$0xff]
        %v751 = vld [vmem:[#allocation5 + $0xa8] sm:$0xff]
        %v752 = vld [vmem:[#allocation5 + $0xb0] sm:$0xff]
        %v753 = vld [vmem:[#allocation5 + $0xb8] sm:$0xff]
        %v754 = vld [vmem:[#allocation5 + $0xc0] sm:$0xff]
        %v755 = vld [vmem:[#allocation5 + $0xc8] sm:$0xff]
        %v756 = vld [vmem:[#allocation5 + $0xd0] sm:$0xff]
        %v757 = vld [vmem:[#allocation5 + $0xd8] sm:$0xff]
        %v758 = vld [vmem:[#allocation5 + $0xe0] sm:$0xff]
        %v759 = vld [vmem:[#allocation5 + $0xe8] sm:$0xff]
        %v760 = vld [vmem:[#allocation5 + $0xf0] sm:$0xff]
        %v761 = vld [vmem:[#allocation5 + $0xf8] sm:$0xff]
        %762 = vmatprep.subr.mxu0 %v731
        %763 = vmatpush1.msra.mxu0 %v730
        %764 = vmatprep.subr.mxu0 %v733
        %765 = vmatpush1.msra.mxu0 %v732
        %766 = vmatprep.subr.mxu0 %v735
        %767 = vmatpush1.msra.mxu0 %v734
        %768 = vmatprep.subr.mxu0 %v737
        %769 = vmatpush1.msra.mxu0 %v736
        %770 = vmatprep.subr.mxu0 %v739
        %771 = vmatpush1.msra.mxu0 %v738
        %772 = vmatprep.subr.mxu0 %v741
        %773 = vmatpush1.msra.mxu0 %v740
        %774 = vmatprep.subr.mxu0 %v743
        %775 = vmatpush1.msra.mxu0 %v742
        %776 = vmatprep.subr.mxu0 %v745
        %777 = vmatpush1.msra.mxu0 %v744
        %778 = vmatprep.subr.mxu0 %v747
        %779 = vmatpush1.msra.mxu0 %v746
        %780 = vmatprep.subr.mxu0 %v749
        %781 = vmatpush1.msra.mxu0 %v748
        %782 = vmatprep.subr.mxu0 %v751
        %783 = vmatpush1.msra.mxu0 %v750
        %784 = vmatprep.subr.mxu0 %v753
        %785 = vmatpush1.msra.mxu0 %v752
        %786 = vmatprep.subr.mxu0 %v755
        %787 = vmatpush1.msra.mxu0 %v754
        %788 = vmatprep.subr.mxu0 %v757
        %789 = vmatpush1.msra.mxu0 %v756
        %790 = vmatprep.subr.mxu0 %v759
        %791 = vmatpush1.msra.mxu0 %v758
        %792 = vmatprep.subr.mxu0 %v761
        %793 = vmatpush1.msra.mxu0 %v760
        %794 = vmatprep.subr.mxu0 0.0
        %795 = vmatpush1.msra.mxu0 0.0
        %796 = vmatprep.subr.mxu0 0.0
        %797 = vmatpush1.msra.mxu0 0.0
        %798 = vmatprep.subr.mxu0 0.0
        %799 = vmatpush1.msra.mxu0 0.0
        %800 = vmatprep.subr.mxu0 0.0
        %801 = vmatpush1.msra.mxu0 0.0
        %802 = vmatprep.subr.mxu0 0.0
        %803 = vmatpush1.msra.mxu0 0.0
        %804 = vmatprep.subr.mxu0 0.0
        %805 = vmatpush1.msra.mxu0 0.0
        %806 = vmatprep.subr.mxu0 0.0
        %807 = vmatpush1.msra.mxu0 0.0
        %808 = vmatprep.subr.mxu0 0.0
        %809 = vmatpush1.msra.mxu0 0.0
        %810 = vmatprep.subr.mxu0 0.0
        %811 = vmatpush1.msra.mxu0 0.0
        %812 = vmatprep.subr.mxu0 0.0
        %813 = vmatpush1.msra.mxu0 0.0
        %814 = vmatprep.subr.mxu0 0.0
        %815 = vmatpush1.msra.mxu0 0.0
        %816 = vmatprep.subr.mxu0 0.0
        %817 = vmatpush1.msra.mxu0 0.0
        %818 = vmatprep.subr.mxu0 0.0
        %819 = vmatpush1.msra.mxu0 0.0
        %820 = vmatprep.subr.mxu0 0.0
        %821 = vmatpush1.msra.mxu0 0.0
        %822 = vmatprep.subr.mxu0 0.0
        %823 = vmatpush1.msra.mxu0 0.0
        %824 = vmatprep.subr.mxu0 0.0
        %825 = vmatpush1.msra.mxu0 0.0
        %826 = vmatprep.mubr.f32.mxu0 0.0
        %827 = vmatmul.mubr.f32.gmra.mrb[0].mxu0 %v727
        %v828 = vpop.f32.mrb[0].mxu0
        %v829 = vadd.f32 0.0, %v828
        %v830 = vpop.f32.mrb[0].mxu0
        %v831 = vadd.f32 0.0, %v830
        %832 = vdwg.mxu0
        %v835 = vcombine.low %v829, %v831
        %v837 = vunpack.c.l.s4 1966171168
        %v838 = vunpack.c.0.s8 %v837
        %v839 = vlaneseq
        %v840 = vshrl.u32 %v839, 7
        %v841 = vsub.s32 %v838, %v840
        %v842 = vrot.slane %v835, %v841
        %v844 = vunpack.c.l.s4 1966171168
        %v845 = vunpack.c.0.s8 %v844
        %v846 = vlaneseq
        %v847 = vshrl.u32 %v846, 7
        %v848 = vsub.s32 %v845, %v847
        %v849 = vrot.slane %v842, %v848
        %v851 = vlaneseq
        %vm852 = vcmp.ge.s32.totalorder %v851, 0
        %vm853 = vcmp.lt.s32.totalorder %v851, 256
        %vm854 = vmand %vm852, %vm853
        %855 = vst.msk [vmem:[#allocation2] ss:$8 sm:$0x3] %vm854, %v849
        %856 = vst.msk [vmem:[#allocation2] ss:$8 sm:$0x0] %vm854, %v849
        %s857 = scalar_lea.vmem [#allocation5], 256
        %v858 = vld [vmem:[%s857] sm:$0xff]
        %v859 = vld [vmem:[%s857 + $0x8] sm:$0xff]
        %v860 = vld [vmem:[%s857 + $0x10] sm:$0xff]
        %v861 = vld [vmem:[%s857 + $0x18] sm:$0xff]
        %v862 = vld [vmem:[%s857 + $0x20] sm:$0xff]
        %v863 = vld [vmem:[%s857 + $0x28] sm:$0xff]
        %v864 = vld [vmem:[%s857 + $0x30] sm:$0xff]
        %v865 = vld [vmem:[%s857 + $0x38] sm:$0xff]
        %v866 = vld [vmem:[%s857 + $0x40] sm:$0xff]
        %v867 = vld [vmem:[%s857 + $0x48] sm:$0xff]
        %v868 = vld [vmem:[%s857 + $0x50] sm:$0xff]
        %v869 = vld [vmem:[%s857 + $0x58] sm:$0xff]
        %v870 = vld [vmem:[%s857 + $0x60] sm:$0xff]
        %v871 = vld [vmem:[%s857 + $0x68] sm:$0xff]
        %v872 = vld [vmem:[%s857 + $0x70] sm:$0xff]
        %v873 = vld [vmem:[%s857 + $0x78] sm:$0xff]
        %v874 = vld [vmem:[%s857 + $0x80] sm:$0xff]
        %v875 = vld [vmem:[%s857 + $0x88] sm:$0xff]
        %v876 = vld [vmem:[%s857 + $0x90] sm:$0xff]
        %v877 = vld [vmem:[%s857 + $0x98] sm:$0xff]
        %v878 = vld [vmem:[%s857 + $0xa0] sm:$0xff]
        %v879 = vld [vmem:[%s857 + $0xa8] sm:$0xff]
        %v880 = vld [vmem:[%s857 + $0xb0] sm:$0xff]
        %v881 = vld [vmem:[%s857 + $0xb8] sm:$0xff]
        %v882 = vld [vmem:[%s857 + $0xc0] sm:$0xff]
        %v883 = vld [vmem:[%s857 + $0xc8] sm:$0xff]
        %v884 = vld [vmem:[%s857 + $0xd0] sm:$0xff]
        %v885 = vld [vmem:[%s857 + $0xd8] sm:$0xff]
        %v886 = vld [vmem:[%s857 + $0xe0] sm:$0xff]
        %v887 = vld [vmem:[%s857 + $0xe8] sm:$0xff]
        %v888 = vld [vmem:[%s857 + $0xf0] sm:$0xff]
        %v889 = vld [vmem:[%s857 + $0xf8] sm:$0xff]
        %890 = vmatprep.subr.mxu0 %v859
        %891 = vmatpush1.msra.mxu0 %v858
        %892 = vmatprep.subr.mxu0 %v861
        %893 = vmatpush1.msra.mxu0 %v860
        %894 = vmatprep.subr.mxu0 %v863
        %895 = vmatpush1.msra.mxu0 %v862
        %896 = vmatprep.subr.mxu0 %v865
        %897 = vmatpush1.msra.mxu0 %v864
        %898 = vmatprep.subr.mxu0 %v867
        %899 = vmatpush1.msra.mxu0 %v866
        %900 = vmatprep.subr.mxu0 %v869
        %901 = vmatpush1.msra.mxu0 %v868
        %902 = vmatprep.subr.mxu0 %v871
        %903 = vmatpush1.msra.mxu0 %v870
        %904 = vmatprep.subr.mxu0 %v873
        %905 = vmatpush1.msra.mxu0 %v872
        %906 = vmatprep.subr.mxu0 %v875
        %907 = vmatpush1.msra.mxu0 %v874
        %908 = vmatprep.subr.mxu0 %v877
        %909 = vmatpush1.msra.mxu0 %v876
        %910 = vmatprep.subr.mxu0 %v879
        %911 = vmatpush1.msra.mxu0 %v878
        %912 = vmatprep.subr.mxu0 %v881
        %913 = vmatpush1.msra.mxu0 %v880
        %914 = vmatprep.subr.mxu0 %v883
        %915 = vmatpush1.msra.mxu0 %v882
        %916 = vmatprep.subr.mxu0 %v885
        %917 = vmatpush1.msra.mxu0 %v884
        %918 = vmatprep.subr.mxu0 %v887
        %919 = vmatpush1.msra.mxu0 %v886
        %920 = vmatprep.subr.mxu0 %v889
        %921 = vmatpush1.msra.mxu0 %v888
        %922 = vmatprep.subr.mxu0 0.0
        %923 = vmatpush1.msra.mxu0 0.0
        %924 = vmatprep.subr.mxu0 0.0
        %925 = vmatpush1.msra.mxu0 0.0
        %926 = vmatprep.subr.mxu0 0.0
        %927 = vmatpush1.msra.mxu0 0.0
        %928 = vmatprep.subr.mxu0 0.0
        %929 = vmatpush1.msra.mxu0 0.0
        %930 = vmatprep.subr.mxu0 0.0
        %931 = vmatpush1.msra.mxu0 0.0
        %932 = vmatprep.subr.mxu0 0.0
        %933 = vmatpush1.msra.mxu0 0.0
        %934 = vmatprep.subr.mxu0 0.0
        %935 = vmatpush1.msra.mxu0 0.0
        %936 = vmatprep.subr.mxu0 0.0
        %937 = vmatpush1.msra.mxu0 0.0
        %938 = vmatprep.subr.mxu0 0.0
        %939 = vmatpush1.msra.mxu0 0.0
        %940 = vmatprep.subr.mxu0 0.0
        %941 = vmatpush1.msra.mxu0 0.0
        %942 = vmatprep.subr.mxu0 0.0
        %943 = vmatpush1.msra.mxu0 0.0
        %944 = vmatprep.subr.mxu0 0.0
        %945 = vmatpush1.msra.mxu0 0.0
        %946 = vmatprep.subr.mxu0 0.0
        %947 = vmatpush1.msra.mxu0 0.0
        %948 = vmatprep.subr.mxu0 0.0
        %949 = vmatpush1.msra.mxu0 0.0
        %950 = vmatprep.subr.mxu0 0.0
        %951 = vmatpush1.msra.mxu0 0.0
        %952 = vmatprep.subr.mxu0 0.0
        %953 = vmatpush1.msra.mxu0 0.0
        %954 = vmatprep.mubr.f32.mxu0 0.0
        %955 = vmatmul.mubr.f32.gmra.mrb[0].mxu0 %v727
        %v956 = vpop.f32.mrb[0].mxu0
        %v957 = vadd.f32 0.0, %v956
        %v958 = vpop.f32.mrb[0].mxu0
        %v959 = vadd.f32 0.0, %v958
        %960 = vdwg.mxu0
        %v963 = vcombine.low %v957, %v959
        %v965 = vunpack.c.l.s4 1966171168
        %v966 = vunpack.c.0.s8 %v965
        %v967 = vlaneseq
        %v968 = vshrl.u32 %v967, 7
        %v969 = vsub.s32 %v966, %v968
        %v970 = vrot.slane %v963, %v969
        %v972 = vunpack.c.l.s4 1966171168
        %v973 = vunpack.c.0.s8 %v972
        %v974 = vlaneseq
        %v975 = vshrl.u32 %v974, 7
        %v976 = vsub.s32 %v973, %v975
        %v977 = vrot.slane %v970, %v976
        %s979 = scalar_lea.vmem [#allocation2], 1
        %980 = vst.msk [vmem:[%s979] ss:$8 sm:$0x3] %vm854, %v977
        %981 = vst.msk [vmem:[%s979] ss:$8 sm:$0x0] %vm854, %v977
        %s982 = scalar_lea.vmem [#allocation5], 512
        %v983 = vld [vmem:[%s982] sm:$0xff]
        %v984 = vld [vmem:[%s982 + $0x8] sm:$0xff]
        %v985 = vld [vmem:[%s982 + $0x10] sm:$0xff]
        %v986 = vld [vmem:[%s982 + $0x18] sm:$0xff]
        %v987 = vld [vmem:[%s982 + $0x20] sm:$0xff]
        %v988 = vld [vmem:[%s982 + $0x28] sm:$0xff]
        %v989 = vld [vmem:[%s982 + $0x30] sm:$0xff]
        %v990 = vld [vmem:[%s982 + $0x38] sm:$0xff]
        %v991 = vld [vmem:[%s982 + $0x40] sm:$0xff]
        %v992 = vld [vmem:[%s982 + $0x48] sm:$0xff]
        %v993 = vld [vmem:[%s982 + $0x50] sm:$0xff]
        %v994 = vld [vmem:[%s982 + $0x58] sm:$0xff]
        %v995 = vld [vmem:[%s982 + $0x60] sm:$0xff]
        %v996 = vld [vmem:[%s982 + $0x68] sm:$0xff]
        %v997 = vld [vmem:[%s982 + $0x70] sm:$0xff]
        %v998 = vld [vmem:[%s982 + $0x78] sm:$0xff]
        %v999 = vld [vmem:[%s982 + $0x80] sm:$0xff]
        %v1000 = vld [vmem:[%s982 + $0x88] sm:$0xff]
        %v1001 = vld [vmem:[%s982 + $0x90] sm:$0xff]
        %v1002 = vld [vmem:[%s982 + $0x98] sm:$0xff]
        %v1003 = vld [vmem:[%s982 + $0xa0] sm:$0xff]
        %v1004 = vld [vmem:[%s982 + $0xa8] sm:$0xff]
        %v1005 = vld [vmem:[%s982 + $0xb0] sm:$0xff]
        %v1006 = vld [vmem:[%s982 + $0xb8] sm:$0xff]
        %v1007 = vld [vmem:[%s982 + $0xc0] sm:$0xff]
        %v1008 = vld [vmem:[%s982 + $0xc8] sm:$0xff]
        %v1009 = vld [vmem:[%s982 + $0xd0] sm:$0xff]
        %v1010 = vld [vmem:[%s982 + $0xd8] sm:$0xff]
        %v1011 = vld [vmem:[%s982 + $0xe0] sm:$0xff]
        %v1012 = vld [vmem:[%s982 + $0xe8] sm:$0xff]
        %v1013 = vld [vmem:[%s982 + $0xf0] sm:$0xff]
        %v1014 = vld [vmem:[%s982 + $0xf8] sm:$0xff]
        %1015 = vmatprep.subr.mxu0 %v984
        %1016 = vmatpush1.msra.mxu0 %v983
        %1017 = vmatprep.subr.mxu0 %v986
        %1018 = vmatpush1.msra.mxu0 %v985
        %1019 = vmatprep.subr.mxu0 %v988
        %1020 = vmatpush1.msra.mxu0 %v987
        %1021 = vmatprep.subr.mxu0 %v990
        %1022 = vmatpush1.msra.mxu0 %v989
        %1023 = vmatprep.subr.mxu0 %v992
        %1024 = vmatpush1.msra.mxu0 %v991
        %1025 = vmatprep.subr.mxu0 %v994
        %1026 = vmatpush1.msra.mxu0 %v993
        %1027 = vmatprep.subr.mxu0 %v996
        %1028 = vmatpush1.msra.mxu0 %v995
        %1029 = vmatprep.subr.mxu0 %v998
        %1030 = vmatpush1.msra.mxu0 %v997
        %1031 = vmatprep.subr.mxu0 %v1000
        %1032 = vmatpush1.msra.mxu0 %v999
        %1033 = vmatprep.subr.mxu0 %v1002
        %1034 = vmatpush1.msra.mxu0 %v1001
        %1035 = vmatprep.subr.mxu0 %v1004
        %1036 = vmatpush1.msra.mxu0 %v1003
        %1037 = vmatprep.subr.mxu0 %v1006
        %1038 = vmatpush1.msra.mxu0 %v1005
        %1039 = vmatprep.subr.mxu0 %v1008
        %1040 = vmatpush1.msra.mxu0 %v1007
        %1041 = vmatprep.subr.mxu0 %v1010
        %1042 = vmatpush1.msra.mxu0 %v1009
        %1043 = vmatprep.subr.mxu0 %v1012
        %1044 = vmatpush1.msra.mxu0 %v1011
        %1045 = vmatprep.subr.mxu0 %v1014
        %1046 = vmatpush1.msra.mxu0 %v1013
        %1047 = vmatprep.subr.mxu0 0.0
        %1048 = vmatpush1.msra.mxu0 0.0
        %1049 = vmatprep.subr.mxu0 0.0
        %1050 = vmatpush1.msra.mxu0 0.0
        %1051 = vmatprep.subr.mxu0 0.0
        %1052 = vmatpush1.msra.mxu0 0.0
        %1053 = vmatprep.subr.mxu0 0.0
        %1054 = vmatpush1.msra.mxu0 0.0
        %1055 = vmatprep.subr.mxu0 0.0
        %1056 = vmatpush1.msra.mxu0 0.0
        %1057 = vmatprep.subr.mxu0 0.0
        %1058 = vmatpush1.msra.mxu0 0.0
        %1059 = vmatprep.subr.mxu0 0.0
        %1060 = vmatpush1.msra.mxu0 0.0
        %1061 = vmatprep.subr.mxu0 0.0
        %1062 = vmatpush1.msra.mxu0 0.0
        %1063 = vmatprep.subr.mxu0 0.0
        %1064 = vmatpush1.msra.mxu0 0.0
        %1065 = vmatprep.subr.mxu0 0.0
        %1066 = vmatpush1.msra.mxu0 0.0
        %1067 = vmatprep.subr.mxu0 0.0
        %1068 = vmatpush1.msra.mxu0 0.0
        %1069 = vmatprep.subr.mxu0 0.0
        %1070 = vmatpush1.msra.mxu0 0.0
        %1071 = vmatprep.subr.mxu0 0.0
        %1072 = vmatpush1.msra.mxu0 0.0
        %1073 = vmatprep.subr.mxu0 0.0
        %1074 = vmatpush1.msra.mxu0 0.0
        %1075 = vmatprep.subr.mxu0 0.0
        %1076 = vmatpush1.msra.mxu0 0.0
        %1077 = vmatprep.subr.mxu0 0.0
        %1078 = vmatpush1.msra.mxu0 0.0
        %1079 = vmatprep.mubr.f32.mxu0 0.0
        %1080 = vmatmul.mubr.f32.gmra.mrb[0].mxu0 %v727
        %v1081 = vpop.f32.mrb[0].mxu0
        %v1082 = vadd.f32 0.0, %v1081
        %v1083 = vpop.f32.mrb[0].mxu0
        %v1084 = vadd.f32 0.0, %v1083
        %1085 = vdwg.mxu0
        %v1088 = vcombine.low %v1082, %v1084
        %v1090 = vunpack.c.l.s4 1966171168
        %v1091 = vunpack.c.0.s8 %v1090
        %v1092 = vlaneseq
        %v1093 = vshrl.u32 %v1092, 7
        %v1094 = vsub.s32 %v1091, %v1093
        %v1095 = vrot.slane %v1088, %v1094
        %v1097 = vunpack.c.l.s4 1966171168
        %v1098 = vunpack.c.0.s8 %v1097
        %v1099 = vlaneseq
        %v1100 = vshrl.u32 %v1099, 7
        %v1101 = vsub.s32 %v1098, %v1100
        %v1102 = vrot.slane %v1095, %v1101
        %s1104 = scalar_lea.vmem [#allocation2], 2
        %1105 = vst.msk [vmem:[%s1104] ss:$8 sm:$0x3] %vm854, %v1102
        %1106 = vst.msk [vmem:[%s1104] ss:$8 sm:$0x0] %vm854, %v1102
        %s1107 = scalar_lea.vmem [#allocation5], 768
        %v1108 = vld [vmem:[%s1107] sm:$0xff]
        %v1109 = vld [vmem:[%s1107 + $0x8] sm:$0xff]
        %v1110 = vld [vmem:[%s1107 + $0x10] sm:$0xff]
        %v1111 = vld [vmem:[%s1107 + $0x18] sm:$0xff]
        %v1112 = vld [vmem:[%s1107 + $0x20] sm:$0xff]
        %v1113 = vld [vmem:[%s1107 + $0x28] sm:$0xff]
        %v1114 = vld [vmem:[%s1107 + $0x30] sm:$0xff]
        %v1115 = vld [vmem:[%s1107 + $0x38] sm:$0xff]
        %v1116 = vld [vmem:[%s1107 + $0x40] sm:$0xff]
        %v1117 = vld [vmem:[%s1107 + $0x48] sm:$0xff]
        %v1118 = vld [vmem:[%s1107 + $0x50] sm:$0xff]
        %v1119 = vld [vmem:[%s1107 + $0x58] sm:$0xff]
        %v1120 = vld [vmem:[%s1107 + $0x60] sm:$0xff]
        %v1121 = vld [vmem:[%s1107 + $0x68] sm:$0xff]
        %v1122 = vld [vmem:[%s1107 + $0x70] sm:$0xff]
        %v1123 = vld [vmem:[%s1107 + $0x78] sm:$0xff]
        %v1124 = vld [vmem:[%s1107 + $0x80] sm:$0xff]
        %v1125 = vld [vmem:[%s1107 + $0x88] sm:$0xff]
        %v1126 = vld [vmem:[%s1107 + $0x90] sm:$0xff]
        %v1127 = vld [vmem:[%s1107 + $0x98] sm:$0xff]
        %v1128 = vld [vmem:[%s1107 + $0xa0] sm:$0xff]
        %v1129 = vld [vmem:[%s1107 + $0xa8] sm:$0xff]
        %v1130 = vld [vmem:[%s1107 + $0xb0] sm:$0xff]
        %v1131 = vld [vmem:[%s1107 + $0xb8] sm:$0xff]
        %v1132 = vld [vmem:[%s1107 + $0xc0] sm:$0xff]
        %v1133 = vld [vmem:[%s1107 + $0xc8] sm:$0xff]
        %v1134 = vld [vmem:[%s1107 + $0xd0] sm:$0xff]
        %v1135 = vld [vmem:[%s1107 + $0xd8] sm:$0xff]
        %v1136 = vld [vmem:[%s1107 + $0xe0] sm:$0xff]
        %v1137 = vld [vmem:[%s1107 + $0xe8] sm:$0xff]
        %v1138 = vld [vmem:[%s1107 + $0xf0] sm:$0xff]
        %v1139 = vld [vmem:[%s1107 + $0xf8] sm:$0xff]
        %1140 = vmatprep.subr.mxu0 %v1109
        %1141 = vmatpush1.msra.mxu0 %v1108
        %1142 = vmatprep.subr.mxu0 %v1111
        %1143 = vmatpush1.msra.mxu0 %v1110
        %1144 = vmatprep.subr.mxu0 %v1113
        %1145 = vmatpush1.msra.mxu0 %v1112
        %1146 = vmatprep.subr.mxu0 %v1115
        %1147 = vmatpush1.msra.mxu0 %v1114
        %1148 = vmatprep.subr.mxu0 %v1117
        %1149 = vmatpush1.msra.mxu0 %v1116
        %1150 = vmatprep.subr.mxu0 %v1119
        %1151 = vmatpush1.msra.mxu0 %v1118
        %1152 = vmatprep.subr.mxu0 %v1121
        %1153 = vmatpush1.msra.mxu0 %v1120
        %1154 = vmatprep.subr.mxu0 %v1123
        %1155 = vmatpush1.msra.mxu0 %v1122
        %1156 = vmatprep.subr.mxu0 %v1125
        %1157 = vmatpush1.msra.mxu0 %v1124
        %1158 = vmatprep.subr.mxu0 %v1127
        %1159 = vmatpush1.msra.mxu0 %v1126
        %1160 = vmatprep.subr.mxu0 %v1129
        %1161 = vmatpush1.msra.mxu0 %v1128
        %1162 = vmatprep.subr.mxu0 %v1131
        %1163 = vmatpush1.msra.mxu0 %v1130
        %1164 = vmatprep.subr.mxu0 %v1133
        %1165 = vmatpush1.msra.mxu0 %v1132
        %1166 = vmatprep.subr.mxu0 %v1135
        %1167 = vmatpush1.msra.mxu0 %v1134
        %1168 = vmatprep.subr.mxu0 %v1137
        %1169 = vmatpush1.msra.mxu0 %v1136
        %1170 = vmatprep.subr.mxu0 %v1139
        %1171 = vmatpush1.msra.mxu0 %v1138
        %1172 = vmatprep.subr.mxu0 0.0
        %1173 = vmatpush1.msra.mxu0 0.0
        %1174 = vmatprep.subr.mxu0 0.0
        %1175 = vmatpush1.msra.mxu0 0.0
        %1176 = vmatprep.subr.mxu0 0.0
        %1177 = vmatpush1.msra.mxu0 0.0
        %1178 = vmatprep.subr.mxu0 0.0
        %1179 = vmatpush1.msra.mxu0 0.0
        %1180 = vmatprep.subr.mxu0 0.0
        %1181 = vmatpush1.msra.mxu0 0.0
        %1182 = vmatprep.subr.mxu0 0.0
        %1183 = vmatpush1.msra.mxu0 0.0
        %1184 = vmatprep.subr.mxu0 0.0
        %1185 = vmatpush1.msra.mxu0 0.0
        %1186 = vmatprep.subr.mxu0 0.0
        %1187 = vmatpush1.msra.mxu0 0.0
        %1188 = vmatprep.subr.mxu0 0.0
        %1189 = vmatpush1.msra.mxu0 0.0
        %1190 = vmatprep.subr.mxu0 0.0
        %1191 = vmatpush1.msra.mxu0 0.0
        %1192 = vmatprep.subr.mxu0 0.0
        %1193 = vmatpush1.msra.mxu0 0.0
        %1194 = vmatprep.subr.mxu0 0.0
        %1195 = vmatpush1.msra.mxu0 0.0
        %1196 = vmatprep.subr.mxu0 0.0
        %1197 = vmatpush1.msra.mxu0 0.0
        %1198 = vmatprep.subr.mxu0 0.0
        %1199 = vmatpush1.msra.mxu0 0.0
        %1200 = vmatprep.subr.mxu0 0.0
        %1201 = vmatpush1.msra.mxu0 0.0
        %1202 = vmatprep.subr.mxu0 0.0
        %1203 = vmatpush1.msra.mxu0 0.0
        %1204 = vmatprep.mubr.f32.mxu0 0.0
        %1205 = vmatmul.mubr.f32.gmra.mrb[0].mxu0 %v727
        %v1206 = vpop.f32.mrb[0].mxu0
        %v1207 = vadd.f32 0.0, %v1206
        %v1208 = vpop.f32.mrb[0].mxu0
        %v1209 = vadd.f32 0.0, %v1208
        %1210 = vdwg.mxu0
        %v1213 = vcombine.low %v1207, %v1209
        %v1215 = vunpack.c.l.s4 1966171168
        %v1216 = vunpack.c.0.s8 %v1215
        %v1217 = vlaneseq
        %v1218 = vshrl.u32 %v1217, 7
        %v1219 = vsub.s32 %v1216, %v1218
        %v1220 = vrot.slane %v1213, %v1219
        %v1222 = vunpack.c.l.s4 1966171168
        %v1223 = vunpack.c.0.s8 %v1222
        %v1224 = vlaneseq
        %v1225 = vshrl.u32 %v1224, 7
        %v1226 = vsub.s32 %v1223, %v1225
        %v1227 = vrot.slane %v1220, %v1226
        %s1229 = scalar_lea.vmem [#allocation2], 3
        %1230 = vst.msk [vmem:[%s1229] ss:$8 sm:$0x3] %vm854, %v1227
        %1231 = vst.msk [vmem:[%s1229] ss:$8 sm:$0x0] %vm854, %v1227
        %v1232 = vld [vmem:[#allocation2] sm:$0xff]
        %v1233 = vld [vmem:[#allocation2 + $0x8] sm:$0xff]
        %v1234 = vld [vmem:[#allocation7] sm:$0xff]
        %v1235 = vld [vmem:[#allocation7 + $0x8] sm:$0xff]
        %v1236 = vadd.f32 %v1232, %v1234
        %v1237 = vadd.f32 %v1233, %v1235
        %v1238 = vld [vmem:[#allocation10] sm:$0xff]
        %v1239 = vld [vmem:[#allocation10 + $0x8] sm:$0xff]
        %v1240 = vld [vmem:[#allocation10 + $0x10] sm:$0xff]
        %v1241 = vld [vmem:[#allocation10 + $0x18] sm:$0xff]
        %v1242 = vld [vmem:[#allocation10 + $0x20] sm:$0xff]
        %v1243 = vld [vmem:[#allocation10 + $0x28] sm:$0xff]
        %v1244 = vld [vmem:[#allocation10 + $0x30] sm:$0xff]
        %v1245 = vld [vmem:[#allocation10 + $0x38] sm:$0xff]
        %v1246 = vld [vmem:[#allocation10 + $0x40] sm:$0xff]
        %v1247 = vld [vmem:[#allocation10 + $0x48] sm:$0xff]
        %v1248 = vld [vmem:[#allocation10 + $0x50] sm:$0xff]
        %v1249 = vld [vmem:[#allocation10 + $0x58] sm:$0xff]
        %v1250 = vld [vmem:[#allocation10 + $0x60] sm:$0xff]
        %v1251 = vld [vmem:[#allocation10 + $0x68] sm:$0xff]
        %v1252 = vld [vmem:[#allocation10 + $0x70] sm:$0xff]
        %v1253 = vld [vmem:[#allocation10 + $0x78] sm:$0xff]
        %v1254 = vld [vmem:[#allocation10 + $0x80] sm:$0xff]
        %v1255 = vld [vmem:[#allocation10 + $0x88] sm:$0xff]
        %v1256 = vld [vmem:[#allocation10 + $0x90] sm:$0xff]
        %v1257 = vld [vmem:[#allocation10 + $0x98] sm:$0xff]
        %v1258 = vld [vmem:[#allocation10 + $0xa0] sm:$0xff]
        %v1259 = vld [vmem:[#allocation10 + $0xa8] sm:$0xff]
        %v1260 = vld [vmem:[#allocation10 + $0xb0] sm:$0xff]
        %v1261 = vld [vmem:[#allocation10 + $0xb8] sm:$0xff]
        %v1262 = vld [vmem:[#allocation10 + $0xc0] sm:$0xff]
        %v1263 = vld [vmem:[#allocation10 + $0xc8] sm:$0xff]
        %v1264 = vld [vmem:[#allocation10 + $0xd0] sm:$0xff]
        %v1265 = vld [vmem:[#allocation10 + $0xd8] sm:$0xff]
        %v1266 = vld [vmem:[#allocation10 + $0xe0] sm:$0xff]
        %v1267 = vld [vmem:[#allocation10 + $0xe8] sm:$0xff]
        %v1268 = vld [vmem:[#allocation10 + $0xf0] sm:$0xff]
        %v1269 = vld [vmem:[#allocation10 + $0xf8] sm:$0xff]
        %v1270 = vld [vmem:[#allocation10 + $0x100] sm:$0xff]
        %v1271 = vld [vmem:[#allocation10 + $0x108] sm:$0xff]
        %v1272 = vld [vmem:[#allocation10 + $0x110] sm:$0xff]
        %v1273 = vld [vmem:[#allocation10 + $0x118] sm:$0xff]
        %v1274 = vld [vmem:[#allocation10 + $0x120] sm:$0xff]
        %v1275 = vld [vmem:[#allocation10 + $0x128] sm:$0xff]
        %v1276 = vld [vmem:[#allocation10 + $0x130] sm:$0xff]
        %v1277 = vld [vmem:[#allocation10 + $0x138] sm:$0xff]
        %v1278 = vld [vmem:[#allocation10 + $0x140] sm:$0xff]
        %v1279 = vld [vmem:[#allocation10 + $0x148] sm:$0xff]
        %v1280 = vld [vmem:[#allocation10 + $0x150] sm:$0xff]
        %v1281 = vld [vmem:[#allocation10 + $0x158] sm:$0xff]
        %v1282 = vld [vmem:[#allocation10 + $0x160] sm:$0xff]
        %v1283 = vld [vmem:[#allocation10 + $0x168] sm:$0xff]
        %v1284 = vld [vmem:[#allocation10 + $0x170] sm:$0xff]
        %v1285 = vld [vmem:[#allocation10 + $0x178] sm:$0xff]
        %v1286 = vld [vmem:[#allocation10 + $0x180] sm:$0xff]
        %v1287 = vld [vmem:[#allocation10 + $0x188] sm:$0xff]
        %v1288 = vld [vmem:[#allocation10 + $0x190] sm:$0xff]
        %v1289 = vld [vmem:[#allocation10 + $0x198] sm:$0xff]
        %v1290 = vld [vmem:[#allocation10 + $0x1a0] sm:$0xff]
        %v1291 = vld [vmem:[#allocation10 + $0x1a8] sm:$0xff]
        %v1292 = vld [vmem:[#allocation10 + $0x1b0] sm:$0xff]
        %v1293 = vld [vmem:[#allocation10 + $0x1b8] sm:$0xff]
        %v1294 = vld [vmem:[#allocation10 + $0x1c0] sm:$0xff]
        %v1295 = vld [vmem:[#allocation10 + $0x1c8] sm:$0xff]
        %v1296 = vld [vmem:[#allocation10 + $0x1d0] sm:$0xff]
        %v1297 = vld [vmem:[#allocation10 + $0x1d8] sm:$0xff]
        %v1298 = vld [vmem:[#allocation10 + $0x1e0] sm:$0xff]
        %v1299 = vld [vmem:[#allocation10 + $0x1e8] sm:$0xff]
        %v1300 = vld [vmem:[#allocation10 + $0x1f0] sm:$0xff]
        %v1301 = vld [vmem:[#allocation10 + $0x1f8] sm:$0xff]
        %v1302 = vld [vmem:[#allocation10 + $0x200] sm:$0xff]
        %v1303 = vld [vmem:[#allocation10 + $0x208] sm:$0xff]
        %v1304 = vld [vmem:[#allocation10 + $0x210] sm:$0xff]
        %v1305 = vld [vmem:[#allocation10 + $0x218] sm:$0xff]
        %v1306 = vld [vmem:[#allocation10 + $0x220] sm:$0xff]
        %v1307 = vld [vmem:[#allocation10 + $0x228] sm:$0xff]
        %v1308 = vld [vmem:[#allocation10 + $0x230] sm:$0xff]
        %v1309 = vld [vmem:[#allocation10 + $0x238] sm:$0xff]
        %v1310 = vld [vmem:[#allocation10 + $0x240] sm:$0xff]
        %v1311 = vld [vmem:[#allocation10 + $0x248] sm:$0xff]
        %v1312 = vld [vmem:[#allocation10 + $0x250] sm:$0xff]
        %v1313 = vld [vmem:[#allocation10 + $0x258] sm:$0xff]
        %v1314 = vld [vmem:[#allocation10 + $0x260] sm:$0xff]
        %v1315 = vld [vmem:[#allocation10 + $0x268] sm:$0xff]
        %v1316 = vld [vmem:[#allocation10 + $0x270] sm:$0xff]
        %v1317 = vld [vmem:[#allocation10 + $0x278] sm:$0xff]
        %v1318 = vld [vmem:[#allocation10 + $0x280] sm:$0xff]
        %v1319 = vld [vmem:[#allocation10 + $0x288] sm:$0xff]
        %v1320 = vld [vmem:[#allocation10 + $0x290] sm:$0xff]
        %v1321 = vld [vmem:[#allocation10 + $0x298] sm:$0xff]
        %v1322 = vld [vmem:[#allocation10 + $0x2a0] sm:$0xff]
        %v1323 = vld [vmem:[#allocation10 + $0x2a8] sm:$0xff]
        %v1324 = vld [vmem:[#allocation10 + $0x2b0] sm:$0xff]
        %v1325 = vld [vmem:[#allocation10 + $0x2b8] sm:$0xff]
        %v1326 = vld [vmem:[#allocation10 + $0x2c0] sm:$0xff]
        %v1327 = vld [vmem:[#allocation10 + $0x2c8] sm:$0xff]
        %v1328 = vld [vmem:[#allocation10 + $0x2d0] sm:$0xff]
        %v1329 = vld [vmem:[#allocation10 + $0x2d8] sm:$0xff]
        %v1330 = vld [vmem:[#allocation10 + $0x2e0] sm:$0xff]
        %v1331 = vld [vmem:[#allocation10 + $0x2e8] sm:$0xff]
        %v1332 = vld [vmem:[#allocation10 + $0x2f0] sm:$0xff]
        %v1333 = vld [vmem:[#allocation10 + $0x2f8] sm:$0xff]
        %v1334 = vld [vmem:[#allocation10 + $0x300] sm:$0xff]
        %v1335 = vld [vmem:[#allocation10 + $0x308] sm:$0xff]
        %v1336 = vld [vmem:[#allocation10 + $0x310] sm:$0xff]
        %v1337 = vld [vmem:[#allocation10 + $0x318] sm:$0xff]
        %v1338 = vld [vmem:[#allocation10 + $0x320] sm:$0xff]
        %v1339 = vld [vmem:[#allocation10 + $0x328] sm:$0xff]
        %v1340 = vld [vmem:[#allocation10 + $0x330] sm:$0xff]
        %v1341 = vld [vmem:[#allocation10 + $0x338] sm:$0xff]
        %v1342 = vld [vmem:[#allocation10 + $0x340] sm:$0xff]
        %v1343 = vld [vmem:[#allocation10 + $0x348] sm:$0xff]
        %v1344 = vld [vmem:[#allocation10 + $0x350] sm:$0xff]
        %v1345 = vld [vmem:[#allocation10 + $0x358] sm:$0xff]
        %v1346 = vld [vmem:[#allocation10 + $0x360] sm:$0xff]
        %v1347 = vld [vmem:[#allocation10 + $0x368] sm:$0xff]
        %v1348 = vld [vmem:[#allocation10 + $0x370] sm:$0xff]
        %v1349 = vld [vmem:[#allocation10 + $0x378] sm:$0xff]
        %v1350 = vld [vmem:[#allocation10 + $0x380] sm:$0xff]
        %v1351 = vld [vmem:[#allocation10 + $0x388] sm:$0xff]
        %v1352 = vld [vmem:[#allocation10 + $0x390] sm:$0xff]
        %v1353 = vld [vmem:[#allocation10 + $0x398] sm:$0xff]
        %v1354 = vld [vmem:[#allocation10 + $0x3a0] sm:$0xff]
        %v1355 = vld [vmem:[#allocation10 + $0x3a8] sm:$0xff]
        %v1356 = vld [vmem:[#allocation10 + $0x3b0] sm:$0xff]
        %v1357 = vld [vmem:[#allocation10 + $0x3b8] sm:$0xff]
        %v1358 = vld [vmem:[#allocation10 + $0x3c0] sm:$0xff]
        %v1359 = vld [vmem:[#allocation10 + $0x3c8] sm:$0xff]
        %v1360 = vld [vmem:[#allocation10 + $0x3d0] sm:$0xff]
        %v1361 = vld [vmem:[#allocation10 + $0x3d8] sm:$0xff]
        %v1362 = vld [vmem:[#allocation10 + $0x3e0] sm:$0xff]
        %v1363 = vld [vmem:[#allocation10 + $0x3e8] sm:$0xff]
        %v1364 = vld [vmem:[#allocation10 + $0x3f0] sm:$0xff]
        %v1365 = vld [vmem:[#allocation10 + $0x3f8] sm:$0xff]
        %1366 = vmatprep.subr.mxu0 %v1239
        %1367 = vmatpush1.msra.mxu0 %v1238
        %1368 = vmatprep.subr.mxu0 %v1243
        %1369 = vmatpush1.msra.mxu0 %v1242
        %1370 = vmatprep.subr.mxu0 %v1247
        %1371 = vmatpush1.msra.mxu0 %v1246
        %1372 = vmatprep.subr.mxu0 %v1251
        %1373 = vmatpush1.msra.mxu0 %v1250
        %1374 = vmatprep.subr.mxu0 %v1255
        %1375 = vmatpush1.msra.mxu0 %v1254
        %1376 = vmatprep.subr.mxu0 %v1259
        %1377 = vmatpush1.msra.mxu0 %v1258
        %1378 = vmatprep.subr.mxu0 %v1263
        %1379 = vmatpush1.msra.mxu0 %v1262
        %1380 = vmatprep.subr.mxu0 %v1267
        %1381 = vmatpush1.msra.mxu0 %v1266
        %1382 = vmatprep.subr.mxu0 %v1271
        %1383 = vmatpush1.msra.mxu0 %v1270
        %1384 = vmatprep.subr.mxu0 %v1275
        %1385 = vmatpush1.msra.mxu0 %v1274
        %1386 = vmatprep.subr.mxu0 %v1279
        %1387 = vmatpush1.msra.mxu0 %v1278
        %1388 = vmatprep.subr.mxu0 %v1283
        %1389 = vmatpush1.msra.mxu0 %v1282
        %1390 = vmatprep.subr.mxu0 %v1287
        %1391 = vmatpush1.msra.mxu0 %v1286
        %1392 = vmatprep.subr.mxu0 %v1291
        %1393 = vmatpush1.msra.mxu0 %v1290
        %1394 = vmatprep.subr.mxu0 %v1295
        %1395 = vmatpush1.msra.mxu0 %v1294
        %1396 = vmatprep.subr.mxu0 %v1299
        %1397 = vmatpush1.msra.mxu0 %v1298
        %1398 = vmatprep.subr.mxu0 %v1303
        %1399 = vmatpush1.msra.mxu0 %v1302
        %1400 = vmatprep.subr.mxu0 %v1307
        %1401 = vmatpush1.msra.mxu0 %v1306
        %1402 = vmatprep.subr.mxu0 %v1311
        %1403 = vmatpush1.msra.mxu0 %v1310
        %1404 = vmatprep.subr.mxu0 %v1315
        %1405 = vmatpush1.msra.mxu0 %v1314
        %1406 = vmatprep.subr.mxu0 %v1319
        %1407 = vmatpush1.msra.mxu0 %v1318
        %1408 = vmatprep.subr.mxu0 %v1323
        %1409 = vmatpush1.msra.mxu0 %v1322
        %1410 = vmatprep.subr.mxu0 %v1327
        %1411 = vmatpush1.msra.mxu0 %v1326
        %1412 = vmatprep.subr.mxu0 %v1331
        %1413 = vmatpush1.msra.mxu0 %v1330
        %1414 = vmatprep.subr.mxu0 %v1335
        %1415 = vmatpush1.msra.mxu0 %v1334
        %1416 = vmatprep.subr.mxu0 %v1339
        %1417 = vmatpush1.msra.mxu0 %v1338
        %1418 = vmatprep.subr.mxu0 %v1343
        %1419 = vmatpush1.msra.mxu0 %v1342
        %1420 = vmatprep.subr.mxu0 %v1347
        %1421 = vmatpush1.msra.mxu0 %v1346
        %1422 = vmatprep.subr.mxu0 %v1351
        %1423 = vmatpush1.msra.mxu0 %v1350
        %1424 = vmatprep.subr.mxu0 %v1355
        %1425 = vmatpush1.msra.mxu0 %v1354
        %1426 = vmatprep.subr.mxu0 %v1359
        %1427 = vmatpush1.msra.mxu0 %v1358
        %1428 = vmatprep.subr.mxu0 %v1363
        %1429 = vmatpush1.msra.mxu0 %v1362
        %1430 = vmatprep.mubr.f32.mxu0 %v1237
        %1431 = vmatmul.mubr.f32.gmra.mrb[0].mxu0 %v1236
        %v1432 = vpop.f32.mrb[0].mxu0
        %v1433 = vadd.f32 0.0, %v1432
        %v1434 = vpop.f32.mrb[0].mxu0
        %v1435 = vadd.f32 0.0, %v1434
        %1436 = vdwg.mxu0
        %1437 = vmatprep.subr.mxu0 %v1241
        %1438 = vmatpush1.msra.mxu0 %v1240
        %1439 = vmatprep.subr.mxu0 %v1245
        %1440 = vmatpush1.msra.mxu0 %v1244
        %1441 = vmatprep.subr.mxu0 %v1249
        %1442 = vmatpush1.msra.mxu0 %v1248
        %1443 = vmatprep.subr.mxu0 %v1253
        %1444 = vmatpush1.msra.mxu0 %v1252
        %1445 = vmatprep.subr.mxu0 %v1257
        %1446 = vmatpush1.msra.mxu0 %v1256
        %1447 = vmatprep.subr.mxu0 %v1261
        %1448 = vmatpush1.msra.mxu0 %v1260
        %1449 = vmatprep.subr.mxu0 %v1265
        %1450 = vmatpush1.msra.mxu0 %v1264
        %1451 = vmatprep.subr.mxu0 %v1269
        %1452 = vmatpush1.msra.mxu0 %v1268
        %1453 = vmatprep.subr.mxu0 %v1273
        %1454 = vmatpush1.msra.mxu0 %v1272
        %1455 = vmatprep.subr.mxu0 %v1277
        %1456 = vmatpush1.msra.mxu0 %v1276
        %1457 = vmatprep.subr.mxu0 %v1281
        %1458 = vmatpush1.msra.mxu0 %v1280
        %1459 = vmatprep.subr.mxu0 %v1285
        %1460 = vmatpush1.msra.mxu0 %v1284
        %1461 = vmatprep.subr.mxu0 %v1289
        %1462 = vmatpush1.msra.mxu0 %v1288
        %1463 = vmatprep.subr.mxu0 %v1293
        %1464 = vmatpush1.msra.mxu0 %v1292
        %1465 = vmatprep.subr.mxu0 %v1297
        %1466 = vmatpush1.msra.mxu0 %v1296
        %1467 = vmatprep.subr.mxu0 %v1301
        %1468 = vmatpush1.msra.mxu0 %v1300
        %1469 = vmatprep.subr.mxu0 %v1305
        %1470 = vmatpush1.msra.mxu0 %v1304
        %1471 = vmatprep.subr.mxu0 %v1309
        %1472 = vmatpush1.msra.mxu0 %v1308
        %1473 = vmatprep.subr.mxu0 %v1313
        %1474 = vmatpush1.msra.mxu0 %v1312
        %1475 = vmatprep.subr.mxu0 %v1317
        %1476 = vmatpush1.msra.mxu0 %v1316
        %1477 = vmatprep.subr.mxu0 %v1321
        %1478 = vmatpush1.msra.mxu0 %v1320
        %1479 = vmatprep.subr.mxu0 %v1325
        %1480 = vmatpush1.msra.mxu0 %v1324
        %1481 = vmatprep.subr.mxu0 %v1329
        %1482 = vmatpush1.msra.mxu0 %v1328
        %1483 = vmatprep.subr.mxu0 %v1333
        %1484 = vmatpush1.msra.mxu0 %v1332
        %1485 = vmatprep.subr.mxu0 %v1337
        %1486 = vmatpush1.msra.mxu0 %v1336
        %1487 = vmatprep.subr.mxu0 %v1341
        %1488 = vmatpush1.msra.mxu0 %v1340
        %1489 = vmatprep.subr.mxu0 %v1345
        %1490 = vmatpush1.msra.mxu0 %v1344
        %1491 = vmatprep.subr.mxu0 %v1349
        %1492 = vmatpush1.msra.mxu0 %v1348
        %1493 = vmatprep.subr.mxu0 %v1353
        %1494 = vmatpush1.msra.mxu0 %v1352
        %1495 = vmatprep.subr.mxu0 %v1357
        %1496 = vmatpush1.msra.mxu0 %v1356
        %1497 = vmatprep.subr.mxu0 %v1361
        %1498 = vmatpush1.msra.mxu0 %v1360
        %1499 = vmatprep.subr.mxu0 %v1365
        %1500 = vmatpush1.msra.mxu0 %v1364
        %1501 = vmatprep.mubr.f32.mxu0 %v1237
        %1502 = vmatmul.mubr.f32.gmra.mrb[0].mxu0 %v1236
        %v1503 = vpop.f32.mrb[0].mxu0
        %v1504 = vadd.f32 0.0, %v1503
        %v1505 = vpop.f32.mrb[0].mxu0
        %v1506 = vadd.f32 0.0, %v1505
        %1507 = vdwg.mxu0
        %v1508 = vld [vmem:[#allocation8] sm:$0xff]
        %s1509 = scalar_lea.vmem [#allocation10], 1024
        %v1510 = vld [vmem:[%s1509] sm:$0xff]
        %v1511 = vld [vmem:[%s1509 + $0x8] sm:$0xff]
        %v1512 = vld [vmem:[%s1509 + $0x10] sm:$0xff]
        %v1513 = vld [vmem:[%s1509 + $0x18] sm:$0xff]
        %v1514 = vld [vmem:[%s1509 + $0x20] sm:$0xff]
        %v1515 = vld [vmem:[%s1509 + $0x28] sm:$0xff]
        %v1516 = vld [vmem:[%s1509 + $0x30] sm:$0xff]
        %v1517 = vld [vmem:[%s1509 + $0x38] sm:$0xff]
        %v1518 = vld [vmem:[%s1509 + $0x40] sm:$0xff]
        %v1519 = vld [vmem:[%s1509 + $0x48] sm:$0xff]
        %v1520 = vld [vmem:[%s1509 + $0x50] sm:$0xff]
        %v1521 = vld [vmem:[%s1509 + $0x58] sm:$0xff]
        %v1522 = vld [vmem:[%s1509 + $0x60] sm:$0xff]
        %v1523 = vld [vmem:[%s1509 + $0x68] sm:$0xff]
        %v1524 = vld [vmem:[%s1509 + $0x70] sm:$0xff]
        %v1525 = vld [vmem:[%s1509 + $0x78] sm:$0xff]
        %v1526 = vld [vmem:[%s1509 + $0x80] sm:$0xff]
        %v1527 = vld [vmem:[%s1509 + $0x88] sm:$0xff]
        %v1528 = vld [vmem:[%s1509 + $0x90] sm:$0xff]
        %v1529 = vld [vmem:[%s1509 + $0x98] sm:$0xff]
        %v1530 = vld [vmem:[%s1509 + $0xa0] sm:$0xff]
        %v1531 = vld [vmem:[%s1509 + $0xa8] sm:$0xff]
        %v1532 = vld [vmem:[%s1509 + $0xb0] sm:$0xff]
        %v1533 = vld [vmem:[%s1509 + $0xb8] sm:$0xff]
        %v1534 = vld [vmem:[%s1509 + $0xc0] sm:$0xff]
        %v1535 = vld [vmem:[%s1509 + $0xc8] sm:$0xff]
        %v1536 = vld [vmem:[%s1509 + $0xd0] sm:$0xff]
        %v1537 = vld [vmem:[%s1509 + $0xd8] sm:$0xff]
        %v1538 = vld [vmem:[%s1509 + $0xe0] sm:$0xff]
        %v1539 = vld [vmem:[%s1509 + $0xe8] sm:$0xff]
        %v1540 = vld [vmem:[%s1509 + $0xf0] sm:$0xff]
        %v1541 = vld [vmem:[%s1509 + $0xf8] sm:$0xff]
        %v1542 = vld [vmem:[%s1509 + $0x100] sm:$0xff]
        %v1543 = vld [vmem:[%s1509 + $0x108] sm:$0xff]
        %v1544 = vld [vmem:[%s1509 + $0x110] sm:$0xff]
        %v1545 = vld [vmem:[%s1509 + $0x118] sm:$0xff]
        %v1546 = vld [vmem:[%s1509 + $0x120] sm:$0xff]
        %v1547 = vld [vmem:[%s1509 + $0x128] sm:$0xff]
        %v1548 = vld [vmem:[%s1509 + $0x130] sm:$0xff]
        %v1549 = vld [vmem:[%s1509 + $0x138] sm:$0xff]
        %v1550 = vld [vmem:[%s1509 + $0x140] sm:$0xff]
        %v1551 = vld [vmem:[%s1509 + $0x148] sm:$0xff]
        %v1552 = vld [vmem:[%s1509 + $0x150] sm:$0xff]
        %v1553 = vld [vmem:[%s1509 + $0x158] sm:$0xff]
        %v1554 = vld [vmem:[%s1509 + $0x160] sm:$0xff]
        %v1555 = vld [vmem:[%s1509 + $0x168] sm:$0xff]
        %v1556 = vld [vmem:[%s1509 + $0x170] sm:$0xff]
        %v1557 = vld [vmem:[%s1509 + $0x178] sm:$0xff]
        %v1558 = vld [vmem:[%s1509 + $0x180] sm:$0xff]
        %v1559 = vld [vmem:[%s1509 + $0x188] sm:$0xff]
        %v1560 = vld [vmem:[%s1509 + $0x190] sm:$0xff]
        %v1561 = vld [vmem:[%s1509 + $0x198] sm:$0xff]
        %v1562 = vld [vmem:[%s1509 + $0x1a0] sm:$0xff]
        %v1563 = vld [vmem:[%s1509 + $0x1a8] sm:$0xff]
        %v1564 = vld [vmem:[%s1509 + $0x1b0] sm:$0xff]
        %v1565 = vld [vmem:[%s1509 + $0x1b8] sm:$0xff]
        %v1566 = vld [vmem:[%s1509 + $0x1c0] sm:$0xff]
        %v1567 = vld [vmem:[%s1509 + $0x1c8] sm:$0xff]
        %v1568 = vld [vmem:[%s1509 + $0x1d0] sm:$0xff]
        %v1569 = vld [vmem:[%s1509 + $0x1d8] sm:$0xff]
        %v1570 = vld [vmem:[%s1509 + $0x1e0] sm:$0xff]
        %v1571 = vld [vmem:[%s1509 + $0x1e8] sm:$0xff]
        %v1572 = vld [vmem:[%s1509 + $0x1f0] sm:$0xff]
        %v1573 = vld [vmem:[%s1509 + $0x1f8] sm:$0xff]
        %v1574 = vld [vmem:[%s1509 + $0x200] sm:$0xff]
        %v1575 = vld [vmem:[%s1509 + $0x208] sm:$0xff]
        %v1576 = vld [vmem:[%s1509 + $0x210] sm:$0xff]
        %v1577 = vld [vmem:[%s1509 + $0x218] sm:$0xff]
        %v1578 = vld [vmem:[%s1509 + $0x220] sm:$0xff]
        %v1579 = vld [vmem:[%s1509 + $0x228] sm:$0xff]
        %v1580 = vld [vmem:[%s1509 + $0x230] sm:$0xff]
        %v1581 = vld [vmem:[%s1509 + $0x238] sm:$0xff]
        %v1582 = vld [vmem:[%s1509 + $0x240] sm:$0xff]
        %v1583 = vld [vmem:[%s1509 + $0x248] sm:$0xff]
        %v1584 = vld [vmem:[%s1509 + $0x250] sm:$0xff]
        %v1585 = vld [vmem:[%s1509 + $0x258] sm:$0xff]
        %v1586 = vld [vmem:[%s1509 + $0x260] sm:$0xff]
        %v1587 = vld [vmem:[%s1509 + $0x268] sm:$0xff]
        %v1588 = vld [vmem:[%s1509 + $0x270] sm:$0xff]
        %v1589 = vld [vmem:[%s1509 + $0x278] sm:$0xff]
        %v1590 = vld [vmem:[%s1509 + $0x280] sm:$0xff]
        %v1591 = vld [vmem:[%s1509 + $0x288] sm:$0xff]
        %v1592 = vld [vmem:[%s1509 + $0x290] sm:$0xff]
        %v1593 = vld [vmem:[%s1509 + $0x298] sm:$0xff]
        %v1594 = vld [vmem:[%s1509 + $0x2a0] sm:$0xff]
        %v1595 = vld [vmem:[%s1509 + $0x2a8] sm:$0xff]
        %v1596 = vld [vmem:[%s1509 + $0x2b0] sm:$0xff]
        %v1597 = vld [vmem:[%s1509 + $0x2b8] sm:$0xff]
        %v1598 = vld [vmem:[%s1509 + $0x2c0] sm:$0xff]
        %v1599 = vld [vmem:[%s1509 + $0x2c8] sm:$0xff]
        %v1600 = vld [vmem:[%s1509 + $0x2d0] sm:$0xff]
        %v1601 = vld [vmem:[%s1509 + $0x2d8] sm:$0xff]
        %v1602 = vld [vmem:[%s1509 + $0x2e0] sm:$0xff]
        %v1603 = vld [vmem:[%s1509 + $0x2e8] sm:$0xff]
        %v1604 = vld [vmem:[%s1509 + $0x2f0] sm:$0xff]
        %v1605 = vld [vmem:[%s1509 + $0x2f8] sm:$0xff]
        %v1606 = vld [vmem:[%s1509 + $0x300] sm:$0xff]
        %v1607 = vld [vmem:[%s1509 + $0x308] sm:$0xff]
        %v1608 = vld [vmem:[%s1509 + $0x310] sm:$0xff]
        %v1609 = vld [vmem:[%s1509 + $0x318] sm:$0xff]
        %v1610 = vld [vmem:[%s1509 + $0x320] sm:$0xff]
        %v1611 = vld [vmem:[%s1509 + $0x328] sm:$0xff]
        %v1612 = vld [vmem:[%s1509 + $0x330] sm:$0xff]
        %v1613 = vld [vmem:[%s1509 + $0x338] sm:$0xff]
        %v1614 = vld [vmem:[%s1509 + $0x340] sm:$0xff]
        %v1615 = vld [vmem:[%s1509 + $0x348] sm:$0xff]
        %v1616 = vld [vmem:[%s1509 + $0x350] sm:$0xff]
        %v1617 = vld [vmem:[%s1509 + $0x358] sm:$0xff]
        %v1618 = vld [vmem:[%s1509 + $0x360] sm:$0xff]
        %v1619 = vld [vmem:[%s1509 + $0x368] sm:$0xff]
        %v1620 = vld [vmem:[%s1509 + $0x370] sm:$0xff]
        %v1621 = vld [vmem:[%s1509 + $0x378] sm:$0xff]
        %v1622 = vld [vmem:[%s1509 + $0x380] sm:$0xff]
        %v1623 = vld [vmem:[%s1509 + $0x388] sm:$0xff]
        %v1624 = vld [vmem:[%s1509 + $0x390] sm:$0xff]
        %v1625 = vld [vmem:[%s1509 + $0x398] sm:$0xff]
        %v1626 = vld [vmem:[%s1509 + $0x3a0] sm:$0xff]
        %v1627 = vld [vmem:[%s1509 + $0x3a8] sm:$0xff]
        %v1628 = vld [vmem:[%s1509 + $0x3b0] sm:$0xff]
        %v1629 = vld [vmem:[%s1509 + $0x3b8] sm:$0xff]
        %v1630 = vld [vmem:[%s1509 + $0x3c0] sm:$0xff]
        %v1631 = vld [vmem:[%s1509 + $0x3c8] sm:$0xff]
        %v1632 = vld [vmem:[%s1509 + $0x3d0] sm:$0xff]
        %v1633 = vld [vmem:[%s1509 + $0x3d8] sm:$0xff]
        %v1634 = vld [vmem:[%s1509 + $0x3e0] sm:$0xff]
        %v1635 = vld [vmem:[%s1509 + $0x3e8] sm:$0xff]
        %v1636 = vld [vmem:[%s1509 + $0x3f0] sm:$0xff]
        %v1637 = vld [vmem:[%s1509 + $0x3f8] sm:$0xff]
        %1638 = vmatprep.subr.mxu0 %v1511
        %1639 = vmatpush1.msra.mxu0 %v1510
        %1640 = vmatprep.subr.mxu0 %v1515
        %1641 = vmatpush1.msra.mxu0 %v1514
        %1642 = vmatprep.subr.mxu0 %v1519
        %1643 = vmatpush1.msra.mxu0 %v1518
        %1644 = vmatprep.subr.mxu0 %v1523
        %1645 = vmatpush1.msra.mxu0 %v1522
        %1646 = vmatprep.subr.mxu0 %v1527
        %1647 = vmatpush1.msra.mxu0 %v1526
        %1648 = vmatprep.subr.mxu0 %v1531
        %1649 = vmatpush1.msra.mxu0 %v1530
        %1650 = vmatprep.subr.mxu0 %v1535
        %1651 = vmatpush1.msra.mxu0 %v1534
        %1652 = vmatprep.subr.mxu0 %v1539
        %1653 = vmatpush1.msra.mxu0 %v1538
        %1654 = vmatprep.subr.mxu0 %v1543
        %1655 = vmatpush1.msra.mxu0 %v1542
        %1656 = vmatprep.subr.mxu0 %v1547
        %1657 = vmatpush1.msra.mxu0 %v1546
        %1658 = vmatprep.subr.mxu0 %v1551
        %1659 = vmatpush1.msra.mxu0 %v1550
        %1660 = vmatprep.subr.mxu0 %v1555
        %1661 = vmatpush1.msra.mxu0 %v1554
        %1662 = vmatprep.subr.mxu0 %v1559
        %1663 = vmatpush1.msra.mxu0 %v1558
        %1664 = vmatprep.subr.mxu0 %v1563
        %1665 = vmatpush1.msra.mxu0 %v1562
        %1666 = vmatprep.subr.mxu0 %v1567
        %1667 = vmatpush1.msra.mxu0 %v1566
        %1668 = vmatprep.subr.mxu0 %v1571
        %1669 = vmatpush1.msra.mxu0 %v1570
        %1670 = vmatprep.subr.mxu0 %v1575
        %1671 = vmatpush1.msra.mxu0 %v1574
        %1672 = vmatprep.subr.mxu0 %v1579
        %1673 = vmatpush1.msra.mxu0 %v1578
        %1674 = vmatprep.subr.mxu0 %v1583
        %1675 = vmatpush1.msra.mxu0 %v1582
        %1676 = vmatprep.subr.mxu0 %v1587
        %1677 = vmatpush1.msra.mxu0 %v1586
        %1678 = vmatprep.subr.mxu0 %v1591
        %1679 = vmatpush1.msra.mxu0 %v1590
        %1680 = vmatprep.subr.mxu0 %v1595
        %1681 = vmatpush1.msra.mxu0 %v1594
        %1682 = vmatprep.subr.mxu0 %v1599
        %1683 = vmatpush1.msra.mxu0 %v1598
        %1684 = vmatprep.subr.mxu0 %v1603
        %1685 = vmatpush1.msra.mxu0 %v1602
        %1686 = vmatprep.subr.mxu0 %v1607
        %1687 = vmatpush1.msra.mxu0 %v1606
        %1688 = vmatprep.subr.mxu0 %v1611
        %1689 = vmatpush1.msra.mxu0 %v1610
        %1690 = vmatprep.subr.mxu0 %v1615
        %1691 = vmatpush1.msra.mxu0 %v1614
        %1692 = vmatprep.subr.mxu0 %v1619
        %1693 = vmatpush1.msra.mxu0 %v1618
        %1694 = vmatprep.subr.mxu0 %v1623
        %1695 = vmatpush1.msra.mxu0 %v1622
        %1696 = vmatprep.subr.mxu0 %v1627
        %1697 = vmatpush1.msra.mxu0 %v1626
        %1698 = vmatprep.subr.mxu0 %v1631
        %1699 = vmatpush1.msra.mxu0 %v1630
        %1700 = vmatprep.subr.mxu0 %v1635
        %1701 = vmatpush1.msra.mxu0 %v1634
        %1702 = vmatprep.mubr.f32.mxu0 %v1237
        %1703 = vmatmul.mubr.f32.gmra.mrb[0].mxu0 %v1236
        %v1704 = vpop.f32.mrb[0].mxu0
        %v1705 = vadd.f32 0.0, %v1704
        %v1706 = vpop.f32.mrb[0].mxu0
        %v1707 = vadd.f32 0.0, %v1706
        %1708 = vdwg.mxu0
        %1709 = vmatprep.subr.mxu0 %v1513
        %1710 = vmatpush1.msra.mxu0 %v1512
        %1711 = vmatprep.subr.mxu0 %v1517
        %1712 = vmatpush1.msra.mxu0 %v1516
        %1713 = vmatprep.subr.mxu0 %v1521
        %1714 = vmatpush1.msra.mxu0 %v1520
        %1715 = vmatprep.subr.mxu0 %v1525
        %1716 = vmatpush1.msra.mxu0 %v1524
        %1717 = vmatprep.subr.mxu0 %v1529
        %1718 = vmatpush1.msra.mxu0 %v1528
        %1719 = vmatprep.subr.mxu0 %v1533
        %1720 = vmatpush1.msra.mxu0 %v1532
        %1721 = vmatprep.subr.mxu0 %v1537
        %1722 = vmatpush1.msra.mxu0 %v1536
        %1723 = vmatprep.subr.mxu0 %v1541
        %1724 = vmatpush1.msra.mxu0 %v1540
        %1725 = vmatprep.subr.mxu0 %v1545
        %1726 = vmatpush1.msra.mxu0 %v1544
        %1727 = vmatprep.subr.mxu0 %v1549
        %1728 = vmatpush1.msra.mxu0 %v1548
        %1729 = vmatprep.subr.mxu0 %v1553
        %1730 = vmatpush1.msra.mxu0 %v1552
        %1731 = vmatprep.subr.mxu0 %v1557
        %1732 = vmatpush1.msra.mxu0 %v1556
        %1733 = vmatprep.subr.mxu0 %v1561
        %1734 = vmatpush1.msra.mxu0 %v1560
        %1735 = vmatprep.subr.mxu0 %v1565
        %1736 = vmatpush1.msra.mxu0 %v1564
        %1737 = vmatprep.subr.mxu0 %v1569
        %1738 = vmatpush1.msra.mxu0 %v1568
        %1739 = vmatprep.subr.mxu0 %v1573
        %1740 = vmatpush1.msra.mxu0 %v1572
        %1741 = vmatprep.subr.mxu0 %v1577
        %1742 = vmatpush1.msra.mxu0 %v1576
        %1743 = vmatprep.subr.mxu0 %v1581
        %1744 = vmatpush1.msra.mxu0 %v1580
        %1745 = vmatprep.subr.mxu0 %v1585
        %1746 = vmatpush1.msra.mxu0 %v1584
        %1747 = vmatprep.subr.mxu0 %v1589
        %1748 = vmatpush1.msra.mxu0 %v1588
        %1749 = vmatprep.subr.mxu0 %v1593
        %1750 = vmatpush1.msra.mxu0 %v1592
        %1751 = vmatprep.subr.mxu0 %v1597
        %1752 = vmatpush1.msra.mxu0 %v1596
        %1753 = vmatprep.subr.mxu0 %v1601
        %1754 = vmatpush1.msra.mxu0 %v1600
        %1755 = vmatprep.subr.mxu0 %v1605
        %1756 = vmatpush1.msra.mxu0 %v1604
        %1757 = vmatprep.subr.mxu0 %v1609
        %1758 = vmatpush1.msra.mxu0 %v1608
        %1759 = vmatprep.subr.mxu0 %v1613
        %1760 = vmatpush1.msra.mxu0 %v1612
        %1761 = vmatprep.subr.mxu0 %v1617
        %1762 = vmatpush1.msra.mxu0 %v1616
        %1763 = vmatprep.subr.mxu0 %v1621
        %1764 = vmatpush1.msra.mxu0 %v1620
        %1765 = vmatprep.subr.mxu0 %v1625
        %1766 = vmatpush1.msra.mxu0 %v1624
        %1767 = vmatprep.subr.mxu0 %v1629
        %1768 = vmatpush1.msra.mxu0 %v1628
        %1769 = vmatprep.subr.mxu0 %v1633
        %1770 = vmatpush1.msra.mxu0 %v1632
        %1771 = vmatprep.subr.mxu0 %v1637
        %1772 = vmatpush1.msra.mxu0 %v1636
        %1773 = vmatprep.mubr.f32.mxu0 %v1237
        %1774 = vmatmul.mubr.f32.gmra.mrb[0].mxu0 %v1236
        %v1775 = vpop.f32.mrb[0].mxu0
        %v1776 = vadd.f32 0.0, %v1775
        %v1777 = vpop.f32.mrb[0].mxu0
        %v1778 = vadd.f32 0.0, %v1777
        %1779 = vdwg.mxu0
        %s1780 = scalar_lea.vmem [#allocation8], 8
        %v1781 = vld [vmem:[%s1780] sm:$0xff]
        %vm1782 = vcmask 64512
        %v1784 = vsel %vm1782, %v1781, 0
        %1786 = vmatprep.subr.mxu0 %v1707
        %1787 = vmatpush1.msra.mxu0 %v1705
        %1788 = vmatprep.subr.mxu0 0.0
        %1789 = vmatpush1.msra.mxu0 0.0
        %1790 = vmatprep.subr.mxu0 0.0
        %1791 = vmatpush1.msra.mxu0 0.0
        %1792 = vmatprep.subr.mxu0 0.0
        %1793 = vmatpush1.msra.mxu0 0.0
        %1794 = vmatprep.subr.mxu0 0.0
        %1795 = vmatpush1.msra.mxu0 0.0
        %1796 = vmatprep.subr.mxu0 0.0
        %1797 = vmatpush1.msra.mxu0 0.0
        %1798 = vmatprep.subr.mxu0 0.0
        %1799 = vmatpush1.msra.mxu0 0.0
        %1800 = vmatprep.subr.mxu0 0.0
        %1801 = vmatpush1.msra.mxu0 0.0
        %1802 = vmatprep.subr.mxu0 0.0
        %1803 = vmatpush1.msra.mxu0 0.0
        %1804 = vmatprep.subr.mxu0 0.0
        %1805 = vmatpush1.msra.mxu0 0.0
        %1806 = vmatprep.subr.mxu0 0.0
        %1807 = vmatpush1.msra.mxu0 0.0
        %1808 = vmatprep.subr.mxu0 0.0
        %1809 = vmatpush1.msra.mxu0 0.0
        %1810 = vmatprep.subr.mxu0 0.0
        %1811 = vmatpush1.msra.mxu0 0.0
        %1812 = vmatprep.subr.mxu0 0.0
        %1813 = vmatpush1.msra.mxu0 0.0
        %1814 = vmatprep.subr.mxu0 0.0
        %1815 = vmatpush1.msra.mxu0 0.0
        %1816 = vmatprep.subr.mxu0 0.0
        %1817 = vmatpush1.msra.mxu0 0.0
        %1818 = vmatprep.subr.mxu0 0.0
        %1819 = vmatpush1.msra.mxu0 0.0
        %1820 = vmatprep.subr.mxu0 0.0
        %1821 = vmatpush1.msra.mxu0 0.0
        %1822 = vmatprep.subr.mxu0 0.0
        %1823 = vmatpush1.msra.mxu0 0.0
        %1824 = vmatprep.subr.mxu0 0.0
        %1825 = vmatpush1.msra.mxu0 0.0
        %1826 = vmatprep.subr.mxu0 0.0
        %1827 = vmatpush1.msra.mxu0 0.0
        %1828 = vmatprep.subr.mxu0 0.0
        %1829 = vmatpush1.msra.mxu0 0.0
        %1830 = vmatprep.subr.mxu0 0.0
        %1831 = vmatpush1.msra.mxu0 0.0
        %1832 = vmatprep.subr.mxu0 0.0
        %1833 = vmatpush1.msra.mxu0 0.0
        %1834 = vmatprep.subr.mxu0 0.0
        %1835 = vmatpush1.msra.mxu0 0.0
        %1836 = vmatprep.subr.mxu0 0.0
        %1837 = vmatpush1.msra.mxu0 0.0
        %1838 = vmatprep.subr.mxu0 0.0
        %1839 = vmatpush1.msra.mxu0 0.0
        %1840 = vmatprep.subr.mxu0 0.0
        %1841 = vmatpush1.msra.mxu0 0.0
        %1842 = vmatprep.subr.mxu0 0.0
        %1843 = vmatpush1.msra.mxu0 0.0
        %1844 = vmatprep.subr.mxu0 0.0
        %1845 = vmatpush1.msra.mxu0 0.0
        %1846 = vmatprep.subr.mxu0 0.0
        %1847 = vmatpush1.msra.mxu0 0.0
        %1848 = vmatprep.subr.mxu0 0.0
        %1849 = vmatpush1.msra.mxu0 0.0
        %1850 = vmatprep.mubr.f32.mxu0 0.0
        %1851 = vmatmul.mubr.f32.gmra.mrb[0].mxu0 %v1784
        %v1852 = vpop.f32.mrb[0].mxu0
        %v1853 = vadd.f32 0.0, %v1852
        %v1854 = vpop.f32.mrb[0].mxu0
        %v1855 = vadd.f32 0.0, %v1854
        %1856 = vdwg.mxu0
        %1857 = vmatprep.subr.mxu0 %v1778
        %1858 = vmatpush1.msra.mxu0 %v1776
        %1859 = vmatprep.subr.mxu0 0.0
        %1860 = vmatpush1.msra.mxu0 0.0
        %1861 = vmatprep.subr.mxu0 0.0
        %1862 = vmatpush1.msra.mxu0 0.0
        %1863 = vmatprep.subr.mxu0 0.0
        %1864 = vmatpush1.msra.mxu0 0.0
        %1865 = vmatprep.subr.mxu0 0.0
        %1866 = vmatpush1.msra.mxu0 0.0
        %1867 = vmatprep.subr.mxu0 0.0
        %1868 = vmatpush1.msra.mxu0 0.0
        %1869 = vmatprep.subr.mxu0 0.0
        %1870 = vmatpush1.msra.mxu0 0.0
        %1871 = vmatprep.subr.mxu0 0.0
        %1872 = vmatpush1.msra.mxu0 0.0
        %1873 = vmatprep.subr.mxu0 0.0
        %1874 = vmatpush1.msra.mxu0 0.0
        %1875 = vmatprep.subr.mxu0 0.0
        %1876 = vmatpush1.msra.mxu0 0.0
        %1877 = vmatprep.subr.mxu0 0.0
        %1878 = vmatpush1.msra.mxu0 0.0
        %1879 = vmatprep.subr.mxu0 0.0
        %1880 = vmatpush1.msra.mxu0 0.0
        %1881 = vmatprep.subr.mxu0 0.0
        %1882 = vmatpush1.msra.mxu0 0.0
        %1883 = vmatprep.subr.mxu0 0.0
        %1884 = vmatpush1.msra.mxu0 0.0
        %1885 = vmatprep.subr.mxu0 0.0
        %1886 = vmatpush1.msra.mxu0 0.0
        %1887 = vmatprep.subr.mxu0 0.0
        %1888 = vmatpush1.msra.mxu0 0.0
        %1889 = vmatprep.subr.mxu0 0.0
        %1890 = vmatpush1.msra.mxu0 0.0
        %1891 = vmatprep.subr.mxu0 0.0
        %1892 = vmatpush1.msra.mxu0 0.0
        %1893 = vmatprep.subr.mxu0 0.0
        %1894 = vmatpush1.msra.mxu0 0.0
        %1895 = vmatprep.subr.mxu0 0.0
        %1896 = vmatpush1.msra.mxu0 0.0
        %1897 = vmatprep.subr.mxu0 0.0
        %1898 = vmatpush1.msra.mxu0 0.0
        %1899 = vmatprep.subr.mxu0 0.0
        %1900 = vmatpush1.msra.mxu0 0.0
        %1901 = vmatprep.subr.mxu0 0.0
        %1902 = vmatpush1.msra.mxu0 0.0
        %1903 = vmatprep.subr.mxu0 0.0
        %1904 = vmatpush1.msra.mxu0 0.0
        %1905 = vmatprep.subr.mxu0 0.0
        %1906 = vmatpush1.msra.mxu0 0.0
        %1907 = vmatprep.subr.mxu0 0.0
        %1908 = vmatpush1.msra.mxu0 0.0
        %1909 = vmatprep.subr.mxu0 0.0
        %1910 = vmatpush1.msra.mxu0 0.0
        %1911 = vmatprep.subr.mxu0 0.0
        %1912 = vmatpush1.msra.mxu0 0.0
        %1913 = vmatprep.subr.mxu0 0.0
        %1914 = vmatpush1.msra.mxu0 0.0
        %1915 = vmatprep.subr.mxu0 0.0
        %1916 = vmatpush1.msra.mxu0 0.0
        %1917 = vmatprep.subr.mxu0 0.0
        %1918 = vmatpush1.msra.mxu0 0.0
        %1919 = vmatprep.subr.mxu0 0.0
        %1920 = vmatpush1.msra.mxu0 0.0
        %1921 = vmatprep.mubr.f32.mxu0 0.0
        %1922 = vmatmul.mubr.f32.gmra.mrb[0].mxu0 %v1784
        %v1923 = vpop.f32.mrb[0].mxu0
        %v1924 = vadd.f32 0.0, %v1923
        %v1925 = vpop.f32.mrb[0].mxu0
        %v1926 = vadd.f32 0.0, %v1925
        %1927 = vdwg.mxu0
        %v1929 = vsel %vm1782, %v1508, 0
        %1931 = vmatprep.subr.mxu0 %v1435
        %1932 = vmatpush1.msra.mxu0 %v1433
        %1933 = vmatprep.subr.mxu0 0.0
        %1934 = vmatpush1.msra.mxu0 0.0
        %1935 = vmatprep.subr.mxu0 0.0
        %1936 = vmatpush1.msra.mxu0 0.0
        %1937 = vmatprep.subr.mxu0 0.0
        %1938 = vmatpush1.msra.mxu0 0.0
        %1939 = vmatprep.subr.mxu0 0.0
        %1940 = vmatpush1.msra.mxu0 0.0
        %1941 = vmatprep.subr.mxu0 0.0
        %1942 = vmatpush1.msra.mxu0 0.0
        %1943 = vmatprep.subr.mxu0 0.0
        %1944 = vmatpush1.msra.mxu0 0.0
        %1945 = vmatprep.subr.mxu0 0.0
        %1946 = vmatpush1.msra.mxu0 0.0
        %1947 = vmatprep.subr.mxu0 0.0
        %1948 = vmatpush1.msra.mxu0 0.0
        %1949 = vmatprep.subr.mxu0 0.0
        %1950 = vmatpush1.msra.mxu0 0.0
        %1951 = vmatprep.subr.mxu0 0.0
        %1952 = vmatpush1.msra.mxu0 0.0
        %1953 = vmatprep.subr.mxu0 0.0
        %1954 = vmatpush1.msra.mxu0 0.0
        %1955 = vmatprep.subr.mxu0 0.0
        %1956 = vmatpush1.msra.mxu0 0.0
        %1957 = vmatprep.subr.mxu0 0.0
        %1958 = vmatpush1.msra.mxu0 0.0
        %1959 = vmatprep.subr.mxu0 0.0
        %1960 = vmatpush1.msra.mxu0 0.0
        %1961 = vmatprep.subr.mxu0 0.0
        %1962 = vmatpush1.msra.mxu0 0.0
        %1963 = vmatprep.subr.mxu0 0.0
        %1964 = vmatpush1.msra.mxu0 0.0
        %1965 = vmatprep.subr.mxu0 0.0
        %1966 = vmatpush1.msra.mxu0 0.0
        %1967 = vmatprep.subr.mxu0 0.0
        %1968 = vmatpush1.msra.mxu0 0.0
        %1969 = vmatprep.subr.mxu0 0.0
        %1970 = vmatpush1.msra.mxu0 0.0
        %1971 = vmatprep.subr.mxu0 0.0
        %1972 = vmatpush1.msra.mxu0 0.0
        %1973 = vmatprep.subr.mxu0 0.0
        %1974 = vmatpush1.msra.mxu0 0.0
        %1975 = vmatprep.subr.mxu0 0.0
        %1976 = vmatpush1.msra.mxu0 0.0
        %1977 = vmatprep.subr.mxu0 0.0
        %1978 = vmatpush1.msra.mxu0 0.0
        %1979 = vmatprep.subr.mxu0 0.0
        %1980 = vmatpush1.msra.mxu0 0.0
        %1981 = vmatprep.subr.mxu0 0.0
        %1982 = vmatpush1.msra.mxu0 0.0
        %1983 = vmatprep.subr.mxu0 0.0
        %1984 = vmatpush1.msra.mxu0 0.0
        %1985 = vmatprep.subr.mxu0 0.0
        %1986 = vmatpush1.msra.mxu0 0.0
        %1987 = vmatprep.subr.mxu0 0.0
        %1988 = vmatpush1.msra.mxu0 0.0
        %1989 = vmatprep.subr.mxu0 0.0
        %1990 = vmatpush1.msra.mxu0 0.0
        %1991 = vmatprep.subr.mxu0 0.0
        %1992 = vmatpush1.msra.mxu0 0.0
        %1993 = vmatprep.subr.mxu0 0.0
        %1994 = vmatpush1.msra.mxu0 0.0
        %1995 = vmatprep.mubr.f32.mxu0 0.0
        %1996 = vmatmul.mubr.f32.gmra.mrb[0].mxu0 %v1929
        %v1997 = vpop.f32.mrb[0].mxu0
        %v1998 = vadd.f32 %v1853, %v1997
        %v1999 = vpop.f32.mrb[0].mxu0
        %v2000 = vadd.f32 %v1855, %v1999
        %2001 = vdwg.mxu0
        %2002 = vmatprep.subr.mxu0 %v1506
        %2003 = vmatpush1.msra.mxu0 %v1504
        %2004 = vmatprep.subr.mxu0 0.0
        %2005 = vmatpush1.msra.mxu0 0.0
        %2006 = vmatprep.subr.mxu0 0.0
        %2007 = vmatpush1.msra.mxu0 0.0
        %2008 = vmatprep.subr.mxu0 0.0
        %2009 = vmatpush1.msra.mxu0 0.0
        %2010 = vmatprep.subr.mxu0 0.0
        %2011 = vmatpush1.msra.mxu0 0.0
        %2012 = vmatprep.subr.mxu0 0.0
        %2013 = vmatpush1.msra.mxu0 0.0
        %2014 = vmatprep.subr.mxu0 0.0
        %2015 = vmatpush1.msra.mxu0 0.0
        %2016 = vmatprep.subr.mxu0 0.0
        %2017 = vmatpush1.msra.mxu0 0.0
        %2018 = vmatprep.subr.mxu0 0.0
        %2019 = vmatpush1.msra.mxu0 0.0
        %2020 = vmatprep.subr.mxu0 0.0
        %2021 = vmatpush1.msra.mxu0 0.0
        %2022 = vmatprep.subr.mxu0 0.0
        %2023 = vmatpush1.msra.mxu0 0.0
        %2024 = vmatprep.subr.mxu0 0.0
        %2025 = vmatpush1.msra.mxu0 0.0
        %2026 = vmatprep.subr.mxu0 0.0
        %2027 = vmatpush1.msra.mxu0 0.0
        %2028 = vmatprep.subr.mxu0 0.0
        %2029 = vmatpush1.msra.mxu0 0.0
        %2030 = vmatprep.subr.mxu0 0.0
        %2031 = vmatpush1.msra.mxu0 0.0
        %2032 = vmatprep.subr.mxu0 0.0
        %2033 = vmatpush1.msra.mxu0 0.0
        %2034 = vmatprep.subr.mxu0 0.0
        %2035 = vmatpush1.msra.mxu0 0.0
        %2036 = vmatprep.subr.mxu0 0.0
        %2037 = vmatpush1.msra.mxu0 0.0
        %2038 = vmatprep.subr.mxu0 0.0
        %2039 = vmatpush1.msra.mxu0 0.0
        %2040 = vmatprep.subr.mxu0 0.0
        %2041 = vmatpush1.msra.mxu0 0.0
        %2042 = vmatprep.subr.mxu0 0.0
        %2043 = vmatpush1.msra.mxu0 0.0
        %2044 = vmatprep.subr.mxu0 0.0
        %2045 = vmatpush1.msra.mxu0 0.0
        %2046 = vmatprep.subr.mxu0 0.0
        %2047 = vmatpush1.msra.mxu0 0.0
        %2048 = vmatprep.subr.mxu0 0.0
        %2049 = vmatpush1.msra.mxu0 0.0
        %2050 = vmatprep.subr.mxu0 0.0
        %2051 = vmatpush1.msra.mxu0 0.0
        %2052 = vmatprep.subr.mxu0 0.0
        %2053 = vmatpush1.msra.mxu0 0.0
        %2054 = vmatprep.subr.mxu0 0.0
        %2055 = vmatpush1.msra.mxu0 0.0
        %2056 = vmatprep.subr.mxu0 0.0
        %2057 = vmatpush1.msra.mxu0 0.0
        %2058 = vmatprep.subr.mxu0 0.0
        %2059 = vmatpush1.msra.mxu0 0.0
        %2060 = vmatprep.subr.mxu0 0.0
        %2061 = vmatpush1.msra.mxu0 0.0
        %2062 = vmatprep.subr.mxu0 0.0
        %2063 = vmatpush1.msra.mxu0 0.0
        %2064 = vmatprep.subr.mxu0 0.0
        %2065 = vmatpush1.msra.mxu0 0.0
        %2066 = vmatprep.mubr.f32.mxu0 0.0
        %2067 = vmatmul.mubr.f32.gmra.mrb[0].mxu0 %v1929
        %v2068 = vpop.f32.mrb[0].mxu0
        %v2069 = vadd.f32 %v1924, %v2068
        %v2070 = vpop.f32.mrb[0].mxu0
        %v2071 = vadd.f32 %v1926, %v2070
        %2072 = vdwg.mxu0
        %s2073 = scalar_lea.vmem [#allocation10], 2048
        %v2074 = vld [vmem:[%s2073] sm:$0xff]
        %v2075 = vld [vmem:[%s2073 + $0x8] sm:$0xff]
        %v2076 = vld [vmem:[%s2073 + $0x10] sm:$0xff]
        %v2077 = vld [vmem:[%s2073 + $0x18] sm:$0xff]
        %v2078 = vld [vmem:[%s2073 + $0x20] sm:$0xff]
        %v2079 = vld [vmem:[%s2073 + $0x28] sm:$0xff]
        %v2080 = vld [vmem:[%s2073 + $0x30] sm:$0xff]
        %v2081 = vld [vmem:[%s2073 + $0x38] sm:$0xff]
        %v2082 = vld [vmem:[%s2073 + $0x40] sm:$0xff]
        %v2083 = vld [vmem:[%s2073 + $0x48] sm:$0xff]
        %v2084 = vld [vmem:[%s2073 + $0x50] sm:$0xff]
        %v2085 = vld [vmem:[%s2073 + $0x58] sm:$0xff]
        %v2086 = vld [vmem:[%s2073 + $0x60] sm:$0xff]
        %v2087 = vld [vmem:[%s2073 + $0x68] sm:$0xff]
        %v2088 = vld [vmem:[%s2073 + $0x70] sm:$0xff]
        %v2089 = vld [vmem:[%s2073 + $0x78] sm:$0xff]
        %v2090 = vld [vmem:[%s2073 + $0x80] sm:$0xff]
        %v2091 = vld [vmem:[%s2073 + $0x88] sm:$0xff]
        %v2092 = vld [vmem:[%s2073 + $0x90] sm:$0xff]
        %v2093 = vld [vmem:[%s2073 + $0x98] sm:$0xff]
        %v2094 = vld [vmem:[%s2073 + $0xa0] sm:$0xff]
        %v2095 = vld [vmem:[%s2073 + $0xa8] sm:$0xff]
        %v2096 = vld [vmem:[%s2073 + $0xb0] sm:$0xff]
        %v2097 = vld [vmem:[%s2073 + $0xb8] sm:$0xff]
        %v2098 = vld [vmem:[%s2073 + $0xc0] sm:$0xff]
        %v2099 = vld [vmem:[%s2073 + $0xc8] sm:$0xff]
        %v2100 = vld [vmem:[%s2073 + $0xd0] sm:$0xff]
        %v2101 = vld [vmem:[%s2073 + $0xd8] sm:$0xff]
        %v2102 = vld [vmem:[%s2073 + $0xe0] sm:$0xff]
        %v2103 = vld [vmem:[%s2073 + $0xe8] sm:$0xff]
        %v2104 = vld [vmem:[%s2073 + $0xf0] sm:$0xff]
        %v2105 = vld [vmem:[%s2073 + $0xf8] sm:$0xff]
        %v2106 = vld [vmem:[%s2073 + $0x100] sm:$0xff]
        %v2107 = vld [vmem:[%s2073 + $0x108] sm:$0xff]
        %v2108 = vld [vmem:[%s2073 + $0x110] sm:$0xff]
        %v2109 = vld [vmem:[%s2073 + $0x118] sm:$0xff]
        %v2110 = vld [vmem:[%s2073 + $0x120] sm:$0xff]
        %v2111 = vld [vmem:[%s2073 + $0x128] sm:$0xff]
        %v2112 = vld [vmem:[%s2073 + $0x130] sm:$0xff]
        %v2113 = vld [vmem:[%s2073 + $0x138] sm:$0xff]
        %v2114 = vld [vmem:[%s2073 + $0x140] sm:$0xff]
        %v2115 = vld [vmem:[%s2073 + $0x148] sm:$0xff]
        %v2116 = vld [vmem:[%s2073 + $0x150] sm:$0xff]
        %v2117 = vld [vmem:[%s2073 + $0x158] sm:$0xff]
        %v2118 = vld [vmem:[%s2073 + $0x160] sm:$0xff]
        %v2119 = vld [vmem:[%s2073 + $0x168] sm:$0xff]
        %v2120 = vld [vmem:[%s2073 + $0x170] sm:$0xff]
        %v2121 = vld [vmem:[%s2073 + $0x178] sm:$0xff]
        %v2122 = vld [vmem:[%s2073 + $0x180] sm:$0xff]
        %v2123 = vld [vmem:[%s2073 + $0x188] sm:$0xff]
        %v2124 = vld [vmem:[%s2073 + $0x190] sm:$0xff]
        %v2125 = vld [vmem:[%s2073 + $0x198] sm:$0xff]
        %v2126 = vld [vmem:[%s2073 + $0x1a0] sm:$0xff]
        %v2127 = vld [vmem:[%s2073 + $0x1a8] sm:$0xff]
        %v2128 = vld [vmem:[%s2073 + $0x1b0] sm:$0xff]
        %v2129 = vld [vmem:[%s2073 + $0x1b8] sm:$0xff]
        %v2130 = vld [vmem:[%s2073 + $0x1c0] sm:$0xff]
        %v2131 = vld [vmem:[%s2073 + $0x1c8] sm:$0xff]
        %v2132 = vld [vmem:[%s2073 + $0x1d0] sm:$0xff]
        %v2133 = vld [vmem:[%s2073 + $0x1d8] sm:$0xff]
        %v2134 = vld [vmem:[%s2073 + $0x1e0] sm:$0xff]
        %v2135 = vld [vmem:[%s2073 + $0x1e8] sm:$0xff]
        %v2136 = vld [vmem:[%s2073 + $0x1f0] sm:$0xff]
        %v2137 = vld [vmem:[%s2073 + $0x1f8] sm:$0xff]
        %v2138 = vld [vmem:[%s2073 + $0x200] sm:$0xff]
        %v2139 = vld [vmem:[%s2073 + $0x208] sm:$0xff]
        %v2140 = vld [vmem:[%s2073 + $0x210] sm:$0xff]
        %v2141 = vld [vmem:[%s2073 + $0x218] sm:$0xff]
        %v2142 = vld [vmem:[%s2073 + $0x220] sm:$0xff]
        %v2143 = vld [vmem:[%s2073 + $0x228] sm:$0xff]
        %v2144 = vld [vmem:[%s2073 + $0x230] sm:$0xff]
        %v2145 = vld [vmem:[%s2073 + $0x238] sm:$0xff]
        %v2146 = vld [vmem:[%s2073 + $0x240] sm:$0xff]
        %v2147 = vld [vmem:[%s2073 + $0x248] sm:$0xff]
        %v2148 = vld [vmem:[%s2073 + $0x250] sm:$0xff]
        %v2149 = vld [vmem:[%s2073 + $0x258] sm:$0xff]
        %v2150 = vld [vmem:[%s2073 + $0x260] sm:$0xff]
        %v2151 = vld [vmem:[%s2073 + $0x268] sm:$0xff]
        %v2152 = vld [vmem:[%s2073 + $0x270] sm:$0xff]
        %v2153 = vld [vmem:[%s2073 + $0x278] sm:$0xff]
        %v2154 = vld [vmem:[%s2073 + $0x280] sm:$0xff]
        %v2155 = vld [vmem:[%s2073 + $0x288] sm:$0xff]
        %v2156 = vld [vmem:[%s2073 + $0x290] sm:$0xff]
        %v2157 = vld [vmem:[%s2073 + $0x298] sm:$0xff]
        %v2158 = vld [vmem:[%s2073 + $0x2a0] sm:$0xff]
        %v2159 = vld [vmem:[%s2073 + $0x2a8] sm:$0xff]
        %v2160 = vld [vmem:[%s2073 + $0x2b0] sm:$0xff]
        %v2161 = vld [vmem:[%s2073 + $0x2b8] sm:$0xff]
        %v2162 = vld [vmem:[%s2073 + $0x2c0] sm:$0xff]
        %v2163 = vld [vmem:[%s2073 + $0x2c8] sm:$0xff]
        %v2164 = vld [vmem:[%s2073 + $0x2d0] sm:$0xff]
        %v2165 = vld [vmem:[%s2073 + $0x2d8] sm:$0xff]
        %v2166 = vld [vmem:[%s2073 + $0x2e0] sm:$0xff]
        %v2167 = vld [vmem:[%s2073 + $0x2e8] sm:$0xff]
        %v2168 = vld [vmem:[%s2073 + $0x2f0] sm:$0xff]
        %v2169 = vld [vmem:[%s2073 + $0x2f8] sm:$0xff]
        %v2170 = vld [vmem:[%s2073 + $0x300] sm:$0xff]
        %v2171 = vld [vmem:[%s2073 + $0x308] sm:$0xff]
        %v2172 = vld [vmem:[%s2073 + $0x310] sm:$0xff]
        %v2173 = vld [vmem:[%s2073 + $0x318] sm:$0xff]
        %v2174 = vld [vmem:[%s2073 + $0x320] sm:$0xff]
        %v2175 = vld [vmem:[%s2073 + $0x328] sm:$0xff]
        %v2176 = vld [vmem:[%s2073 + $0x330] sm:$0xff]
        %v2177 = vld [vmem:[%s2073 + $0x338] sm:$0xff]
        %v2178 = vld [vmem:[%s2073 + $0x340] sm:$0xff]
        %v2179 = vld [vmem:[%s2073 + $0x348] sm:$0xff]
        %v2180 = vld [vmem:[%s2073 + $0x350] sm:$0xff]
        %v2181 = vld [vmem:[%s2073 + $0x358] sm:$0xff]
        %v2182 = vld [vmem:[%s2073 + $0x360] sm:$0xff]
        %v2183 = vld [vmem:[%s2073 + $0x368] sm:$0xff]
        %v2184 = vld [vmem:[%s2073 + $0x370] sm:$0xff]
        %v2185 = vld [vmem:[%s2073 + $0x378] sm:$0xff]
        %v2186 = vld [vmem:[%s2073 + $0x380] sm:$0xff]
        %v2187 = vld [vmem:[%s2073 + $0x388] sm:$0xff]
        %v2188 = vld [vmem:[%s2073 + $0x390] sm:$0xff]
        %v2189 = vld [vmem:[%s2073 + $0x398] sm:$0xff]
        %v2190 = vld [vmem:[%s2073 + $0x3a0] sm:$0xff]
        %v2191 = vld [vmem:[%s2073 + $0x3a8] sm:$0xff]
        %v2192 = vld [vmem:[%s2073 + $0x3b0] sm:$0xff]
        %v2193 = vld [vmem:[%s2073 + $0x3b8] sm:$0xff]
        %v2194 = vld [vmem:[%s2073 + $0x3c0] sm:$0xff]
        %v2195 = vld [vmem:[%s2073 + $0x3c8] sm:$0xff]
        %v2196 = vld [vmem:[%s2073 + $0x3d0] sm:$0xff]
        %v2197 = vld [vmem:[%s2073 + $0x3d8] sm:$0xff]
        %v2198 = vld [vmem:[%s2073 + $0x3e0] sm:$0xff]
        %v2199 = vld [vmem:[%s2073 + $0x3e8] sm:$0xff]
        %v2200 = vld [vmem:[%s2073 + $0x3f0] sm:$0xff]
        %v2201 = vld [vmem:[%s2073 + $0x3f8] sm:$0xff]
        %2202 = vmatprep.subr.mxu0 %v2075
        %2203 = vmatpush1.msra.mxu0 %v2074
        %2204 = vmatprep.subr.mxu0 %v2079
        %2205 = vmatpush1.msra.mxu0 %v2078
        %2206 = vmatprep.subr.mxu0 %v2083
        %2207 = vmatpush1.msra.mxu0 %v2082
        %2208 = vmatprep.subr.mxu0 %v2087
        %2209 = vmatpush1.msra.mxu0 %v2086
        %2210 = vmatprep.subr.mxu0 %v2091
        %2211 = vmatpush1.msra.mxu0 %v2090
        %2212 = vmatprep.subr.mxu0 %v2095
        %2213 = vmatpush1.msra.mxu0 %v2094
        %2214 = vmatprep.subr.mxu0 %v2099
        %2215 = vmatpush1.msra.mxu0 %v2098
        %2216 = vmatprep.subr.mxu0 %v2103
        %2217 = vmatpush1.msra.mxu0 %v2102
        %2218 = vmatprep.subr.mxu0 %v2107
        %2219 = vmatpush1.msra.mxu0 %v2106
        %2220 = vmatprep.subr.mxu0 %v2111
        %2221 = vmatpush1.msra.mxu0 %v2110
        %2222 = vmatprep.subr.mxu0 %v2115
        %2223 = vmatpush1.msra.mxu0 %v2114
        %2224 = vmatprep.subr.mxu0 %v2119
        %2225 = vmatpush1.msra.mxu0 %v2118
        %2226 = vmatprep.subr.mxu0 %v2123
        %2227 = vmatpush1.msra.mxu0 %v2122
        %2228 = vmatprep.subr.mxu0 %v2127
        %2229 = vmatpush1.msra.mxu0 %v2126
        %2230 = vmatprep.subr.mxu0 %v2131
        %2231 = vmatpush1.msra.mxu0 %v2130
        %2232 = vmatprep.subr.mxu0 %v2135
        %2233 = vmatpush1.msra.mxu0 %v2134
        %2234 = vmatprep.subr.mxu0 %v2139
        %2235 = vmatpush1.msra.mxu0 %v2138
        %2236 = vmatprep.subr.mxu0 %v2143
        %2237 = vmatpush1.msra.mxu0 %v2142
        %2238 = vmatprep.subr.mxu0 %v2147
        %2239 = vmatpush1.msra.mxu0 %v2146
        %2240 = vmatprep.subr.mxu0 %v2151
        %2241 = vmatpush1.msra.mxu0 %v2150
        %2242 = vmatprep.subr.mxu0 %v2155
        %2243 = vmatpush1.msra.mxu0 %v2154
        %2244 = vmatprep.subr.mxu0 %v2159
        %2245 = vmatpush1.msra.mxu0 %v2158
        %2246 = vmatprep.subr.mxu0 %v2163
        %2247 = vmatpush1.msra.mxu0 %v2162
        %2248 = vmatprep.subr.mxu0 %v2167
        %2249 = vmatpush1.msra.mxu0 %v2166
        %2250 = vmatprep.subr.mxu0 %v2171
        %2251 = vmatpush1.msra.mxu0 %v2170
        %2252 = vmatprep.subr.mxu0 %v2175
        %2253 = vmatpush1.msra.mxu0 %v2174
        %2254 = vmatprep.subr.mxu0 %v2179
        %2255 = vmatpush1.msra.mxu0 %v2178
        %2256 = vmatprep.subr.mxu0 %v2183
        %2257 = vmatpush1.msra.mxu0 %v2182
        %2258 = vmatprep.subr.mxu0 %v2187
        %2259 = vmatpush1.msra.mxu0 %v2186
        %2260 = vmatprep.subr.mxu0 %v2191
        %2261 = vmatpush1.msra.mxu0 %v2190
        %2262 = vmatprep.subr.mxu0 %v2195
        %2263 = vmatpush1.msra.mxu0 %v2194
        %2264 = vmatprep.subr.mxu0 %v2199
        %2265 = vmatpush1.msra.mxu0 %v2198
        %2266 = vmatprep.mubr.f32.mxu0 %v1237
        %2267 = vmatmul.mubr.f32.gmra.mrb[0].mxu0 %v1236
        %v2268 = vpop.f32.mrb[0].mxu0
        %v2269 = vadd.f32 0.0, %v2268
        %v2270 = vpop.f32.mrb[0].mxu0
        %v2271 = vadd.f32 0.0, %v2270
        %2272 = vdwg.mxu0
        %2273 = vmatprep.subr.mxu0 %v2077
        %2274 = vmatpush1.msra.mxu0 %v2076
        %2275 = vmatprep.subr.mxu0 %v2081
        %2276 = vmatpush1.msra.mxu0 %v2080
        %2277 = vmatprep.subr.mxu0 %v2085
        %2278 = vmatpush1.msra.mxu0 %v2084
        %2279 = vmatprep.subr.mxu0 %v2089
        %2280 = vmatpush1.msra.mxu0 %v2088
        %2281 = vmatprep.subr.mxu0 %v2093
        %2282 = vmatpush1.msra.mxu0 %v2092
        %2283 = vmatprep.subr.mxu0 %v2097
        %2284 = vmatpush1.msra.mxu0 %v2096
        %2285 = vmatprep.subr.mxu0 %v2101
        %2286 = vmatpush1.msra.mxu0 %v2100
        %2287 = vmatprep.subr.mxu0 %v2105
        %2288 = vmatpush1.msra.mxu0 %v2104
        %2289 = vmatprep.subr.mxu0 %v2109
        %2290 = vmatpush1.msra.mxu0 %v2108
        %2291 = vmatprep.subr.mxu0 %v2113
        %2292 = vmatpush1.msra.mxu0 %v2112
        %2293 = vmatprep.subr.mxu0 %v2117
        %2294 = vmatpush1.msra.mxu0 %v2116
        %2295 = vmatprep.subr.mxu0 %v2121
        %2296 = vmatpush1.msra.mxu0 %v2120
        %2297 = vmatprep.subr.mxu0 %v2125
        %2298 = vmatpush1.msra.mxu0 %v2124
        %2299 = vmatprep.subr.mxu0 %v2129
        %2300 = vmatpush1.msra.mxu0 %v2128
        %2301 = vmatprep.subr.mxu0 %v2133
        %2302 = vmatpush1.msra.mxu0 %v2132
        %2303 = vmatprep.subr.mxu0 %v2137
        %2304 = vmatpush1.msra.mxu0 %v2136
        %2305 = vmatprep.subr.mxu0 %v2141
        %2306 = vmatpush1.msra.mxu0 %v2140
        %2307 = vmatprep.subr.mxu0 %v2145
        %2308 = vmatpush1.msra.mxu0 %v2144
        %2309 = vmatprep.subr.mxu0 %v2149
        %2310 = vmatpush1.msra.mxu0 %v2148
        %2311 = vmatprep.subr.mxu0 %v2153
        %2312 = vmatpush1.msra.mxu0 %v2152
        %2313 = vmatprep.subr.mxu0 %v2157
        %2314 = vmatpush1.msra.mxu0 %v2156
        %2315 = vmatprep.subr.mxu0 %v2161
        %2316 = vmatpush1.msra.mxu0 %v2160
        %2317 = vmatprep.subr.mxu0 %v2165
        %2318 = vmatpush1.msra.mxu0 %v2164
        %2319 = vmatprep.subr.mxu0 %v2169
        %2320 = vmatpush1.msra.mxu0 %v2168
        %2321 = vmatprep.subr.mxu0 %v2173
        %2322 = vmatpush1.msra.mxu0 %v2172
        %2323 = vmatprep.subr.mxu0 %v2177
        %2324 = vmatpush1.msra.mxu0 %v2176
        %2325 = vmatprep.subr.mxu0 %v2181
        %2326 = vmatpush1.msra.mxu0 %v2180
        %2327 = vmatprep.subr.mxu0 %v2185
        %2328 = vmatpush1.msra.mxu0 %v2184
        %2329 = vmatprep.subr.mxu0 %v2189
        %2330 = vmatpush1.msra.mxu0 %v2188
        %2331 = vmatprep.subr.mxu0 %v2193
        %2332 = vmatpush1.msra.mxu0 %v2192
        %2333 = vmatprep.subr.mxu0 %v2197
        %2334 = vmatpush1.msra.mxu0 %v2196
        %2335 = vmatprep.subr.mxu0 %v2201
        %2336 = vmatpush1.msra.mxu0 %v2200
        %2337 = vmatprep.mubr.f32.mxu0 %v1237
        %2338 = vmatmul.mubr.f32.gmra.mrb[0].mxu0 %v1236
        %v2339 = vpop.f32.mrb[0].mxu0
        %v2340 = vadd.f32 0.0, %v2339
        %v2341 = vpop.f32.mrb[0].mxu0
        %v2342 = vadd.f32 0.0, %v2341
        %2343 = vdwg.mxu0
        %s2344 = scalar_lea.vmem [#allocation8], 16
        %v2345 = vld [vmem:[%s2344] sm:$0xff]
        %v2347 = vsel %vm1782, %v2345, 0
        %2349 = vmatprep.subr.mxu0 %v2271
        %2350 = vmatpush1.msra.mxu0 %v2269
        %2351 = vmatprep.subr.mxu0 0.0
        %2352 = vmatpush1.msra.mxu0 0.0
        %2353 = vmatprep.subr.mxu0 0.0
        %2354 = vmatpush1.msra.mxu0 0.0
        %2355 = vmatprep.subr.mxu0 0.0
        %2356 = vmatpush1.msra.mxu0 0.0
        %2357 = vmatprep.subr.mxu0 0.0
        %2358 = vmatpush1.msra.mxu0 0.0
        %2359 = vmatprep.subr.mxu0 0.0
        %2360 = vmatpush1.msra.mxu0 0.0
        %2361 = vmatprep.subr.mxu0 0.0
        %2362 = vmatpush1.msra.mxu0 0.0
        %2363 = vmatprep.subr.mxu0 0.0
        %2364 = vmatpush1.msra.mxu0 0.0
        %2365 = vmatprep.subr.mxu0 0.0
        %2366 = vmatpush1.msra.mxu0 0.0
        %2367 = vmatprep.subr.mxu0 0.0
        %2368 = vmatpush1.msra.mxu0 0.0
        %2369 = vmatprep.subr.mxu0 0.0
        %2370 = vmatpush1.msra.mxu0 0.0
        %2371 = vmatprep.subr.mxu0 0.0
        %2372 = vmatpush1.msra.mxu0 0.0
        %2373 = vmatprep.subr.mxu0 0.0
        %2374 = vmatpush1.msra.mxu0 0.0
        %2375 = vmatprep.subr.mxu0 0.0
        %2376 = vmatpush1.msra.mxu0 0.0
        %2377 = vmatprep.subr.mxu0 0.0
        %2378 = vmatpush1.msra.mxu0 0.0
        %2379 = vmatprep.subr.mxu0 0.0
        %2380 = vmatpush1.msra.mxu0 0.0
        %2381 = vmatprep.subr.mxu0 0.0
        %2382 = vmatpush1.msra.mxu0 0.0
        %2383 = vmatprep.subr.mxu0 0.0
        %2384 = vmatpush1.msra.mxu0 0.0
        %2385 = vmatprep.subr.mxu0 0.0
        %2386 = vmatpush1.msra.mxu0 0.0
        %2387 = vmatprep.subr.mxu0 0.0
        %2388 = vmatpush1.msra.mxu0 0.0
        %2389 = vmatprep.subr.mxu0 0.0
        %2390 = vmatpush1.msra.mxu0 0.0
        %2391 = vmatprep.subr.mxu0 0.0
        %2392 = vmatpush1.msra.mxu0 0.0
        %2393 = vmatprep.subr.mxu0 0.0
        %2394 = vmatpush1.msra.mxu0 0.0
        %2395 = vmatprep.subr.mxu0 0.0
        %2396 = vmatpush1.msra.mxu0 0.0
        %2397 = vmatprep.subr.mxu0 0.0
        %2398 = vmatpush1.msra.mxu0 0.0
        %2399 = vmatprep.subr.mxu0 0.0
        %2400 = vmatpush1.msra.mxu0 0.0
        %2401 = vmatprep.subr.mxu0 0.0
        %2402 = vmatpush1.msra.mxu0 0.0
        %2403 = vmatprep.subr.mxu0 0.0
        %2404 = vmatpush1.msra.mxu0 0.0
        %2405 = vmatprep.subr.mxu0 0.0
        %2406 = vmatpush1.msra.mxu0 0.0
        %2407 = vmatprep.subr.mxu0 0.0
        %2408 = vmatpush1.msra.mxu0 0.0
        %2409 = vmatprep.subr.mxu0 0.0
        %2410 = vmatpush1.msra.mxu0 0.0
        %2411 = vmatprep.subr.mxu0 0.0
        %2412 = vmatpush1.msra.mxu0 0.0
        %2413 = vmatprep.mubr.f32.mxu0 0.0
        %2414 = vmatmul.mubr.f32.gmra.mrb[0].mxu0 %v2347
        %v2415 = vpop.f32.mrb[0].mxu0
        %v2416 = vadd.f32 0.0, %v2415
        %v2417 = vpop.f32.mrb[0].mxu0
        %v2418 = vadd.f32 0.0, %v2417
        %2419 = vdwg.mxu0
        %2420 = vmatprep.subr.mxu0 %v2342
        %2421 = vmatpush1.msra.mxu0 %v2340
        %2422 = vmatprep.subr.mxu0 0.0
        %2423 = vmatpush1.msra.mxu0 0.0
        %2424 = vmatprep.subr.mxu0 0.0
        %2425 = vmatpush1.msra.mxu0 0.0
        %2426 = vmatprep.subr.mxu0 0.0
        %2427 = vmatpush1.msra.mxu0 0.0
        %2428 = vmatprep.subr.mxu0 0.0
        %2429 = vmatpush1.msra.mxu0 0.0
        %2430 = vmatprep.subr.mxu0 0.0
        %2431 = vmatpush1.msra.mxu0 0.0
        %2432 = vmatprep.subr.mxu0 0.0
        %2433 = vmatpush1.msra.mxu0 0.0
        %2434 = vmatprep.subr.mxu0 0.0
        %2435 = vmatpush1.msra.mxu0 0.0
        %2436 = vmatprep.subr.mxu0 0.0
        %2437 = vmatpush1.msra.mxu0 0.0
        %2438 = vmatprep.subr.mxu0 0.0
        %2439 = vmatpush1.msra.mxu0 0.0
        %2440 = vmatprep.subr.mxu0 0.0
        %2441 = vmatpush1.msra.mxu0 0.0
        %2442 = vmatprep.subr.mxu0 0.0
        %2443 = vmatpush1.msra.mxu0 0.0
        %2444 = vmatprep.subr.mxu0 0.0
        %2445 = vmatpush1.msra.mxu0 0.0
        %2446 = vmatprep.subr.mxu0 0.0
        %2447 = vmatpush1.msra.mxu0 0.0
        %2448 = vmatprep.subr.mxu0 0.0
        %2449 = vmatpush1.msra.mxu0 0.0
        %2450 = vmatprep.subr.mxu0 0.0
        %2451 = vmatpush1.msra.mxu0 0.0
        %2452 = vmatprep.subr.mxu0 0.0
        %2453 = vmatpush1.msra.mxu0 0.0
        %2454 = vmatprep.subr.mxu0 0.0
        %2455 = vmatpush1.msra.mxu0 0.0
        %2456 = vmatprep.subr.mxu0 0.0
        %2457 = vmatpush1.msra.mxu0 0.0
        %2458 = vmatprep.subr.mxu0 0.0
        %2459 = vmatpush1.msra.mxu0 0.0
        %2460 = vmatprep.subr.mxu0 0.0
        %2461 = vmatpush1.msra.mxu0 0.0
        %2462 = vmatprep.subr.mxu0 0.0
        %2463 = vmatpush1.msra.mxu0 0.0
        %2464 = vmatprep.subr.mxu0 0.0
        %2465 = vmatpush1.msra.mxu0 0.0
        %2466 = vmatprep.subr.mxu0 0.0
        %2467 = vmatpush1.msra.mxu0 0.0
        %2468 = vmatprep.subr.mxu0 0.0
        %2469 = vmatpush1.msra.mxu0 0.0
        %2470 = vmatprep.subr.mxu0 0.0
        %2471 = vmatpush1.msra.mxu0 0.0
        %2472 = vmatprep.subr.mxu0 0.0
        %2473 = vmatpush1.msra.mxu0 0.0
        %2474 = vmatprep.subr.mxu0 0.0
        %2475 = vmatpush1.msra.mxu0 0.0
        %2476 = vmatprep.subr.mxu0 0.0
        %2477 = vmatpush1.msra.mxu0 0.0
        %2478 = vmatprep.subr.mxu0 0.0
        %2479 = vmatpush1.msra.mxu0 0.0
        %2480 = vmatprep.subr.mxu0 0.0
        %2481 = vmatpush1.msra.mxu0 0.0
        %2482 = vmatprep.subr.mxu0 0.0
        %2483 = vmatpush1.msra.mxu0 0.0
        %2484 = vmatprep.mubr.f32.mxu0 0.0
        %2485 = vmatmul.mubr.f32.gmra.mrb[0].mxu0 %v2347
        %v2486 = vpop.f32.mrb[0].mxu0
        %v2487 = vadd.f32 0.0, %v2486
        %v2488 = vpop.f32.mrb[0].mxu0
        %v2489 = vadd.f32 0.0, %v2488
        %2490 = vdwg.mxu0
        %v2491 = vadd.f32 %v1998, %v2416
        %v2492 = vadd.f32 %v2000, %v2418
        %v2493 = vadd.f32 %v2069, %v2487
        %v2494 = vadd.f32 %v2071, %v2489
        %v2495 = vld [vmem:[#allocation11] sm:$0xf]
        %v2497 = vlaneseq
        %v2498 = vshrl.u32 %v2497, 7
        %v2499 = vsub.s32 0, %v2498
        %v2500 = vrot.slane %v2495, %v2499
        %v2501 = vlaneseq
        %v2502 = vshrl.u32 %v2501, 7
        %v2503 = vsub.s32 1, %v2502
        %v2504 = vrot.slane %v2495, %v2503
        %v2505 = vlaneseq
        %v2506 = vshrl.u32 %v2505, 7
        %v2507 = vsub.s32 2, %v2506
        %v2508 = vrot.slane %v2495, %v2507
        %v2509 = vlaneseq
        %v2510 = vshrl.u32 %v2509, 7
        %v2511 = vsub.s32 3, %v2510
        %v2512 = vrot.slane %v2495, %v2511
        %v2517 = vadd.f32 %v2491, %v2500
        %v2518 = vadd.f32 %v2492, %v2504
        %v2519 = vadd.f32 %v2493, %v2508
        %v2520 = vadd.f32 %v2494, %v2512
        %v2521 = vmax.f32 %v2517, 0.0
        %v2522 = vmax.f32 %v2518, 0.0
        %v2523 = vmax.f32 %v2519, 0.0
        %v2524 = vmax.f32 %v2520, 0.0
        %v2525 = vld [vmem:[#allocation13] sm:$0xff]
        %v2526 = vld [vmem:[#allocation13 + $0x8] sm:$0xff]
        %v2527 = vld [vmem:[#allocation13 + $0x10] sm:$0xff]
        %v2528 = vld [vmem:[#allocation13 + $0x18] sm:$0xff]
        %v2529 = vld [vmem:[#allocation13 + $0x20] sm:$0xff]
        %v2530 = vld [vmem:[#allocation13 + $0x28] sm:$0xff]
        %v2531 = vld [vmem:[#allocation13 + $0x30] sm:$0xff]
        %v2532 = vld [vmem:[#allocation13 + $0x38] sm:$0xff]
        %v2533 = vld [vmem:[#allocation13 + $0x40] sm:$0xff]
        %v2534 = vld [vmem:[#allocation13 + $0x48] sm:$0xff]
        %v2535 = vld [vmem:[#allocation13 + $0x50] sm:$0xff]
        %v2536 = vld [vmem:[#allocation13 + $0x58] sm:$0xff]
        %v2537 = vld [vmem:[#allocation13 + $0x60] sm:$0xff]
        %v2538 = vld [vmem:[#allocation13 + $0x68] sm:$0xff]
        %v2539 = vld [vmem:[#allocation13 + $0x70] sm:$0xff]
        %v2540 = vld [vmem:[#allocation13 + $0x78] sm:$0xff]
        %v2541 = vld [vmem:[#allocation13 + $0x80] sm:$0xff]
        %v2542 = vld [vmem:[#allocation13 + $0x88] sm:$0xff]
        %v2543 = vld [vmem:[#allocation13 + $0x90] sm:$0xff]
        %v2544 = vld [vmem:[#allocation13 + $0x98] sm:$0xff]
        %v2545 = vld [vmem:[#allocation13 + $0xa0] sm:$0xff]
        %v2546 = vld [vmem:[#allocation13 + $0xa8] sm:$0xff]
        %v2547 = vld [vmem:[#allocation13 + $0xb0] sm:$0xff]
        %v2548 = vld [vmem:[#allocation13 + $0xb8] sm:$0xff]
        %v2549 = vld [vmem:[#allocation13 + $0xc0] sm:$0xff]
        %v2550 = vld [vmem:[#allocation13 + $0xc8] sm:$0xff]
        %v2551 = vld [vmem:[#allocation13 + $0xd0] sm:$0xff]
        %v2552 = vld [vmem:[#allocation13 + $0xd8] sm:$0xff]
        %v2553 = vld [vmem:[#allocation13 + $0xe0] sm:$0xff]
        %v2554 = vld [vmem:[#allocation13 + $0xe8] sm:$0xff]
        %v2555 = vld [vmem:[#allocation13 + $0xf0] sm:$0xff]
        %v2556 = vld [vmem:[#allocation13 + $0xf8] sm:$0xff]
        %v2557 = vld [vmem:[#allocation13 + $0x100] sm:$0xff]
        %v2558 = vld [vmem:[#allocation13 + $0x108] sm:$0xff]
        %v2559 = vld [vmem:[#allocation13 + $0x110] sm:$0xff]
        %v2560 = vld [vmem:[#allocation13 + $0x118] sm:$0xff]
        %v2561 = vld [vmem:[#allocation13 + $0x120] sm:$0xff]
        %v2562 = vld [vmem:[#allocation13 + $0x128] sm:$0xff]
        %v2563 = vld [vmem:[#allocation13 + $0x130] sm:$0xff]
        %v2564 = vld [vmem:[#allocation13 + $0x138] sm:$0xff]
        %v2565 = vld [vmem:[#allocation13 + $0x140] sm:$0xff]
        %v2566 = vld [vmem:[#allocation13 + $0x148] sm:$0xff]
        %v2567 = vld [vmem:[#allocation13 + $0x150] sm:$0xff]
        %v2568 = vld [vmem:[#allocation13 + $0x158] sm:$0xff]
        %v2569 = vld [vmem:[#allocation13 + $0x160] sm:$0xff]
        %v2570 = vld [vmem:[#allocation13 + $0x168] sm:$0xff]
        %v2571 = vld [vmem:[#allocation13 + $0x170] sm:$0xff]
        %v2572 = vld [vmem:[#allocation13 + $0x178] sm:$0xff]
        %v2573 = vld [vmem:[#allocation13 + $0x180] sm:$0xff]
        %v2574 = vld [vmem:[#allocation13 + $0x188] sm:$0xff]
        %v2575 = vld [vmem:[#allocation13 + $0x190] sm:$0xff]
        %v2576 = vld [vmem:[#allocation13 + $0x198] sm:$0xff]
        %v2577 = vld [vmem:[#allocation13 + $0x1a0] sm:$0xff]
        %v2578 = vld [vmem:[#allocation13 + $0x1a8] sm:$0xff]
        %v2579 = vld [vmem:[#allocation13 + $0x1b0] sm:$0xff]
        %v2580 = vld [vmem:[#allocation13 + $0x1b8] sm:$0xff]
        %v2581 = vld [vmem:[#allocation13 + $0x1c0] sm:$0xff]
        %v2582 = vld [vmem:[#allocation13 + $0x1c8] sm:$0xff]
        %v2583 = vld [vmem:[#allocation13 + $0x1d0] sm:$0xff]
        %v2584 = vld [vmem:[#allocation13 + $0x1d8] sm:$0xff]
        %v2585 = vld [vmem:[#allocation13 + $0x1e0] sm:$0xff]
        %v2586 = vld [vmem:[#allocation13 + $0x1e8] sm:$0xff]
        %v2587 = vld [vmem:[#allocation13 + $0x1f0] sm:$0xff]
        %v2588 = vld [vmem:[#allocation13 + $0x1f8] sm:$0xff]
        %v2589 = vld [vmem:[#allocation13 + $0x200] sm:$0xff]
        %v2590 = vld [vmem:[#allocation13 + $0x208] sm:$0xff]
        %v2591 = vld [vmem:[#allocation13 + $0x210] sm:$0xff]
        %v2592 = vld [vmem:[#allocation13 + $0x218] sm:$0xff]
        %v2593 = vld [vmem:[#allocation13 + $0x220] sm:$0xff]
        %v2594 = vld [vmem:[#allocation13 + $0x228] sm:$0xff]
        %v2595 = vld [vmem:[#allocation13 + $0x230] sm:$0xff]
        %v2596 = vld [vmem:[#allocation13 + $0x238] sm:$0xff]
        %v2597 = vld [vmem:[#allocation13 + $0x240] sm:$0xff]
        %v2598 = vld [vmem:[#allocation13 + $0x248] sm:$0xff]
        %v2599 = vld [vmem:[#allocation13 + $0x250] sm:$0xff]
        %v2600 = vld [vmem:[#allocation13 + $0x258] sm:$0xff]
        %v2601 = vld [vmem:[#allocation13 + $0x260] sm:$0xff]
        %v2602 = vld [vmem:[#allocation13 + $0x268] sm:$0xff]
        %v2603 = vld [vmem:[#allocation13 + $0x270] sm:$0xff]
        %v2604 = vld [vmem:[#allocation13 + $0x278] sm:$0xff]
        %v2605 = vld [vmem:[#allocation13 + $0x280] sm:$0xff]
        %v2606 = vld [vmem:[#allocation13 + $0x288] sm:$0xff]
        %v2607 = vld [vmem:[#allocation13 + $0x290] sm:$0xff]
        %v2608 = vld [vmem:[#allocation13 + $0x298] sm:$0xff]
        %v2609 = vld [vmem:[#allocation13 + $0x2a0] sm:$0xff]
        %v2610 = vld [vmem:[#allocation13 + $0x2a8] sm:$0xff]
        %v2611 = vld [vmem:[#allocation13 + $0x2b0] sm:$0xff]
        %v2612 = vld [vmem:[#allocation13 + $0x2b8] sm:$0xff]
        %v2613 = vld [vmem:[#allocation13 + $0x2c0] sm:$0xff]
        %v2614 = vld [vmem:[#allocation13 + $0x2c8] sm:$0xff]
        %v2615 = vld [vmem:[#allocation13 + $0x2d0] sm:$0xff]
        %v2616 = vld [vmem:[#allocation13 + $0x2d8] sm:$0xff]
        %v2617 = vld [vmem:[#allocation13 + $0x2e0] sm:$0xff]
        %v2618 = vld [vmem:[#allocation13 + $0x2e8] sm:$0xff]
        %v2619 = vld [vmem:[#allocation13 + $0x2f0] sm:$0xff]
        %v2620 = vld [vmem:[#allocation13 + $0x2f8] sm:$0xff]
        %v2621 = vld [vmem:[#allocation13 + $0x300] sm:$0xff]
        %v2622 = vld [vmem:[#allocation13 + $0x308] sm:$0xff]
        %v2623 = vld [vmem:[#allocation13 + $0x310] sm:$0xff]
        %v2624 = vld [vmem:[#allocation13 + $0x318] sm:$0xff]
        %v2625 = vld [vmem:[#allocation13 + $0x320] sm:$0xff]
        %v2626 = vld [vmem:[#allocation13 + $0x328] sm:$0xff]
        %v2627 = vld [vmem:[#allocation13 + $0x330] sm:$0xff]
        %v2628 = vld [vmem:[#allocation13 + $0x338] sm:$0xff]
        %v2629 = vld [vmem:[#allocation13 + $0x340] sm:$0xff]
        %v2630 = vld [vmem:[#allocation13 + $0x348] sm:$0xff]
        %v2631 = vld [vmem:[#allocation13 + $0x350] sm:$0xff]
        %v2632 = vld [vmem:[#allocation13 + $0x358] sm:$0xff]
        %v2633 = vld [vmem:[#allocation13 + $0x360] sm:$0xff]
        %v2634 = vld [vmem:[#allocation13 + $0x368] sm:$0xff]
        %v2635 = vld [vmem:[#allocation13 + $0x370] sm:$0xff]
        %v2636 = vld [vmem:[#allocation13 + $0x378] sm:$0xff]
        %v2637 = vld [vmem:[#allocation13 + $0x380] sm:$0xff]
        %v2638 = vld [vmem:[#allocation13 + $0x388] sm:$0xff]
        %v2639 = vld [vmem:[#allocation13 + $0x390] sm:$0xff]
        %v2640 = vld [vmem:[#allocation13 + $0x398] sm:$0xff]
        %v2641 = vld [vmem:[#allocation13 + $0x3a0] sm:$0xff]
        %v2642 = vld [vmem:[#allocation13 + $0x3a8] sm:$0xff]
        %v2643 = vld [vmem:[#allocation13 + $0x3b0] sm:$0xff]
        %v2644 = vld [vmem:[#allocation13 + $0x3b8] sm:$0xff]
        %v2645 = vld [vmem:[#allocation13 + $0x3c0] sm:$0xff]
        %v2646 = vld [vmem:[#allocation13 + $0x3c8] sm:$0xff]
        %v2647 = vld [vmem:[#allocation13 + $0x3d0] sm:$0xff]
        %v2648 = vld [vmem:[#allocation13 + $0x3d8] sm:$0xff]
        %v2649 = vld [vmem:[#allocation13 + $0x3e0] sm:$0xff]
        %v2650 = vld [vmem:[#allocation13 + $0x3e8] sm:$0xff]
        %v2651 = vld [vmem:[#allocation13 + $0x3f0] sm:$0xff]
        %v2652 = vld [vmem:[#allocation13 + $0x3f8] sm:$0xff]
        %v2653 = vld [vmem:[#allocation13 + $0x400] sm:$0xff]
        %v2654 = vld [vmem:[#allocation13 + $0x408] sm:$0xff]
        %v2655 = vld [vmem:[#allocation13 + $0x410] sm:$0xff]
        %v2656 = vld [vmem:[#allocation13 + $0x418] sm:$0xff]
        %v2657 = vld [vmem:[#allocation13 + $0x420] sm:$0xff]
        %v2658 = vld [vmem:[#allocation13 + $0x428] sm:$0xff]
        %v2659 = vld [vmem:[#allocation13 + $0x430] sm:$0xff]
        %v2660 = vld [vmem:[#allocation13 + $0x438] sm:$0xff]
        %v2661 = vld [vmem:[#allocation13 + $0x440] sm:$0xff]
        %v2662 = vld [vmem:[#allocation13 + $0x448] sm:$0xff]
        %v2663 = vld [vmem:[#allocation13 + $0x450] sm:$0xff]
        %v2664 = vld [vmem:[#allocation13 + $0x458] sm:$0xff]
        %v2665 = vld [vmem:[#allocation13 + $0x460] sm:$0xff]
        %v2666 = vld [vmem:[#allocation13 + $0x468] sm:$0xff]
        %v2667 = vld [vmem:[#allocation13 + $0x470] sm:$0xff]
        %v2668 = vld [vmem:[#allocation13 + $0x478] sm:$0xff]
        %v2669 = vld [vmem:[#allocation13 + $0x480] sm:$0xff]
        %v2670 = vld [vmem:[#allocation13 + $0x488] sm:$0xff]
        %v2671 = vld [vmem:[#allocation13 + $0x490] sm:$0xff]
        %v2672 = vld [vmem:[#allocation13 + $0x498] sm:$0xff]
        %v2673 = vld [vmem:[#allocation13 + $0x4a0] sm:$0xff]
        %v2674 = vld [vmem:[#allocation13 + $0x4a8] sm:$0xff]
        %v2675 = vld [vmem:[#allocation13 + $0x4b0] sm:$0xff]
        %v2676 = vld [vmem:[#allocation13 + $0x4b8] sm:$0xff]
        %v2677 = vld [vmem:[#allocation13 + $0x4c0] sm:$0xff]
        %v2678 = vld [vmem:[#allocation13 + $0x4c8] sm:$0xff]
        %v2679 = vld [vmem:[#allocation13 + $0x4d0] sm:$0xff]
        %v2680 = vld [vmem:[#allocation13 + $0x4d8] sm:$0xff]
        %v2681 = vld [vmem:[#allocation13 + $0x4e0] sm:$0xff]
        %v2682 = vld [vmem:[#allocation13 + $0x4e8] sm:$0xff]
        %v2683 = vld [vmem:[#allocation13 + $0x4f0] sm:$0xff]
        %v2684 = vld [vmem:[#allocation13 + $0x4f8] sm:$0xff]
        %v2685 = vld [vmem:[#allocation13 + $0x500] sm:$0xff]
        %v2686 = vld [vmem:[#allocation13 + $0x508] sm:$0xff]
        %v2687 = vld [vmem:[#allocation13 + $0x510] sm:$0xff]
        %v2688 = vld [vmem:[#allocation13 + $0x518] sm:$0xff]
        %v2689 = vld [vmem:[#allocation13 + $0x520] sm:$0xff]
        %v2690 = vld [vmem:[#allocation13 + $0x528] sm:$0xff]
        %v2691 = vld [vmem:[#allocation13 + $0x530] sm:$0xff]
        %v2692 = vld [vmem:[#allocation13 + $0x538] sm:$0xff]
        %v2693 = vld [vmem:[#allocation13 + $0x540] sm:$0xff]
        %v2694 = vld [vmem:[#allocation13 + $0x548] sm:$0xff]
        %v2695 = vld [vmem:[#allocation13 + $0x550] sm:$0xff]
        %v2696 = vld [vmem:[#allocation13 + $0x558] sm:$0xff]
        %v2697 = vld [vmem:[#allocation13 + $0x560] sm:$0xff]
        %v2698 = vld [vmem:[#allocation13 + $0x568] sm:$0xff]
        %v2699 = vld [vmem:[#allocation13 + $0x570] sm:$0xff]
        %v2700 = vld [vmem:[#allocation13 + $0x578] sm:$0xff]
        %v2701 = vld [vmem:[#allocation13 + $0x580] sm:$0xff]
        %v2702 = vld [vmem:[#allocation13 + $0x588] sm:$0xff]
        %v2703 = vld [vmem:[#allocation13 + $0x590] sm:$0xff]
        %v2704 = vld [vmem:[#allocation13 + $0x598] sm:$0xff]
        %v2705 = vld [vmem:[#allocation13 + $0x5a0] sm:$0xff]
        %v2706 = vld [vmem:[#allocation13 + $0x5a8] sm:$0xff]
        %v2707 = vld [vmem:[#allocation13 + $0x5b0] sm:$0xff]
        %v2708 = vld [vmem:[#allocation13 + $0x5b8] sm:$0xff]
        %v2709 = vld [vmem:[#allocation13 + $0x5c0] sm:$0xff]
        %v2710 = vld [vmem:[#allocation13 + $0x5c8] sm:$0xff]
        %v2711 = vld [vmem:[#allocation13 + $0x5d0] sm:$0xff]
        %v2712 = vld [vmem:[#allocation13 + $0x5d8] sm:$0xff]
        %v2713 = vld [vmem:[#allocation13 + $0x5e0] sm:$0xff]
        %v2714 = vld [vmem:[#allocation13 + $0x5e8] sm:$0xff]
        %v2715 = vld [vmem:[#allocation13 + $0x5f0] sm:$0xff]
        %v2716 = vld [vmem:[#allocation13 + $0x5f8] sm:$0xff]
        %v2717 = vld [vmem:[#allocation13 + $0x600] sm:$0xff]
        %v2718 = vld [vmem:[#allocation13 + $0x608] sm:$0xff]
        %v2719 = vld [vmem:[#allocation13 + $0x610] sm:$0xff]
        %v2720 = vld [vmem:[#allocation13 + $0x618] sm:$0xff]
        %v2721 = vld [vmem:[#allocation13 + $0x620] sm:$0xff]
        %v2722 = vld [vmem:[#allocation13 + $0x628] sm:$0xff]
        %v2723 = vld [vmem:[#allocation13 + $0x630] sm:$0xff]
        %v2724 = vld [vmem:[#allocation13 + $0x638] sm:$0xff]
        %v2725 = vld [vmem:[#allocation13 + $0x640] sm:$0xff]
        %v2726 = vld [vmem:[#allocation13 + $0x648] sm:$0xff]
        %v2727 = vld [vmem:[#allocation13 + $0x650] sm:$0xff]
        %v2728 = vld [vmem:[#allocation13 + $0x658] sm:$0xff]
        %v2729 = vld [vmem:[#allocation13 + $0x660] sm:$0xff]
        %v2730 = vld [vmem:[#allocation13 + $0x668] sm:$0xff]
        %v2731 = vld [vmem:[#allocation13 + $0x670] sm:$0xff]
        %v2732 = vld [vmem:[#allocation13 + $0x678] sm:$0xff]
        %v2733 = vld [vmem:[#allocation13 + $0x680] sm:$0xff]
        %v2734 = vld [vmem:[#allocation13 + $0x688] sm:$0xff]
        %v2735 = vld [vmem:[#allocation13 + $0x690] sm:$0xff]
        %v2736 = vld [vmem:[#allocation13 + $0x698] sm:$0xff]
        %v2737 = vld [vmem:[#allocation13 + $0x6a0] sm:$0xff]
        %v2738 = vld [vmem:[#allocation13 + $0x6a8] sm:$0xff]
        %v2739 = vld [vmem:[#allocation13 + $0x6b0] sm:$0xff]
        %v2740 = vld [vmem:[#allocation13 + $0x6b8] sm:$0xff]
        %v2741 = vld [vmem:[#allocation13 + $0x6c0] sm:$0xff]
        %v2742 = vld [vmem:[#allocation13 + $0x6c8] sm:$0xff]
        %v2743 = vld [vmem:[#allocation13 + $0x6d0] sm:$0xff]
        %v2744 = vld [vmem:[#allocation13 + $0x6d8] sm:$0xff]
        %v2745 = vld [vmem:[#allocation13 + $0x6e0] sm:$0xff]
        %v2746 = vld [vmem:[#allocation13 + $0x6e8] sm:$0xff]
        %v2747 = vld [vmem:[#allocation13 + $0x6f0] sm:$0xff]
        %v2748 = vld [vmem:[#allocation13 + $0x6f8] sm:$0xff]
        %v2749 = vld [vmem:[#allocation13 + $0x700] sm:$0xff]
        %v2750 = vld [vmem:[#allocation13 + $0x708] sm:$0xff]
        %v2751 = vld [vmem:[#allocation13 + $0x710] sm:$0xff]
        %v2752 = vld [vmem:[#allocation13 + $0x718] sm:$0xff]
        %v2753 = vld [vmem:[#allocation13 + $0x720] sm:$0xff]
        %v2754 = vld [vmem:[#allocation13 + $0x728] sm:$0xff]
        %v2755 = vld [vmem:[#allocation13 + $0x730] sm:$0xff]
        %v2756 = vld [vmem:[#allocation13 + $0x738] sm:$0xff]
        %v2757 = vld [vmem:[#allocation13 + $0x740] sm:$0xff]
        %v2758 = vld [vmem:[#allocation13 + $0x748] sm:$0xff]
        %v2759 = vld [vmem:[#allocation13 + $0x750] sm:$0xff]
        %v2760 = vld [vmem:[#allocation13 + $0x758] sm:$0xff]
        %v2761 = vld [vmem:[#allocation13 + $0x760] sm:$0xff]
        %v2762 = vld [vmem:[#allocation13 + $0x768] sm:$0xff]
        %v2763 = vld [vmem:[#allocation13 + $0x770] sm:$0xff]
        %v2764 = vld [vmem:[#allocation13 + $0x778] sm:$0xff]
        %v2765 = vld [vmem:[#allocation13 + $0x780] sm:$0xff]
        %v2766 = vld [vmem:[#allocation13 + $0x788] sm:$0xff]
        %v2767 = vld [vmem:[#allocation13 + $0x790] sm:$0xff]
        %v2768 = vld [vmem:[#allocation13 + $0x798] sm:$0xff]
        %v2769 = vld [vmem:[#allocation13 + $0x7a0] sm:$0xff]
        %v2770 = vld [vmem:[#allocation13 + $0x7a8] sm:$0xff]
        %v2771 = vld [vmem:[#allocation13 + $0x7b0] sm:$0xff]
        %v2772 = vld [vmem:[#allocation13 + $0x7b8] sm:$0xff]
        %v2773 = vld [vmem:[#allocation13 + $0x7c0] sm:$0xff]
        %v2774 = vld [vmem:[#allocation13 + $0x7c8] sm:$0xff]
        %v2775 = vld [vmem:[#allocation13 + $0x7d0] sm:$0xff]
        %v2776 = vld [vmem:[#allocation13 + $0x7d8] sm:$0xff]
        %v2777 = vld [vmem:[#allocation13 + $0x7e0] sm:$0xff]
        %v2778 = vld [vmem:[#allocation13 + $0x7e8] sm:$0xff]
        %v2779 = vld [vmem:[#allocation13 + $0x7f0] sm:$0xff]
        %v2780 = vld [vmem:[#allocation13 + $0x7f8] sm:$0xff]
        %2781 = vmatprep.subr.mxu0 %v2526
        %2782 = vmatpush1.msra.mxu0 %v2525
        %2783 = vmatprep.subr.mxu0 %v2530
        %2784 = vmatpush1.msra.mxu0 %v2529
        %2785 = vmatprep.subr.mxu0 %v2534
        %2786 = vmatpush1.msra.mxu0 %v2533
        %2787 = vmatprep.subr.mxu0 %v2538
        %2788 = vmatpush1.msra.mxu0 %v2537
        %2789 = vmatprep.subr.mxu0 %v2542
        %2790 = vmatpush1.msra.mxu0 %v2541
        %2791 = vmatprep.subr.mxu0 %v2546
        %2792 = vmatpush1.msra.mxu0 %v2545
        %2793 = vmatprep.subr.mxu0 %v2550
        %2794 = vmatpush1.msra.mxu0 %v2549
        %2795 = vmatprep.subr.mxu0 %v2554
        %2796 = vmatpush1.msra.mxu0 %v2553
        %2797 = vmatprep.subr.mxu0 %v2558
        %2798 = vmatpush1.msra.mxu0 %v2557
        %2799 = vmatprep.subr.mxu0 %v2562
        %2800 = vmatpush1.msra.mxu0 %v2561
        %2801 = vmatprep.subr.mxu0 %v2566
        %2802 = vmatpush1.msra.mxu0 %v2565
        %2803 = vmatprep.subr.mxu0 %v2570
        %2804 = vmatpush1.msra.mxu0 %v2569
        %2805 = vmatprep.subr.mxu0 %v2574
        %2806 = vmatpush1.msra.mxu0 %v2573
        %2807 = vmatprep.subr.mxu0 %v2578
        %2808 = vmatpush1.msra.mxu0 %v2577
        %2809 = vmatprep.subr.mxu0 %v2582
        %2810 = vmatpush1.msra.mxu0 %v2581
        %2811 = vmatprep.subr.mxu0 %v2586
        %2812 = vmatpush1.msra.mxu0 %v2585
        %2813 = vmatprep.subr.mxu0 %v2590
        %2814 = vmatpush1.msra.mxu0 %v2589
        %2815 = vmatprep.subr.mxu0 %v2594
        %2816 = vmatpush1.msra.mxu0 %v2593
        %2817 = vmatprep.subr.mxu0 %v2598
        %2818 = vmatpush1.msra.mxu0 %v2597
        %2819 = vmatprep.subr.mxu0 %v2602
        %2820 = vmatpush1.msra.mxu0 %v2601
        %2821 = vmatprep.subr.mxu0 %v2606
        %2822 = vmatpush1.msra.mxu0 %v2605
        %2823 = vmatprep.subr.mxu0 %v2610
        %2824 = vmatpush1.msra.mxu0 %v2609
        %2825 = vmatprep.subr.mxu0 %v2614
        %2826 = vmatpush1.msra.mxu0 %v2613
        %2827 = vmatprep.subr.mxu0 %v2618
        %2828 = vmatpush1.msra.mxu0 %v2617
        %2829 = vmatprep.subr.mxu0 %v2622
        %2830 = vmatpush1.msra.mxu0 %v2621
        %2831 = vmatprep.subr.mxu0 %v2626
        %2832 = vmatpush1.msra.mxu0 %v2625
        %2833 = vmatprep.subr.mxu0 %v2630
        %2834 = vmatpush1.msra.mxu0 %v2629
        %2835 = vmatprep.subr.mxu0 %v2634
        %2836 = vmatpush1.msra.mxu0 %v2633
        %2837 = vmatprep.subr.mxu0 %v2638
        %2838 = vmatpush1.msra.mxu0 %v2637
        %2839 = vmatprep.subr.mxu0 %v2642
        %2840 = vmatpush1.msra.mxu0 %v2641
        %2841 = vmatprep.subr.mxu0 %v2646
        %2842 = vmatpush1.msra.mxu0 %v2645
        %2843 = vmatprep.subr.mxu0 %v2650
        %2844 = vmatpush1.msra.mxu0 %v2649
        %2845 = vmatprep.mubr.f32.mxu0 %v2522
        %2846 = vmatmul.mubr.f32.gmra.mrb[0].mxu0 %v2521
        %v2847 = vpop.f32.mrb[0].mxu0
        %v2848 = vadd.f32 0.0, %v2847
        %v2849 = vpop.f32.mrb[0].mxu0
        %v2850 = vadd.f32 0.0, %v2849
        %2851 = vdwg.mxu0
        %2852 = vmatprep.subr.mxu0 %v2654
        %2853 = vmatpush1.msra.mxu0 %v2653
        %2854 = vmatprep.subr.mxu0 %v2658
        %2855 = vmatpush1.msra.mxu0 %v2657
        %2856 = vmatprep.subr.mxu0 %v2662
        %2857 = vmatpush1.msra.mxu0 %v2661
        %2858 = vmatprep.subr.mxu0 %v2666
        %2859 = vmatpush1.msra.mxu0 %v2665
        %2860 = vmatprep.subr.mxu0 %v2670
        %2861 = vmatpush1.msra.mxu0 %v2669
        %2862 = vmatprep.subr.mxu0 %v2674
        %2863 = vmatpush1.msra.mxu0 %v2673
        %2864 = vmatprep.subr.mxu0 %v2678
        %2865 = vmatpush1.msra.mxu0 %v2677
        %2866 = vmatprep.subr.mxu0 %v2682
        %2867 = vmatpush1.msra.mxu0 %v2681
        %2868 = vmatprep.subr.mxu0 %v2686
        %2869 = vmatpush1.msra.mxu0 %v2685
        %2870 = vmatprep.subr.mxu0 %v2690
        %2871 = vmatpush1.msra.mxu0 %v2689
        %2872 = vmatprep.subr.mxu0 %v2694
        %2873 = vmatpush1.msra.mxu0 %v2693
        %2874 = vmatprep.subr.mxu0 %v2698
        %2875 = vmatpush1.msra.mxu0 %v2697
        %2876 = vmatprep.subr.mxu0 %v2702
        %2877 = vmatpush1.msra.mxu0 %v2701
        %2878 = vmatprep.subr.mxu0 %v2706
        %2879 = vmatpush1.msra.mxu0 %v2705
        %2880 = vmatprep.subr.mxu0 %v2710
        %2881 = vmatpush1.msra.mxu0 %v2709
        %2882 = vmatprep.subr.mxu0 %v2714
        %2883 = vmatpush1.msra.mxu0 %v2713
        %2884 = vmatprep.subr.mxu0 %v2718
        %2885 = vmatpush1.msra.mxu0 %v2717
        %2886 = vmatprep.subr.mxu0 %v2722
        %2887 = vmatpush1.msra.mxu0 %v2721
        %2888 = vmatprep.subr.mxu0 %v2726
        %2889 = vmatpush1.msra.mxu0 %v2725
        %2890 = vmatprep.subr.mxu0 %v2730
        %2891 = vmatpush1.msra.mxu0 %v2729
        %2892 = vmatprep.subr.mxu0 %v2734
        %2893 = vmatpush1.msra.mxu0 %v2733
        %2894 = vmatprep.subr.mxu0 %v2738
        %2895 = vmatpush1.msra.mxu0 %v2737
        %2896 = vmatprep.subr.mxu0 %v2742
        %2897 = vmatpush1.msra.mxu0 %v2741
        %2898 = vmatprep.subr.mxu0 %v2746
        %2899 = vmatpush1.msra.mxu0 %v2745
        %2900 = vmatprep.subr.mxu0 %v2750
        %2901 = vmatpush1.msra.mxu0 %v2749
        %2902 = vmatprep.subr.mxu0 %v2754
        %2903 = vmatpush1.msra.mxu0 %v2753
        %2904 = vmatprep.subr.mxu0 %v2758
        %2905 = vmatpush1.msra.mxu0 %v2757
        %2906 = vmatprep.subr.mxu0 %v2762
        %2907 = vmatpush1.msra.mxu0 %v2761
        %2908 = vmatprep.subr.mxu0 %v2766
        %2909 = vmatpush1.msra.mxu0 %v2765
        %2910 = vmatprep.subr.mxu0 %v2770
        %2911 = vmatpush1.msra.mxu0 %v2769
        %2912 = vmatprep.subr.mxu0 %v2774
        %2913 = vmatpush1.msra.mxu0 %v2773
        %2914 = vmatprep.subr.mxu0 %v2778
        %2915 = vmatpush1.msra.mxu0 %v2777
        %2916 = vmatprep.mubr.f32.mxu0 %v2524
        %2917 = vmatmul.mubr.f32.gmra.mrb[0].mxu0 %v2523
        %v2918 = vpop.f32.mrb[0].mxu0
        %v2919 = vadd.f32 %v2848, %v2918
        %v2920 = vpop.f32.mrb[0].mxu0
        %v2921 = vadd.f32 %v2850, %v2920
        %2922 = vdwg.mxu0
        %2923 = vmatprep.subr.mxu0 %v2528
        %2924 = vmatpush1.msra.mxu0 %v2527
        %2925 = vmatprep.subr.mxu0 %v2532
        %2926 = vmatpush1.msra.mxu0 %v2531
        %2927 = vmatprep.subr.mxu0 %v2536
        %2928 = vmatpush1.msra.mxu0 %v2535
        %2929 = vmatprep.subr.mxu0 %v2540
        %2930 = vmatpush1.msra.mxu0 %v2539
        %2931 = vmatprep.subr.mxu0 %v2544
        %2932 = vmatpush1.msra.mxu0 %v2543
        %2933 = vmatprep.subr.mxu0 %v2548
        %2934 = vmatpush1.msra.mxu0 %v2547
        %2935 = vmatprep.subr.mxu0 %v2552
        %2936 = vmatpush1.msra.mxu0 %v2551
        %2937 = vmatprep.subr.mxu0 %v2556
        %2938 = vmatpush1.msra.mxu0 %v2555
        %2939 = vmatprep.subr.mxu0 %v2560
        %2940 = vmatpush1.msra.mxu0 %v2559
        %2941 = vmatprep.subr.mxu0 %v2564
        %2942 = vmatpush1.msra.mxu0 %v2563
        %2943 = vmatprep.subr.mxu0 %v2568
        %2944 = vmatpush1.msra.mxu0 %v2567
        %2945 = vmatprep.subr.mxu0 %v2572
        %2946 = vmatpush1.msra.mxu0 %v2571
        %2947 = vmatprep.subr.mxu0 %v2576
        %2948 = vmatpush1.msra.mxu0 %v2575
        %2949 = vmatprep.subr.mxu0 %v2580
        %2950 = vmatpush1.msra.mxu0 %v2579
        %2951 = vmatprep.subr.mxu0 %v2584
        %2952 = vmatpush1.msra.mxu0 %v2583
        %2953 = vmatprep.subr.mxu0 %v2588
        %2954 = vmatpush1.msra.mxu0 %v2587
        %2955 = vmatprep.subr.mxu0 %v2592
        %2956 = vmatpush1.msra.mxu0 %v2591
        %2957 = vmatprep.subr.mxu0 %v2596
        %2958 = vmatpush1.msra.mxu0 %v2595
        %2959 = vmatprep.subr.mxu0 %v2600
        %2960 = vmatpush1.msra.mxu0 %v2599
        %2961 = vmatprep.subr.mxu0 %v2604
        %2962 = vmatpush1.msra.mxu0 %v2603
        %2963 = vmatprep.subr.mxu0 %v2608
        %2964 = vmatpush1.msra.mxu0 %v2607
        %2965 = vmatprep.subr.mxu0 %v2612
        %2966 = vmatpush1.msra.mxu0 %v2611
        %2967 = vmatprep.subr.mxu0 %v2616
        %2968 = vmatpush1.msra.mxu0 %v2615
        %2969 = vmatprep.subr.mxu0 %v2620
        %2970 = vmatpush1.msra.mxu0 %v2619
        %2971 = vmatprep.subr.mxu0 %v2624
        %2972 = vmatpush1.msra.mxu0 %v2623
        %2973 = vmatprep.subr.mxu0 %v2628
        %2974 = vmatpush1.msra.mxu0 %v2627
        %2975 = vmatprep.subr.mxu0 %v2632
        %2976 = vmatpush1.msra.mxu0 %v2631
        %2977 = vmatprep.subr.mxu0 %v2636
        %2978 = vmatpush1.msra.mxu0 %v2635
        %2979 = vmatprep.subr.mxu0 %v2640
        %2980 = vmatpush1.msra.mxu0 %v2639
        %2981 = vmatprep.subr.mxu0 %v2644
        %2982 = vmatpush1.msra.mxu0 %v2643
        %2983 = vmatprep.subr.mxu0 %v2648
        %2984 = vmatpush1.msra.mxu0 %v2647
        %2985 = vmatprep.subr.mxu0 %v2652
        %2986 = vmatpush1.msra.mxu0 %v2651
        %2987 = vmatprep.mubr.f32.mxu0 %v2522
        %2988 = vmatmul.mubr.f32.gmra.mrb[0].mxu0 %v2521
        %v2989 = vpop.f32.mrb[0].mxu0
        %v2990 = vadd.f32 0.0, %v2989
        %v2991 = vpop.f32.mrb[0].mxu0
        %v2992 = vadd.f32 0.0, %v2991
        %2993 = vdwg.mxu0
        %2994 = vmatprep.subr.mxu0 %v2656
        %2995 = vmatpush1.msra.mxu0 %v2655
        %2996 = vmatprep.subr.mxu0 %v2660
        %2997 = vmatpush1.msra.mxu0 %v2659
        %2998 = vmatprep.subr.mxu0 %v2664
        %2999 = vmatpush1.msra.mxu0 %v2663
        %3000 = vmatprep.subr.mxu0 %v2668
        %3001 = vmatpush1.msra.mxu0 %v2667
        %3002 = vmatprep.subr.mxu0 %v2672
        %3003 = vmatpush1.msra.mxu0 %v2671
        %3004 = vmatprep.subr.mxu0 %v2676
        %3005 = vmatpush1.msra.mxu0 %v2675
        %3006 = vmatprep.subr.mxu0 %v2680
        %3007 = vmatpush1.msra.mxu0 %v2679
        %3008 = vmatprep.subr.mxu0 %v2684
        %3009 = vmatpush1.msra.mxu0 %v2683
        %3010 = vmatprep.subr.mxu0 %v2688
        %3011 = vmatpush1.msra.mxu0 %v2687
        %3012 = vmatprep.subr.mxu0 %v2692
        %3013 = vmatpush1.msra.mxu0 %v2691
        %3014 = vmatprep.subr.mxu0 %v2696
        %3015 = vmatpush1.msra.mxu0 %v2695
        %3016 = vmatprep.subr.mxu0 %v2700
        %3017 = vmatpush1.msra.mxu0 %v2699
        %3018 = vmatprep.subr.mxu0 %v2704
        %3019 = vmatpush1.msra.mxu0 %v2703
        %3020 = vmatprep.subr.mxu0 %v2708
        %3021 = vmatpush1.msra.mxu0 %v2707
        %3022 = vmatprep.subr.mxu0 %v2712
        %3023 = vmatpush1.msra.mxu0 %v2711
        %3024 = vmatprep.subr.mxu0 %v2716
        %3025 = vmatpush1.msra.mxu0 %v2715
        %3026 = vmatprep.subr.mxu0 %v2720
        %3027 = vmatpush1.msra.mxu0 %v2719
        %3028 = vmatprep.subr.mxu0 %v2724
        %3029 = vmatpush1.msra.mxu0 %v2723
        %3030 = vmatprep.subr.mxu0 %v2728
        %3031 = vmatpush1.msra.mxu0 %v2727
        %3032 = vmatprep.subr.mxu0 %v2732
        %3033 = vmatpush1.msra.mxu0 %v2731
        %3034 = vmatprep.subr.mxu0 %v2736
        %3035 = vmatpush1.msra.mxu0 %v2735
        %3036 = vmatprep.subr.mxu0 %v2740
        %3037 = vmatpush1.msra.mxu0 %v2739
        %3038 = vmatprep.subr.mxu0 %v2744
        %3039 = vmatpush1.msra.mxu0 %v2743
        %3040 = vmatprep.subr.mxu0 %v2748
        %3041 = vmatpush1.msra.mxu0 %v2747
        %3042 = vmatprep.subr.mxu0 %v2752
        %3043 = vmatpush1.msra.mxu0 %v2751
        %3044 = vmatprep.subr.mxu0 %v2756
        %3045 = vmatpush1.msra.mxu0 %v2755
        %3046 = vmatprep.subr.mxu0 %v2760
        %3047 = vmatpush1.msra.mxu0 %v2759
        %3048 = vmatprep.subr.mxu0 %v2764
        %3049 = vmatpush1.msra.mxu0 %v2763
        %3050 = vmatprep.subr.mxu0 %v2768
        %3051 = vmatpush1.msra.mxu0 %v2767
        %3052 = vmatprep.subr.mxu0 %v2772
        %3053 = vmatpush1.msra.mxu0 %v2771
        %3054 = vmatprep.subr.mxu0 %v2776
        %3055 = vmatpush1.msra.mxu0 %v2775
        %3056 = vmatprep.subr.mxu0 %v2780
        %3057 = vmatpush1.msra.mxu0 %v2779
        %3058 = vmatprep.mubr.f32.mxu0 %v2524
        %3059 = vmatmul.mubr.f32.gmra.mrb[0].mxu0 %v2523
        %v3060 = vpop.f32.mrb[0].mxu0
        %v3061 = vadd.f32 %v2990, %v3060
        %v3062 = vpop.f32.mrb[0].mxu0
        %v3063 = vadd.f32 %v2992, %v3062
        %3064 = vdwg.mxu0
        %v3065 = vld [vmem:[%s6] sm:$0xff]
        %v3066 = vld [vmem:[%s6 + $0x8] sm:$0xff]
        %s3067 = scalar_lea.vmem [#allocation13], 2048
        %v3068 = vld [vmem:[%s3067] sm:$0xff]
        %v3069 = vld [vmem:[%s3067 + $0x8] sm:$0xff]
        %v3070 = vld [vmem:[%s3067 + $0x10] sm:$0xff]
        %v3071 = vld [vmem:[%s3067 + $0x18] sm:$0xff]
        %v3072 = vld [vmem:[%s3067 + $0x20] sm:$0xff]
        %v3073 = vld [vmem:[%s3067 + $0x28] sm:$0xff]
        %v3074 = vld [vmem:[%s3067 + $0x30] sm:$0xff]
        %v3075 = vld [vmem:[%s3067 + $0x38] sm:$0xff]
        %v3076 = vld [vmem:[%s3067 + $0x40] sm:$0xff]
        %v3077 = vld [vmem:[%s3067 + $0x48] sm:$0xff]
        %v3078 = vld [vmem:[%s3067 + $0x50] sm:$0xff]
        %v3079 = vld [vmem:[%s3067 + $0x58] sm:$0xff]
        %v3080 = vld [vmem:[%s3067 + $0x60] sm:$0xff]
        %v3081 = vld [vmem:[%s3067 + $0x68] sm:$0xff]
        %v3082 = vld [vmem:[%s3067 + $0x70] sm:$0xff]
        %v3083 = vld [vmem:[%s3067 + $0x78] sm:$0xff]
        %v3084 = vld [vmem:[%s3067 + $0x80] sm:$0xff]
        %v3085 = vld [vmem:[%s3067 + $0x88] sm:$0xff]
        %v3086 = vld [vmem:[%s3067 + $0x90] sm:$0xff]
        %v3087 = vld [vmem:[%s3067 + $0x98] sm:$0xff]
        %v3088 = vld [vmem:[%s3067 + $0xa0] sm:$0xff]
        %v3089 = vld [vmem:[%s3067 + $0xa8] sm:$0xff]
        %v3090 = vld [vmem:[%s3067 + $0xb0] sm:$0xff]
        %v3091 = vld [vmem:[%s3067 + $0xb8] sm:$0xff]
        %v3092 = vld [vmem:[%s3067 + $0xc0] sm:$0xff]
        %v3093 = vld [vmem:[%s3067 + $0xc8] sm:$0xff]
        %v3094 = vld [vmem:[%s3067 + $0xd0] sm:$0xff]
        %v3095 = vld [vmem:[%s3067 + $0xd8] sm:$0xff]
        %v3096 = vld [vmem:[%s3067 + $0xe0] sm:$0xff]
        %v3097 = vld [vmem:[%s3067 + $0xe8] sm:$0xff]
        %v3098 = vld [vmem:[%s3067 + $0xf0] sm:$0xff]
        %v3099 = vld [vmem:[%s3067 + $0xf8] sm:$0xff]
        %v3100 = vld [vmem:[%s3067 + $0x100] sm:$0xff]
        %v3101 = vld [vmem:[%s3067 + $0x108] sm:$0xff]
        %v3102 = vld [vmem:[%s3067 + $0x110] sm:$0xff]
        %v3103 = vld [vmem:[%s3067 + $0x118] sm:$0xff]
        %v3104 = vld [vmem:[%s3067 + $0x120] sm:$0xff]
        %v3105 = vld [vmem:[%s3067 + $0x128] sm:$0xff]
        %v3106 = vld [vmem:[%s3067 + $0x130] sm:$0xff]
        %v3107 = vld [vmem:[%s3067 + $0x138] sm:$0xff]
        %v3108 = vld [vmem:[%s3067 + $0x140] sm:$0xff]
        %v3109 = vld [vmem:[%s3067 + $0x148] sm:$0xff]
        %v3110 = vld [vmem:[%s3067 + $0x150] sm:$0xff]
        %v3111 = vld [vmem:[%s3067 + $0x158] sm:$0xff]
        %v3112 = vld [vmem:[%s3067 + $0x160] sm:$0xff]
        %v3113 = vld [vmem:[%s3067 + $0x168] sm:$0xff]
        %v3114 = vld [vmem:[%s3067 + $0x170] sm:$0xff]
        %v3115 = vld [vmem:[%s3067 + $0x178] sm:$0xff]
        %v3116 = vld [vmem:[%s3067 + $0x180] sm:$0xff]
        %v3117 = vld [vmem:[%s3067 + $0x188] sm:$0xff]
        %v3118 = vld [vmem:[%s3067 + $0x190] sm:$0xff]
        %v3119 = vld [vmem:[%s3067 + $0x198] sm:$0xff]
        %v3120 = vld [vmem:[%s3067 + $0x1a0] sm:$0xff]
        %v3121 = vld [vmem:[%s3067 + $0x1a8] sm:$0xff]
        %v3122 = vld [vmem:[%s3067 + $0x1b0] sm:$0xff]
        %v3123 = vld [vmem:[%s3067 + $0x1b8] sm:$0xff]
        %v3124 = vld [vmem:[%s3067 + $0x1c0] sm:$0xff]
        %v3125 = vld [vmem:[%s3067 + $0x1c8] sm:$0xff]
        %v3126 = vld [vmem:[%s3067 + $0x1d0] sm:$0xff]
        %v3127 = vld [vmem:[%s3067 + $0x1d8] sm:$0xff]
        %v3128 = vld [vmem:[%s3067 + $0x1e0] sm:$0xff]
        %v3129 = vld [vmem:[%s3067 + $0x1e8] sm:$0xff]
        %v3130 = vld [vmem:[%s3067 + $0x1f0] sm:$0xff]
        %v3131 = vld [vmem:[%s3067 + $0x1f8] sm:$0xff]
        %v3132 = vld [vmem:[%s3067 + $0x200] sm:$0xff]
        %v3133 = vld [vmem:[%s3067 + $0x208] sm:$0xff]
        %v3134 = vld [vmem:[%s3067 + $0x210] sm:$0xff]
        %v3135 = vld [vmem:[%s3067 + $0x218] sm:$0xff]
        %v3136 = vld [vmem:[%s3067 + $0x220] sm:$0xff]
        %v3137 = vld [vmem:[%s3067 + $0x228] sm:$0xff]
        %v3138 = vld [vmem:[%s3067 + $0x230] sm:$0xff]
        %v3139 = vld [vmem:[%s3067 + $0x238] sm:$0xff]
        %v3140 = vld [vmem:[%s3067 + $0x240] sm:$0xff]
        %v3141 = vld [vmem:[%s3067 + $0x248] sm:$0xff]
        %v3142 = vld [vmem:[%s3067 + $0x250] sm:$0xff]
        %v3143 = vld [vmem:[%s3067 + $0x258] sm:$0xff]
        %v3144 = vld [vmem:[%s3067 + $0x260] sm:$0xff]
        %v3145 = vld [vmem:[%s3067 + $0x268] sm:$0xff]
        %v3146 = vld [vmem:[%s3067 + $0x270] sm:$0xff]
        %v3147 = vld [vmem:[%s3067 + $0x278] sm:$0xff]
        %v3148 = vld [vmem:[%s3067 + $0x280] sm:$0xff]
        %v3149 = vld [vmem:[%s3067 + $0x288] sm:$0xff]
        %v3150 = vld [vmem:[%s3067 + $0x290] sm:$0xff]
        %v3151 = vld [vmem:[%s3067 + $0x298] sm:$0xff]
        %v3152 = vld [vmem:[%s3067 + $0x2a0] sm:$0xff]
        %v3153 = vld [vmem:[%s3067 + $0x2a8] sm:$0xff]
        %v3154 = vld [vmem:[%s3067 + $0x2b0] sm:$0xff]
        %v3155 = vld [vmem:[%s3067 + $0x2b8] sm:$0xff]
        %v3156 = vld [vmem:[%s3067 + $0x2c0] sm:$0xff]
        %v3157 = vld [vmem:[%s3067 + $0x2c8] sm:$0xff]
        %v3158 = vld [vmem:[%s3067 + $0x2d0] sm:$0xff]
        %v3159 = vld [vmem:[%s3067 + $0x2d8] sm:$0xff]
        %v3160 = vld [vmem:[%s3067 + $0x2e0] sm:$0xff]
        %v3161 = vld [vmem:[%s3067 + $0x2e8] sm:$0xff]
        %v3162 = vld [vmem:[%s3067 + $0x2f0] sm:$0xff]
        %v3163 = vld [vmem:[%s3067 + $0x2f8] sm:$0xff]
        %v3164 = vld [vmem:[%s3067 + $0x300] sm:$0xff]
        %v3165 = vld [vmem:[%s3067 + $0x308] sm:$0xff]
        %v3166 = vld [vmem:[%s3067 + $0x310] sm:$0xff]
        %v3167 = vld [vmem:[%s3067 + $0x318] sm:$0xff]
        %v3168 = vld [vmem:[%s3067 + $0x320] sm:$0xff]
        %v3169 = vld [vmem:[%s3067 + $0x328] sm:$0xff]
        %v3170 = vld [vmem:[%s3067 + $0x330] sm:$0xff]
        %v3171 = vld [vmem:[%s3067 + $0x338] sm:$0xff]
        %v3172 = vld [vmem:[%s3067 + $0x340] sm:$0xff]
        %v3173 = vld [vmem:[%s3067 + $0x348] sm:$0xff]
        %v3174 = vld [vmem:[%s3067 + $0x350] sm:$0xff]
        %v3175 = vld [vmem:[%s3067 + $0x358] sm:$0xff]
        %v3176 = vld [vmem:[%s3067 + $0x360] sm:$0xff]
        %v3177 = vld [vmem:[%s3067 + $0x368] sm:$0xff]
        %v3178 = vld [vmem:[%s3067 + $0x370] sm:$0xff]
        %v3179 = vld [vmem:[%s3067 + $0x378] sm:$0xff]
        %v3180 = vld [vmem:[%s3067 + $0x380] sm:$0xff]
        %v3181 = vld [vmem:[%s3067 + $0x388] sm:$0xff]
        %v3182 = vld [vmem:[%s3067 + $0x390] sm:$0xff]
        %v3183 = vld [vmem:[%s3067 + $0x398] sm:$0xff]
        %v3184 = vld [vmem:[%s3067 + $0x3a0] sm:$0xff]
        %v3185 = vld [vmem:[%s3067 + $0x3a8] sm:$0xff]
        %v3186 = vld [vmem:[%s3067 + $0x3b0] sm:$0xff]
        %v3187 = vld [vmem:[%s3067 + $0x3b8] sm:$0xff]
        %v3188 = vld [vmem:[%s3067 + $0x3c0] sm:$0xff]
        %v3189 = vld [vmem:[%s3067 + $0x3c8] sm:$0xff]
        %v3190 = vld [vmem:[%s3067 + $0x3d0] sm:$0xff]
        %v3191 = vld [vmem:[%s3067 + $0x3d8] sm:$0xff]
        %v3192 = vld [vmem:[%s3067 + $0x3e0] sm:$0xff]
        %v3193 = vld [vmem:[%s3067 + $0x3e8] sm:$0xff]
        %v3194 = vld [vmem:[%s3067 + $0x3f0] sm:$0xff]
        %v3195 = vld [vmem:[%s3067 + $0x3f8] sm:$0xff]
        %v3196 = vld [vmem:[%s3067 + $0x400] sm:$0xff]
        %v3197 = vld [vmem:[%s3067 + $0x408] sm:$0xff]
        %v3198 = vld [vmem:[%s3067 + $0x410] sm:$0xff]
        %v3199 = vld [vmem:[%s3067 + $0x418] sm:$0xff]
        %v3200 = vld [vmem:[%s3067 + $0x420] sm:$0xff]
        %v3201 = vld [vmem:[%s3067 + $0x428] sm:$0xff]
        %v3202 = vld [vmem:[%s3067 + $0x430] sm:$0xff]
        %v3203 = vld [vmem:[%s3067 + $0x438] sm:$0xff]
        %v3204 = vld [vmem:[%s3067 + $0x440] sm:$0xff]
        %v3205 = vld [vmem:[%s3067 + $0x448] sm:$0xff]
        %v3206 = vld [vmem:[%s3067 + $0x450] sm:$0xff]
        %v3207 = vld [vmem:[%s3067 + $0x458] sm:$0xff]
        %v3208 = vld [vmem:[%s3067 + $0x460] sm:$0xff]
        %v3209 = vld [vmem:[%s3067 + $0x468] sm:$0xff]
        %v3210 = vld [vmem:[%s3067 + $0x470] sm:$0xff]
        %v3211 = vld [vmem:[%s3067 + $0x478] sm:$0xff]
        %v3212 = vld [vmem:[%s3067 + $0x480] sm:$0xff]
        %v3213 = vld [vmem:[%s3067 + $0x488] sm:$0xff]
        %v3214 = vld [vmem:[%s3067 + $0x490] sm:$0xff]
        %v3215 = vld [vmem:[%s3067 + $0x498] sm:$0xff]
        %v3216 = vld [vmem:[%s3067 + $0x4a0] sm:$0xff]
        %v3217 = vld [vmem:[%s3067 + $0x4a8] sm:$0xff]
        %v3218 = vld [vmem:[%s3067 + $0x4b0] sm:$0xff]
        %v3219 = vld [vmem:[%s3067 + $0x4b8] sm:$0xff]
        %v3220 = vld [vmem:[%s3067 + $0x4c0] sm:$0xff]
        %v3221 = vld [vmem:[%s3067 + $0x4c8] sm:$0xff]
        %v3222 = vld [vmem:[%s3067 + $0x4d0] sm:$0xff]
        %v3223 = vld [vmem:[%s3067 + $0x4d8] sm:$0xff]
        %v3224 = vld [vmem:[%s3067 + $0x4e0] sm:$0xff]
        %v3225 = vld [vmem:[%s3067 + $0x4e8] sm:$0xff]
        %v3226 = vld [vmem:[%s3067 + $0x4f0] sm:$0xff]
        %v3227 = vld [vmem:[%s3067 + $0x4f8] sm:$0xff]
        %v3228 = vld [vmem:[%s3067 + $0x500] sm:$0xff]
        %v3229 = vld [vmem:[%s3067 + $0x508] sm:$0xff]
        %v3230 = vld [vmem:[%s3067 + $0x510] sm:$0xff]
        %v3231 = vld [vmem:[%s3067 + $0x518] sm:$0xff]
        %v3232 = vld [vmem:[%s3067 + $0x520] sm:$0xff]
        %v3233 = vld [vmem:[%s3067 + $0x528] sm:$0xff]
        %v3234 = vld [vmem:[%s3067 + $0x530] sm:$0xff]
        %v3235 = vld [vmem:[%s3067 + $0x538] sm:$0xff]
        %v3236 = vld [vmem:[%s3067 + $0x540] sm:$0xff]
        %v3237 = vld [vmem:[%s3067 + $0x548] sm:$0xff]
        %v3238 = vld [vmem:[%s3067 + $0x550] sm:$0xff]
        %v3239 = vld [vmem:[%s3067 + $0x558] sm:$0xff]
        %v3240 = vld [vmem:[%s3067 + $0x560] sm:$0xff]
        %v3241 = vld [vmem:[%s3067 + $0x568] sm:$0xff]
        %v3242 = vld [vmem:[%s3067 + $0x570] sm:$0xff]
        %v3243 = vld [vmem:[%s3067 + $0x578] sm:$0xff]
        %v3244 = vld [vmem:[%s3067 + $0x580] sm:$0xff]
        %v3245 = vld [vmem:[%s3067 + $0x588] sm:$0xff]
        %v3246 = vld [vmem:[%s3067 + $0x590] sm:$0xff]
        %v3247 = vld [vmem:[%s3067 + $0x598] sm:$0xff]
        %v3248 = vld [vmem:[%s3067 + $0x5a0] sm:$0xff]
        %v3249 = vld [vmem:[%s3067 + $0x5a8] sm:$0xff]
        %v3250 = vld [vmem:[%s3067 + $0x5b0] sm:$0xff]
        %v3251 = vld [vmem:[%s3067 + $0x5b8] sm:$0xff]
        %v3252 = vld [vmem:[%s3067 + $0x5c0] sm:$0xff]
        %v3253 = vld [vmem:[%s3067 + $0x5c8] sm:$0xff]
        %v3254 = vld [vmem:[%s3067 + $0x5d0] sm:$0xff]
        %v3255 = vld [vmem:[%s3067 + $0x5d8] sm:$0xff]
        %v3256 = vld [vmem:[%s3067 + $0x5e0] sm:$0xff]
        %v3257 = vld [vmem:[%s3067 + $0x5e8] sm:$0xff]
        %v3258 = vld [vmem:[%s3067 + $0x5f0] sm:$0xff]
        %v3259 = vld [vmem:[%s3067 + $0x5f8] sm:$0xff]
        %v3260 = vld [vmem:[%s3067 + $0x600] sm:$0xff]
        %v3261 = vld [vmem:[%s3067 + $0x608] sm:$0xff]
        %v3262 = vld [vmem:[%s3067 + $0x610] sm:$0xff]
        %v3263 = vld [vmem:[%s3067 + $0x618] sm:$0xff]
        %v3264 = vld [vmem:[%s3067 + $0x620] sm:$0xff]
        %v3265 = vld [vmem:[%s3067 + $0x628] sm:$0xff]
        %v3266 = vld [vmem:[%s3067 + $0x630] sm:$0xff]
        %v3267 = vld [vmem:[%s3067 + $0x638] sm:$0xff]
        %v3268 = vld [vmem:[%s3067 + $0x640] sm:$0xff]
        %v3269 = vld [vmem:[%s3067 + $0x648] sm:$0xff]
        %v3270 = vld [vmem:[%s3067 + $0x650] sm:$0xff]
        %v3271 = vld [vmem:[%s3067 + $0x658] sm:$0xff]
        %v3272 = vld [vmem:[%s3067 + $0x660] sm:$0xff]
        %v3273 = vld [vmem:[%s3067 + $0x668] sm:$0xff]
        %v3274 = vld [vmem:[%s3067 + $0x670] sm:$0xff]
        %v3275 = vld [vmem:[%s3067 + $0x678] sm:$0xff]
        %v3276 = vld [vmem:[%s3067 + $0x680] sm:$0xff]
        %v3277 = vld [vmem:[%s3067 + $0x688] sm:$0xff]
        %v3278 = vld [vmem:[%s3067 + $0x690] sm:$0xff]
        %v3279 = vld [vmem:[%s3067 + $0x698] sm:$0xff]
        %v3280 = vld [vmem:[%s3067 + $0x6a0] sm:$0xff]
        %v3281 = vld [vmem:[%s3067 + $0x6a8] sm:$0xff]
        %v3282 = vld [vmem:[%s3067 + $0x6b0] sm:$0xff]
        %v3283 = vld [vmem:[%s3067 + $0x6b8] sm:$0xff]
        %v3284 = vld [vmem:[%s3067 + $0x6c0] sm:$0xff]
        %v3285 = vld [vmem:[%s3067 + $0x6c8] sm:$0xff]
        %v3286 = vld [vmem:[%s3067 + $0x6d0] sm:$0xff]
        %v3287 = vld [vmem:[%s3067 + $0x6d8] sm:$0xff]
        %v3288 = vld [vmem:[%s3067 + $0x6e0] sm:$0xff]
        %v3289 = vld [vmem:[%s3067 + $0x6e8] sm:$0xff]
        %v3290 = vld [vmem:[%s3067 + $0x6f0] sm:$0xff]
        %v3291 = vld [vmem:[%s3067 + $0x6f8] sm:$0xff]
        %v3292 = vld [vmem:[%s3067 + $0x700] sm:$0xff]
        %v3293 = vld [vmem:[%s3067 + $0x708] sm:$0xff]
        %v3294 = vld [vmem:[%s3067 + $0x710] sm:$0xff]
        %v3295 = vld [vmem:[%s3067 + $0x718] sm:$0xff]
        %v3296 = vld [vmem:[%s3067 + $0x720] sm:$0xff]
        %v3297 = vld [vmem:[%s3067 + $0x728] sm:$0xff]
        %v3298 = vld [vmem:[%s3067 + $0x730] sm:$0xff]
        %v3299 = vld [vmem:[%s3067 + $0x738] sm:$0xff]
        %v3300 = vld [vmem:[%s3067 + $0x740] sm:$0xff]
        %v3301 = vld [vmem:[%s3067 + $0x748] sm:$0xff]
        %v3302 = vld [vmem:[%s3067 + $0x750] sm:$0xff]
        %v3303 = vld [vmem:[%s3067 + $0x758] sm:$0xff]
        %v3304 = vld [vmem:[%s3067 + $0x760] sm:$0xff]
        %v3305 = vld [vmem:[%s3067 + $0x768] sm:$0xff]
        %v3306 = vld [vmem:[%s3067 + $0x770] sm:$0xff]
        %v3307 = vld [vmem:[%s3067 + $0x778] sm:$0xff]
        %v3308 = vld [vmem:[%s3067 + $0x780] sm:$0xff]
        %v3309 = vld [vmem:[%s3067 + $0x788] sm:$0xff]
        %v3310 = vld [vmem:[%s3067 + $0x790] sm:$0xff]
        %v3311 = vld [vmem:[%s3067 + $0x798] sm:$0xff]
        %v3312 = vld [vmem:[%s3067 + $0x7a0] sm:$0xff]
        %v3313 = vld [vmem:[%s3067 + $0x7a8] sm:$0xff]
        %v3314 = vld [vmem:[%s3067 + $0x7b0] sm:$0xff]
        %v3315 = vld [vmem:[%s3067 + $0x7b8] sm:$0xff]
        %v3316 = vld [vmem:[%s3067 + $0x7c0] sm:$0xff]
        %v3317 = vld [vmem:[%s3067 + $0x7c8] sm:$0xff]
        %v3318 = vld [vmem:[%s3067 + $0x7d0] sm:$0xff]
        %v3319 = vld [vmem:[%s3067 + $0x7d8] sm:$0xff]
        %v3320 = vld [vmem:[%s3067 + $0x7e0] sm:$0xff]
        %v3321 = vld [vmem:[%s3067 + $0x7e8] sm:$0xff]
        %v3322 = vld [vmem:[%s3067 + $0x7f0] sm:$0xff]
        %v3323 = vld [vmem:[%s3067 + $0x7f8] sm:$0xff]
        %3324 = vmatprep.subr.mxu0 %v3069
        %3325 = vmatpush1.msra.mxu0 %v3068
        %3326 = vmatprep.subr.mxu0 %v3073
        %3327 = vmatpush1.msra.mxu0 %v3072
        %3328 = vmatprep.subr.mxu0 %v3077
        %3329 = vmatpush1.msra.mxu0 %v3076
        %3330 = vmatprep.subr.mxu0 %v3081
        %3331 = vmatpush1.msra.mxu0 %v3080
        %3332 = vmatprep.subr.mxu0 %v3085
        %3333 = vmatpush1.msra.mxu0 %v3084
        %3334 = vmatprep.subr.mxu0 %v3089
        %3335 = vmatpush1.msra.mxu0 %v3088
        %3336 = vmatprep.subr.mxu0 %v3093
        %3337 = vmatpush1.msra.mxu0 %v3092
        %3338 = vmatprep.subr.mxu0 %v3097
        %3339 = vmatpush1.msra.mxu0 %v3096
        %3340 = vmatprep.subr.mxu0 %v3101
        %3341 = vmatpush1.msra.mxu0 %v3100
        %3342 = vmatprep.subr.mxu0 %v3105
        %3343 = vmatpush1.msra.mxu0 %v3104
        %3344 = vmatprep.subr.mxu0 %v3109
        %3345 = vmatpush1.msra.mxu0 %v3108
        %3346 = vmatprep.subr.mxu0 %v3113
        %3347 = vmatpush1.msra.mxu0 %v3112
        %3348 = vmatprep.subr.mxu0 %v3117
        %3349 = vmatpush1.msra.mxu0 %v3116
        %3350 = vmatprep.subr.mxu0 %v3121
        %3351 = vmatpush1.msra.mxu0 %v3120
        %3352 = vmatprep.subr.mxu0 %v3125
        %3353 = vmatpush1.msra.mxu0 %v3124
        %3354 = vmatprep.subr.mxu0 %v3129
        %3355 = vmatpush1.msra.mxu0 %v3128
        %3356 = vmatprep.subr.mxu0 %v3133
        %3357 = vmatpush1.msra.mxu0 %v3132
        %3358 = vmatprep.subr.mxu0 %v3137
        %3359 = vmatpush1.msra.mxu0 %v3136
        %3360 = vmatprep.subr.mxu0 %v3141
        %3361 = vmatpush1.msra.mxu0 %v3140
        %3362 = vmatprep.subr.mxu0 %v3145
        %3363 = vmatpush1.msra.mxu0 %v3144
        %3364 = vmatprep.subr.mxu0 %v3149
        %3365 = vmatpush1.msra.mxu0 %v3148
        %3366 = vmatprep.subr.mxu0 %v3153
        %3367 = vmatpush1.msra.mxu0 %v3152
        %3368 = vmatprep.subr.mxu0 %v3157
        %3369 = vmatpush1.msra.mxu0 %v3156
        %3370 = vmatprep.subr.mxu0 %v3161
        %3371 = vmatpush1.msra.mxu0 %v3160
        %3372 = vmatprep.subr.mxu0 %v3165
        %3373 = vmatpush1.msra.mxu0 %v3164
        %3374 = vmatprep.subr.mxu0 %v3169
        %3375 = vmatpush1.msra.mxu0 %v3168
        %3376 = vmatprep.subr.mxu0 %v3173
        %3377 = vmatpush1.msra.mxu0 %v3172
        %3378 = vmatprep.subr.mxu0 %v3177
        %3379 = vmatpush1.msra.mxu0 %v3176
        %3380 = vmatprep.subr.mxu0 %v3181
        %3381 = vmatpush1.msra.mxu0 %v3180
        %3382 = vmatprep.subr.mxu0 %v3185
        %3383 = vmatpush1.msra.mxu0 %v3184
        %3384 = vmatprep.subr.mxu0 %v3189
        %3385 = vmatpush1.msra.mxu0 %v3188
        %3386 = vmatprep.subr.mxu0 %v3193
        %3387 = vmatpush1.msra.mxu0 %v3192
        %3388 = vmatprep.mubr.f32.mxu0 %v2522
        %3389 = vmatmul.mubr.f32.gmra.mrb[0].mxu0 %v2521
        %v3390 = vpop.f32.mrb[0].mxu0
        %v3391 = vadd.f32 0.0, %v3390
        %v3392 = vpop.f32.mrb[0].mxu0
        %v3393 = vadd.f32 0.0, %v3392
        %3394 = vdwg.mxu0
        %3395 = vmatprep.subr.mxu0 %v3197
        %3396 = vmatpush1.msra.mxu0 %v3196
        %3397 = vmatprep.subr.mxu0 %v3201
        %3398 = vmatpush1.msra.mxu0 %v3200
        %3399 = vmatprep.subr.mxu0 %v3205
        %3400 = vmatpush1.msra.mxu0 %v3204
        %3401 = vmatprep.subr.mxu0 %v3209
        %3402 = vmatpush1.msra.mxu0 %v3208
        %3403 = vmatprep.subr.mxu0 %v3213
        %3404 = vmatpush1.msra.mxu0 %v3212
        %3405 = vmatprep.subr.mxu0 %v3217
        %3406 = vmatpush1.msra.mxu0 %v3216
        %3407 = vmatprep.subr.mxu0 %v3221
        %3408 = vmatpush1.msra.mxu0 %v3220
        %3409 = vmatprep.subr.mxu0 %v3225
        %3410 = vmatpush1.msra.mxu0 %v3224
        %3411 = vmatprep.subr.mxu0 %v3229
        %3412 = vmatpush1.msra.mxu0 %v3228
        %3413 = vmatprep.subr.mxu0 %v3233
        %3414 = vmatpush1.msra.mxu0 %v3232
        %3415 = vmatprep.subr.mxu0 %v3237
        %3416 = vmatpush1.msra.mxu0 %v3236
        %3417 = vmatprep.subr.mxu0 %v3241
        %3418 = vmatpush1.msra.mxu0 %v3240
        %3419 = vmatprep.subr.mxu0 %v3245
        %3420 = vmatpush1.msra.mxu0 %v3244
        %3421 = vmatprep.subr.mxu0 %v3249
        %3422 = vmatpush1.msra.mxu0 %v3248
        %3423 = vmatprep.subr.mxu0 %v3253
        %3424 = vmatpush1.msra.mxu0 %v3252
        %3425 = vmatprep.subr.mxu0 %v3257
        %3426 = vmatpush1.msra.mxu0 %v3256
        %3427 = vmatprep.subr.mxu0 %v3261
        %3428 = vmatpush1.msra.mxu0 %v3260
        %3429 = vmatprep.subr.mxu0 %v3265
        %3430 = vmatpush1.msra.mxu0 %v3264
        %3431 = vmatprep.subr.mxu0 %v3269
        %3432 = vmatpush1.msra.mxu0 %v3268
        %3433 = vmatprep.subr.mxu0 %v3273
        %3434 = vmatpush1.msra.mxu0 %v3272
        %3435 = vmatprep.subr.mxu0 %v3277
        %3436 = vmatpush1.msra.mxu0 %v3276
        %3437 = vmatprep.subr.mxu0 %v3281
        %3438 = vmatpush1.msra.mxu0 %v3280
        %3439 = vmatprep.subr.mxu0 %v3285
        %3440 = vmatpush1.msra.mxu0 %v3284
        %3441 = vmatprep.subr.mxu0 %v3289
        %3442 = vmatpush1.msra.mxu0 %v3288
        %3443 = vmatprep.subr.mxu0 %v3293
        %3444 = vmatpush1.msra.mxu0 %v3292
        %3445 = vmatprep.subr.mxu0 %v3297
        %3446 = vmatpush1.msra.mxu0 %v3296
        %3447 = vmatprep.subr.mxu0 %v3301
        %3448 = vmatpush1.msra.mxu0 %v3300
        %3449 = vmatprep.subr.mxu0 %v3305
        %3450 = vmatpush1.msra.mxu0 %v3304
        %3451 = vmatprep.subr.mxu0 %v3309
        %3452 = vmatpush1.msra.mxu0 %v3308
        %3453 = vmatprep.subr.mxu0 %v3313
        %3454 = vmatpush1.msra.mxu0 %v3312
        %3455 = vmatprep.subr.mxu0 %v3317
        %3456 = vmatpush1.msra.mxu0 %v3316
        %3457 = vmatprep.subr.mxu0 %v3321
        %3458 = vmatpush1.msra.mxu0 %v3320
        %3459 = vmatprep.mubr.f32.mxu0 %v2524
        %3460 = vmatmul.mubr.f32.gmra.mrb[0].mxu0 %v2523
        %v3461 = vpop.f32.mrb[0].mxu0
        %v3462 = vadd.f32 %v3391, %v3461
        %v3463 = vpop.f32.mrb[0].mxu0
        %v3464 = vadd.f32 %v3393, %v3463
        %3465 = vdwg.mxu0
        %3466 = vmatprep.subr.mxu0 %v3071
        %3467 = vmatpush1.msra.mxu0 %v3070
        %3468 = vmatprep.subr.mxu0 %v3075
        %3469 = vmatpush1.msra.mxu0 %v3074
        %3470 = vmatprep.subr.mxu0 %v3079
        %3471 = vmatpush1.msra.mxu0 %v3078
        %3472 = vmatprep.subr.mxu0 %v3083
        %3473 = vmatpush1.msra.mxu0 %v3082
        %3474 = vmatprep.subr.mxu0 %v3087
        %3475 = vmatpush1.msra.mxu0 %v3086
        %3476 = vmatprep.subr.mxu0 %v3091
        %3477 = vmatpush1.msra.mxu0 %v3090
        %3478 = vmatprep.subr.mxu0 %v3095
        %3479 = vmatpush1.msra.mxu0 %v3094
        %3480 = vmatprep.subr.mxu0 %v3099
        %3481 = vmatpush1.msra.mxu0 %v3098
        %3482 = vmatprep.subr.mxu0 %v3103
        %3483 = vmatpush1.msra.mxu0 %v3102
        %3484 = vmatprep.subr.mxu0 %v3107
        %3485 = vmatpush1.msra.mxu0 %v3106
        %3486 = vmatprep.subr.mxu0 %v3111
        %3487 = vmatpush1.msra.mxu0 %v3110
        %3488 = vmatprep.subr.mxu0 %v3115
        %3489 = vmatpush1.msra.mxu0 %v3114
        %3490 = vmatprep.subr.mxu0 %v3119
        %3491 = vmatpush1.msra.mxu0 %v3118
        %3492 = vmatprep.subr.mxu0 %v3123
        %3493 = vmatpush1.msra.mxu0 %v3122
        %3494 = vmatprep.subr.mxu0 %v3127
        %3495 = vmatpush1.msra.mxu0 %v3126
        %3496 = vmatprep.subr.mxu0 %v3131
        %3497 = vmatpush1.msra.mxu0 %v3130
        %3498 = vmatprep.subr.mxu0 %v3135
        %3499 = vmatpush1.msra.mxu0 %v3134
        %3500 = vmatprep.subr.mxu0 %v3139
        %3501 = vmatpush1.msra.mxu0 %v3138
        %3502 = vmatprep.subr.mxu0 %v3143
        %3503 = vmatpush1.msra.mxu0 %v3142
        %3504 = vmatprep.subr.mxu0 %v3147
        %3505 = vmatpush1.msra.mxu0 %v3146
        %3506 = vmatprep.subr.mxu0 %v3151
        %3507 = vmatpush1.msra.mxu0 %v3150
        %3508 = vmatprep.subr.mxu0 %v3155
        %3509 = vmatpush1.msra.mxu0 %v3154
        %3510 = vmatprep.subr.mxu0 %v3159
        %3511 = vmatpush1.msra.mxu0 %v3158
        %3512 = vmatprep.subr.mxu0 %v3163
        %3513 = vmatpush1.msra.mxu0 %v3162
        %3514 = vmatprep.subr.mxu0 %v3167
        %3515 = vmatpush1.msra.mxu0 %v3166
        %3516 = vmatprep.subr.mxu0 %v3171
        %3517 = vmatpush1.msra.mxu0 %v3170
        %3518 = vmatprep.subr.mxu0 %v3175
        %3519 = vmatpush1.msra.mxu0 %v3174
        %3520 = vmatprep.subr.mxu0 %v3179
        %3521 = vmatpush1.msra.mxu0 %v3178
        %3522 = vmatprep.subr.mxu0 %v3183
        %3523 = vmatpush1.msra.mxu0 %v3182
        %3524 = vmatprep.subr.mxu0 %v3187
        %3525 = vmatpush1.msra.mxu0 %v3186
        %3526 = vmatprep.subr.mxu0 %v3191
        %3527 = vmatpush1.msra.mxu0 %v3190
        %3528 = vmatprep.subr.mxu0 %v3195
        %3529 = vmatpush1.msra.mxu0 %v3194
        %3530 = vmatprep.mubr.f32.mxu0 %v2522
        %3531 = vmatmul.mubr.f32.gmra.mrb[0].mxu0 %v2521
        %v3532 = vpop.f32.mrb[0].mxu0
        %v3533 = vadd.f32 0.0, %v3532
        %v3534 = vpop.f32.mrb[0].mxu0
        %v3535 = vadd.f32 0.0, %v3534
        %3536 = vdwg.mxu0
        %3537 = vmatprep.subr.mxu0 %v3199
        %3538 = vmatpush1.msra.mxu0 %v3198
        %3539 = vmatprep.subr.mxu0 %v3203
        %3540 = vmatpush1.msra.mxu0 %v3202
        %3541 = vmatprep.subr.mxu0 %v3207
        %3542 = vmatpush1.msra.mxu0 %v3206
        %3543 = vmatprep.subr.mxu0 %v3211
        %3544 = vmatpush1.msra.mxu0 %v3210
        %3545 = vmatprep.subr.mxu0 %v3215
        %3546 = vmatpush1.msra.mxu0 %v3214
        %3547 = vmatprep.subr.mxu0 %v3219
        %3548 = vmatpush1.msra.mxu0 %v3218
        %3549 = vmatprep.subr.mxu0 %v3223
        %3550 = vmatpush1.msra.mxu0 %v3222
        %3551 = vmatprep.subr.mxu0 %v3227
        %3552 = vmatpush1.msra.mxu0 %v3226
        %3553 = vmatprep.subr.mxu0 %v3231
        %3554 = vmatpush1.msra.mxu0 %v3230
        %3555 = vmatprep.subr.mxu0 %v3235
        %3556 = vmatpush1.msra.mxu0 %v3234
        %3557 = vmatprep.subr.mxu0 %v3239
        %3558 = vmatpush1.msra.mxu0 %v3238
        %3559 = vmatprep.subr.mxu0 %v3243
        %3560 = vmatpush1.msra.mxu0 %v3242
        %3561 = vmatprep.subr.mxu0 %v3247
        %3562 = vmatpush1.msra.mxu0 %v3246
        %3563 = vmatprep.subr.mxu0 %v3251
        %3564 = vmatpush1.msra.mxu0 %v3250
        %3565 = vmatprep.subr.mxu0 %v3255
        %3566 = vmatpush1.msra.mxu0 %v3254
        %3567 = vmatprep.subr.mxu0 %v3259
        %3568 = vmatpush1.msra.mxu0 %v3258
        %3569 = vmatprep.subr.mxu0 %v3263
        %3570 = vmatpush1.msra.mxu0 %v3262
        %3571 = vmatprep.subr.mxu0 %v3267
        %3572 = vmatpush1.msra.mxu0 %v3266
        %3573 = vmatprep.subr.mxu0 %v3271
        %3574 = vmatpush1.msra.mxu0 %v3270
        %3575 = vmatprep.subr.mxu0 %v3275
        %3576 = vmatpush1.msra.mxu0 %v3274
        %3577 = vmatprep.subr.mxu0 %v3279
        %3578 = vmatpush1.msra.mxu0 %v3278
        %3579 = vmatprep.subr.mxu0 %v3283
        %3580 = vmatpush1.msra.mxu0 %v3282
        %3581 = vmatprep.subr.mxu0 %v3287
        %3582 = vmatpush1.msra.mxu0 %v3286
        %3583 = vmatprep.subr.mxu0 %v3291
        %3584 = vmatpush1.msra.mxu0 %v3290
        %3585 = vmatprep.subr.mxu0 %v3295
        %3586 = vmatpush1.msra.mxu0 %v3294
        %3587 = vmatprep.subr.mxu0 %v3299
        %3588 = vmatpush1.msra.mxu0 %v3298
        %3589 = vmatprep.subr.mxu0 %v3303
        %3590 = vmatpush1.msra.mxu0 %v3302
        %3591 = vmatprep.subr.mxu0 %v3307
        %3592 = vmatpush1.msra.mxu0 %v3306
        %3593 = vmatprep.subr.mxu0 %v3311
        %3594 = vmatpush1.msra.mxu0 %v3310
        %3595 = vmatprep.subr.mxu0 %v3315
        %3596 = vmatpush1.msra.mxu0 %v3314
        %3597 = vmatprep.subr.mxu0 %v3319
        %3598 = vmatpush1.msra.mxu0 %v3318
        %3599 = vmatprep.subr.mxu0 %v3323
        %3600 = vmatpush1.msra.mxu0 %v3322
        %3601 = vmatprep.mubr.f32.mxu0 %v2524
        %3602 = vmatmul.mubr.f32.gmra.mrb[0].mxu0 %v2523
        %v3603 = vpop.f32.mrb[0].mxu0
        %v3604 = vadd.f32 %v3533, %v3603
        %v3605 = vpop.f32.mrb[0].mxu0
        %v3606 = vadd.f32 %v3535, %v3605
        %3607 = vdwg.mxu0
        %s3608 = scalar_lea.vmem %s6, 16
        %v3609 = vld [vmem:[%s3608] sm:$0xff]
        %v3610 = vld [vmem:[%s3608 + $0x8] sm:$0xff]
        %v3612 = vsel %vm1782, %v3609, 0
        %v3615 = vsel %vm1782, %v3610, 0
        %3617 = vmatprep.subr.mxu0 %v3464
        %3618 = vmatpush1.msra.mxu0 %v3462
        %3619 = vmatprep.subr.mxu0 0.0
        %3620 = vmatpush1.msra.mxu0 0.0
        %3621 = vmatprep.subr.mxu0 0.0
        %3622 = vmatpush1.msra.mxu0 0.0
        %3623 = vmatprep.subr.mxu0 0.0
        %3624 = vmatpush1.msra.mxu0 0.0
        %3625 = vmatprep.subr.mxu0 0.0
        %3626 = vmatpush1.msra.mxu0 0.0
        %3627 = vmatprep.subr.mxu0 0.0
        %3628 = vmatpush1.msra.mxu0 0.0
        %3629 = vmatprep.subr.mxu0 0.0
        %3630 = vmatpush1.msra.mxu0 0.0
        %3631 = vmatprep.subr.mxu0 0.0
        %3632 = vmatpush1.msra.mxu0 0.0
        %3633 = vmatprep.subr.mxu0 0.0
        %3634 = vmatpush1.msra.mxu0 0.0
        %3635 = vmatprep.subr.mxu0 0.0
        %3636 = vmatpush1.msra.mxu0 0.0
        %3637 = vmatprep.subr.mxu0 0.0
        %3638 = vmatpush1.msra.mxu0 0.0
        %3639 = vmatprep.subr.mxu0 0.0
        %3640 = vmatpush1.msra.mxu0 0.0
        %3641 = vmatprep.subr.mxu0 0.0
        %3642 = vmatpush1.msra.mxu0 0.0
        %3643 = vmatprep.subr.mxu0 0.0
        %3644 = vmatpush1.msra.mxu0 0.0
        %3645 = vmatprep.subr.mxu0 0.0
        %3646 = vmatpush1.msra.mxu0 0.0
        %3647 = vmatprep.subr.mxu0 0.0
        %3648 = vmatpush1.msra.mxu0 0.0
        %3649 = vmatprep.subr.mxu0 0.0
        %3650 = vmatpush1.msra.mxu0 0.0
        %3651 = vmatprep.subr.mxu0 0.0
        %3652 = vmatpush1.msra.mxu0 0.0
        %3653 = vmatprep.subr.mxu0 0.0
        %3654 = vmatpush1.msra.mxu0 0.0
        %3655 = vmatprep.subr.mxu0 0.0
        %3656 = vmatpush1.msra.mxu0 0.0
        %3657 = vmatprep.subr.mxu0 0.0
        %3658 = vmatpush1.msra.mxu0 0.0
        %3659 = vmatprep.subr.mxu0 0.0
        %3660 = vmatpush1.msra.mxu0 0.0
        %3661 = vmatprep.subr.mxu0 0.0
        %3662 = vmatpush1.msra.mxu0 0.0
        %3663 = vmatprep.subr.mxu0 0.0
        %3664 = vmatpush1.msra.mxu0 0.0
        %3665 = vmatprep.subr.mxu0 0.0
        %3666 = vmatpush1.msra.mxu0 0.0
        %3667 = vmatprep.subr.mxu0 0.0
        %3668 = vmatpush1.msra.mxu0 0.0
        %3669 = vmatprep.subr.mxu0 0.0
        %3670 = vmatpush1.msra.mxu0 0.0
        %3671 = vmatprep.subr.mxu0 0.0
        %3672 = vmatpush1.msra.mxu0 0.0
        %3673 = vmatprep.subr.mxu0 0.0
        %3674 = vmatpush1.msra.mxu0 0.0
        %3675 = vmatprep.subr.mxu0 0.0
        %3676 = vmatpush1.msra.mxu0 0.0
        %3677 = vmatprep.subr.mxu0 0.0
        %3678 = vmatpush1.msra.mxu0 0.0
        %3679 = vmatprep.subr.mxu0 0.0
        %3680 = vmatpush1.msra.mxu0 0.0
        %3681 = vmatprep.mubr.f32.mxu0 0.0
        %3682 = vmatmul.mubr.f32.gmra.mrb[0].mxu0 %v3612
        %v3683 = vpop.f32.mrb[0].mxu0
        %v3684 = vadd.f32 0.0, %v3683
        %v3685 = vpop.f32.mrb[0].mxu0
        %v3686 = vadd.f32 0.0, %v3685
        %3687 = vmatprep.mubr.f32.mxu0 0.0
        %3688 = vmatmul.mubr.f32.gmra.mrb[0].mxu0 %v3615
        %v3689 = vpop.f32.mrb[0].mxu0
        %v3690 = vadd.f32 0.0, %v3689
        %v3691 = vpop.f32.mrb[0].mxu0
        %v3692 = vadd.f32 0.0, %v3691
        %3693 = vdwg.mxu0
        %3694 = vmatprep.subr.mxu0 %v3606
        %3695 = vmatpush1.msra.mxu0 %v3604
        %3696 = vmatprep.subr.mxu0 0.0
        %3697 = vmatpush1.msra.mxu0 0.0
        %3698 = vmatprep.subr.mxu0 0.0
        %3699 = vmatpush1.msra.mxu0 0.0
        %3700 = vmatprep.subr.mxu0 0.0
        %3701 = vmatpush1.msra.mxu0 0.0
        %3702 = vmatprep.subr.mxu0 0.0
        %3703 = vmatpush1.msra.mxu0 0.0
        %3704 = vmatprep.subr.mxu0 0.0
        %3705 = vmatpush1.msra.mxu0 0.0
        %3706 = vmatprep.subr.mxu0 0.0
        %3707 = vmatpush1.msra.mxu0 0.0
        %3708 = vmatprep.subr.mxu0 0.0
        %3709 = vmatpush1.msra.mxu0 0.0
        %3710 = vmatprep.subr.mxu0 0.0
        %3711 = vmatpush1.msra.mxu0 0.0
        %3712 = vmatprep.subr.mxu0 0.0
        %3713 = vmatpush1.msra.mxu0 0.0
        %3714 = vmatprep.subr.mxu0 0.0
        %3715 = vmatpush1.msra.mxu0 0.0
        %3716 = vmatprep.subr.mxu0 0.0
        %3717 = vmatpush1.msra.mxu0 0.0
        %3718 = vmatprep.subr.mxu0 0.0
        %3719 = vmatpush1.msra.mxu0 0.0
        %3720 = vmatprep.subr.mxu0 0.0
        %3721 = vmatpush1.msra.mxu0 0.0
        %3722 = vmatprep.subr.mxu0 0.0
        %3723 = vmatpush1.msra.mxu0 0.0
        %3724 = vmatprep.subr.mxu0 0.0
        %3725 = vmatpush1.msra.mxu0 0.0
        %3726 = vmatprep.subr.mxu0 0.0
        %3727 = vmatpush1.msra.mxu0 0.0
        %3728 = vmatprep.subr.mxu0 0.0
        %3729 = vmatpush1.msra.mxu0 0.0
        %3730 = vmatprep.subr.mxu0 0.0
        %3731 = vmatpush1.msra.mxu0 0.0
        %3732 = vmatprep.subr.mxu0 0.0
        %3733 = vmatpush1.msra.mxu0 0.0
        %3734 = vmatprep.subr.mxu0 0.0
        %3735 = vmatpush1.msra.mxu0 0.0
        %3736 = vmatprep.subr.mxu0 0.0
        %3737 = vmatpush1.msra.mxu0 0.0
        %3738 = vmatprep.subr.mxu0 0.0
        %3739 = vmatpush1.msra.mxu0 0.0
        %3740 = vmatprep.subr.mxu0 0.0
        %3741 = vmatpush1.msra.mxu0 0.0
        %3742 = vmatprep.subr.mxu0 0.0
        %3743 = vmatpush1.msra.mxu0 0.0
        %3744 = vmatprep.subr.mxu0 0.0
        %3745 = vmatpush1.msra.mxu0 0.0
        %3746 = vmatprep.subr.mxu0 0.0
        %3747 = vmatpush1.msra.mxu0 0.0
        %3748 = vmatprep.subr.mxu0 0.0
        %3749 = vmatpush1.msra.mxu0 0.0
        %3750 = vmatprep.subr.mxu0 0.0
        %3751 = vmatpush1.msra.mxu0 0.0
        %3752 = vmatprep.subr.mxu0 0.0
        %3753 = vmatpush1.msra.mxu0 0.0
        %3754 = vmatprep.subr.mxu0 0.0
        %3755 = vmatpush1.msra.mxu0 0.0
        %3756 = vmatprep.subr.mxu0 0.0
        %3757 = vmatpush1.msra.mxu0 0.0
        %3758 = vmatprep.mubr.f32.mxu0 0.0
        %3759 = vmatmul.mubr.f32.gmra.mrb[0].mxu0 %v3612
        %v3760 = vpop.f32.mrb[0].mxu0
        %v3761 = vadd.f32 0.0, %v3760
        %v3762 = vpop.f32.mrb[0].mxu0
        %v3763 = vadd.f32 0.0, %v3762
        %3764 = vmatprep.mubr.f32.mxu0 0.0
        %3765 = vmatmul.mubr.f32.gmra.mrb[0].mxu0 %v3615
        %v3766 = vpop.f32.mrb[0].mxu0
        %v3767 = vadd.f32 0.0, %v3766
        %v3768 = vpop.f32.mrb[0].mxu0
        %v3769 = vadd.f32 0.0, %v3768
        %3770 = vdwg.mxu0
        %v3772 = vsel %vm1782, %v3065, 0
        %v3775 = vsel %vm1782, %v3066, 0
        %3777 = vmatprep.subr.mxu0 %v2921
        %3778 = vmatpush1.msra.mxu0 %v2919
        %3779 = vmatprep.subr.mxu0 0.0
        %3780 = vmatpush1.msra.mxu0 0.0
        %3781 = vmatprep.subr.mxu0 0.0
        %3782 = vmatpush1.msra.mxu0 0.0
        %3783 = vmatprep.subr.mxu0 0.0
        %3784 = vmatpush1.msra.mxu0 0.0
        %3785 = vmatprep.subr.mxu0 0.0
        %3786 = vmatpush1.msra.mxu0 0.0
        %3787 = vmatprep.subr.mxu0 0.0
        %3788 = vmatpush1.msra.mxu0 0.0
        %3789 = vmatprep.subr.mxu0 0.0
        %3790 = vmatpush1.msra.mxu0 0.0
        %3791 = vmatprep.subr.mxu0 0.0
        %3792 = vmatpush1.msra.mxu0 0.0
        %3793 = vmatprep.subr.mxu0 0.0
        %3794 = vmatpush1.msra.mxu0 0.0
        %3795 = vmatprep.subr.mxu0 0.0
        %3796 = vmatpush1.msra.mxu0 0.0
        %3797 = vmatprep.subr.mxu0 0.0
        %3798 = vmatpush1.msra.mxu0 0.0
        %3799 = vmatprep.subr.mxu0 0.0
        %3800 = vmatpush1.msra.mxu0 0.0
        %3801 = vmatprep.subr.mxu0 0.0
        %3802 = vmatpush1.msra.mxu0 0.0
        %3803 = vmatprep.subr.mxu0 0.0
        %3804 = vmatpush1.msra.mxu0 0.0
        %3805 = vmatprep.subr.mxu0 0.0
        %3806 = vmatpush1.msra.mxu0 0.0
        %3807 = vmatprep.subr.mxu0 0.0
        %3808 = vmatpush1.msra.mxu0 0.0
        %3809 = vmatprep.subr.mxu0 0.0
        %3810 = vmatpush1.msra.mxu0 0.0
        %3811 = vmatprep.subr.mxu0 0.0
        %3812 = vmatpush1.msra.mxu0 0.0
        %3813 = vmatprep.subr.mxu0 0.0
        %3814 = vmatpush1.msra.mxu0 0.0
        %3815 = vmatprep.subr.mxu0 0.0
        %3816 = vmatpush1.msra.mxu0 0.0
        %3817 = vmatprep.subr.mxu0 0.0
        %3818 = vmatpush1.msra.mxu0 0.0
        %3819 = vmatprep.subr.mxu0 0.0
        %3820 = vmatpush1.msra.mxu0 0.0
        %3821 = vmatprep.subr.mxu0 0.0
        %3822 = vmatpush1.msra.mxu0 0.0
        %3823 = vmatprep.subr.mxu0 0.0
        %3824 = vmatpush1.msra.mxu0 0.0
        %3825 = vmatprep.subr.mxu0 0.0
        %3826 = vmatpush1.msra.mxu0 0.0
        %3827 = vmatprep.subr.mxu0 0.0
        %3828 = vmatpush1.msra.mxu0 0.0
        %3829 = vmatprep.subr.mxu0 0.0
        %3830 = vmatpush1.msra.mxu0 0.0
        %3831 = vmatprep.subr.mxu0 0.0
        %3832 = vmatpush1.msra.mxu0 0.0
        %3833 = vmatprep.subr.mxu0 0.0
        %3834 = vmatpush1.msra.mxu0 0.0
        %3835 = vmatprep.subr.mxu0 0.0
        %3836 = vmatpush1.msra.mxu0 0.0
        %3837 = vmatprep.subr.mxu0 0.0
        %3838 = vmatpush1.msra.mxu0 0.0
        %3839 = vmatprep.subr.mxu0 0.0
        %3840 = vmatpush1.msra.mxu0 0.0
        %3841 = vmatprep.mubr.f32.mxu0 0.0
        %3842 = vmatmul.mubr.f32.gmra.mrb[0].mxu0 %v3772
        %v3843 = vpop.f32.mrb[0].mxu0
        %v3844 = vadd.f32 %v3684, %v3843
        %v3845 = vpop.f32.mrb[0].mxu0
        %v3846 = vadd.f32 %v3686, %v3845
        %3847 = vmatprep.mubr.f32.mxu0 0.0
        %3848 = vmatmul.mubr.f32.gmra.mrb[0].mxu0 %v3775
        %v3849 = vpop.f32.mrb[0].mxu0
        %v3850 = vadd.f32 %v3690, %v3849
        %v3851 = vpop.f32.mrb[0].mxu0
        %v3852 = vadd.f32 %v3692, %v3851
        %3853 = vdwg.mxu0
        %3854 = vmatprep.subr.mxu0 %v3063
        %3855 = vmatpush1.msra.mxu0 %v3061
        %3856 = vmatprep.subr.mxu0 0.0
        %3857 = vmatpush1.msra.mxu0 0.0
        %3858 = vmatprep.subr.mxu0 0.0
        %3859 = vmatpush1.msra.mxu0 0.0
        %3860 = vmatprep.subr.mxu0 0.0
        %3861 = vmatpush1.msra.mxu0 0.0
        %3862 = vmatprep.subr.mxu0 0.0
        %3863 = vmatpush1.msra.mxu0 0.0
        %3864 = vmatprep.subr.mxu0 0.0
        %3865 = vmatpush1.msra.mxu0 0.0
        %3866 = vmatprep.subr.mxu0 0.0
        %3867 = vmatpush1.msra.mxu0 0.0
        %3868 = vmatprep.subr.mxu0 0.0
        %3869 = vmatpush1.msra.mxu0 0.0
        %3870 = vmatprep.subr.mxu0 0.0
        %3871 = vmatpush1.msra.mxu0 0.0
        %3872 = vmatprep.subr.mxu0 0.0
        %3873 = vmatpush1.msra.mxu0 0.0
        %3874 = vmatprep.subr.mxu0 0.0
        %3875 = vmatpush1.msra.mxu0 0.0
        %3876 = vmatprep.subr.mxu0 0.0
        %3877 = vmatpush1.msra.mxu0 0.0
        %3878 = vmatprep.subr.mxu0 0.0
        %3879 = vmatpush1.msra.mxu0 0.0
        %3880 = vmatprep.subr.mxu0 0.0
        %3881 = vmatpush1.msra.mxu0 0.0
        %3882 = vmatprep.subr.mxu0 0.0
        %3883 = vmatpush1.msra.mxu0 0.0
        %3884 = vmatprep.subr.mxu0 0.0
        %3885 = vmatpush1.msra.mxu0 0.0
        %3886 = vmatprep.subr.mxu0 0.0
        %3887 = vmatpush1.msra.mxu0 0.0
        %3888 = vmatprep.subr.mxu0 0.0
        %3889 = vmatpush1.msra.mxu0 0.0
        %3890 = vmatprep.subr.mxu0 0.0
        %3891 = vmatpush1.msra.mxu0 0.0
        %3892 = vmatprep.subr.mxu0 0.0
        %3893 = vmatpush1.msra.mxu0 0.0
        %3894 = vmatprep.subr.mxu0 0.0
        %3895 = vmatpush1.msra.mxu0 0.0
        %3896 = vmatprep.subr.mxu0 0.0
        %3897 = vmatpush1.msra.mxu0 0.0
        %3898 = vmatprep.subr.mxu0 0.0
        %3899 = vmatpush1.msra.mxu0 0.0
        %3900 = vmatprep.subr.mxu0 0.0
        %3901 = vmatpush1.msra.mxu0 0.0
        %3902 = vmatprep.subr.mxu0 0.0
        %3903 = vmatpush1.msra.mxu0 0.0
        %3904 = vmatprep.subr.mxu0 0.0
        %3905 = vmatpush1.msra.mxu0 0.0
        %3906 = vmatprep.subr.mxu0 0.0
        %3907 = vmatpush1.msra.mxu0 0.0
        %3908 = vmatprep.subr.mxu0 0.0
        %3909 = vmatpush1.msra.mxu0 0.0
        %3910 = vmatprep.subr.mxu0 0.0
        %3911 = vmatpush1.msra.mxu0 0.0
        %3912 = vmatprep.subr.mxu0 0.0
        %3913 = vmatpush1.msra.mxu0 0.0
        %3914 = vmatprep.subr.mxu0 0.0
        %3915 = vmatpush1.msra.mxu0 0.0
        %3916 = vmatprep.subr.mxu0 0.0
        %3917 = vmatpush1.msra.mxu0 0.0
        %3918 = vmatprep.mubr.f32.mxu0 0.0
        %3919 = vmatmul.mubr.f32.gmra.mrb[0].mxu0 %v3772
        %v3920 = vpop.f32.mrb[0].mxu0
        %v3921 = vadd.f32 %v3761, %v3920
        %v3922 = vpop.f32.mrb[0].mxu0
        %v3923 = vadd.f32 %v3763, %v3922
        %3924 = vmatprep.mubr.f32.mxu0 0.0
        %3925 = vmatmul.mubr.f32.gmra.mrb[0].mxu0 %v3775
        %v3926 = vpop.f32.mrb[0].mxu0
        %v3927 = vadd.f32 %v3767, %v3926
        %v3928 = vpop.f32.mrb[0].mxu0
        %v3929 = vadd.f32 %v3769, %v3928
        %3930 = vdwg.mxu0
        %s3931 = scalar_lea.vmem [#allocation13], 4096
        %v3932 = vld [vmem:[%s3931] sm:$0xff]
        %v3933 = vld [vmem:[%s3931 + $0x8] sm:$0xff]
        %v3934 = vld [vmem:[%s3931 + $0x10] sm:$0xff]
        %v3935 = vld [vmem:[%s3931 + $0x18] sm:$0xff]
        %v3936 = vld [vmem:[%s3931 + $0x20] sm:$0xff]
        %v3937 = vld [vmem:[%s3931 + $0x28] sm:$0xff]
        %v3938 = vld [vmem:[%s3931 + $0x30] sm:$0xff]
        %v3939 = vld [vmem:[%s3931 + $0x38] sm:$0xff]
        %v3940 = vld [vmem:[%s3931 + $0x40] sm:$0xff]
        %v3941 = vld [vmem:[%s3931 + $0x48] sm:$0xff]
        %v3942 = vld [vmem:[%s3931 + $0x50] sm:$0xff]
        %v3943 = vld [vmem:[%s3931 + $0x58] sm:$0xff]
        %v3944 = vld [vmem:[%s3931 + $0x60] sm:$0xff]
        %v3945 = vld [vmem:[%s3931 + $0x68] sm:$0xff]
        %v3946 = vld [vmem:[%s3931 + $0x70] sm:$0xff]
        %v3947 = vld [vmem:[%s3931 + $0x78] sm:$0xff]
        %v3948 = vld [vmem:[%s3931 + $0x80] sm:$0xff]
        %v3949 = vld [vmem:[%s3931 + $0x88] sm:$0xff]
        %v3950 = vld [vmem:[%s3931 + $0x90] sm:$0xff]
        %v3951 = vld [vmem:[%s3931 + $0x98] sm:$0xff]
        %v3952 = vld [vmem:[%s3931 + $0xa0] sm:$0xff]
        %v3953 = vld [vmem:[%s3931 + $0xa8] sm:$0xff]
        %v3954 = vld [vmem:[%s3931 + $0xb0] sm:$0xff]
        %v3955 = vld [vmem:[%s3931 + $0xb8] sm:$0xff]
        %v3956 = vld [vmem:[%s3931 + $0xc0] sm:$0xff]
        %v3957 = vld [vmem:[%s3931 + $0xc8] sm:$0xff]
        %v3958 = vld [vmem:[%s3931 + $0xd0] sm:$0xff]
        %v3959 = vld [vmem:[%s3931 + $0xd8] sm:$0xff]
        %v3960 = vld [vmem:[%s3931 + $0xe0] sm:$0xff]
        %v3961 = vld [vmem:[%s3931 + $0xe8] sm:$0xff]
        %v3962 = vld [vmem:[%s3931 + $0xf0] sm:$0xff]
        %v3963 = vld [vmem:[%s3931 + $0xf8] sm:$0xff]
        %v3964 = vld [vmem:[%s3931 + $0x100] sm:$0xff]
        %v3965 = vld [vmem:[%s3931 + $0x108] sm:$0xff]
        %v3966 = vld [vmem:[%s3931 + $0x110] sm:$0xff]
        %v3967 = vld [vmem:[%s3931 + $0x118] sm:$0xff]
        %v3968 = vld [vmem:[%s3931 + $0x120] sm:$0xff]
        %v3969 = vld [vmem:[%s3931 + $0x128] sm:$0xff]
        %v3970 = vld [vmem:[%s3931 + $0x130] sm:$0xff]
        %v3971 = vld [vmem:[%s3931 + $0x138] sm:$0xff]
        %v3972 = vld [vmem:[%s3931 + $0x140] sm:$0xff]
        %v3973 = vld [vmem:[%s3931 + $0x148] sm:$0xff]
        %v3974 = vld [vmem:[%s3931 + $0x150] sm:$0xff]
        %v3975 = vld [vmem:[%s3931 + $0x158] sm:$0xff]
        %v3976 = vld [vmem:[%s3931 + $0x160] sm:$0xff]
        %v3977 = vld [vmem:[%s3931 + $0x168] sm:$0xff]
        %v3978 = vld [vmem:[%s3931 + $0x170] sm:$0xff]
        %v3979 = vld [vmem:[%s3931 + $0x178] sm:$0xff]
        %v3980 = vld [vmem:[%s3931 + $0x180] sm:$0xff]
        %v3981 = vld [vmem:[%s3931 + $0x188] sm:$0xff]
        %v3982 = vld [vmem:[%s3931 + $0x190] sm:$0xff]
        %v3983 = vld [vmem:[%s3931 + $0x198] sm:$0xff]
        %v3984 = vld [vmem:[%s3931 + $0x1a0] sm:$0xff]
        %v3985 = vld [vmem:[%s3931 + $0x1a8] sm:$0xff]
        %v3986 = vld [vmem:[%s3931 + $0x1b0] sm:$0xff]
        %v3987 = vld [vmem:[%s3931 + $0x1b8] sm:$0xff]
        %v3988 = vld [vmem:[%s3931 + $0x1c0] sm:$0xff]
        %v3989 = vld [vmem:[%s3931 + $0x1c8] sm:$0xff]
        %v3990 = vld [vmem:[%s3931 + $0x1d0] sm:$0xff]
        %v3991 = vld [vmem:[%s3931 + $0x1d8] sm:$0xff]
        %v3992 = vld [vmem:[%s3931 + $0x1e0] sm:$0xff]
        %v3993 = vld [vmem:[%s3931 + $0x1e8] sm:$0xff]
        %v3994 = vld [vmem:[%s3931 + $0x1f0] sm:$0xff]
        %v3995 = vld [vmem:[%s3931 + $0x1f8] sm:$0xff]
        %v3996 = vld [vmem:[%s3931 + $0x200] sm:$0xff]
        %v3997 = vld [vmem:[%s3931 + $0x208] sm:$0xff]
        %v3998 = vld [vmem:[%s3931 + $0x210] sm:$0xff]
        %v3999 = vld [vmem:[%s3931 + $0x218] sm:$0xff]
        %v4000 = vld [vmem:[%s3931 + $0x220] sm:$0xff]
        %v4001 = vld [vmem:[%s3931 + $0x228] sm:$0xff]
        %v4002 = vld [vmem:[%s3931 + $0x230] sm:$0xff]
        %v4003 = vld [vmem:[%s3931 + $0x238] sm:$0xff]
        %v4004 = vld [vmem:[%s3931 + $0x240] sm:$0xff]
        %v4005 = vld [vmem:[%s3931 + $0x248] sm:$0xff]
        %v4006 = vld [vmem:[%s3931 + $0x250] sm:$0xff]
        %v4007 = vld [vmem:[%s3931 + $0x258] sm:$0xff]
        %v4008 = vld [vmem:[%s3931 + $0x260] sm:$0xff]
        %v4009 = vld [vmem:[%s3931 + $0x268] sm:$0xff]
        %v4010 = vld [vmem:[%s3931 + $0x270] sm:$0xff]
        %v4011 = vld [vmem:[%s3931 + $0x278] sm:$0xff]
        %v4012 = vld [vmem:[%s3931 + $0x280] sm:$0xff]
        %v4013 = vld [vmem:[%s3931 + $0x288] sm:$0xff]
        %v4014 = vld [vmem:[%s3931 + $0x290] sm:$0xff]
        %v4015 = vld [vmem:[%s3931 + $0x298] sm:$0xff]
        %v4016 = vld [vmem:[%s3931 + $0x2a0] sm:$0xff]
        %v4017 = vld [vmem:[%s3931 + $0x2a8] sm:$0xff]
        %v4018 = vld [vmem:[%s3931 + $0x2b0] sm:$0xff]
        %v4019 = vld [vmem:[%s3931 + $0x2b8] sm:$0xff]
        %v4020 = vld [vmem:[%s3931 + $0x2c0] sm:$0xff]
        %v4021 = vld [vmem:[%s3931 + $0x2c8] sm:$0xff]
        %v4022 = vld [vmem:[%s3931 + $0x2d0] sm:$0xff]
        %v4023 = vld [vmem:[%s3931 + $0x2d8] sm:$0xff]
        %v4024 = vld [vmem:[%s3931 + $0x2e0] sm:$0xff]
        %v4025 = vld [vmem:[%s3931 + $0x2e8] sm:$0xff]
        %v4026 = vld [vmem:[%s3931 + $0x2f0] sm:$0xff]
        %v4027 = vld [vmem:[%s3931 + $0x2f8] sm:$0xff]
        %v4028 = vld [vmem:[%s3931 + $0x300] sm:$0xff]
        %v4029 = vld [vmem:[%s3931 + $0x308] sm:$0xff]
        %v4030 = vld [vmem:[%s3931 + $0x310] sm:$0xff]
        %v4031 = vld [vmem:[%s3931 + $0x318] sm:$0xff]
        %v4032 = vld [vmem:[%s3931 + $0x320] sm:$0xff]
        %v4033 = vld [vmem:[%s3931 + $0x328] sm:$0xff]
        %v4034 = vld [vmem:[%s3931 + $0x330] sm:$0xff]
        %v4035 = vld [vmem:[%s3931 + $0x338] sm:$0xff]
        %v4036 = vld [vmem:[%s3931 + $0x340] sm:$0xff]
        %v4037 = vld [vmem:[%s3931 + $0x348] sm:$0xff]
        %v4038 = vld [vmem:[%s3931 + $0x350] sm:$0xff]
        %v4039 = vld [vmem:[%s3931 + $0x358] sm:$0xff]
        %v4040 = vld [vmem:[%s3931 + $0x360] sm:$0xff]
        %v4041 = vld [vmem:[%s3931 + $0x368] sm:$0xff]
        %v4042 = vld [vmem:[%s3931 + $0x370] sm:$0xff]
        %v4043 = vld [vmem:[%s3931 + $0x378] sm:$0xff]
        %v4044 = vld [vmem:[%s3931 + $0x380] sm:$0xff]
        %v4045 = vld [vmem:[%s3931 + $0x388] sm:$0xff]
        %v4046 = vld [vmem:[%s3931 + $0x390] sm:$0xff]
        %v4047 = vld [vmem:[%s3931 + $0x398] sm:$0xff]
        %v4048 = vld [vmem:[%s3931 + $0x3a0] sm:$0xff]
        %v4049 = vld [vmem:[%s3931 + $0x3a8] sm:$0xff]
        %v4050 = vld [vmem:[%s3931 + $0x3b0] sm:$0xff]
        %v4051 = vld [vmem:[%s3931 + $0x3b8] sm:$0xff]
        %v4052 = vld [vmem:[%s3931 + $0x3c0] sm:$0xff]
        %v4053 = vld [vmem:[%s3931 + $0x3c8] sm:$0xff]
        %v4054 = vld [vmem:[%s3931 + $0x3d0] sm:$0xff]
        %v4055 = vld [vmem:[%s3931 + $0x3d8] sm:$0xff]
        %v4056 = vld [vmem:[%s3931 + $0x3e0] sm:$0xff]
        %v4057 = vld [vmem:[%s3931 + $0x3e8] sm:$0xff]
        %v4058 = vld [vmem:[%s3931 + $0x3f0] sm:$0xff]
        %v4059 = vld [vmem:[%s3931 + $0x3f8] sm:$0xff]
        %v4060 = vld [vmem:[%s3931 + $0x400] sm:$0xff]
        %v4061 = vld [vmem:[%s3931 + $0x408] sm:$0xff]
        %v4062 = vld [vmem:[%s3931 + $0x410] sm:$0xff]
        %v4063 = vld [vmem:[%s3931 + $0x418] sm:$0xff]
        %v4064 = vld [vmem:[%s3931 + $0x420] sm:$0xff]
        %v4065 = vld [vmem:[%s3931 + $0x428] sm:$0xff]
        %v4066 = vld [vmem:[%s3931 + $0x430] sm:$0xff]
        %v4067 = vld [vmem:[%s3931 + $0x438] sm:$0xff]
        %v4068 = vld [vmem:[%s3931 + $0x440] sm:$0xff]
        %v4069 = vld [vmem:[%s3931 + $0x448] sm:$0xff]
        %v4070 = vld [vmem:[%s3931 + $0x450] sm:$0xff]
        %v4071 = vld [vmem:[%s3931 + $0x458] sm:$0xff]
        %v4072 = vld [vmem:[%s3931 + $0x460] sm:$0xff]
        %v4073 = vld [vmem:[%s3931 + $0x468] sm:$0xff]
        %v4074 = vld [vmem:[%s3931 + $0x470] sm:$0xff]
        %v4075 = vld [vmem:[%s3931 + $0x478] sm:$0xff]
        %v4076 = vld [vmem:[%s3931 + $0x480] sm:$0xff]
        %v4077 = vld [vmem:[%s3931 + $0x488] sm:$0xff]
        %v4078 = vld [vmem:[%s3931 + $0x490] sm:$0xff]
        %v4079 = vld [vmem:[%s3931 + $0x498] sm:$0xff]
        %v4080 = vld [vmem:[%s3931 + $0x4a0] sm:$0xff]
        %v4081 = vld [vmem:[%s3931 + $0x4a8] sm:$0xff]
        %v4082 = vld [vmem:[%s3931 + $0x4b0] sm:$0xff]
        %v4083 = vld [vmem:[%s3931 + $0x4b8] sm:$0xff]
        %v4084 = vld [vmem:[%s3931 + $0x4c0] sm:$0xff]
        %v4085 = vld [vmem:[%s3931 + $0x4c8] sm:$0xff]
        %v4086 = vld [vmem:[%s3931 + $0x4d0] sm:$0xff]
        %v4087 = vld [vmem:[%s3931 + $0x4d8] sm:$0xff]
        %v4088 = vld [vmem:[%s3931 + $0x4e0] sm:$0xff]
        %v4089 = vld [vmem:[%s3931 + $0x4e8] sm:$0xff]
        %v4090 = vld [vmem:[%s3931 + $0x4f0] sm:$0xff]
        %v4091 = vld [vmem:[%s3931 + $0x4f8] sm:$0xff]
        %v4092 = vld [vmem:[%s3931 + $0x500] sm:$0xff]
        %v4093 = vld [vmem:[%s3931 + $0x508] sm:$0xff]
        %v4094 = vld [vmem:[%s3931 + $0x510] sm:$0xff]
        %v4095 = vld [vmem:[%s3931 + $0x518] sm:$0xff]
        %v4096 = vld [vmem:[%s3931 + $0x520] sm:$0xff]
        %v4097 = vld [vmem:[%s3931 + $0x528] sm:$0xff]
        %v4098 = vld [vmem:[%s3931 + $0x530] sm:$0xff]
        %v4099 = vld [vmem:[%s3931 + $0x538] sm:$0xff]
        %v4100 = vld [vmem:[%s3931 + $0x540] sm:$0xff]
        %v4101 = vld [vmem:[%s3931 + $0x548] sm:$0xff]
        %v4102 = vld [vmem:[%s3931 + $0x550] sm:$0xff]
        %v4103 = vld [vmem:[%s3931 + $0x558] sm:$0xff]
        %v4104 = vld [vmem:[%s3931 + $0x560] sm:$0xff]
        %v4105 = vld [vmem:[%s3931 + $0x568] sm:$0xff]
        %v4106 = vld [vmem:[%s3931 + $0x570] sm:$0xff]
        %v4107 = vld [vmem:[%s3931 + $0x578] sm:$0xff]
        %v4108 = vld [vmem:[%s3931 + $0x580] sm:$0xff]
        %v4109 = vld [vmem:[%s3931 + $0x588] sm:$0xff]
        %v4110 = vld [vmem:[%s3931 + $0x590] sm:$0xff]
        %v4111 = vld [vmem:[%s3931 + $0x598] sm:$0xff]
        %v4112 = vld [vmem:[%s3931 + $0x5a0] sm:$0xff]
        %v4113 = vld [vmem:[%s3931 + $0x5a8] sm:$0xff]
        %v4114 = vld [vmem:[%s3931 + $0x5b0] sm:$0xff]
        %v4115 = vld [vmem:[%s3931 + $0x5b8] sm:$0xff]
        %v4116 = vld [vmem:[%s3931 + $0x5c0] sm:$0xff]
        %v4117 = vld [vmem:[%s3931 + $0x5c8] sm:$0xff]
        %v4118 = vld [vmem:[%s3931 + $0x5d0] sm:$0xff]
        %v4119 = vld [vmem:[%s3931 + $0x5d8] sm:$0xff]
        %v4120 = vld [vmem:[%s3931 + $0x5e0] sm:$0xff]
        %v4121 = vld [vmem:[%s3931 + $0x5e8] sm:$0xff]
        %v4122 = vld [vmem:[%s3931 + $0x5f0] sm:$0xff]
        %v4123 = vld [vmem:[%s3931 + $0x5f8] sm:$0xff]
        %v4124 = vld [vmem:[%s3931 + $0x600] sm:$0xff]
        %v4125 = vld [vmem:[%s3931 + $0x608] sm:$0xff]
        %v4126 = vld [vmem:[%s3931 + $0x610] sm:$0xff]
        %v4127 = vld [vmem:[%s3931 + $0x618] sm:$0xff]
        %v4128 = vld [vmem:[%s3931 + $0x620] sm:$0xff]
        %v4129 = vld [vmem:[%s3931 + $0x628] sm:$0xff]
        %v4130 = vld [vmem:[%s3931 + $0x630] sm:$0xff]
        %v4131 = vld [vmem:[%s3931 + $0x638] sm:$0xff]
        %v4132 = vld [vmem:[%s3931 + $0x640] sm:$0xff]
        %v4133 = vld [vmem:[%s3931 + $0x648] sm:$0xff]
        %v4134 = vld [vmem:[%s3931 + $0x650] sm:$0xff]
        %v4135 = vld [vmem:[%s3931 + $0x658] sm:$0xff]
        %v4136 = vld [vmem:[%s3931 + $0x660] sm:$0xff]
        %v4137 = vld [vmem:[%s3931 + $0x668] sm:$0xff]
        %v4138 = vld [vmem:[%s3931 + $0x670] sm:$0xff]
        %v4139 = vld [vmem:[%s3931 + $0x678] sm:$0xff]
        %v4140 = vld [vmem:[%s3931 + $0x680] sm:$0xff]
        %v4141 = vld [vmem:[%s3931 + $0x688] sm:$0xff]
        %v4142 = vld [vmem:[%s3931 + $0x690] sm:$0xff]
        %v4143 = vld [vmem:[%s3931 + $0x698] sm:$0xff]
        %v4144 = vld [vmem:[%s3931 + $0x6a0] sm:$0xff]
        %v4145 = vld [vmem:[%s3931 + $0x6a8] sm:$0xff]
        %v4146 = vld [vmem:[%s3931 + $0x6b0] sm:$0xff]
        %v4147 = vld [vmem:[%s3931 + $0x6b8] sm:$0xff]
        %v4148 = vld [vmem:[%s3931 + $0x6c0] sm:$0xff]
        %v4149 = vld [vmem:[%s3931 + $0x6c8] sm:$0xff]
        %v4150 = vld [vmem:[%s3931 + $0x6d0] sm:$0xff]
        %v4151 = vld [vmem:[%s3931 + $0x6d8] sm:$0xff]
        %v4152 = vld [vmem:[%s3931 + $0x6e0] sm:$0xff]
        %v4153 = vld [vmem:[%s3931 + $0x6e8] sm:$0xff]
        %v4154 = vld [vmem:[%s3931 + $0x6f0] sm:$0xff]
        %v4155 = vld [vmem:[%s3931 + $0x6f8] sm:$0xff]
        %v4156 = vld [vmem:[%s3931 + $0x700] sm:$0xff]
        %v4157 = vld [vmem:[%s3931 + $0x708] sm:$0xff]
        %v4158 = vld [vmem:[%s3931 + $0x710] sm:$0xff]
        %v4159 = vld [vmem:[%s3931 + $0x718] sm:$0xff]
        %v4160 = vld [vmem:[%s3931 + $0x720] sm:$0xff]
        %v4161 = vld [vmem:[%s3931 + $0x728] sm:$0xff]
        %v4162 = vld [vmem:[%s3931 + $0x730] sm:$0xff]
        %v4163 = vld [vmem:[%s3931 + $0x738] sm:$0xff]
        %v4164 = vld [vmem:[%s3931 + $0x740] sm:$0xff]
        %v4165 = vld [vmem:[%s3931 + $0x748] sm:$0xff]
        %v4166 = vld [vmem:[%s3931 + $0x750] sm:$0xff]
        %v4167 = vld [vmem:[%s3931 + $0x758] sm:$0xff]
        %v4168 = vld [vmem:[%s3931 + $0x760] sm:$0xff]
        %v4169 = vld [vmem:[%s3931 + $0x768] sm:$0xff]
        %v4170 = vld [vmem:[%s3931 + $0x770] sm:$0xff]
        %v4171 = vld [vmem:[%s3931 + $0x778] sm:$0xff]
        %v4172 = vld [vmem:[%s3931 + $0x780] sm:$0xff]
        %v4173 = vld [vmem:[%s3931 + $0x788] sm:$0xff]
        %v4174 = vld [vmem:[%s3931 + $0x790] sm:$0xff]
        %v4175 = vld [vmem:[%s3931 + $0x798] sm:$0xff]
        %v4176 = vld [vmem:[%s3931 + $0x7a0] sm:$0xff]
        %v4177 = vld [vmem:[%s3931 + $0x7a8] sm:$0xff]
        %v4178 = vld [vmem:[%s3931 + $0x7b0] sm:$0xff]
        %v4179 = vld [vmem:[%s3931 + $0x7b8] sm:$0xff]
        %v4180 = vld [vmem:[%s3931 + $0x7c0] sm:$0xff]
        %v4181 = vld [vmem:[%s3931 + $0x7c8] sm:$0xff]
        %v4182 = vld [vmem:[%s3931 + $0x7d0] sm:$0xff]
        %v4183 = vld [vmem:[%s3931 + $0x7d8] sm:$0xff]
        %v4184 = vld [vmem:[%s3931 + $0x7e0] sm:$0xff]
        %v4185 = vld [vmem:[%s3931 + $0x7e8] sm:$0xff]
        %v4186 = vld [vmem:[%s3931 + $0x7f0] sm:$0xff]
        %v4187 = vld [vmem:[%s3931 + $0x7f8] sm:$0xff]
        %4188 = vmatprep.subr.mxu0 %v3933
        %4189 = vmatpush1.msra.mxu0 %v3932
        %4190 = vmatprep.subr.mxu0 %v3937
        %4191 = vmatpush1.msra.mxu0 %v3936
        %4192 = vmatprep.subr.mxu0 %v3941
        %4193 = vmatpush1.msra.mxu0 %v3940
        %4194 = vmatprep.subr.mxu0 %v3945
        %4195 = vmatpush1.msra.mxu0 %v3944
        %4196 = vmatprep.subr.mxu0 %v3949
        %4197 = vmatpush1.msra.mxu0 %v3948
        %4198 = vmatprep.subr.mxu0 %v3953
        %4199 = vmatpush1.msra.mxu0 %v3952
        %4200 = vmatprep.subr.mxu0 %v3957
        %4201 = vmatpush1.msra.mxu0 %v3956
        %4202 = vmatprep.subr.mxu0 %v3961
        %4203 = vmatpush1.msra.mxu0 %v3960
        %4204 = vmatprep.subr.mxu0 %v3965
        %4205 = vmatpush1.msra.mxu0 %v3964
        %4206 = vmatprep.subr.mxu0 %v3969
        %4207 = vmatpush1.msra.mxu0 %v3968
        %4208 = vmatprep.subr.mxu0 %v3973
        %4209 = vmatpush1.msra.mxu0 %v3972
        %4210 = vmatprep.subr.mxu0 %v3977
        %4211 = vmatpush1.msra.mxu0 %v3976
        %4212 = vmatprep.subr.mxu0 %v3981
        %4213 = vmatpush1.msra.mxu0 %v3980
        %4214 = vmatprep.subr.mxu0 %v3985
        %4215 = vmatpush1.msra.mxu0 %v3984
        %4216 = vmatprep.subr.mxu0 %v3989
        %4217 = vmatpush1.msra.mxu0 %v3988
        %4218 = vmatprep.subr.mxu0 %v3993
        %4219 = vmatpush1.msra.mxu0 %v3992
        %4220 = vmatprep.subr.mxu0 %v3997
        %4221 = vmatpush1.msra.mxu0 %v3996
        %4222 = vmatprep.subr.mxu0 %v4001
        %4223 = vmatpush1.msra.mxu0 %v4000
        %4224 = vmatprep.subr.mxu0 %v4005
        %4225 = vmatpush1.msra.mxu0 %v4004
        %4226 = vmatprep.subr.mxu0 %v4009
        %4227 = vmatpush1.msra.mxu0 %v4008
        %4228 = vmatprep.subr.mxu0 %v4013
        %4229 = vmatpush1.msra.mxu0 %v4012
        %4230 = vmatprep.subr.mxu0 %v4017
        %4231 = vmatpush1.msra.mxu0 %v4016
        %4232 = vmatprep.subr.mxu0 %v4021
        %4233 = vmatpush1.msra.mxu0 %v4020
        %4234 = vmatprep.subr.mxu0 %v4025
        %4235 = vmatpush1.msra.mxu0 %v4024
        %4236 = vmatprep.subr.mxu0 %v4029
        %4237 = vmatpush1.msra.mxu0 %v4028
        %4238 = vmatprep.subr.mxu0 %v4033
        %4239 = vmatpush1.msra.mxu0 %v4032
        %4240 = vmatprep.subr.mxu0 %v4037
        %4241 = vmatpush1.msra.mxu0 %v4036
        %4242 = vmatprep.subr.mxu0 %v4041
        %4243 = vmatpush1.msra.mxu0 %v4040
        %4244 = vmatprep.subr.mxu0 %v4045
        %4245 = vmatpush1.msra.mxu0 %v4044
        %4246 = vmatprep.subr.mxu0 %v4049
        %4247 = vmatpush1.msra.mxu0 %v4048
        %4248 = vmatprep.subr.mxu0 %v4053
        %4249 = vmatpush1.msra.mxu0 %v4052
        %4250 = vmatprep.subr.mxu0 %v4057
        %4251 = vmatpush1.msra.mxu0 %v4056
        %4252 = vmatprep.mubr.f32.mxu0 %v2522
        %4253 = vmatmul.mubr.f32.gmra.mrb[0].mxu0 %v2521
        %v4254 = vpop.f32.mrb[0].mxu0
        %v4255 = vadd.f32 0.0, %v4254
        %v4256 = vpop.f32.mrb[0].mxu0
        %v4257 = vadd.f32 0.0, %v4256
        %4258 = vdwg.mxu0
        %4259 = vmatprep.subr.mxu0 %v4061
        %4260 = vmatpush1.msra.mxu0 %v4060
        %4261 = vmatprep.subr.mxu0 %v4065
        %4262 = vmatpush1.msra.mxu0 %v4064
        %4263 = vmatprep.subr.mxu0 %v4069
        %4264 = vmatpush1.msra.mxu0 %v4068
        %4265 = vmatprep.subr.mxu0 %v4073
        %4266 = vmatpush1.msra.mxu0 %v4072
        %4267 = vmatprep.subr.mxu0 %v4077
        %4268 = vmatpush1.msra.mxu0 %v4076
        %4269 = vmatprep.subr.mxu0 %v4081
        %4270 = vmatpush1.msra.mxu0 %v4080
        %4271 = vmatprep.subr.mxu0 %v4085
        %4272 = vmatpush1.msra.mxu0 %v4084
        %4273 = vmatprep.subr.mxu0 %v4089
        %4274 = vmatpush1.msra.mxu0 %v4088
        %4275 = vmatprep.subr.mxu0 %v4093
        %4276 = vmatpush1.msra.mxu0 %v4092
        %4277 = vmatprep.subr.mxu0 %v4097
        %4278 = vmatpush1.msra.mxu0 %v4096
        %4279 = vmatprep.subr.mxu0 %v4101
        %4280 = vmatpush1.msra.mxu0 %v4100
        %4281 = vmatprep.subr.mxu0 %v4105
        %4282 = vmatpush1.msra.mxu0 %v4104
        %4283 = vmatprep.subr.mxu0 %v4109
        %4284 = vmatpush1.msra.mxu0 %v4108
        %4285 = vmatprep.subr.mxu0 %v4113
        %4286 = vmatpush1.msra.mxu0 %v4112
        %4287 = vmatprep.subr.mxu0 %v4117
        %4288 = vmatpush1.msra.mxu0 %v4116
        %4289 = vmatprep.subr.mxu0 %v4121
        %4290 = vmatpush1.msra.mxu0 %v4120
        %4291 = vmatprep.subr.mxu0 %v4125
        %4292 = vmatpush1.msra.mxu0 %v4124
        %4293 = vmatprep.subr.mxu0 %v4129
        %4294 = vmatpush1.msra.mxu0 %v4128
        %4295 = vmatprep.subr.mxu0 %v4133
        %4296 = vmatpush1.msra.mxu0 %v4132
        %4297 = vmatprep.subr.mxu0 %v4137
        %4298 = vmatpush1.msra.mxu0 %v4136
        %4299 = vmatprep.subr.mxu0 %v4141
        %4300 = vmatpush1.msra.mxu0 %v4140
        %4301 = vmatprep.subr.mxu0 %v4145
        %4302 = vmatpush1.msra.mxu0 %v4144
        %4303 = vmatprep.subr.mxu0 %v4149
        %4304 = vmatpush1.msra.mxu0 %v4148
        %4305 = vmatprep.subr.mxu0 %v4153
        %4306 = vmatpush1.msra.mxu0 %v4152
        %4307 = vmatprep.subr.mxu0 %v4157
        %4308 = vmatpush1.msra.mxu0 %v4156
        %4309 = vmatprep.subr.mxu0 %v4161
        %4310 = vmatpush1.msra.mxu0 %v4160
        %4311 = vmatprep.subr.mxu0 %v4165
        %4312 = vmatpush1.msra.mxu0 %v4164
        %4313 = vmatprep.subr.mxu0 %v4169
        %4314 = vmatpush1.msra.mxu0 %v4168
        %4315 = vmatprep.subr.mxu0 %v4173
        %4316 = vmatpush1.msra.mxu0 %v4172
        %4317 = vmatprep.subr.mxu0 %v4177
        %4318 = vmatpush1.msra.mxu0 %v4176
        %4319 = vmatprep.subr.mxu0 %v4181
        %4320 = vmatpush1.msra.mxu0 %v4180
        %4321 = vmatprep.subr.mxu0 %v4185
        %4322 = vmatpush1.msra.mxu0 %v4184
        %4323 = vmatprep.mubr.f32.mxu0 %v2524
        %4324 = vmatmul.mubr.f32.gmra.mrb[0].mxu0 %v2523
        %v4325 = vpop.f32.mrb[0].mxu0
        %v4326 = vadd.f32 %v4255, %v4325
        %v4327 = vpop.f32.mrb[0].mxu0
        %v4328 = vadd.f32 %v4257, %v4327
        %4329 = vdwg.mxu0
        %4330 = vmatprep.subr.mxu0 %v3935
        %4331 = vmatpush1.msra.mxu0 %v3934
        %4332 = vmatprep.subr.mxu0 %v3939
        %4333 = vmatpush1.msra.mxu0 %v3938
        %4334 = vmatprep.subr.mxu0 %v3943
        %4335 = vmatpush1.msra.mxu0 %v3942
        %4336 = vmatprep.subr.mxu0 %v3947
        %4337 = vmatpush1.msra.mxu0 %v3946
        %4338 = vmatprep.subr.mxu0 %v3951
        %4339 = vmatpush1.msra.mxu0 %v3950
        %4340 = vmatprep.subr.mxu0 %v3955
        %4341 = vmatpush1.msra.mxu0 %v3954
        %4342 = vmatprep.subr.mxu0 %v3959
        %4343 = vmatpush1.msra.mxu0 %v3958
        %4344 = vmatprep.subr.mxu0 %v3963
        %4345 = vmatpush1.msra.mxu0 %v3962
        %4346 = vmatprep.subr.mxu0 %v3967
        %4347 = vmatpush1.msra.mxu0 %v3966
        %4348 = vmatprep.subr.mxu0 %v3971
        %4349 = vmatpush1.msra.mxu0 %v3970
        %4350 = vmatprep.subr.mxu0 %v3975
        %4351 = vmatpush1.msra.mxu0 %v3974
        %4352 = vmatprep.subr.mxu0 %v3979
        %4353 = vmatpush1.msra.mxu0 %v3978
        %4354 = vmatprep.subr.mxu0 %v3983
        %4355 = vmatpush1.msra.mxu0 %v3982
        %4356 = vmatprep.subr.mxu0 %v3987
        %4357 = vmatpush1.msra.mxu0 %v3986
        %4358 = vmatprep.subr.mxu0 %v3991
        %4359 = vmatpush1.msra.mxu0 %v3990
        %4360 = vmatprep.subr.mxu0 %v3995
        %4361 = vmatpush1.msra.mxu0 %v3994
        %4362 = vmatprep.subr.mxu0 %v3999
        %4363 = vmatpush1.msra.mxu0 %v3998
        %4364 = vmatprep.subr.mxu0 %v4003
        %4365 = vmatpush1.msra.mxu0 %v4002
        %4366 = vmatprep.subr.mxu0 %v4007
        %4367 = vmatpush1.msra.mxu0 %v4006
        %4368 = vmatprep.subr.mxu0 %v4011
        %4369 = vmatpush1.msra.mxu0 %v4010
        %4370 = vmatprep.subr.mxu0 %v4015
        %4371 = vmatpush1.msra.mxu0 %v4014
        %4372 = vmatprep.subr.mxu0 %v4019
        %4373 = vmatpush1.msra.mxu0 %v4018
        %4374 = vmatprep.subr.mxu0 %v4023
        %4375 = vmatpush1.msra.mxu0 %v4022
        %4376 = vmatprep.subr.mxu0 %v4027
        %4377 = vmatpush1.msra.mxu0 %v4026
        %4378 = vmatprep.subr.mxu0 %v4031
        %4379 = vmatpush1.msra.mxu0 %v4030
        %4380 = vmatprep.subr.mxu0 %v4035
        %4381 = vmatpush1.msra.mxu0 %v4034
        %4382 = vmatprep.subr.mxu0 %v4039
        %4383 = vmatpush1.msra.mxu0 %v4038
        %4384 = vmatprep.subr.mxu0 %v4043
        %4385 = vmatpush1.msra.mxu0 %v4042
        %4386 = vmatprep.subr.mxu0 %v4047
        %4387 = vmatpush1.msra.mxu0 %v4046
        %4388 = vmatprep.subr.mxu0 %v4051
        %4389 = vmatpush1.msra.mxu0 %v4050
        %4390 = vmatprep.subr.mxu0 %v4055
        %4391 = vmatpush1.msra.mxu0 %v4054
        %4392 = vmatprep.subr.mxu0 %v4059
        %4393 = vmatpush1.msra.mxu0 %v4058
        %4394 = vmatprep.mubr.f32.mxu0 %v2522
        %4395 = vmatmul.mubr.f32.gmra.mrb[0].mxu0 %v2521
        %v4396 = vpop.f32.mrb[0].mxu0
        %v4397 = vadd.f32 0.0, %v4396
        %v4398 = vpop.f32.mrb[0].mxu0
        %v4399 = vadd.f32 0.0, %v4398
        %4400 = vdwg.mxu0
        %4401 = vmatprep.subr.mxu0 %v4063
        %4402 = vmatpush1.msra.mxu0 %v4062
        %4403 = vmatprep.subr.mxu0 %v4067
        %4404 = vmatpush1.msra.mxu0 %v4066
        %4405 = vmatprep.subr.mxu0 %v4071
        %4406 = vmatpush1.msra.mxu0 %v4070
        %4407 = vmatprep.subr.mxu0 %v4075
        %4408 = vmatpush1.msra.mxu0 %v4074
        %4409 = vmatprep.subr.mxu0 %v4079
        %4410 = vmatpush1.msra.mxu0 %v4078
        %4411 = vmatprep.subr.mxu0 %v4083
        %4412 = vmatpush1.msra.mxu0 %v4082
        %4413 = vmatprep.subr.mxu0 %v4087
        %4414 = vmatpush1.msra.mxu0 %v4086
        %4415 = vmatprep.subr.mxu0 %v4091
        %4416 = vmatpush1.msra.mxu0 %v4090
        %4417 = vmatprep.subr.mxu0 %v4095
        %4418 = vmatpush1.msra.mxu0 %v4094
        %4419 = vmatprep.subr.mxu0 %v4099
        %4420 = vmatpush1.msra.mxu0 %v4098
        %4421 = vmatprep.subr.mxu0 %v4103
        %4422 = vmatpush1.msra.mxu0 %v4102
        %4423 = vmatprep.subr.mxu0 %v4107
        %4424 = vmatpush1.msra.mxu0 %v4106
        %4425 = vmatprep.subr.mxu0 %v4111
        %4426 = vmatpush1.msra.mxu0 %v4110
        %4427 = vmatprep.subr.mxu0 %v4115
        %4428 = vmatpush1.msra.mxu0 %v4114
        %4429 = vmatprep.subr.mxu0 %v4119
        %4430 = vmatpush1.msra.mxu0 %v4118
        %4431 = vmatprep.subr.mxu0 %v4123
        %4432 = vmatpush1.msra.mxu0 %v4122
        %4433 = vmatprep.subr.mxu0 %v4127
        %4434 = vmatpush1.msra.mxu0 %v4126
        %4435 = vmatprep.subr.mxu0 %v4131
        %4436 = vmatpush1.msra.mxu0 %v4130
        %4437 = vmatprep.subr.mxu0 %v4135
        %4438 = vmatpush1.msra.mxu0 %v4134
        %4439 = vmatprep.subr.mxu0 %v4139
        %4440 = vmatpush1.msra.mxu0 %v4138
        %4441 = vmatprep.subr.mxu0 %v4143
        %4442 = vmatpush1.msra.mxu0 %v4142
        %4443 = vmatprep.subr.mxu0 %v4147
        %4444 = vmatpush1.msra.mxu0 %v4146
        %4445 = vmatprep.subr.mxu0 %v4151
        %4446 = vmatpush1.msra.mxu0 %v4150
        %4447 = vmatprep.subr.mxu0 %v4155
        %4448 = vmatpush1.msra.mxu0 %v4154
        %4449 = vmatprep.subr.mxu0 %v4159
        %4450 = vmatpush1.msra.mxu0 %v4158
        %4451 = vmatprep.subr.mxu0 %v4163
        %4452 = vmatpush1.msra.mxu0 %v4162
        %4453 = vmatprep.subr.mxu0 %v4167
        %4454 = vmatpush1.msra.mxu0 %v4166
        %4455 = vmatprep.subr.mxu0 %v4171
        %4456 = vmatpush1.msra.mxu0 %v4170
        %4457 = vmatprep.subr.mxu0 %v4175
        %4458 = vmatpush1.msra.mxu0 %v4174
        %4459 = vmatprep.subr.mxu0 %v4179
        %4460 = vmatpush1.msra.mxu0 %v4178
        %4461 = vmatprep.subr.mxu0 %v4183
        %4462 = vmatpush1.msra.mxu0 %v4182
        %4463 = vmatprep.subr.mxu0 %v4187
        %4464 = vmatpush1.msra.mxu0 %v4186
        %4465 = vmatprep.mubr.f32.mxu0 %v2524
        %4466 = vmatmul.mubr.f32.gmra.mrb[0].mxu0 %v2523
        %v4467 = vpop.f32.mrb[0].mxu0
        %v4468 = vadd.f32 %v4397, %v4467
        %v4469 = vpop.f32.mrb[0].mxu0
        %v4470 = vadd.f32 %v4399, %v4469
        %4471 = vdwg.mxu0
        %s4472 = scalar_lea.vmem %s6, 32
        %v4473 = vld [vmem:[%s4472] sm:$0xff]
        %v4474 = vld [vmem:[%s4472 + $0x8] sm:$0xff]
        %v4476 = vsel %vm1782, %v4473, 0
        %v4479 = vsel %vm1782, %v4474, 0
        %4481 = vmatprep.subr.mxu0 %v4328
        %4482 = vmatpush1.msra.mxu0 %v4326
        %4483 = vmatprep.subr.mxu0 0.0
        %4484 = vmatpush1.msra.mxu0 0.0
        %4485 = vmatprep.subr.mxu0 0.0
        %4486 = vmatpush1.msra.mxu0 0.0
        %4487 = vmatprep.subr.mxu0 0.0
        %4488 = vmatpush1.msra.mxu0 0.0
        %4489 = vmatprep.subr.mxu0 0.0
        %4490 = vmatpush1.msra.mxu0 0.0
        %4491 = vmatprep.subr.mxu0 0.0
        %4492 = vmatpush1.msra.mxu0 0.0
        %4493 = vmatprep.subr.mxu0 0.0
        %4494 = vmatpush1.msra.mxu0 0.0
        %4495 = vmatprep.subr.mxu0 0.0
        %4496 = vmatpush1.msra.mxu0 0.0
        %4497 = vmatprep.subr.mxu0 0.0
        %4498 = vmatpush1.msra.mxu0 0.0
        %4499 = vmatprep.subr.mxu0 0.0
        %4500 = vmatpush1.msra.mxu0 0.0
        %4501 = vmatprep.subr.mxu0 0.0
        %4502 = vmatpush1.msra.mxu0 0.0
        %4503 = vmatprep.subr.mxu0 0.0
        %4504 = vmatpush1.msra.mxu0 0.0
        %4505 = vmatprep.subr.mxu0 0.0
        %4506 = vmatpush1.msra.mxu0 0.0
        %4507 = vmatprep.subr.mxu0 0.0
        %4508 = vmatpush1.msra.mxu0 0.0
        %4509 = vmatprep.subr.mxu0 0.0
        %4510 = vmatpush1.msra.mxu0 0.0
        %4511 = vmatprep.subr.mxu0 0.0
        %4512 = vmatpush1.msra.mxu0 0.0
        %4513 = vmatprep.subr.mxu0 0.0
        %4514 = vmatpush1.msra.mxu0 0.0
        %4515 = vmatprep.subr.mxu0 0.0
        %4516 = vmatpush1.msra.mxu0 0.0
        %4517 = vmatprep.subr.mxu0 0.0
        %4518 = vmatpush1.msra.mxu0 0.0
        %4519 = vmatprep.subr.mxu0 0.0
        %4520 = vmatpush1.msra.mxu0 0.0
        %4521 = vmatprep.subr.mxu0 0.0
        %4522 = vmatpush1.msra.mxu0 0.0
        %4523 = vmatprep.subr.mxu0 0.0
        %4524 = vmatpush1.msra.mxu0 0.0
        %4525 = vmatprep.subr.mxu0 0.0
        %4526 = vmatpush1.msra.mxu0 0.0
        %4527 = vmatprep.subr.mxu0 0.0
        %4528 = vmatpush1.msra.mxu0 0.0
        %4529 = vmatprep.subr.mxu0 0.0
        %4530 = vmatpush1.msra.mxu0 0.0
        %4531 = vmatprep.subr.mxu0 0.0
        %4532 = vmatpush1.msra.mxu0 0.0
        %4533 = vmatprep.subr.mxu0 0.0
        %4534 = vmatpush1.msra.mxu0 0.0
        %4535 = vmatprep.subr.mxu0 0.0
        %4536 = vmatpush1.msra.mxu0 0.0
        %4537 = vmatprep.subr.mxu0 0.0
        %4538 = vmatpush1.msra.mxu0 0.0
        %4539 = vmatprep.subr.mxu0 0.0
        %4540 = vmatpush1.msra.mxu0 0.0
        %4541 = vmatprep.subr.mxu0 0.0
        %4542 = vmatpush1.msra.mxu0 0.0
        %4543 = vmatprep.subr.mxu0 0.0
        %4544 = vmatpush1.msra.mxu0 0.0
        %4545 = vmatprep.mubr.f32.mxu0 0.0
        %4546 = vmatmul.mubr.f32.gmra.mrb[0].mxu0 %v4476
        %v4547 = vpop.f32.mrb[0].mxu0
        %v4548 = vadd.f32 0.0, %v4547
        %v4549 = vpop.f32.mrb[0].mxu0
        %v4550 = vadd.f32 0.0, %v4549
        %4551 = vmatprep.mubr.f32.mxu0 0.0
        %4552 = vmatmul.mubr.f32.gmra.mrb[0].mxu0 %v4479
        %v4553 = vpop.f32.mrb[0].mxu0
        %v4554 = vadd.f32 0.0, %v4553
        %v4555 = vpop.f32.mrb[0].mxu0
        %v4556 = vadd.f32 0.0, %v4555
        %4557 = vdwg.mxu0
        %4558 = vmatprep.subr.mxu0 %v4470
        %4559 = vmatpush1.msra.mxu0 %v4468
        %4560 = vmatprep.subr.mxu0 0.0
        %4561 = vmatpush1.msra.mxu0 0.0
        %4562 = vmatprep.subr.mxu0 0.0
        %4563 = vmatpush1.msra.mxu0 0.0
        %4564 = vmatprep.subr.mxu0 0.0
        %4565 = vmatpush1.msra.mxu0 0.0
        %4566 = vmatprep.subr.mxu0 0.0
        %4567 = vmatpush1.msra.mxu0 0.0
        %4568 = vmatprep.subr.mxu0 0.0
        %4569 = vmatpush1.msra.mxu0 0.0
        %4570 = vmatprep.subr.mxu0 0.0
        %4571 = vmatpush1.msra.mxu0 0.0
        %4572 = vmatprep.subr.mxu0 0.0
        %4573 = vmatpush1.msra.mxu0 0.0
        %4574 = vmatprep.subr.mxu0 0.0
        %4575 = vmatpush1.msra.mxu0 0.0
        %4576 = vmatprep.subr.mxu0 0.0
        %4577 = vmatpush1.msra.mxu0 0.0
        %4578 = vmatprep.subr.mxu0 0.0
        %4579 = vmatpush1.msra.mxu0 0.0
        %4580 = vmatprep.subr.mxu0 0.0
        %4581 = vmatpush1.msra.mxu0 0.0
        %4582 = vmatprep.subr.mxu0 0.0
        %4583 = vmatpush1.msra.mxu0 0.0
        %4584 = vmatprep.subr.mxu0 0.0
        %4585 = vmatpush1.msra.mxu0 0.0
        %4586 = vmatprep.subr.mxu0 0.0
        %4587 = vmatpush1.msra.mxu0 0.0
        %4588 = vmatprep.subr.mxu0 0.0
        %4589 = vmatpush1.msra.mxu0 0.0
        %4590 = vmatprep.subr.mxu0 0.0
        %4591 = vmatpush1.msra.mxu0 0.0
        %4592 = vmatprep.subr.mxu0 0.0
        %4593 = vmatpush1.msra.mxu0 0.0
        %4594 = vmatprep.subr.mxu0 0.0
        %4595 = vmatpush1.msra.mxu0 0.0
        %4596 = vmatprep.subr.mxu0 0.0
        %4597 = vmatpush1.msra.mxu0 0.0
        %4598 = vmatprep.subr.mxu0 0.0
        %4599 = vmatpush1.msra.mxu0 0.0
        %4600 = vmatprep.subr.mxu0 0.0
        %4601 = vmatpush1.msra.mxu0 0.0
        %4602 = vmatprep.subr.mxu0 0.0
        %4603 = vmatpush1.msra.mxu0 0.0
        %4604 = vmatprep.subr.mxu0 0.0
        %4605 = vmatpush1.msra.mxu0 0.0
        %4606 = vmatprep.subr.mxu0 0.0
        %4607 = vmatpush1.msra.mxu0 0.0
        %4608 = vmatprep.subr.mxu0 0.0
        %4609 = vmatpush1.msra.mxu0 0.0
        %4610 = vmatprep.subr.mxu0 0.0
        %4611 = vmatpush1.msra.mxu0 0.0
        %4612 = vmatprep.subr.mxu0 0.0
        %4613 = vmatpush1.msra.mxu0 0.0
        %4614 = vmatprep.subr.mxu0 0.0
        %4615 = vmatpush1.msra.mxu0 0.0
        %4616 = vmatprep.subr.mxu0 0.0
        %4617 = vmatpush1.msra.mxu0 0.0
        %4618 = vmatprep.subr.mxu0 0.0
        %4619 = vmatpush1.msra.mxu0 0.0
        %4620 = vmatprep.subr.mxu0 0.0
        %4621 = vmatpush1.msra.mxu0 0.0
        %4622 = vmatprep.mubr.f32.mxu0 0.0
        %4623 = vmatmul.mubr.f32.gmra.mrb[0].mxu0 %v4476
        %v4624 = vpop.f32.mrb[0].mxu0
        %v4625 = vadd.f32 0.0, %v4624
        %v4626 = vpop.f32.mrb[0].mxu0
        %v4627 = vadd.f32 0.0, %v4626
        %4628 = vmatprep.mubr.f32.mxu0 0.0
        %4629 = vmatmul.mubr.f32.gmra.mrb[0].mxu0 %v4479
        %v4630 = vpop.f32.mrb[0].mxu0
        %v4631 = vadd.f32 0.0, %v4630
        %v4632 = vpop.f32.mrb[0].mxu0
        %v4633 = vadd.f32 0.0, %v4632
        %4634 = vdwg.mxu0
        %v4635 = vadd.f32 %v3844, %v4548
        %v4636 = vadd.f32 %v3846, %v4550
        %v4637 = vadd.f32 %v3921, %v4625
        %v4638 = vadd.f32 %v3923, %v4627
        %v4639 = vadd.f32 %v3850, %v4554
        %v4640 = vadd.f32 %v3852, %v4556
        %v4641 = vadd.f32 %v3927, %v4631
        %v4642 = vadd.f32 %v3929, %v4633
        %v4643 = vld [vmem:[#allocation14] sm:$0xf]
        %v4645 = vlaneseq
        %v4646 = vshrl.u32 %v4645, 7
        %v4647 = vsub.s32 0, %v4646
        %v4648 = vrot.slane %v4643, %v4647
        %v4649 = vlaneseq
        %v4650 = vshrl.u32 %v4649, 7
        %v4651 = vsub.s32 1, %v4650
        %v4652 = vrot.slane %v4643, %v4651
        %v4653 = vlaneseq
        %v4654 = vshrl.u32 %v4653, 7
        %v4655 = vsub.s32 2, %v4654
        %v4656 = vrot.slane %v4643, %v4655
        %v4657 = vlaneseq
        %v4658 = vshrl.u32 %v4657, 7
        %v4659 = vsub.s32 3, %v4658
        %v4660 = vrot.slane %v4643, %v4659
        %v4665 = vadd.f32 %v4635, %v4648
        %v4666 = vadd.f32 %v4636, %v4652
        %v4667 = vadd.f32 %v4637, %v4656
        %v4668 = vadd.f32 %v4638, %v4660
        %v4669 = vadd.f32 %v4639, %v4648
        %v4670 = vadd.f32 %v4640, %v4652
        %v4671 = vadd.f32 %v4641, %v4656
        %v4672 = vadd.f32 %v4642, %v4660
        %v4673 = vmax.f32 %v4665, 0.0
        %v4674 = vmax.f32 %v4666, 0.0
        %v4675 = vmax.f32 %v4667, 0.0
        %v4676 = vmax.f32 %v4668, 0.0
        %v4677 = vmax.f32 %v4669, 0.0
        %v4678 = vmax.f32 %v4670, 0.0
        %v4679 = vmax.f32 %v4671, 0.0
        %v4680 = vmax.f32 %v4672, 0.0
        %v4681 = vld [vmem:[#allocation16] sm:$0xff]
        %v4682 = vld [vmem:[#allocation16 + $0x8] sm:$0xff]
        %v4683 = vld [vmem:[#allocation16 + $0x10] sm:$0xff]
        %v4684 = vld [vmem:[#allocation16 + $0x18] sm:$0xff]
        %v4685 = vld [vmem:[#allocation16 + $0x20] sm:$0xff]
        %v4686 = vld [vmem:[#allocation16 + $0x28] sm:$0xff]
        %v4687 = vld [vmem:[#allocation16 + $0x30] sm:$0xff]
        %v4688 = vld [vmem:[#allocation16 + $0x38] sm:$0xff]
        %v4689 = vld [vmem:[#allocation16 + $0x40] sm:$0xff]
        %v4690 = vld [vmem:[#allocation16 + $0x48] sm:$0xff]
        %v4691 = vld [vmem:[#allocation16 + $0x50] sm:$0xff]
        %v4692 = vld [vmem:[#allocation16 + $0x58] sm:$0xff]
        %v4693 = vld [vmem:[#allocation16 + $0x60] sm:$0xff]
        %v4694 = vld [vmem:[#allocation16 + $0x68] sm:$0xff]
        %v4695 = vld [vmem:[#allocation16 + $0x70] sm:$0xff]
        %v4696 = vld [vmem:[#allocation16 + $0x78] sm:$0xff]
        %v4697 = vld [vmem:[#allocation16 + $0x80] sm:$0xff]
        %v4698 = vld [vmem:[#allocation16 + $0x88] sm:$0xff]
        %v4699 = vld [vmem:[#allocation16 + $0x90] sm:$0xff]
        %v4700 = vld [vmem:[#allocation16 + $0x98] sm:$0xff]
        %v4701 = vld [vmem:[#allocation16 + $0xa0] sm:$0xff]
        %v4702 = vld [vmem:[#allocation16 + $0xa8] sm:$0xff]
        %v4703 = vld [vmem:[#allocation16 + $0xb0] sm:$0xff]
        %v4704 = vld [vmem:[#allocation16 + $0xb8] sm:$0xff]
        %v4705 = vld [vmem:[#allocation16 + $0xc0] sm:$0xff]
        %v4706 = vld [vmem:[#allocation16 + $0xc8] sm:$0xff]
        %v4707 = vld [vmem:[#allocation16 + $0xd0] sm:$0xff]
        %v4708 = vld [vmem:[#allocation16 + $0xd8] sm:$0xff]
        %v4709 = vld [vmem:[#allocation16 + $0xe0] sm:$0xff]
        %v4710 = vld [vmem:[#allocation16 + $0xe8] sm:$0xff]
        %v4711 = vld [vmem:[#allocation16 + $0xf0] sm:$0xff]
        %v4712 = vld [vmem:[#allocation16 + $0xf8] sm:$0xff]
        %v4713 = vld [vmem:[#allocation16 + $0x100] sm:$0xff]
        %v4714 = vld [vmem:[#allocation16 + $0x108] sm:$0xff]
        %v4715 = vld [vmem:[#allocation16 + $0x110] sm:$0xff]
        %v4716 = vld [vmem:[#allocation16 + $0x118] sm:$0xff]
        %v4717 = vld [vmem:[#allocation16 + $0x120] sm:$0xff]
        %v4718 = vld [vmem:[#allocation16 + $0x128] sm:$0xff]
        %v4719 = vld [vmem:[#allocation16 + $0x130] sm:$0xff]
        %v4720 = vld [vmem:[#allocation16 + $0x138] sm:$0xff]
        %v4721 = vld [vmem:[#allocation16 + $0x140] sm:$0xff]
        %v4722 = vld [vmem:[#allocation16 + $0x148] sm:$0xff]
        %v4723 = vld [vmem:[#allocation16 + $0x150] sm:$0xff]
        %v4724 = vld [vmem:[#allocation16 + $0x158] sm:$0xff]
        %v4725 = vld [vmem:[#allocation16 + $0x160] sm:$0xff]
        %v4726 = vld [vmem:[#allocation16 + $0x168] sm:$0xff]
        %v4727 = vld [vmem:[#allocation16 + $0x170] sm:$0xff]
        %v4728 = vld [vmem:[#allocation16 + $0x178] sm:$0xff]
        %v4729 = vld [vmem:[#allocation16 + $0x180] sm:$0xff]
        %v4730 = vld [vmem:[#allocation16 + $0x188] sm:$0xff]
        %v4731 = vld [vmem:[#allocation16 + $0x190] sm:$0xff]
        %v4732 = vld [vmem:[#allocation16 + $0x198] sm:$0xff]
        %v4733 = vld [vmem:[#allocation16 + $0x1a0] sm:$0xff]
        %v4734 = vld [vmem:[#allocation16 + $0x1a8] sm:$0xff]
        %v4735 = vld [vmem:[#allocation16 + $0x1b0] sm:$0xff]
        %v4736 = vld [vmem:[#allocation16 + $0x1b8] sm:$0xff]
        %v4737 = vld [vmem:[#allocation16 + $0x1c0] sm:$0xff]
        %v4738 = vld [vmem:[#allocation16 + $0x1c8] sm:$0xff]
        %v4739 = vld [vmem:[#allocation16 + $0x1d0] sm:$0xff]
        %v4740 = vld [vmem:[#allocation16 + $0x1d8] sm:$0xff]
        %v4741 = vld [vmem:[#allocation16 + $0x1e0] sm:$0xff]
        %v4742 = vld [vmem:[#allocation16 + $0x1e8] sm:$0xff]
        %v4743 = vld [vmem:[#allocation16 + $0x1f0] sm:$0xff]
        %v4744 = vld [vmem:[#allocation16 + $0x1f8] sm:$0xff]
        %v4745 = vld [vmem:[#allocation16 + $0x200] sm:$0xff]
        %v4746 = vld [vmem:[#allocation16 + $0x208] sm:$0xff]
        %v4747 = vld [vmem:[#allocation16 + $0x210] sm:$0xff]
        %v4748 = vld [vmem:[#allocation16 + $0x218] sm:$0xff]
        %v4749 = vld [vmem:[#allocation16 + $0x220] sm:$0xff]
        %v4750 = vld [vmem:[#allocation16 + $0x228] sm:$0xff]
        %v4751 = vld [vmem:[#allocation16 + $0x230] sm:$0xff]
        %v4752 = vld [vmem:[#allocation16 + $0x238] sm:$0xff]
        %v4753 = vld [vmem:[#allocation16 + $0x240] sm:$0xff]
        %v4754 = vld [vmem:[#allocation16 + $0x248] sm:$0xff]
        %v4755 = vld [vmem:[#allocation16 + $0x250] sm:$0xff]
        %v4756 = vld [vmem:[#allocation16 + $0x258] sm:$0xff]
        %v4757 = vld [vmem:[#allocation16 + $0x260] sm:$0xff]
        %v4758 = vld [vmem:[#allocation16 + $0x268] sm:$0xff]
        %v4759 = vld [vmem:[#allocation16 + $0x270] sm:$0xff]
        %v4760 = vld [vmem:[#allocation16 + $0x278] sm:$0xff]
        %v4761 = vld [vmem:[#allocation16 + $0x280] sm:$0xff]
        %v4762 = vld [vmem:[#allocation16 + $0x288] sm:$0xff]
        %v4763 = vld [vmem:[#allocation16 + $0x290] sm:$0xff]
        %v4764 = vld [vmem:[#allocation16 + $0x298] sm:$0xff]
        %v4765 = vld [vmem:[#allocation16 + $0x2a0] sm:$0xff]
        %v4766 = vld [vmem:[#allocation16 + $0x2a8] sm:$0xff]
        %v4767 = vld [vmem:[#allocation16 + $0x2b0] sm:$0xff]
        %v4768 = vld [vmem:[#allocation16 + $0x2b8] sm:$0xff]
        %v4769 = vld [vmem:[#allocation16 + $0x2c0] sm:$0xff]
        %v4770 = vld [vmem:[#allocation16 + $0x2c8] sm:$0xff]
        %v4771 = vld [vmem:[#allocation16 + $0x2d0] sm:$0xff]
        %v4772 = vld [vmem:[#allocation16 + $0x2d8] sm:$0xff]
        %v4773 = vld [vmem:[#allocation16 + $0x2e0] sm:$0xff]
        %v4774 = vld [vmem:[#allocation16 + $0x2e8] sm:$0xff]
        %v4775 = vld [vmem:[#allocation16 + $0x2f0] sm:$0xff]
        %v4776 = vld [vmem:[#allocation16 + $0x2f8] sm:$0xff]
        %v4777 = vld [vmem:[#allocation16 + $0x300] sm:$0xff]
        %v4778 = vld [vmem:[#allocation16 + $0x308] sm:$0xff]
        %v4779 = vld [vmem:[#allocation16 + $0x310] sm:$0xff]
        %v4780 = vld [vmem:[#allocation16 + $0x318] sm:$0xff]
        %v4781 = vld [vmem:[#allocation16 + $0x320] sm:$0xff]
        %v4782 = vld [vmem:[#allocation16 + $0x328] sm:$0xff]
        %v4783 = vld [vmem:[#allocation16 + $0x330] sm:$0xff]
        %v4784 = vld [vmem:[#allocation16 + $0x338] sm:$0xff]
        %v4785 = vld [vmem:[#allocation16 + $0x340] sm:$0xff]
        %v4786 = vld [vmem:[#allocation16 + $0x348] sm:$0xff]
        %v4787 = vld [vmem:[#allocation16 + $0x350] sm:$0xff]
        %v4788 = vld [vmem:[#allocation16 + $0x358] sm:$0xff]
        %v4789 = vld [vmem:[#allocation16 + $0x360] sm:$0xff]
        %v4790 = vld [vmem:[#allocation16 + $0x368] sm:$0xff]
        %v4791 = vld [vmem:[#allocation16 + $0x370] sm:$0xff]
        %v4792 = vld [vmem:[#allocation16 + $0x378] sm:$0xff]
        %v4793 = vld [vmem:[#allocation16 + $0x380] sm:$0xff]
        %v4794 = vld [vmem:[#allocation16 + $0x388] sm:$0xff]
        %v4795 = vld [vmem:[#allocation16 + $0x390] sm:$0xff]
        %v4796 = vld [vmem:[#allocation16 + $0x398] sm:$0xff]
        %v4797 = vld [vmem:[#allocation16 + $0x3a0] sm:$0xff]
        %v4798 = vld [vmem:[#allocation16 + $0x3a8] sm:$0xff]
        %v4799 = vld [vmem:[#allocation16 + $0x3b0] sm:$0xff]
        %v4800 = vld [vmem:[#allocation16 + $0x3b8] sm:$0xff]
        %v4801 = vld [vmem:[#allocation16 + $0x3c0] sm:$0xff]
        %v4802 = vld [vmem:[#allocation16 + $0x3c8] sm:$0xff]
        %v4803 = vld [vmem:[#allocation16 + $0x3d0] sm:$0xff]
        %v4804 = vld [vmem:[#allocation16 + $0x3d8] sm:$0xff]
        %v4805 = vld [vmem:[#allocation16 + $0x3e0] sm:$0xff]
        %v4806 = vld [vmem:[#allocation16 + $0x3e8] sm:$0xff]
        %v4807 = vld [vmem:[#allocation16 + $0x3f0] sm:$0xff]
        %v4808 = vld [vmem:[#allocation16 + $0x3f8] sm:$0xff]
        %v4809 = vld [vmem:[#allocation16 + $0x400] sm:$0xff]
        %v4810 = vld [vmem:[#allocation16 + $0x408] sm:$0xff]
        %v4811 = vld [vmem:[#allocation16 + $0x410] sm:$0xff]
        %v4812 = vld [vmem:[#allocation16 + $0x418] sm:$0xff]
        %v4813 = vld [vmem:[#allocation16 + $0x420] sm:$0xff]
        %v4814 = vld [vmem:[#allocation16 + $0x428] sm:$0xff]
        %v4815 = vld [vmem:[#allocation16 + $0x430] sm:$0xff]
        %v4816 = vld [vmem:[#allocation16 + $0x438] sm:$0xff]
        %v4817 = vld [vmem:[#allocation16 + $0x440] sm:$0xff]
        %v4818 = vld [vmem:[#allocation16 + $0x448] sm:$0xff]
        %v4819 = vld [vmem:[#allocation16 + $0x450] sm:$0xff]
        %v4820 = vld [vmem:[#allocation16 + $0x458] sm:$0xff]
        %v4821 = vld [vmem:[#allocation16 + $0x460] sm:$0xff]
        %v4822 = vld [vmem:[#allocation16 + $0x468] sm:$0xff]
        %v4823 = vld [vmem:[#allocation16 + $0x470] sm:$0xff]
        %v4824 = vld [vmem:[#allocation16 + $0x478] sm:$0xff]
        %v4825 = vld [vmem:[#allocation16 + $0x480] sm:$0xff]
        %v4826 = vld [vmem:[#allocation16 + $0x488] sm:$0xff]
        %v4827 = vld [vmem:[#allocation16 + $0x490] sm:$0xff]
        %v4828 = vld [vmem:[#allocation16 + $0x498] sm:$0xff]
        %v4829 = vld [vmem:[#allocation16 + $0x4a0] sm:$0xff]
        %v4830 = vld [vmem:[#allocation16 + $0x4a8] sm:$0xff]
        %v4831 = vld [vmem:[#allocation16 + $0x4b0] sm:$0xff]
        %v4832 = vld [vmem:[#allocation16 + $0x4b8] sm:$0xff]
        %v4833 = vld [vmem:[#allocation16 + $0x4c0] sm:$0xff]
        %v4834 = vld [vmem:[#allocation16 + $0x4c8] sm:$0xff]
        %v4835 = vld [vmem:[#allocation16 + $0x4d0] sm:$0xff]
        %v4836 = vld [vmem:[#allocation16 + $0x4d8] sm:$0xff]
        %v4837 = vld [vmem:[#allocation16 + $0x4e0] sm:$0xff]
        %v4838 = vld [vmem:[#allocation16 + $0x4e8] sm:$0xff]
        %v4839 = vld [vmem:[#allocation16 + $0x4f0] sm:$0xff]
        %v4840 = vld [vmem:[#allocation16 + $0x4f8] sm:$0xff]
        %v4841 = vld [vmem:[#allocation16 + $0x500] sm:$0xff]
        %v4842 = vld [vmem:[#allocation16 + $0x508] sm:$0xff]
        %v4843 = vld [vmem:[#allocation16 + $0x510] sm:$0xff]
        %v4844 = vld [vmem:[#allocation16 + $0x518] sm:$0xff]
        %v4845 = vld [vmem:[#allocation16 + $0x520] sm:$0xff]
        %v4846 = vld [vmem:[#allocation16 + $0x528] sm:$0xff]
        %v4847 = vld [vmem:[#allocation16 + $0x530] sm:$0xff]
        %v4848 = vld [vmem:[#allocation16 + $0x538] sm:$0xff]
        %v4849 = vld [vmem:[#allocation16 + $0x540] sm:$0xff]
        %v4850 = vld [vmem:[#allocation16 + $0x548] sm:$0xff]
        %v4851 = vld [vmem:[#allocation16 + $0x550] sm:$0xff]
        %v4852 = vld [vmem:[#allocation16 + $0x558] sm:$0xff]
        %v4853 = vld [vmem:[#allocation16 + $0x560] sm:$0xff]
        %v4854 = vld [vmem:[#allocation16 + $0x568] sm:$0xff]
        %v4855 = vld [vmem:[#allocation16 + $0x570] sm:$0xff]
        %v4856 = vld [vmem:[#allocation16 + $0x578] sm:$0xff]
        %v4857 = vld [vmem:[#allocation16 + $0x580] sm:$0xff]
        %v4858 = vld [vmem:[#allocation16 + $0x588] sm:$0xff]
        %v4859 = vld [vmem:[#allocation16 + $0x590] sm:$0xff]
        %v4860 = vld [vmem:[#allocation16 + $0x598] sm:$0xff]
        %v4861 = vld [vmem:[#allocation16 + $0x5a0] sm:$0xff]
        %v4862 = vld [vmem:[#allocation16 + $0x5a8] sm:$0xff]
        %v4863 = vld [vmem:[#allocation16 + $0x5b0] sm:$0xff]
        %v4864 = vld [vmem:[#allocation16 + $0x5b8] sm:$0xff]
        %v4865 = vld [vmem:[#allocation16 + $0x5c0] sm:$0xff]
        %v4866 = vld [vmem:[#allocation16 + $0x5c8] sm:$0xff]
        %v4867 = vld [vmem:[#allocation16 + $0x5d0] sm:$0xff]
        %v4868 = vld [vmem:[#allocation16 + $0x5d8] sm:$0xff]
        %v4869 = vld [vmem:[#allocation16 + $0x5e0] sm:$0xff]
        %v4870 = vld [vmem:[#allocation16 + $0x5e8] sm:$0xff]
        %v4871 = vld [vmem:[#allocation16 + $0x5f0] sm:$0xff]
        %v4872 = vld [vmem:[#allocation16 + $0x5f8] sm:$0xff]
        %v4873 = vld [vmem:[#allocation16 + $0x600] sm:$0xff]
        %v4874 = vld [vmem:[#allocation16 + $0x608] sm:$0xff]
        %v4875 = vld [vmem:[#allocation16 + $0x610] sm:$0xff]
        %v4876 = vld [vmem:[#allocation16 + $0x618] sm:$0xff]
        %v4877 = vld [vmem:[#allocation16 + $0x620] sm:$0xff]
        %v4878 = vld [vmem:[#allocation16 + $0x628] sm:$0xff]
        %v4879 = vld [vmem:[#allocation16 + $0x630] sm:$0xff]
        %v4880 = vld [vmem:[#allocation16 + $0x638] sm:$0xff]
        %v4881 = vld [vmem:[#allocation16 + $0x640] sm:$0xff]
        %v4882 = vld [vmem:[#allocation16 + $0x648] sm:$0xff]
        %v4883 = vld [vmem:[#allocation16 + $0x650] sm:$0xff]
        %v4884 = vld [vmem:[#allocation16 + $0x658] sm:$0xff]
        %v4885 = vld [vmem:[#allocation16 + $0x660] sm:$0xff]
        %v4886 = vld [vmem:[#allocation16 + $0x668] sm:$0xff]
        %v4887 = vld [vmem:[#allocation16 + $0x670] sm:$0xff]
        %v4888 = vld [vmem:[#allocation16 + $0x678] sm:$0xff]
        %v4889 = vld [vmem:[#allocation16 + $0x680] sm:$0xff]
        %v4890 = vld [vmem:[#allocation16 + $0x688] sm:$0xff]
        %v4891 = vld [vmem:[#allocation16 + $0x690] sm:$0xff]
        %v4892 = vld [vmem:[#allocation16 + $0x698] sm:$0xff]
        %v4893 = vld [vmem:[#allocation16 + $0x6a0] sm:$0xff]
        %v4894 = vld [vmem:[#allocation16 + $0x6a8] sm:$0xff]
        %v4895 = vld [vmem:[#allocation16 + $0x6b0] sm:$0xff]
        %v4896 = vld [vmem:[#allocation16 + $0x6b8] sm:$0xff]
        %v4897 = vld [vmem:[#allocation16 + $0x6c0] sm:$0xff]
        %v4898 = vld [vmem:[#allocation16 + $0x6c8] sm:$0xff]
        %v4899 = vld [vmem:[#allocation16 + $0x6d0] sm:$0xff]
        %v4900 = vld [vmem:[#allocation16 + $0x6d8] sm:$0xff]
        %v4901 = vld [vmem:[#allocation16 + $0x6e0] sm:$0xff]
        %v4902 = vld [vmem:[#allocation16 + $0x6e8] sm:$0xff]
        %v4903 = vld [vmem:[#allocation16 + $0x6f0] sm:$0xff]
        %v4904 = vld [vmem:[#allocation16 + $0x6f8] sm:$0xff]
        %v4905 = vld [vmem:[#allocation16 + $0x700] sm:$0xff]
        %v4906 = vld [vmem:[#allocation16 + $0x708] sm:$0xff]
        %v4907 = vld [vmem:[#allocation16 + $0x710] sm:$0xff]
        %v4908 = vld [vmem:[#allocation16 + $0x718] sm:$0xff]
        %v4909 = vld [vmem:[#allocation16 + $0x720] sm:$0xff]
        %v4910 = vld [vmem:[#allocation16 + $0x728] sm:$0xff]
        %v4911 = vld [vmem:[#allocation16 + $0x730] sm:$0xff]
        %v4912 = vld [vmem:[#allocation16 + $0x738] sm:$0xff]
        %v4913 = vld [vmem:[#allocation16 + $0x740] sm:$0xff]
        %v4914 = vld [vmem:[#allocation16 + $0x748] sm:$0xff]
        %v4915 = vld [vmem:[#allocation16 + $0x750] sm:$0xff]
        %v4916 = vld [vmem:[#allocation16 + $0x758] sm:$0xff]
        %v4917 = vld [vmem:[#allocation16 + $0x760] sm:$0xff]
        %v4918 = vld [vmem:[#allocation16 + $0x768] sm:$0xff]
        %v4919 = vld [vmem:[#allocation16 + $0x770] sm:$0xff]
        %v4920 = vld [vmem:[#allocation16 + $0x778] sm:$0xff]
        %v4921 = vld [vmem:[#allocation16 + $0x780] sm:$0xff]
        %v4922 = vld [vmem:[#allocation16 + $0x788] sm:$0xff]
        %v4923 = vld [vmem:[#allocation16 + $0x790] sm:$0xff]
        %v4924 = vld [vmem:[#allocation16 + $0x798] sm:$0xff]
        %v4925 = vld [vmem:[#allocation16 + $0x7a0] sm:$0xff]
        %v4926 = vld [vmem:[#allocation16 + $0x7a8] sm:$0xff]
        %v4927 = vld [vmem:[#allocation16 + $0x7b0] sm:$0xff]
        %v4928 = vld [vmem:[#allocation16 + $0x7b8] sm:$0xff]
        %v4929 = vld [vmem:[#allocation16 + $0x7c0] sm:$0xff]
        %v4930 = vld [vmem:[#allocation16 + $0x7c8] sm:$0xff]
        %v4931 = vld [vmem:[#allocation16 + $0x7d0] sm:$0xff]
        %v4932 = vld [vmem:[#allocation16 + $0x7d8] sm:$0xff]
        %v4933 = vld [vmem:[#allocation16 + $0x7e0] sm:$0xff]
        %v4934 = vld [vmem:[#allocation16 + $0x7e8] sm:$0xff]
        %v4935 = vld [vmem:[#allocation16 + $0x7f0] sm:$0xff]
        %v4936 = vld [vmem:[#allocation16 + $0x7f8] sm:$0xff]
        %4937 = vmatprep.subr.mxu0 %v4682
        %4938 = vmatpush1.msra.mxu0 %v4681
        %4939 = vmatprep.subr.mxu0 %v4686
        %4940 = vmatpush1.msra.mxu0 %v4685
        %4941 = vmatprep.subr.mxu0 %v4690
        %4942 = vmatpush1.msra.mxu0 %v4689
        %4943 = vmatprep.subr.mxu0 %v4694
        %4944 = vmatpush1.msra.mxu0 %v4693
        %4945 = vmatprep.subr.mxu0 %v4698
        %4946 = vmatpush1.msra.mxu0 %v4697
        %4947 = vmatprep.subr.mxu0 %v4702
        %4948 = vmatpush1.msra.mxu0 %v4701
        %4949 = vmatprep.subr.mxu0 %v4706
        %4950 = vmatpush1.msra.mxu0 %v4705
        %4951 = vmatprep.subr.mxu0 %v4710
        %4952 = vmatpush1.msra.mxu0 %v4709
        %4953 = vmatprep.subr.mxu0 %v4714
        %4954 = vmatpush1.msra.mxu0 %v4713
        %4955 = vmatprep.subr.mxu0 %v4718
        %4956 = vmatpush1.msra.mxu0 %v4717
        %4957 = vmatprep.subr.mxu0 %v4722
        %4958 = vmatpush1.msra.mxu0 %v4721
        %4959 = vmatprep.subr.mxu0 %v4726
        %4960 = vmatpush1.msra.mxu0 %v4725
        %4961 = vmatprep.subr.mxu0 %v4730
        %4962 = vmatpush1.msra.mxu0 %v4729
        %4963 = vmatprep.subr.mxu0 %v4734
        %4964 = vmatpush1.msra.mxu0 %v4733
        %4965 = vmatprep.subr.mxu0 %v4738
        %4966 = vmatpush1.msra.mxu0 %v4737
        %4967 = vmatprep.subr.mxu0 %v4742
        %4968 = vmatpush1.msra.mxu0 %v4741
        %4969 = vmatprep.subr.mxu0 %v4746
        %4970 = vmatpush1.msra.mxu0 %v4745
        %4971 = vmatprep.subr.mxu0 %v4750
        %4972 = vmatpush1.msra.mxu0 %v4749
        %4973 = vmatprep.subr.mxu0 %v4754
        %4974 = vmatpush1.msra.mxu0 %v4753
        %4975 = vmatprep.subr.mxu0 %v4758
        %4976 = vmatpush1.msra.mxu0 %v4757
        %4977 = vmatprep.subr.mxu0 %v4762
        %4978 = vmatpush1.msra.mxu0 %v4761
        %4979 = vmatprep.subr.mxu0 %v4766
        %4980 = vmatpush1.msra.mxu0 %v4765
        %4981 = vmatprep.subr.mxu0 %v4770
        %4982 = vmatpush1.msra.mxu0 %v4769
        %4983 = vmatprep.subr.mxu0 %v4774
        %4984 = vmatpush1.msra.mxu0 %v4773
        %4985 = vmatprep.subr.mxu0 %v4778
        %4986 = vmatpush1.msra.mxu0 %v4777
        %4987 = vmatprep.subr.mxu0 %v4782
        %4988 = vmatpush1.msra.mxu0 %v4781
        %4989 = vmatprep.subr.mxu0 %v4786
        %4990 = vmatpush1.msra.mxu0 %v4785
        %4991 = vmatprep.subr.mxu0 %v4790
        %4992 = vmatpush1.msra.mxu0 %v4789
        %4993 = vmatprep.subr.mxu0 %v4794
        %4994 = vmatpush1.msra.mxu0 %v4793
        %4995 = vmatprep.subr.mxu0 %v4798
        %4996 = vmatpush1.msra.mxu0 %v4797
        %4997 = vmatprep.subr.mxu0 %v4802
        %4998 = vmatpush1.msra.mxu0 %v4801
        %4999 = vmatprep.subr.mxu0 %v4806
        %5000 = vmatpush1.msra.mxu0 %v4805
        %5001 = vmatprep.mubr.f32.mxu0 %v4674
        %5002 = vmatmul.mubr.f32.gmra.mrb[0].mxu0 %v4673
        %v5003 = vpop.f32.mrb[0].mxu0
        %v5004 = vadd.f32 0.0, %v5003
        %v5005 = vpop.f32.mrb[0].mxu0
        %v5006 = vadd.f32 0.0, %v5005
        %5007 = vmatprep.mubr.f32.mxu0 %v4678
        %5008 = vmatmul.mubr.f32.gmra.mrb[0].mxu0 %v4677
        %v5009 = vpop.f32.mrb[0].mxu0
        %v5010 = vadd.f32 0.0, %v5009
        %v5011 = vpop.f32.mrb[0].mxu0
        %v5012 = vadd.f32 0.0, %v5011
        %5013 = vdwg.mxu0
        %5014 = vmatprep.subr.mxu0 %v4810
        %5015 = vmatpush1.msra.mxu0 %v4809
        %5016 = vmatprep.subr.mxu0 %v4814
        %5017 = vmatpush1.msra.mxu0 %v4813
        %5018 = vmatprep.subr.mxu0 %v4818
        %5019 = vmatpush1.msra.mxu0 %v4817
        %5020 = vmatprep.subr.mxu0 %v4822
        %5021 = vmatpush1.msra.mxu0 %v4821
        %5022 = vmatprep.subr.mxu0 %v4826
        %5023 = vmatpush1.msra.mxu0 %v4825
        %5024 = vmatprep.subr.mxu0 %v4830
        %5025 = vmatpush1.msra.mxu0 %v4829
        %5026 = vmatprep.subr.mxu0 %v4834
        %5027 = vmatpush1.msra.mxu0 %v4833
        %5028 = vmatprep.subr.mxu0 %v4838
        %5029 = vmatpush1.msra.mxu0 %v4837
        %5030 = vmatprep.subr.mxu0 %v4842
        %5031 = vmatpush1.msra.mxu0 %v4841
        %5032 = vmatprep.subr.mxu0 %v4846
        %5033 = vmatpush1.msra.mxu0 %v4845
        %5034 = vmatprep.subr.mxu0 %v4850
        %5035 = vmatpush1.msra.mxu0 %v4849
        %5036 = vmatprep.subr.mxu0 %v4854
        %5037 = vmatpush1.msra.mxu0 %v4853
        %5038 = vmatprep.subr.mxu0 %v4858
        %5039 = vmatpush1.msra.mxu0 %v4857
        %5040 = vmatprep.subr.mxu0 %v4862
        %5041 = vmatpush1.msra.mxu0 %v4861
        %5042 = vmatprep.subr.mxu0 %v4866
        %5043 = vmatpush1.msra.mxu0 %v4865
        %5044 = vmatprep.subr.mxu0 %v4870
        %5045 = vmatpush1.msra.mxu0 %v4869
        %5046 = vmatprep.subr.mxu0 %v4874
        %5047 = vmatpush1.msra.mxu0 %v4873
        %5048 = vmatprep.subr.mxu0 %v4878
        %5049 = vmatpush1.msra.mxu0 %v4877
        %5050 = vmatprep.subr.mxu0 %v4882
        %5051 = vmatpush1.msra.mxu0 %v4881
        %5052 = vmatprep.subr.mxu0 %v4886
        %5053 = vmatpush1.msra.mxu0 %v4885
        %5054 = vmatprep.subr.mxu0 %v4890
        %5055 = vmatpush1.msra.mxu0 %v4889
        %5056 = vmatprep.subr.mxu0 %v4894
        %5057 = vmatpush1.msra.mxu0 %v4893
        %5058 = vmatprep.subr.mxu0 %v4898
        %5059 = vmatpush1.msra.mxu0 %v4897
        %5060 = vmatprep.subr.mxu0 %v4902
        %5061 = vmatpush1.msra.mxu0 %v4901
        %5062 = vmatprep.subr.mxu0 %v4906
        %5063 = vmatpush1.msra.mxu0 %v4905
        %5064 = vmatprep.subr.mxu0 %v4910
        %5065 = vmatpush1.msra.mxu0 %v4909
        %5066 = vmatprep.subr.mxu0 %v4914
        %5067 = vmatpush1.msra.mxu0 %v4913
        %5068 = vmatprep.subr.mxu0 %v4918
        %5069 = vmatpush1.msra.mxu0 %v4917
        %5070 = vmatprep.subr.mxu0 %v4922
        %5071 = vmatpush1.msra.mxu0 %v4921
        %5072 = vmatprep.subr.mxu0 %v4926
        %5073 = vmatpush1.msra.mxu0 %v4925
        %5074 = vmatprep.subr.mxu0 %v4930
        %5075 = vmatpush1.msra.mxu0 %v4929
        %5076 = vmatprep.subr.mxu0 %v4934
        %5077 = vmatpush1.msra.mxu0 %v4933
        %5078 = vmatprep.mubr.f32.mxu0 %v4676
        %5079 = vmatmul.mubr.f32.gmra.mrb[0].mxu0 %v4675
        %v5080 = vpop.f32.mrb[0].mxu0
        %v5081 = vadd.f32 %v5004, %v5080
        %v5082 = vpop.f32.mrb[0].mxu0
        %v5083 = vadd.f32 %v5006, %v5082
        %5084 = vmatprep.mubr.f32.mxu0 %v4680
        %5085 = vmatmul.mubr.f32.gmra.mrb[0].mxu0 %v4679
        %v5086 = vpop.f32.mrb[0].mxu0
        %v5087 = vadd.f32 %v5010, %v5086
        %v5088 = vpop.f32.mrb[0].mxu0
        %v5089 = vadd.f32 %v5012, %v5088
        %5090 = vdwg.mxu0
        %5091 = vmatprep.subr.mxu0 %v4684
        %5092 = vmatpush1.msra.mxu0 %v4683
        %5093 = vmatprep.subr.mxu0 %v4688
        %5094 = vmatpush1.msra.mxu0 %v4687
        %5095 = vmatprep.subr.mxu0 %v4692
        %5096 = vmatpush1.msra.mxu0 %v4691
        %5097 = vmatprep.subr.mxu0 %v4696
        %5098 = vmatpush1.msra.mxu0 %v4695
        %5099 = vmatprep.subr.mxu0 %v4700
        %5100 = vmatpush1.msra.mxu0 %v4699
        %5101 = vmatprep.subr.mxu0 %v4704
        %5102 = vmatpush1.msra.mxu0 %v4703
        %5103 = vmatprep.subr.mxu0 %v4708
        %5104 = vmatpush1.msra.mxu0 %v4707
        %5105 = vmatprep.subr.mxu0 %v4712
        %5106 = vmatpush1.msra.mxu0 %v4711
        %5107 = vmatprep.subr.mxu0 %v4716
        %5108 = vmatpush1.msra.mxu0 %v4715
        %5109 = vmatprep.subr.mxu0 %v4720
        %5110 = vmatpush1.msra.mxu0 %v4719
        %5111 = vmatprep.subr.mxu0 %v4724
        %5112 = vmatpush1.msra.mxu0 %v4723
        %5113 = vmatprep.subr.mxu0 %v4728
        %5114 = vmatpush1.msra.mxu0 %v4727
        %5115 = vmatprep.subr.mxu0 %v4732
        %5116 = vmatpush1.msra.mxu0 %v4731
        %5117 = vmatprep.subr.mxu0 %v4736
        %5118 = vmatpush1.msra.mxu0 %v4735
        %5119 = vmatprep.subr.mxu0 %v4740
        %5120 = vmatpush1.msra.mxu0 %v4739
        %5121 = vmatprep.subr.mxu0 %v4744
        %5122 = vmatpush1.msra.mxu0 %v4743
        %5123 = vmatprep.subr.mxu0 %v4748
        %5124 = vmatpush1.msra.mxu0 %v4747
        %5125 = vmatprep.subr.mxu0 %v4752
        %5126 = vmatpush1.msra.mxu0 %v4751
        %5127 = vmatprep.subr.mxu0 %v4756
        %5128 = vmatpush1.msra.mxu0 %v4755
        %5129 = vmatprep.subr.mxu0 %v4760
        %5130 = vmatpush1.msra.mxu0 %v4759
        %5131 = vmatprep.subr.mxu0 %v4764
        %5132 = vmatpush1.msra.mxu0 %v4763
        %5133 = vmatprep.subr.mxu0 %v4768
        %5134 = vmatpush1.msra.mxu0 %v4767
        %5135 = vmatprep.subr.mxu0 %v4772
        %5136 = vmatpush1.msra.mxu0 %v4771
        %5137 = vmatprep.subr.mxu0 %v4776
        %5138 = vmatpush1.msra.mxu0 %v4775
        %5139 = vmatprep.subr.mxu0 %v4780
        %5140 = vmatpush1.msra.mxu0 %v4779
        %5141 = vmatprep.subr.mxu0 %v4784
        %5142 = vmatpush1.msra.mxu0 %v4783
        %5143 = vmatprep.subr.mxu0 %v4788
        %5144 = vmatpush1.msra.mxu0 %v4787
        %5145 = vmatprep.subr.mxu0 %v4792
        %5146 = vmatpush1.msra.mxu0 %v4791
        %5147 = vmatprep.subr.mxu0 %v4796
        %5148 = vmatpush1.msra.mxu0 %v4795
        %5149 = vmatprep.subr.mxu0 %v4800
        %5150 = vmatpush1.msra.mxu0 %v4799
        %5151 = vmatprep.subr.mxu0 %v4804
        %5152 = vmatpush1.msra.mxu0 %v4803
        %5153 = vmatprep.subr.mxu0 %v4808
        %5154 = vmatpush1.msra.mxu0 %v4807
        %5155 = vmatprep.mubr.f32.mxu0 %v4674
        %5156 = vmatmul.mubr.f32.gmra.mrb[0].mxu0 %v4673
        %v5157 = vpop.f32.mrb[0].mxu0
        %v5158 = vadd.f32 0.0, %v5157
        %v5159 = vpop.f32.mrb[0].mxu0
        %v5160 = vadd.f32 0.0, %v5159
        %5161 = vmatprep.mubr.f32.mxu0 %v4678
        %5162 = vmatmul.mubr.f32.gmra.mrb[0].mxu0 %v4677
        %v5163 = vpop.f32.mrb[0].mxu0
        %v5164 = vadd.f32 0.0, %v5163
        %v5165 = vpop.f32.mrb[0].mxu0
        %v5166 = vadd.f32 0.0, %v5165
        %5167 = vdwg.mxu0
        %5168 = vmatprep.subr.mxu0 %v4812
        %5169 = vmatpush1.msra.mxu0 %v4811
        %5170 = vmatprep.subr.mxu0 %v4816
        %5171 = vmatpush1.msra.mxu0 %v4815
        %5172 = vmatprep.subr.mxu0 %v4820
        %5173 = vmatpush1.msra.mxu0 %v4819
        %5174 = vmatprep.subr.mxu0 %v4824
        %5175 = vmatpush1.msra.mxu0 %v4823
        %5176 = vmatprep.subr.mxu0 %v4828
        %5177 = vmatpush1.msra.mxu0 %v4827
        %5178 = vmatprep.subr.mxu0 %v4832
        %5179 = vmatpush1.msra.mxu0 %v4831
        %5180 = vmatprep.subr.mxu0 %v4836
        %5181 = vmatpush1.msra.mxu0 %v4835
        %5182 = vmatprep.subr.mxu0 %v4840
        %5183 = vmatpush1.msra.mxu0 %v4839
        %5184 = vmatprep.subr.mxu0 %v4844
        %5185 = vmatpush1.msra.mxu0 %v4843
        %5186 = vmatprep.subr.mxu0 %v4848
        %5187 = vmatpush1.msra.mxu0 %v4847
        %5188 = vmatprep.subr.mxu0 %v4852
        %5189 = vmatpush1.msra.mxu0 %v4851
        %5190 = vmatprep.subr.mxu0 %v4856
        %5191 = vmatpush1.msra.mxu0 %v4855
        %5192 = vmatprep.subr.mxu0 %v4860
        %5193 = vmatpush1.msra.mxu0 %v4859
        %5194 = vmatprep.subr.mxu0 %v4864
        %5195 = vmatpush1.msra.mxu0 %v4863
        %5196 = vmatprep.subr.mxu0 %v4868
        %5197 = vmatpush1.msra.mxu0 %v4867
        %5198 = vmatprep.subr.mxu0 %v4872
        %5199 = vmatpush1.msra.mxu0 %v4871
        %5200 = vmatprep.subr.mxu0 %v4876
        %5201 = vmatpush1.msra.mxu0 %v4875
        %5202 = vmatprep.subr.mxu0 %v4880
        %5203 = vmatpush1.msra.mxu0 %v4879
        %5204 = vmatprep.subr.mxu0 %v4884
        %5205 = vmatpush1.msra.mxu0 %v4883
        %5206 = vmatprep.subr.mxu0 %v4888
        %5207 = vmatpush1.msra.mxu0 %v4887
        %5208 = vmatprep.subr.mxu0 %v4892
        %5209 = vmatpush1.msra.mxu0 %v4891
        %5210 = vmatprep.subr.mxu0 %v4896
        %5211 = vmatpush1.msra.mxu0 %v4895
        %5212 = vmatprep.subr.mxu0 %v4900
        %5213 = vmatpush1.msra.mxu0 %v4899
        %5214 = vmatprep.subr.mxu0 %v4904
        %5215 = vmatpush1.msra.mxu0 %v4903
        %5216 = vmatprep.subr.mxu0 %v4908
        %5217 = vmatpush1.msra.mxu0 %v4907
        %5218 = vmatprep.subr.mxu0 %v4912
        %5219 = vmatpush1.msra.mxu0 %v4911
        %5220 = vmatprep.subr.mxu0 %v4916
        %5221 = vmatpush1.msra.mxu0 %v4915
        %5222 = vmatprep.subr.mxu0 %v4920
        %5223 = vmatpush1.msra.mxu0 %v4919
        %5224 = vmatprep.subr.mxu0 %v4924
        %5225 = vmatpush1.msra.mxu0 %v4923
        %5226 = vmatprep.subr.mxu0 %v4928
        %5227 = vmatpush1.msra.mxu0 %v4927
        %5228 = vmatprep.subr.mxu0 %v4932
        %5229 = vmatpush1.msra.mxu0 %v4931
        %5230 = vmatprep.subr.mxu0 %v4936
        %5231 = vmatpush1.msra.mxu0 %v4935
        %5232 = vmatprep.mubr.f32.mxu0 %v4676
        %5233 = vmatmul.mubr.f32.gmra.mrb[0].mxu0 %v4675
        %v5234 = vpop.f32.mrb[0].mxu0
        %v5235 = vadd.f32 %v5158, %v5234
        %v5236 = vpop.f32.mrb[0].mxu0
        %v5237 = vadd.f32 %v5160, %v5236
        %5238 = vmatprep.mubr.f32.mxu0 %v4680
        %5239 = vmatmul.mubr.f32.gmra.mrb[0].mxu0 %v4679
        %v5240 = vpop.f32.mrb[0].mxu0
        %v5241 = vadd.f32 %v5164, %v5240
        %v5242 = vpop.f32.mrb[0].mxu0
        %v5243 = vadd.f32 %v5166, %v5242
        %5244 = vdwg.mxu0
        %v5245 = vld [vmem:[%s9] sm:$0xff]
        %v5246 = vld [vmem:[%s9 + $0x8] sm:$0xff]
        %v5247 = vld [vmem:[%s9 + $0x10] sm:$0xff]
        %v5248 = vld [vmem:[%s9 + $0x18] sm:$0xff]
        %s5249 = scalar_lea.vmem [#allocation16], 2048
        %v5250 = vld [vmem:[%s5249] sm:$0xff]
        %v5251 = vld [vmem:[%s5249 + $0x8] sm:$0xff]
        %v5252 = vld [vmem:[%s5249 + $0x10] sm:$0xff]
        %v5253 = vld [vmem:[%s5249 + $0x18] sm:$0xff]
        %v5254 = vld [vmem:[%s5249 + $0x20] sm:$0xff]
        %v5255 = vld [vmem:[%s5249 + $0x28] sm:$0xff]
        %v5256 = vld [vmem:[%s5249 + $0x30] sm:$0xff]
        %v5257 = vld [vmem:[%s5249 + $0x38] sm:$0xff]
        %v5258 = vld [vmem:[%s5249 + $0x40] sm:$0xff]
        %v5259 = vld [vmem:[%s5249 + $0x48] sm:$0xff]
        %v5260 = vld [vmem:[%s5249 + $0x50] sm:$0xff]
        %v5261 = vld [vmem:[%s5249 + $0x58] sm:$0xff]
        %v5262 = vld [vmem:[%s5249 + $0x60] sm:$0xff]
        %v5263 = vld [vmem:[%s5249 + $0x68] sm:$0xff]
        %v5264 = vld [vmem:[%s5249 + $0x70] sm:$0xff]
        %v5265 = vld [vmem:[%s5249 + $0x78] sm:$0xff]
        %v5266 = vld [vmem:[%s5249 + $0x80] sm:$0xff]
        %v5267 = vld [vmem:[%s5249 + $0x88] sm:$0xff]
        %v5268 = vld [vmem:[%s5249 + $0x90] sm:$0xff]
        %v5269 = vld [vmem:[%s5249 + $0x98] sm:$0xff]
        %v5270 = vld [vmem:[%s5249 + $0xa0] sm:$0xff]
        %v5271 = vld [vmem:[%s5249 + $0xa8] sm:$0xff]
        %v5272 = vld [vmem:[%s5249 + $0xb0] sm:$0xff]
        %v5273 = vld [vmem:[%s5249 + $0xb8] sm:$0xff]
        %v5274 = vld [vmem:[%s5249 + $0xc0] sm:$0xff]
        %v5275 = vld [vmem:[%s5249 + $0xc8] sm:$0xff]
        %v5276 = vld [vmem:[%s5249 + $0xd0] sm:$0xff]
        %v5277 = vld [vmem:[%s5249 + $0xd8] sm:$0xff]
        %v5278 = vld [vmem:[%s5249 + $0xe0] sm:$0xff]
        %v5279 = vld [vmem:[%s5249 + $0xe8] sm:$0xff]
        %v5280 = vld [vmem:[%s5249 + $0xf0] sm:$0xff]
        %v5281 = vld [vmem:[%s5249 + $0xf8] sm:$0xff]
        %v5282 = vld [vmem:[%s5249 + $0x100] sm:$0xff]
        %v5283 = vld [vmem:[%s5249 + $0x108] sm:$0xff]
        %v5284 = vld [vmem:[%s5249 + $0x110] sm:$0xff]
        %v5285 = vld [vmem:[%s5249 + $0x118] sm:$0xff]
        %v5286 = vld [vmem:[%s5249 + $0x120] sm:$0xff]
        %v5287 = vld [vmem:[%s5249 + $0x128] sm:$0xff]
        %v5288 = vld [vmem:[%s5249 + $0x130] sm:$0xff]
        %v5289 = vld [vmem:[%s5249 + $0x138] sm:$0xff]
        %v5290 = vld [vmem:[%s5249 + $0x140] sm:$0xff]
        %v5291 = vld [vmem:[%s5249 + $0x148] sm:$0xff]
        %v5292 = vld [vmem:[%s5249 + $0x150] sm:$0xff]
        %v5293 = vld [vmem:[%s5249 + $0x158] sm:$0xff]
        %v5294 = vld [vmem:[%s5249 + $0x160] sm:$0xff]
        %v5295 = vld [vmem:[%s5249 + $0x168] sm:$0xff]
        %v5296 = vld [vmem:[%s5249 + $0x170] sm:$0xff]
        %v5297 = vld [vmem:[%s5249 + $0x178] sm:$0xff]
        %v5298 = vld [vmem:[%s5249 + $0x180] sm:$0xff]
        %v5299 = vld [vmem:[%s5249 + $0x188] sm:$0xff]
        %v5300 = vld [vmem:[%s5249 + $0x190] sm:$0xff]
        %v5301 = vld [vmem:[%s5249 + $0x198] sm:$0xff]
        %v5302 = vld [vmem:[%s5249 + $0x1a0] sm:$0xff]
        %v5303 = vld [vmem:[%s5249 + $0x1a8] sm:$0xff]
        %v5304 = vld [vmem:[%s5249 + $0x1b0] sm:$0xff]
        %v5305 = vld [vmem:[%s5249 + $0x1b8] sm:$0xff]
        %v5306 = vld [vmem:[%s5249 + $0x1c0] sm:$0xff]
        %v5307 = vld [vmem:[%s5249 + $0x1c8] sm:$0xff]
        %v5308 = vld [vmem:[%s5249 + $0x1d0] sm:$0xff]
        %v5309 = vld [vmem:[%s5249 + $0x1d8] sm:$0xff]
        %v5310 = vld [vmem:[%s5249 + $0x1e0] sm:$0xff]
        %v5311 = vld [vmem:[%s5249 + $0x1e8] sm:$0xff]
        %v5312 = vld [vmem:[%s5249 + $0x1f0] sm:$0xff]
        %v5313 = vld [vmem:[%s5249 + $0x1f8] sm:$0xff]
        %v5314 = vld [vmem:[%s5249 + $0x200] sm:$0xff]
        %v5315 = vld [vmem:[%s5249 + $0x208] sm:$0xff]
        %v5316 = vld [vmem:[%s5249 + $0x210] sm:$0xff]
        %v5317 = vld [vmem:[%s5249 + $0x218] sm:$0xff]
        %v5318 = vld [vmem:[%s5249 + $0x220] sm:$0xff]
        %v5319 = vld [vmem:[%s5249 + $0x228] sm:$0xff]
        %v5320 = vld [vmem:[%s5249 + $0x230] sm:$0xff]
        %v5321 = vld [vmem:[%s5249 + $0x238] sm:$0xff]
        %v5322 = vld [vmem:[%s5249 + $0x240] sm:$0xff]
        %v5323 = vld [vmem:[%s5249 + $0x248] sm:$0xff]
        %v5324 = vld [vmem:[%s5249 + $0x250] sm:$0xff]
        %v5325 = vld [vmem:[%s5249 + $0x258] sm:$0xff]
        %v5326 = vld [vmem:[%s5249 + $0x260] sm:$0xff]
        %v5327 = vld [vmem:[%s5249 + $0x268] sm:$0xff]
        %v5328 = vld [vmem:[%s5249 + $0x270] sm:$0xff]
        %v5329 = vld [vmem:[%s5249 + $0x278] sm:$0xff]
        %v5330 = vld [vmem:[%s5249 + $0x280] sm:$0xff]
        %v5331 = vld [vmem:[%s5249 + $0x288] sm:$0xff]
        %v5332 = vld [vmem:[%s5249 + $0x290] sm:$0xff]
        %v5333 = vld [vmem:[%s5249 + $0x298] sm:$0xff]
        %v5334 = vld [vmem:[%s5249 + $0x2a0] sm:$0xff]
        %v5335 = vld [vmem:[%s5249 + $0x2a8] sm:$0xff]
        %v5336 = vld [vmem:[%s5249 + $0x2b0] sm:$0xff]
        %v5337 = vld [vmem:[%s5249 + $0x2b8] sm:$0xff]
        %v5338 = vld [vmem:[%s5249 + $0x2c0] sm:$0xff]
        %v5339 = vld [vmem:[%s5249 + $0x2c8] sm:$0xff]
        %v5340 = vld [vmem:[%s5249 + $0x2d0] sm:$0xff]
        %v5341 = vld [vmem:[%s5249 + $0x2d8] sm:$0xff]
        %v5342 = vld [vmem:[%s5249 + $0x2e0] sm:$0xff]
        %v5343 = vld [vmem:[%s5249 + $0x2e8] sm:$0xff]
        %v5344 = vld [vmem:[%s5249 + $0x2f0] sm:$0xff]
        %v5345 = vld [vmem:[%s5249 + $0x2f8] sm:$0xff]
        %v5346 = vld [vmem:[%s5249 + $0x300] sm:$0xff]
        %v5347 = vld [vmem:[%s5249 + $0x308] sm:$0xff]
        %v5348 = vld [vmem:[%s5249 + $0x310] sm:$0xff]
        %v5349 = vld [vmem:[%s5249 + $0x318] sm:$0xff]
        %v5350 = vld [vmem:[%s5249 + $0x320] sm:$0xff]
        %v5351 = vld [vmem:[%s5249 + $0x328] sm:$0xff]
        %v5352 = vld [vmem:[%s5249 + $0x330] sm:$0xff]
        %v5353 = vld [vmem:[%s5249 + $0x338] sm:$0xff]
        %v5354 = vld [vmem:[%s5249 + $0x340] sm:$0xff]
        %v5355 = vld [vmem:[%s5249 + $0x348] sm:$0xff]
        %v5356 = vld [vmem:[%s5249 + $0x350] sm:$0xff]
        %v5357 = vld [vmem:[%s5249 + $0x358] sm:$0xff]
        %v5358 = vld [vmem:[%s5249 + $0x360] sm:$0xff]
        %v5359 = vld [vmem:[%s5249 + $0x368] sm:$0xff]
        %v5360 = vld [vmem:[%s5249 + $0x370] sm:$0xff]
        %v5361 = vld [vmem:[%s5249 + $0x378] sm:$0xff]
        %v5362 = vld [vmem:[%s5249 + $0x380] sm:$0xff]
        %v5363 = vld [vmem:[%s5249 + $0x388] sm:$0xff]
        %v5364 = vld [vmem:[%s5249 + $0x390] sm:$0xff]
        %v5365 = vld [vmem:[%s5249 + $0x398] sm:$0xff]
        %v5366 = vld [vmem:[%s5249 + $0x3a0] sm:$0xff]
        %v5367 = vld [vmem:[%s5249 + $0x3a8] sm:$0xff]
        %v5368 = vld [vmem:[%s5249 + $0x3b0] sm:$0xff]
        %v5369 = vld [vmem:[%s5249 + $0x3b8] sm:$0xff]
        %v5370 = vld [vmem:[%s5249 + $0x3c0] sm:$0xff]
        %v5371 = vld [vmem:[%s5249 + $0x3c8] sm:$0xff]
        %v5372 = vld [vmem:[%s5249 + $0x3d0] sm:$0xff]
        %v5373 = vld [vmem:[%s5249 + $0x3d8] sm:$0xff]
        %v5374 = vld [vmem:[%s5249 + $0x3e0] sm:$0xff]
        %v5375 = vld [vmem:[%s5249 + $0x3e8] sm:$0xff]
        %v5376 = vld [vmem:[%s5249 + $0x3f0] sm:$0xff]
        %v5377 = vld [vmem:[%s5249 + $0x3f8] sm:$0xff]
        %v5378 = vld [vmem:[%s5249 + $0x400] sm:$0xff]
        %v5379 = vld [vmem:[%s5249 + $0x408] sm:$0xff]
        %v5380 = vld [vmem:[%s5249 + $0x410] sm:$0xff]
        %v5381 = vld [vmem:[%s5249 + $0x418] sm:$0xff]
        %v5382 = vld [vmem:[%s5249 + $0x420] sm:$0xff]
        %v5383 = vld [vmem:[%s5249 + $0x428] sm:$0xff]
        %v5384 = vld [vmem:[%s5249 + $0x430] sm:$0xff]
        %v5385 = vld [vmem:[%s5249 + $0x438] sm:$0xff]
        %v5386 = vld [vmem:[%s5249 + $0x440] sm:$0xff]
        %v5387 = vld [vmem:[%s5249 + $0x448] sm:$0xff]
        %v5388 = vld [vmem:[%s5249 + $0x450] sm:$0xff]
        %v5389 = vld [vmem:[%s5249 + $0x458] sm:$0xff]
        %v5390 = vld [vmem:[%s5249 + $0x460] sm:$0xff]
        %v5391 = vld [vmem:[%s5249 + $0x468] sm:$0xff]
        %v5392 = vld [vmem:[%s5249 + $0x470] sm:$0xff]
        %v5393 = vld [vmem:[%s5249 + $0x478] sm:$0xff]
        %v5394 = vld [vmem:[%s5249 + $0x480] sm:$0xff]
        %v5395 = vld [vmem:[%s5249 + $0x488] sm:$0xff]
        %v5396 = vld [vmem:[%s5249 + $0x490] sm:$0xff]
        %v5397 = vld [vmem:[%s5249 + $0x498] sm:$0xff]
        %v5398 = vld [vmem:[%s5249 + $0x4a0] sm:$0xff]
        %v5399 = vld [vmem:[%s5249 + $0x4a8] sm:$0xff]
        %v5400 = vld [vmem:[%s5249 + $0x4b0] sm:$0xff]
        %v5401 = vld [vmem:[%s5249 + $0x4b8] sm:$0xff]
        %v5402 = vld [vmem:[%s5249 + $0x4c0] sm:$0xff]
        %v5403 = vld [vmem:[%s5249 + $0x4c8] sm:$0xff]
        %v5404 = vld [vmem:[%s5249 + $0x4d0] sm:$0xff]
        %v5405 = vld [vmem:[%s5249 + $0x4d8] sm:$0xff]
        %v5406 = vld [vmem:[%s5249 + $0x4e0] sm:$0xff]
        %v5407 = vld [vmem:[%s5249 + $0x4e8] sm:$0xff]
        %v5408 = vld [vmem:[%s5249 + $0x4f0] sm:$0xff]
        %v5409 = vld [vmem:[%s5249 + $0x4f8] sm:$0xff]
        %v5410 = vld [vmem:[%s5249 + $0x500] sm:$0xff]
        %v5411 = vld [vmem:[%s5249 + $0x508] sm:$0xff]
        %v5412 = vld [vmem:[%s5249 + $0x510] sm:$0xff]
        %v5413 = vld [vmem:[%s5249 + $0x518] sm:$0xff]
        %v5414 = vld [vmem:[%s5249 + $0x520] sm:$0xff]
        %v5415 = vld [vmem:[%s5249 + $0x528] sm:$0xff]
        %v5416 = vld [vmem:[%s5249 + $0x530] sm:$0xff]
        %v5417 = vld [vmem:[%s5249 + $0x538] sm:$0xff]
        %v5418 = vld [vmem:[%s5249 + $0x540] sm:$0xff]
        %v5419 = vld [vmem:[%s5249 + $0x548] sm:$0xff]
        %v5420 = vld [vmem:[%s5249 + $0x550] sm:$0xff]
        %v5421 = vld [vmem:[%s5249 + $0x558] sm:$0xff]
        %v5422 = vld [vmem:[%s5249 + $0x560] sm:$0xff]
        %v5423 = vld [vmem:[%s5249 + $0x568] sm:$0xff]
        %v5424 = vld [vmem:[%s5249 + $0x570] sm:$0xff]
        %v5425 = vld [vmem:[%s5249 + $0x578] sm:$0xff]
        %v5426 = vld [vmem:[%s5249 + $0x580] sm:$0xff]
        %v5427 = vld [vmem:[%s5249 + $0x588] sm:$0xff]
        %v5428 = vld [vmem:[%s5249 + $0x590] sm:$0xff]
        %v5429 = vld [vmem:[%s5249 + $0x598] sm:$0xff]
        %v5430 = vld [vmem:[%s5249 + $0x5a0] sm:$0xff]
        %v5431 = vld [vmem:[%s5249 + $0x5a8] sm:$0xff]
        %v5432 = vld [vmem:[%s5249 + $0x5b0] sm:$0xff]
        %v5433 = vld [vmem:[%s5249 + $0x5b8] sm:$0xff]
        %v5434 = vld [vmem:[%s5249 + $0x5c0] sm:$0xff]
        %v5435 = vld [vmem:[%s5249 + $0x5c8] sm:$0xff]
        %v5436 = vld [vmem:[%s5249 + $0x5d0] sm:$0xff]
        %v5437 = vld [vmem:[%s5249 + $0x5d8] sm:$0xff]
        %v5438 = vld [vmem:[%s5249 + $0x5e0] sm:$0xff]
        %v5439 = vld [vmem:[%s5249 + $0x5e8] sm:$0xff]
        %v5440 = vld [vmem:[%s5249 + $0x5f0] sm:$0xff]
        %v5441 = vld [vmem:[%s5249 + $0x5f8] sm:$0xff]
        %v5442 = vld [vmem:[%s5249 + $0x600] sm:$0xff]
        %v5443 = vld [vmem:[%s5249 + $0x608] sm:$0xff]
        %v5444 = vld [vmem:[%s5249 + $0x610] sm:$0xff]
        %v5445 = vld [vmem:[%s5249 + $0x618] sm:$0xff]
        %v5446 = vld [vmem:[%s5249 + $0x620] sm:$0xff]
        %v5447 = vld [vmem:[%s5249 + $0x628] sm:$0xff]
        %v5448 = vld [vmem:[%s5249 + $0x630] sm:$0xff]
        %v5449 = vld [vmem:[%s5249 + $0x638] sm:$0xff]
        %v5450 = vld [vmem:[%s5249 + $0x640] sm:$0xff]
        %v5451 = vld [vmem:[%s5249 + $0x648] sm:$0xff]
        %v5452 = vld [vmem:[%s5249 + $0x650] sm:$0xff]
        %v5453 = vld [vmem:[%s5249 + $0x658] sm:$0xff]
        %v5454 = vld [vmem:[%s5249 + $0x660] sm:$0xff]
        %v5455 = vld [vmem:[%s5249 + $0x668] sm:$0xff]
        %v5456 = vld [vmem:[%s5249 + $0x670] sm:$0xff]
        %v5457 = vld [vmem:[%s5249 + $0x678] sm:$0xff]
        %v5458 = vld [vmem:[%s5249 + $0x680] sm:$0xff]
        %v5459 = vld [vmem:[%s5249 + $0x688] sm:$0xff]
        %v5460 = vld [vmem:[%s5249 + $0x690] sm:$0xff]
        %v5461 = vld [vmem:[%s5249 + $0x698] sm:$0xff]
        %v5462 = vld [vmem:[%s5249 + $0x6a0] sm:$0xff]
        %v5463 = vld [vmem:[%s5249 + $0x6a8] sm:$0xff]
        %v5464 = vld [vmem:[%s5249 + $0x6b0] sm:$0xff]
        %v5465 = vld [vmem:[%s5249 + $0x6b8] sm:$0xff]
        %v5466 = vld [vmem:[%s5249 + $0x6c0] sm:$0xff]
        %v5467 = vld [vmem:[%s5249 + $0x6c8] sm:$0xff]
        %v5468 = vld [vmem:[%s5249 + $0x6d0] sm:$0xff]
        %v5469 = vld [vmem:[%s5249 + $0x6d8] sm:$0xff]
        %v5470 = vld [vmem:[%s5249 + $0x6e0] sm:$0xff]
        %v5471 = vld [vmem:[%s5249 + $0x6e8] sm:$0xff]
        %v5472 = vld [vmem:[%s5249 + $0x6f0] sm:$0xff]
        %v5473 = vld [vmem:[%s5249 + $0x6f8] sm:$0xff]
        %v5474 = vld [vmem:[%s5249 + $0x700] sm:$0xff]
        %v5475 = vld [vmem:[%s5249 + $0x708] sm:$0xff]
        %v5476 = vld [vmem:[%s5249 + $0x710] sm:$0xff]
        %v5477 = vld [vmem:[%s5249 + $0x718] sm:$0xff]
        %v5478 = vld [vmem:[%s5249 + $0x720] sm:$0xff]
        %v5479 = vld [vmem:[%s5249 + $0x728] sm:$0xff]
        %v5480 = vld [vmem:[%s5249 + $0x730] sm:$0xff]
        %v5481 = vld [vmem:[%s5249 + $0x738] sm:$0xff]
        %v5482 = vld [vmem:[%s5249 + $0x740] sm:$0xff]
        %v5483 = vld [vmem:[%s5249 + $0x748] sm:$0xff]
        %v5484 = vld [vmem:[%s5249 + $0x750] sm:$0xff]
        %v5485 = vld [vmem:[%s5249 + $0x758] sm:$0xff]
        %v5486 = vld [vmem:[%s5249 + $0x760] sm:$0xff]
        %v5487 = vld [vmem:[%s5249 + $0x768] sm:$0xff]
        %v5488 = vld [vmem:[%s5249 + $0x770] sm:$0xff]
        %v5489 = vld [vmem:[%s5249 + $0x778] sm:$0xff]
        %v5490 = vld [vmem:[%s5249 + $0x780] sm:$0xff]
        %v5491 = vld [vmem:[%s5249 + $0x788] sm:$0xff]
        %v5492 = vld [vmem:[%s5249 + $0x790] sm:$0xff]
        %v5493 = vld [vmem:[%s5249 + $0x798] sm:$0xff]
        %v5494 = vld [vmem:[%s5249 + $0x7a0] sm:$0xff]
        %v5495 = vld [vmem:[%s5249 + $0x7a8] sm:$0xff]
        %v5496 = vld [vmem:[%s5249 + $0x7b0] sm:$0xff]
        %v5497 = vld [vmem:[%s5249 + $0x7b8] sm:$0xff]
        %v5498 = vld [vmem:[%s5249 + $0x7c0] sm:$0xff]
        %v5499 = vld [vmem:[%s5249 + $0x7c8] sm:$0xff]
        %v5500 = vld [vmem:[%s5249 + $0x7d0] sm:$0xff]
        %v5501 = vld [vmem:[%s5249 + $0x7d8] sm:$0xff]
        %v5502 = vld [vmem:[%s5249 + $0x7e0] sm:$0xff]
        %v5503 = vld [vmem:[%s5249 + $0x7e8] sm:$0xff]
        %v5504 = vld [vmem:[%s5249 + $0x7f0] sm:$0xff]
        %v5505 = vld [vmem:[%s5249 + $0x7f8] sm:$0xff]
        %5506 = vmatprep.subr.mxu0 %v5251
        %5507 = vmatpush1.msra.mxu0 %v5250
        %5508 = vmatprep.subr.mxu0 %v5255
        %5509 = vmatpush1.msra.mxu0 %v5254
        %5510 = vmatprep.subr.mxu0 %v5259
        %5511 = vmatpush1.msra.mxu0 %v5258
        %5512 = vmatprep.subr.mxu0 %v5263
        %5513 = vmatpush1.msra.mxu0 %v5262
        %5514 = vmatprep.subr.mxu0 %v5267
        %5515 = vmatpush1.msra.mxu0 %v5266
        %5516 = vmatprep.subr.mxu0 %v5271
        %5517 = vmatpush1.msra.mxu0 %v5270
        %5518 = vmatprep.subr.mxu0 %v5275
        %5519 = vmatpush1.msra.mxu0 %v5274
        %5520 = vmatprep.subr.mxu0 %v5279
        %5521 = vmatpush1.msra.mxu0 %v5278
        %5522 = vmatprep.subr.mxu0 %v5283
        %5523 = vmatpush1.msra.mxu0 %v5282
        %5524 = vmatprep.subr.mxu0 %v5287
        %5525 = vmatpush1.msra.mxu0 %v5286
        %5526 = vmatprep.subr.mxu0 %v5291
        %5527 = vmatpush1.msra.mxu0 %v5290
        %5528 = vmatprep.subr.mxu0 %v5295
        %5529 = vmatpush1.msra.mxu0 %v5294
        %5530 = vmatprep.subr.mxu0 %v5299
        %5531 = vmatpush1.msra.mxu0 %v5298
        %5532 = vmatprep.subr.mxu0 %v5303
        %5533 = vmatpush1.msra.mxu0 %v5302
        %5534 = vmatprep.subr.mxu0 %v5307
        %5535 = vmatpush1.msra.mxu0 %v5306
        %5536 = vmatprep.subr.mxu0 %v5311
        %5537 = vmatpush1.msra.mxu0 %v5310
        %5538 = vmatprep.subr.mxu0 %v5315
        %5539 = vmatpush1.msra.mxu0 %v5314
        %5540 = vmatprep.subr.mxu0 %v5319
        %5541 = vmatpush1.msra.mxu0 %v5318
        %5542 = vmatprep.subr.mxu0 %v5323
        %5543 = vmatpush1.msra.mxu0 %v5322
        %5544 = vmatprep.subr.mxu0 %v5327
        %5545 = vmatpush1.msra.mxu0 %v5326
        %5546 = vmatprep.subr.mxu0 %v5331
        %5547 = vmatpush1.msra.mxu0 %v5330
        %5548 = vmatprep.subr.mxu0 %v5335
        %5549 = vmatpush1.msra.mxu0 %v5334
        %5550 = vmatprep.subr.mxu0 %v5339
        %5551 = vmatpush1.msra.mxu0 %v5338
        %5552 = vmatprep.subr.mxu0 %v5343
        %5553 = vmatpush1.msra.mxu0 %v5342
        %5554 = vmatprep.subr.mxu0 %v5347
        %5555 = vmatpush1.msra.mxu0 %v5346
        %5556 = vmatprep.subr.mxu0 %v5351
        %5557 = vmatpush1.msra.mxu0 %v5350
        %5558 = vmatprep.subr.mxu0 %v5355
        %5559 = vmatpush1.msra.mxu0 %v5354
        %5560 = vmatprep.subr.mxu0 %v5359
        %5561 = vmatpush1.msra.mxu0 %v5358
        %5562 = vmatprep.subr.mxu0 %v5363
        %5563 = vmatpush1.msra.mxu0 %v5362
        %5564 = vmatprep.subr.mxu0 %v5367
        %5565 = vmatpush1.msra.mxu0 %v5366
        %5566 = vmatprep.subr.mxu0 %v5371
        %5567 = vmatpush1.msra.mxu0 %v5370
        %5568 = vmatprep.subr.mxu0 %v5375
        %5569 = vmatpush1.msra.mxu0 %v5374
        %5570 = vmatprep.mubr.f32.mxu0 %v4674
        %5571 = vmatmul.mubr.f32.gmra.mrb[0].mxu0 %v4673
        %v5572 = vpop.f32.mrb[0].mxu0
        %v5573 = vadd.f32 0.0, %v5572
        %v5574 = vpop.f32.mrb[0].mxu0
        %v5575 = vadd.f32 0.0, %v5574
        %5576 = vmatprep.mubr.f32.mxu0 %v4678
        %5577 = vmatmul.mubr.f32.gmra.mrb[0].mxu0 %v4677
        %v5578 = vpop.f32.mrb[0].mxu0
        %v5579 = vadd.f32 0.0, %v5578
        %v5580 = vpop.f32.mrb[0].mxu0
        %v5581 = vadd.f32 0.0, %v5580
        %5582 = vdwg.mxu0
        %5583 = vmatprep.subr.mxu0 %v5379
        %5584 = vmatpush1.msra.mxu0 %v5378
        %5585 = vmatprep.subr.mxu0 %v5383
        %5586 = vmatpush1.msra.mxu0 %v5382
        %5587 = vmatprep.subr.mxu0 %v5387
        %5588 = vmatpush1.msra.mxu0 %v5386
        %5589 = vmatprep.subr.mxu0 %v5391
        %5590 = vmatpush1.msra.mxu0 %v5390
        %5591 = vmatprep.subr.mxu0 %v5395
        %5592 = vmatpush1.msra.mxu0 %v5394
        %5593 = vmatprep.subr.mxu0 %v5399
        %5594 = vmatpush1.msra.mxu0 %v5398
        %5595 = vmatprep.subr.mxu0 %v5403
        %5596 = vmatpush1.msra.mxu0 %v5402
        %5597 = vmatprep.subr.mxu0 %v5407
        %5598 = vmatpush1.msra.mxu0 %v5406
        %5599 = vmatprep.subr.mxu0 %v5411
        %5600 = vmatpush1.msra.mxu0 %v5410
        %5601 = vmatprep.subr.mxu0 %v5415
        %5602 = vmatpush1.msra.mxu0 %v5414
        %5603 = vmatprep.subr.mxu0 %v5419
        %5604 = vmatpush1.msra.mxu0 %v5418
        %5605 = vmatprep.subr.mxu0 %v5423
        %5606 = vmatpush1.msra.mxu0 %v5422
        %5607 = vmatprep.subr.mxu0 %v5427
        %5608 = vmatpush1.msra.mxu0 %v5426
        %5609 = vmatprep.subr.mxu0 %v5431
        %5610 = vmatpush1.msra.mxu0 %v5430
        %5611 = vmatprep.subr.mxu0 %v5435
        %5612 = vmatpush1.msra.mxu0 %v5434
        %5613 = vmatprep.subr.mxu0 %v5439
        %5614 = vmatpush1.msra.mxu0 %v5438
        %5615 = vmatprep.subr.mxu0 %v5443
        %5616 = vmatpush1.msra.mxu0 %v5442
        %5617 = vmatprep.subr.mxu0 %v5447
        %5618 = vmatpush1.msra.mxu0 %v5446
        %5619 = vmatprep.subr.mxu0 %v5451
        %5620 = vmatpush1.msra.mxu0 %v5450
        %5621 = vmatprep.subr.mxu0 %v5455
        %5622 = vmatpush1.msra.mxu0 %v5454
        %5623 = vmatprep.subr.mxu0 %v5459
        %5624 = vmatpush1.msra.mxu0 %v5458
        %5625 = vmatprep.subr.mxu0 %v5463
        %5626 = vmatpush1.msra.mxu0 %v5462
        %5627 = vmatprep.subr.mxu0 %v5467
        %5628 = vmatpush1.msra.mxu0 %v5466
        %5629 = vmatprep.subr.mxu0 %v5471
        %5630 = vmatpush1.msra.mxu0 %v5470
        %5631 = vmatprep.subr.mxu0 %v5475
        %5632 = vmatpush1.msra.mxu0 %v5474
        %5633 = vmatprep.subr.mxu0 %v5479
        %5634 = vmatpush1.msra.mxu0 %v5478
        %5635 = vmatprep.subr.mxu0 %v5483
        %5636 = vmatpush1.msra.mxu0 %v5482
        %5637 = vmatprep.subr.mxu0 %v5487
        %5638 = vmatpush1.msra.mxu0 %v5486
        %5639 = vmatprep.subr.mxu0 %v5491
        %5640 = vmatpush1.msra.mxu0 %v5490
        %5641 = vmatprep.subr.mxu0 %v5495
        %5642 = vmatpush1.msra.mxu0 %v5494
        %5643 = vmatprep.subr.mxu0 %v5499
        %5644 = vmatpush1.msra.mxu0 %v5498
        %5645 = vmatprep.subr.mxu0 %v5503
        %5646 = vmatpush1.msra.mxu0 %v5502
        %5647 = vmatprep.mubr.f32.mxu0 %v4676
        %5648 = vmatmul.mubr.f32.gmra.mrb[0].mxu0 %v4675
        %v5649 = vpop.f32.mrb[0].mxu0
        %v5650 = vadd.f32 %v5573, %v5649
        %v5651 = vpop.f32.mrb[0].mxu0
        %v5652 = vadd.f32 %v5575, %v5651
        %5653 = vmatprep.mubr.f32.mxu0 %v4680
        %5654 = vmatmul.mubr.f32.gmra.mrb[0].mxu0 %v4679
        %v5655 = vpop.f32.mrb[0].mxu0
        %v5656 = vadd.f32 %v5579, %v5655
        %v5657 = vpop.f32.mrb[0].mxu0
        %v5658 = vadd.f32 %v5581, %v5657
        %5659 = vdwg.mxu0
        %5660 = vmatprep.subr.mxu0 %v5253
        %5661 = vmatpush1.msra.mxu0 %v5252
        %5662 = vmatprep.subr.mxu0 %v5257
        %5663 = vmatpush1.msra.mxu0 %v5256
        %5664 = vmatprep.subr.mxu0 %v5261
        %5665 = vmatpush1.msra.mxu0 %v5260
        %5666 = vmatprep.subr.mxu0 %v5265
        %5667 = vmatpush1.msra.mxu0 %v5264
        %5668 = vmatprep.subr.mxu0 %v5269
        %5669 = vmatpush1.msra.mxu0 %v5268
        %5670 = vmatprep.subr.mxu0 %v5273
        %5671 = vmatpush1.msra.mxu0 %v5272
        %5672 = vmatprep.subr.mxu0 %v5277
        %5673 = vmatpush1.msra.mxu0 %v5276
        %5674 = vmatprep.subr.mxu0 %v5281
        %5675 = vmatpush1.msra.mxu0 %v5280
        %5676 = vmatprep.subr.mxu0 %v5285
        %5677 = vmatpush1.msra.mxu0 %v5284
        %5678 = vmatprep.subr.mxu0 %v5289
        %5679 = vmatpush1.msra.mxu0 %v5288
        %5680 = vmatprep.subr.mxu0 %v5293
        %5681 = vmatpush1.msra.mxu0 %v5292
        %5682 = vmatprep.subr.mxu0 %v5297
        %5683 = vmatpush1.msra.mxu0 %v5296
        %5684 = vmatprep.subr.mxu0 %v5301
        %5685 = vmatpush1.msra.mxu0 %v5300
        %5686 = vmatprep.subr.mxu0 %v5305
        %5687 = vmatpush1.msra.mxu0 %v5304
        %5688 = vmatprep.subr.mxu0 %v5309
        %5689 = vmatpush1.msra.mxu0 %v5308
        %5690 = vmatprep.subr.mxu0 %v5313
        %5691 = vmatpush1.msra.mxu0 %v5312
        %5692 = vmatprep.subr.mxu0 %v5317
        %5693 = vmatpush1.msra.mxu0 %v5316
        %5694 = vmatprep.subr.mxu0 %v5321
        %5695 = vmatpush1.msra.mxu0 %v5320
        %5696 = vmatprep.subr.mxu0 %v5325
        %5697 = vmatpush1.msra.mxu0 %v5324
        %5698 = vmatprep.subr.mxu0 %v5329
        %5699 = vmatpush1.msra.mxu0 %v5328
        %5700 = vmatprep.subr.mxu0 %v5333
        %5701 = vmatpush1.msra.mxu0 %v5332
        %5702 = vmatprep.subr.mxu0 %v5337
        %5703 = vmatpush1.msra.mxu0 %v5336
        %5704 = vmatprep.subr.mxu0 %v5341
        %5705 = vmatpush1.msra.mxu0 %v5340
        %5706 = vmatprep.subr.mxu0 %v5345
        %5707 = vmatpush1.msra.mxu0 %v5344
        %5708 = vmatprep.subr.mxu0 %v5349
        %5709 = vmatpush1.msra.mxu0 %v5348
        %5710 = vmatprep.subr.mxu0 %v5353
        %5711 = vmatpush1.msra.mxu0 %v5352
        %5712 = vmatprep.subr.mxu0 %v5357
        %5713 = vmatpush1.msra.mxu0 %v5356
        %5714 = vmatprep.subr.mxu0 %v5361
        %5715 = vmatpush1.msra.mxu0 %v5360
        %5716 = vmatprep.subr.mxu0 %v5365
        %5717 = vmatpush1.msra.mxu0 %v5364
        %5718 = vmatprep.subr.mxu0 %v5369
        %5719 = vmatpush1.msra.mxu0 %v5368
        %5720 = vmatprep.subr.mxu0 %v5373
        %5721 = vmatpush1.msra.mxu0 %v5372
        %5722 = vmatprep.subr.mxu0 %v5377
        %5723 = vmatpush1.msra.mxu0 %v5376
        %5724 = vmatprep.mubr.f32.mxu0 %v4674
        %5725 = vmatmul.mubr.f32.gmra.mrb[0].mxu0 %v4673
        %v5726 = vpop.f32.mrb[0].mxu0
        %v5727 = vadd.f32 0.0, %v5726
        %v5728 = vpop.f32.mrb[0].mxu0
        %v5729 = vadd.f32 0.0, %v5728
        %5730 = vmatprep.mubr.f32.mxu0 %v4678
        %5731 = vmatmul.mubr.f32.gmra.mrb[0].mxu0 %v4677
        %v5732 = vpop.f32.mrb[0].mxu0
        %v5733 = vadd.f32 0.0, %v5732
        %v5734 = vpop.f32.mrb[0].mxu0
        %v5735 = vadd.f32 0.0, %v5734
        %5736 = vdwg.mxu0
        %5737 = vmatprep.subr.mxu0 %v5381
        %5738 = vmatpush1.msra.mxu0 %v5380
        %5739 = vmatprep.subr.mxu0 %v5385
        %5740 = vmatpush1.msra.mxu0 %v5384
        %5741 = vmatprep.subr.mxu0 %v5389
        %5742 = vmatpush1.msra.mxu0 %v5388
        %5743 = vmatprep.subr.mxu0 %v5393
        %5744 = vmatpush1.msra.mxu0 %v5392
        %5745 = vmatprep.subr.mxu0 %v5397
        %5746 = vmatpush1.msra.mxu0 %v5396
        %5747 = vmatprep.subr.mxu0 %v5401
        %5748 = vmatpush1.msra.mxu0 %v5400
        %5749 = vmatprep.subr.mxu0 %v5405
        %5750 = vmatpush1.msra.mxu0 %v5404
        %5751 = vmatprep.subr.mxu0 %v5409
        %5752 = vmatpush1.msra.mxu0 %v5408
        %5753 = vmatprep.subr.mxu0 %v5413
        %5754 = vmatpush1.msra.mxu0 %v5412
        %5755 = vmatprep.subr.mxu0 %v5417
        %5756 = vmatpush1.msra.mxu0 %v5416
        %5757 = vmatprep.subr.mxu0 %v5421
        %5758 = vmatpush1.msra.mxu0 %v5420
        %5759 = vmatprep.subr.mxu0 %v5425
        %5760 = vmatpush1.msra.mxu0 %v5424
        %5761 = vmatprep.subr.mxu0 %v5429
        %5762 = vmatpush1.msra.mxu0 %v5428
        %5763 = vmatprep.subr.mxu0 %v5433
        %5764 = vmatpush1.msra.mxu0 %v5432
        %5765 = vmatprep.subr.mxu0 %v5437
        %5766 = vmatpush1.msra.mxu0 %v5436
        %5767 = vmatprep.subr.mxu0 %v5441
        %5768 = vmatpush1.msra.mxu0 %v5440
        %5769 = vmatprep.subr.mxu0 %v5445
        %5770 = vmatpush1.msra.mxu0 %v5444
        %5771 = vmatprep.subr.mxu0 %v5449
        %5772 = vmatpush1.msra.mxu0 %v5448
        %5773 = vmatprep.subr.mxu0 %v5453
        %5774 = vmatpush1.msra.mxu0 %v5452
        %5775 = vmatprep.subr.mxu0 %v5457
        %5776 = vmatpush1.msra.mxu0 %v5456
        %5777 = vmatprep.subr.mxu0 %v5461
        %5778 = vmatpush1.msra.mxu0 %v5460
        %5779 = vmatprep.subr.mxu0 %v5465
        %5780 = vmatpush1.msra.mxu0 %v5464
        %5781 = vmatprep.subr.mxu0 %v5469
        %5782 = vmatpush1.msra.mxu0 %v5468
        %5783 = vmatprep.subr.mxu0 %v5473
        %5784 = vmatpush1.msra.mxu0 %v5472
        %5785 = vmatprep.subr.mxu0 %v5477
        %5786 = vmatpush1.msra.mxu0 %v5476
        %5787 = vmatprep.subr.mxu0 %v5481
        %5788 = vmatpush1.msra.mxu0 %v5480
        %5789 = vmatprep.subr.mxu0 %v5485
        %5790 = vmatpush1.msra.mxu0 %v5484
        %5791 = vmatprep.subr.mxu0 %v5489
        %5792 = vmatpush1.msra.mxu0 %v5488
        %5793 = vmatprep.subr.mxu0 %v5493
        %5794 = vmatpush1.msra.mxu0 %v5492
        %5795 = vmatprep.subr.mxu0 %v5497
        %5796 = vmatpush1.msra.mxu0 %v5496
        %5797 = vmatprep.subr.mxu0 %v5501
        %5798 = vmatpush1.msra.mxu0 %v5500
        %5799 = vmatprep.subr.mxu0 %v5505
        %5800 = vmatpush1.msra.mxu0 %v5504
        %5801 = vmatprep.mubr.f32.mxu0 %v4676
        %5802 = vmatmul.mubr.f32.gmra.mrb[0].mxu0 %v4675
        %v5803 = vpop.f32.mrb[0].mxu0
        %v5804 = vadd.f32 %v5727, %v5803
        %v5805 = vpop.f32.mrb[0].mxu0
        %v5806 = vadd.f32 %v5729, %v5805
        %5807 = vmatprep.mubr.f32.mxu0 %v4680
        %5808 = vmatmul.mubr.f32.gmra.mrb[0].mxu0 %v4679
        %v5809 = vpop.f32.mrb[0].mxu0
        %v5810 = vadd.f32 %v5733, %v5809
        %v5811 = vpop.f32.mrb[0].mxu0
        %v5812 = vadd.f32 %v5735, %v5811
        %5813 = vdwg.mxu0
        %s5814 = scalar_lea.vmem %s9, 32
        %v5815 = vld [vmem:[%s5814] sm:$0xff]
        %v5816 = vld [vmem:[%s5814 + $0x8] sm:$0xff]
        %v5817 = vld [vmem:[%s5814 + $0x10] sm:$0xff]
        %v5818 = vld [vmem:[%s5814 + $0x18] sm:$0xff]
        %vm5819 = vcmask 130048
        %v5821 = vsel %vm5819, %v5815, 0
        %v5824 = vsel %vm5819, %v5816, 0
        %v5827 = vsel %vm5819, %v5817, 0
        %v5830 = vsel %vm5819, %v5818, 0
        %5832 = vmatprep.subr.mxu0 %v5652
        %5833 = vmatpush1.msra.mxu0 %v5650
        %5834 = vmatprep.subr.mxu0 %v5658
        %5835 = vmatpush1.msra.mxu0 %v5656
        %5836 = vmatprep.subr.mxu0 0.0
        %5837 = vmatpush1.msra.mxu0 0.0
        %5838 = vmatprep.subr.mxu0 0.0
        %5839 = vmatpush1.msra.mxu0 0.0
        %5840 = vmatprep.subr.mxu0 0.0
        %5841 = vmatpush1.msra.mxu0 0.0
        %5842 = vmatprep.subr.mxu0 0.0
        %5843 = vmatpush1.msra.mxu0 0.0
        %5844 = vmatprep.subr.mxu0 0.0
        %5845 = vmatpush1.msra.mxu0 0.0
        %5846 = vmatprep.subr.mxu0 0.0
        %5847 = vmatpush1.msra.mxu0 0.0
        %5848 = vmatprep.subr.mxu0 0.0
        %5849 = vmatpush1.msra.mxu0 0.0
        %5850 = vmatprep.subr.mxu0 0.0
        %5851 = vmatpush1.msra.mxu0 0.0
        %5852 = vmatprep.subr.mxu0 0.0
        %5853 = vmatpush1.msra.mxu0 0.0
        %5854 = vmatprep.subr.mxu0 0.0
        %5855 = vmatpush1.msra.mxu0 0.0
        %5856 = vmatprep.subr.mxu0 0.0
        %5857 = vmatpush1.msra.mxu0 0.0
        %5858 = vmatprep.subr.mxu0 0.0
        %5859 = vmatpush1.msra.mxu0 0.0
        %5860 = vmatprep.subr.mxu0 0.0
        %5861 = vmatpush1.msra.mxu0 0.0
        %5862 = vmatprep.subr.mxu0 0.0
        %5863 = vmatpush1.msra.mxu0 0.0
        %5864 = vmatprep.subr.mxu0 0.0
        %5865 = vmatpush1.msra.mxu0 0.0
        %5866 = vmatprep.subr.mxu0 0.0
        %5867 = vmatpush1.msra.mxu0 0.0
        %5868 = vmatprep.subr.mxu0 0.0
        %5869 = vmatpush1.msra.mxu0 0.0
        %5870 = vmatprep.subr.mxu0 0.0
        %5871 = vmatpush1.msra.mxu0 0.0
        %5872 = vmatprep.subr.mxu0 0.0
        %5873 = vmatpush1.msra.mxu0 0.0
        %5874 = vmatprep.subr.mxu0 0.0
        %5875 = vmatpush1.msra.mxu0 0.0
        %5876 = vmatprep.subr.mxu0 0.0
        %5877 = vmatpush1.msra.mxu0 0.0
        %5878 = vmatprep.subr.mxu0 0.0
        %5879 = vmatpush1.msra.mxu0 0.0
        %5880 = vmatprep.subr.mxu0 0.0
        %5881 = vmatpush1.msra.mxu0 0.0
        %5882 = vmatprep.subr.mxu0 0.0
        %5883 = vmatpush1.msra.mxu0 0.0
        %5884 = vmatprep.subr.mxu0 0.0
        %5885 = vmatpush1.msra.mxu0 0.0
        %5886 = vmatprep.subr.mxu0 0.0
        %5887 = vmatpush1.msra.mxu0 0.0
        %5888 = vmatprep.subr.mxu0 0.0
        %5889 = vmatpush1.msra.mxu0 0.0
        %5890 = vmatprep.subr.mxu0 0.0
        %5891 = vmatpush1.msra.mxu0 0.0
        %5892 = vmatprep.subr.mxu0 0.0
        %5893 = vmatpush1.msra.mxu0 0.0
        %5894 = vmatprep.subr.mxu0 0.0
        %5895 = vmatpush1.msra.mxu0 0.0
        %5896 = vmatprep.mubr.f32.mxu0 0.0
        %5897 = vmatmul.mubr.f32.gmra.mrb[0].mxu0 %v5821
        %v5898 = vpop.f32.mrb[0].mxu0
        %v5899 = vadd.f32 0.0, %v5898
        %v5900 = vpop.f32.mrb[0].mxu0
        %v5901 = vadd.f32 0.0, %v5900
        %5902 = vmatprep.mubr.f32.mxu0 0.0
        %5903 = vmatmul.mubr.f32.gmra.mrb[0].mxu0 %v5824
        %v5904 = vpop.f32.mrb[0].mxu0
        %v5905 = vadd.f32 0.0, %v5904
        %v5906 = vpop.f32.mrb[0].mxu0
        %v5907 = vadd.f32 0.0, %v5906
        %5908 = vmatprep.mubr.f32.mxu0 0.0
        %5909 = vmatmul.mubr.f32.gmra.mrb[0].mxu0 %v5827
        %v5910 = vpop.f32.mrb[0].mxu0
        %v5911 = vadd.f32 0.0, %v5910
        %v5912 = vpop.f32.mrb[0].mxu0
        %v5913 = vadd.f32 0.0, %v5912
        %5914 = vmatprep.mubr.f32.mxu0 0.0
        %5915 = vmatmul.mubr.f32.gmra.mrb[0].mxu0 %v5830
        %v5916 = vpop.f32.mrb[0].mxu0
        %v5917 = vadd.f32 0.0, %v5916
        %v5918 = vpop.f32.mrb[0].mxu0
        %v5919 = vadd.f32 0.0, %v5918
        %5920 = vdwg.mxu0
        %5921 = vmatprep.subr.mxu0 %v5806
        %5922 = vmatpush1.msra.mxu0 %v5804
        %5923 = vmatprep.subr.mxu0 %v5812
        %5924 = vmatpush1.msra.mxu0 %v5810
        %5925 = vmatprep.subr.mxu0 0.0
        %5926 = vmatpush1.msra.mxu0 0.0
        %5927 = vmatprep.subr.mxu0 0.0
        %5928 = vmatpush1.msra.mxu0 0.0
        %5929 = vmatprep.subr.mxu0 0.0
        %5930 = vmatpush1.msra.mxu0 0.0
        %5931 = vmatprep.subr.mxu0 0.0
        %5932 = vmatpush1.msra.mxu0 0.0
        %5933 = vmatprep.subr.mxu0 0.0
        %5934 = vmatpush1.msra.mxu0 0.0
        %5935 = vmatprep.subr.mxu0 0.0
        %5936 = vmatpush1.msra.mxu0 0.0
        %5937 = vmatprep.subr.mxu0 0.0
        %5938 = vmatpush1.msra.mxu0 0.0
        %5939 = vmatprep.subr.mxu0 0.0
        %5940 = vmatpush1.msra.mxu0 0.0
        %5941 = vmatprep.subr.mxu0 0.0
        %5942 = vmatpush1.msra.mxu0 0.0
        %5943 = vmatprep.subr.mxu0 0.0
        %5944 = vmatpush1.msra.mxu0 0.0
        %5945 = vmatprep.subr.mxu0 0.0
        %5946 = vmatpush1.msra.mxu0 0.0
        %5947 = vmatprep.subr.mxu0 0.0
        %5948 = vmatpush1.msra.mxu0 0.0
        %5949 = vmatprep.subr.mxu0 0.0
        %5950 = vmatpush1.msra.mxu0 0.0
        %5951 = vmatprep.subr.mxu0 0.0
        %5952 = vmatpush1.msra.mxu0 0.0
        %5953 = vmatprep.subr.mxu0 0.0
        %5954 = vmatpush1.msra.mxu0 0.0
        %5955 = vmatprep.subr.mxu0 0.0
        %5956 = vmatpush1.msra.mxu0 0.0
        %5957 = vmatprep.subr.mxu0 0.0
        %5958 = vmatpush1.msra.mxu0 0.0
        %5959 = vmatprep.subr.mxu0 0.0
        %5960 = vmatpush1.msra.mxu0 0.0
        %5961 = vmatprep.subr.mxu0 0.0
        %5962 = vmatpush1.msra.mxu0 0.0
        %5963 = vmatprep.subr.mxu0 0.0
        %5964 = vmatpush1.msra.mxu0 0.0
        %5965 = vmatprep.subr.mxu0 0.0
        %5966 = vmatpush1.msra.mxu0 0.0
        %5967 = vmatprep.subr.mxu0 0.0
        %5968 = vmatpush1.msra.mxu0 0.0
        %5969 = vmatprep.subr.mxu0 0.0
        %5970 = vmatpush1.msra.mxu0 0.0
        %5971 = vmatprep.subr.mxu0 0.0
        %5972 = vmatpush1.msra.mxu0 0.0
        %5973 = vmatprep.subr.mxu0 0.0
        %5974 = vmatpush1.msra.mxu0 0.0
        %5975 = vmatprep.subr.mxu0 0.0
        %5976 = vmatpush1.msra.mxu0 0.0
        %5977 = vmatprep.subr.mxu0 0.0
        %5978 = vmatpush1.msra.mxu0 0.0
        %5979 = vmatprep.subr.mxu0 0.0
        %5980 = vmatpush1.msra.mxu0 0.0
        %5981 = vmatprep.subr.mxu0 0.0
        %5982 = vmatpush1.msra.mxu0 0.0
        %5983 = vmatprep.subr.mxu0 0.0
        %5984 = vmatpush1.msra.mxu0 0.0
        %5985 = vmatprep.mubr.f32.mxu0 0.0
        %5986 = vmatmul.mubr.f32.gmra.mrb[0].mxu0 %v5821
        %v5987 = vpop.f32.mrb[0].mxu0
        %v5988 = vadd.f32 0.0, %v5987
        %v5989 = vpop.f32.mrb[0].mxu0
        %v5990 = vadd.f32 0.0, %v5989
        %5991 = vmatprep.mubr.f32.mxu0 0.0
        %5992 = vmatmul.mubr.f32.gmra.mrb[0].mxu0 %v5824
        %v5993 = vpop.f32.mrb[0].mxu0
        %v5994 = vadd.f32 0.0, %v5993
        %v5995 = vpop.f32.mrb[0].mxu0
        %v5996 = vadd.f32 0.0, %v5995
        %5997 = vmatprep.mubr.f32.mxu0 0.0
        %5998 = vmatmul.mubr.f32.gmra.mrb[0].mxu0 %v5827
        %v5999 = vpop.f32.mrb[0].mxu0
        %v6000 = vadd.f32 0.0, %v5999
        %v6001 = vpop.f32.mrb[0].mxu0
        %v6002 = vadd.f32 0.0, %v6001
        %6003 = vmatprep.mubr.f32.mxu0 0.0
        %6004 = vmatmul.mubr.f32.gmra.mrb[0].mxu0 %v5830
        %v6005 = vpop.f32.mrb[0].mxu0
        %v6006 = vadd.f32 0.0, %v6005
        %v6007 = vpop.f32.mrb[0].mxu0
        %v6008 = vadd.f32 0.0, %v6007
        %6009 = vdwg.mxu0
        %v6011 = vsel %vm5819, %v5245, 0
        %v6014 = vsel %vm5819, %v5246, 0
        %v6017 = vsel %vm5819, %v5247, 0
        %v6020 = vsel %vm5819, %v5248, 0
        %6022 = vmatprep.subr.mxu0 %v5083
        %6023 = vmatpush1.msra.mxu0 %v5081
        %6024 = vmatprep.subr.mxu0 %v5089
        %6025 = vmatpush1.msra.mxu0 %v5087
        %6026 = vmatprep.subr.mxu0 0.0
        %6027 = vmatpush1.msra.mxu0 0.0
        %6028 = vmatprep.subr.mxu0 0.0
        %6029 = vmatpush1.msra.mxu0 0.0
        %6030 = vmatprep.subr.mxu0 0.0
        %6031 = vmatpush1.msra.mxu0 0.0
        %6032 = vmatprep.subr.mxu0 0.0
        %6033 = vmatpush1.msra.mxu0 0.0
        %6034 = vmatprep.subr.mxu0 0.0
        %6035 = vmatpush1.msra.mxu0 0.0
        %6036 = vmatprep.subr.mxu0 0.0
        %6037 = vmatpush1.msra.mxu0 0.0
        %6038 = vmatprep.subr.mxu0 0.0
        %6039 = vmatpush1.msra.mxu0 0.0
        %6040 = vmatprep.subr.mxu0 0.0
        %6041 = vmatpush1.msra.mxu0 0.0
        %6042 = vmatprep.subr.mxu0 0.0
        %6043 = vmatpush1.msra.mxu0 0.0
        %6044 = vmatprep.subr.mxu0 0.0
        %6045 = vmatpush1.msra.mxu0 0.0
        %6046 = vmatprep.subr.mxu0 0.0
        %6047 = vmatpush1.msra.mxu0 0.0
        %6048 = vmatprep.subr.mxu0 0.0
        %6049 = vmatpush1.msra.mxu0 0.0
        %6050 = vmatprep.subr.mxu0 0.0
        %6051 = vmatpush1.msra.mxu0 0.0
        %6052 = vmatprep.subr.mxu0 0.0
        %6053 = vmatpush1.msra.mxu0 0.0
        %6054 = vmatprep.subr.mxu0 0.0
        %6055 = vmatpush1.msra.mxu0 0.0
        %6056 = vmatprep.subr.mxu0 0.0
        %6057 = vmatpush1.msra.mxu0 0.0
        %6058 = vmatprep.subr.mxu0 0.0
        %6059 = vmatpush1.msra.mxu0 0.0
        %6060 = vmatprep.subr.mxu0 0.0
        %6061 = vmatpush1.msra.mxu0 0.0
        %6062 = vmatprep.subr.mxu0 0.0
        %6063 = vmatpush1.msra.mxu0 0.0
        %6064 = vmatprep.subr.mxu0 0.0
        %6065 = vmatpush1.msra.mxu0 0.0
        %6066 = vmatprep.subr.mxu0 0.0
        %6067 = vmatpush1.msra.mxu0 0.0
        %6068 = vmatprep.subr.mxu0 0.0
        %6069 = vmatpush1.msra.mxu0 0.0
        %6070 = vmatprep.subr.mxu0 0.0
        %6071 = vmatpush1.msra.mxu0 0.0
        %6072 = vmatprep.subr.mxu0 0.0
        %6073 = vmatpush1.msra.mxu0 0.0
        %6074 = vmatprep.subr.mxu0 0.0
        %6075 = vmatpush1.msra.mxu0 0.0
        %6076 = vmatprep.subr.mxu0 0.0
        %6077 = vmatpush1.msra.mxu0 0.0
        %6078 = vmatprep.subr.mxu0 0.0
        %6079 = vmatpush1.msra.mxu0 0.0
        %6080 = vmatprep.subr.mxu0 0.0
        %6081 = vmatpush1.msra.mxu0 0.0
        %6082 = vmatprep.subr.mxu0 0.0
        %6083 = vmatpush1.msra.mxu0 0.0
        %6084 = vmatprep.subr.mxu0 0.0
        %6085 = vmatpush1.msra.mxu0 0.0
        %6086 = vmatprep.mubr.f32.mxu0 0.0
        %6087 = vmatmul.mubr.f32.gmra.mrb[0].mxu0 %v6011
        %v6088 = vpop.f32.mrb[0].mxu0
        %v6089 = vadd.f32 %v5899, %v6088
        %v6090 = vpop.f32.mrb[0].mxu0
        %v6091 = vadd.f32 %v5901, %v6090
        %6092 = vmatprep.mubr.f32.mxu0 0.0
        %6093 = vmatmul.mubr.f32.gmra.mrb[0].mxu0 %v6014
        %v6094 = vpop.f32.mrb[0].mxu0
        %v6095 = vadd.f32 %v5905, %v6094
        %v6096 = vpop.f32.mrb[0].mxu0
        %v6097 = vadd.f32 %v5907, %v6096
        %6098 = vmatprep.mubr.f32.mxu0 0.0
        %6099 = vmatmul.mubr.f32.gmra.mrb[0].mxu0 %v6017
        %v6100 = vpop.f32.mrb[0].mxu0
        %v6101 = vadd.f32 %v5911, %v6100
        %v6102 = vpop.f32.mrb[0].mxu0
        %v6103 = vadd.f32 %v5913, %v6102
        %6104 = vmatprep.mubr.f32.mxu0 0.0
        %6105 = vmatmul.mubr.f32.gmra.mrb[0].mxu0 %v6020
        %v6106 = vpop.f32.mrb[0].mxu0
        %v6107 = vadd.f32 %v5917, %v6106
        %v6108 = vpop.f32.mrb[0].mxu0
        %v6109 = vadd.f32 %v5919, %v6108
        %6110 = vdwg.mxu0
        %6111 = vmatprep.subr.mxu0 %v5237
        %6112 = vmatpush1.msra.mxu0 %v5235
        %6113 = vmatprep.subr.mxu0 %v5243
        %6114 = vmatpush1.msra.mxu0 %v5241
        %6115 = vmatprep.subr.mxu0 0.0
        %6116 = vmatpush1.msra.mxu0 0.0
        %6117 = vmatprep.subr.mxu0 0.0
        %6118 = vmatpush1.msra.mxu0 0.0
        %6119 = vmatprep.subr.mxu0 0.0
        %6120 = vmatpush1.msra.mxu0 0.0
        %6121 = vmatprep.subr.mxu0 0.0
        %6122 = vmatpush1.msra.mxu0 0.0
        %6123 = vmatprep.subr.mxu0 0.0
        %6124 = vmatpush1.msra.mxu0 0.0
        %6125 = vmatprep.subr.mxu0 0.0
        %6126 = vmatpush1.msra.mxu0 0.0
        %6127 = vmatprep.subr.mxu0 0.0
        %6128 = vmatpush1.msra.mxu0 0.0
        %6129 = vmatprep.subr.mxu0 0.0
        %6130 = vmatpush1.msra.mxu0 0.0
        %6131 = vmatprep.subr.mxu0 0.0
        %6132 = vmatpush1.msra.mxu0 0.0
        %6133 = vmatprep.subr.mxu0 0.0
        %6134 = vmatpush1.msra.mxu0 0.0
        %6135 = vmatprep.subr.mxu0 0.0
        %6136 = vmatpush1.msra.mxu0 0.0
        %6137 = vmatprep.subr.mxu0 0.0
        %6138 = vmatpush1.msra.mxu0 0.0
        %6139 = vmatprep.subr.mxu0 0.0
        %6140 = vmatpush1.msra.mxu0 0.0
        %6141 = vmatprep.subr.mxu0 0.0
        %6142 = vmatpush1.msra.mxu0 0.0
        %6143 = vmatprep.subr.mxu0 0.0
        %6144 = vmatpush1.msra.mxu0 0.0
        %6145 = vmatprep.subr.mxu0 0.0
        %6146 = vmatpush1.msra.mxu0 0.0
        %6147 = vmatprep.subr.mxu0 0.0
        %6148 = vmatpush1.msra.mxu0 0.0
        %6149 = vmatprep.subr.mxu0 0.0
        %6150 = vmatpush1.msra.mxu0 0.0
        %6151 = vmatprep.subr.mxu0 0.0
        %6152 = vmatpush1.msra.mxu0 0.0
        %6153 = vmatprep.subr.mxu0 0.0
        %6154 = vmatpush1.msra.mxu0 0.0
        %6155 = vmatprep.subr.mxu0 0.0
        %6156 = vmatpush1.msra.mxu0 0.0
        %6157 = vmatprep.subr.mxu0 0.0
        %6158 = vmatpush1.msra.mxu0 0.0
        %6159 = vmatprep.subr.mxu0 0.0
        %6160 = vmatpush1.msra.mxu0 0.0
        %6161 = vmatprep.subr.mxu0 0.0
        %6162 = vmatpush1.msra.mxu0 0.0
        %6163 = vmatprep.subr.mxu0 0.0
        %6164 = vmatpush1.msra.mxu0 0.0
        %6165 = vmatprep.subr.mxu0 0.0
        %6166 = vmatpush1.msra.mxu0 0.0
        %6167 = vmatprep.subr.mxu0 0.0
        %6168 = vmatpush1.msra.mxu0 0.0
        %6169 = vmatprep.subr.mxu0 0.0
        %6170 = vmatpush1.msra.mxu0 0.0
        %6171 = vmatprep.subr.mxu0 0.0
        %6172 = vmatpush1.msra.mxu0 0.0
        %6173 = vmatprep.subr.mxu0 0.0
        %6174 = vmatpush1.msra.mxu0 0.0
        %6175 = vmatprep.mubr.f32.mxu0 0.0
        %6176 = vmatmul.mubr.f32.gmra.mrb[0].mxu0 %v6011
        %v6177 = vpop.f32.mrb[0].mxu0
        %v6178 = vadd.f32 %v5988, %v6177
        %v6179 = vpop.f32.mrb[0].mxu0
        %v6180 = vadd.f32 %v5990, %v6179
        %6181 = vmatprep.mubr.f32.mxu0 0.0
        %6182 = vmatmul.mubr.f32.gmra.mrb[0].mxu0 %v6014
        %v6183 = vpop.f32.mrb[0].mxu0
        %v6184 = vadd.f32 %v5994, %v6183
        %v6185 = vpop.f32.mrb[0].mxu0
        %v6186 = vadd.f32 %v5996, %v6185
        %6187 = vmatprep.mubr.f32.mxu0 0.0
        %6188 = vmatmul.mubr.f32.gmra.mrb[0].mxu0 %v6017
        %v6189 = vpop.f32.mrb[0].mxu0
        %v6190 = vadd.f32 %v6000, %v6189
        %v6191 = vpop.f32.mrb[0].mxu0
        %v6192 = vadd.f32 %v6002, %v6191
        %6193 = vmatprep.mubr.f32.mxu0 0.0
        %6194 = vmatmul.mubr.f32.gmra.mrb[0].mxu0 %v6020
        %v6195 = vpop.f32.mrb[0].mxu0
        %v6196 = vadd.f32 %v6006, %v6195
        %v6197 = vpop.f32.mrb[0].mxu0
        %v6198 = vadd.f32 %v6008, %v6197
        %6199 = vdwg.mxu0
        %s6200 = scalar_lea.vmem [#allocation16], 4096
        %v6201 = vld [vmem:[%s6200] sm:$0xff]
        %v6202 = vld [vmem:[%s6200 + $0x8] sm:$0xff]
        %v6203 = vld [vmem:[%s6200 + $0x10] sm:$0xff]
        %v6204 = vld [vmem:[%s6200 + $0x18] sm:$0xff]
        %v6205 = vld [vmem:[%s6200 + $0x20] sm:$0xff]
        %v6206 = vld [vmem:[%s6200 + $0x28] sm:$0xff]
        %v6207 = vld [vmem:[%s6200 + $0x30] sm:$0xff]
        %v6208 = vld [vmem:[%s6200 + $0x38] sm:$0xff]
        %v6209 = vld [vmem:[%s6200 + $0x40] sm:$0xff]
        %v6210 = vld [vmem:[%s6200 + $0x48] sm:$0xff]
        %v6211 = vld [vmem:[%s6200 + $0x50] sm:$0xff]
        %v6212 = vld [vmem:[%s6200 + $0x58] sm:$0xff]
        %v6213 = vld [vmem:[%s6200 + $0x60] sm:$0xff]
        %v6214 = vld [vmem:[%s6200 + $0x68] sm:$0xff]
        %v6215 = vld [vmem:[%s6200 + $0x70] sm:$0xff]
        %v6216 = vld [vmem:[%s6200 + $0x78] sm:$0xff]
        %v6217 = vld [vmem:[%s6200 + $0x80] sm:$0xff]
        %v6218 = vld [vmem:[%s6200 + $0x88] sm:$0xff]
        %v6219 = vld [vmem:[%s6200 + $0x90] sm:$0xff]
        %v6220 = vld [vmem:[%s6200 + $0x98] sm:$0xff]
        %v6221 = vld [vmem:[%s6200 + $0xa0] sm:$0xff]
        %v6222 = vld [vmem:[%s6200 + $0xa8] sm:$0xff]
        %v6223 = vld [vmem:[%s6200 + $0xb0] sm:$0xff]
        %v6224 = vld [vmem:[%s6200 + $0xb8] sm:$0xff]
        %v6225 = vld [vmem:[%s6200 + $0xc0] sm:$0xff]
        %v6226 = vld [vmem:[%s6200 + $0xc8] sm:$0xff]
        %v6227 = vld [vmem:[%s6200 + $0xd0] sm:$0xff]
        %v6228 = vld [vmem:[%s6200 + $0xd8] sm:$0xff]
        %v6229 = vld [vmem:[%s6200 + $0xe0] sm:$0xff]
        %v6230 = vld [vmem:[%s6200 + $0xe8] sm:$0xff]
        %v6231 = vld [vmem:[%s6200 + $0xf0] sm:$0xff]
        %v6232 = vld [vmem:[%s6200 + $0xf8] sm:$0xff]
        %v6233 = vld [vmem:[%s6200 + $0x100] sm:$0xff]
        %v6234 = vld [vmem:[%s6200 + $0x108] sm:$0xff]
        %v6235 = vld [vmem:[%s6200 + $0x110] sm:$0xff]
        %v6236 = vld [vmem:[%s6200 + $0x118] sm:$0xff]
        %v6237 = vld [vmem:[%s6200 + $0x120] sm:$0xff]
        %v6238 = vld [vmem:[%s6200 + $0x128] sm:$0xff]
        %v6239 = vld [vmem:[%s6200 + $0x130] sm:$0xff]
        %v6240 = vld [vmem:[%s6200 + $0x138] sm:$0xff]
        %v6241 = vld [vmem:[%s6200 + $0x140] sm:$0xff]
        %v6242 = vld [vmem:[%s6200 + $0x148] sm:$0xff]
        %v6243 = vld [vmem:[%s6200 + $0x150] sm:$0xff]
        %v6244 = vld [vmem:[%s6200 + $0x158] sm:$0xff]
        %v6245 = vld [vmem:[%s6200 + $0x160] sm:$0xff]
        %v6246 = vld [vmem:[%s6200 + $0x168] sm:$0xff]
        %v6247 = vld [vmem:[%s6200 + $0x170] sm:$0xff]
        %v6248 = vld [vmem:[%s6200 + $0x178] sm:$0xff]
        %v6249 = vld [vmem:[%s6200 + $0x180] sm:$0xff]
        %v6250 = vld [vmem:[%s6200 + $0x188] sm:$0xff]
        %v6251 = vld [vmem:[%s6200 + $0x190] sm:$0xff]
        %v6252 = vld [vmem:[%s6200 + $0x198] sm:$0xff]
        %v6253 = vld [vmem:[%s6200 + $0x1a0] sm:$0xff]
        %v6254 = vld [vmem:[%s6200 + $0x1a8] sm:$0xff]
        %v6255 = vld [vmem:[%s6200 + $0x1b0] sm:$0xff]
        %v6256 = vld [vmem:[%s6200 + $0x1b8] sm:$0xff]
        %v6257 = vld [vmem:[%s6200 + $0x1c0] sm:$0xff]
        %v6258 = vld [vmem:[%s6200 + $0x1c8] sm:$0xff]
        %v6259 = vld [vmem:[%s6200 + $0x1d0] sm:$0xff]
        %v6260 = vld [vmem:[%s6200 + $0x1d8] sm:$0xff]
        %v6261 = vld [vmem:[%s6200 + $0x1e0] sm:$0xff]
        %v6262 = vld [vmem:[%s6200 + $0x1e8] sm:$0xff]
        %v6263 = vld [vmem:[%s6200 + $0x1f0] sm:$0xff]
        %v6264 = vld [vmem:[%s6200 + $0x1f8] sm:$0xff]
        %v6265 = vld [vmem:[%s6200 + $0x200] sm:$0xff]
        %v6266 = vld [vmem:[%s6200 + $0x208] sm:$0xff]
        %v6267 = vld [vmem:[%s6200 + $0x210] sm:$0xff]
        %v6268 = vld [vmem:[%s6200 + $0x218] sm:$0xff]
        %v6269 = vld [vmem:[%s6200 + $0x220] sm:$0xff]
        %v6270 = vld [vmem:[%s6200 + $0x228] sm:$0xff]
        %v6271 = vld [vmem:[%s6200 + $0x230] sm:$0xff]
        %v6272 = vld [vmem:[%s6200 + $0x238] sm:$0xff]
        %v6273 = vld [vmem:[%s6200 + $0x240] sm:$0xff]
        %v6274 = vld [vmem:[%s6200 + $0x248] sm:$0xff]
        %v6275 = vld [vmem:[%s6200 + $0x250] sm:$0xff]
        %v6276 = vld [vmem:[%s6200 + $0x258] sm:$0xff]
        %v6277 = vld [vmem:[%s6200 + $0x260] sm:$0xff]
        %v6278 = vld [vmem:[%s6200 + $0x268] sm:$0xff]
        %v6279 = vld [vmem:[%s6200 + $0x270] sm:$0xff]
        %v6280 = vld [vmem:[%s6200 + $0x278] sm:$0xff]
        %v6281 = vld [vmem:[%s6200 + $0x280] sm:$0xff]
        %v6282 = vld [vmem:[%s6200 + $0x288] sm:$0xff]
        %v6283 = vld [vmem:[%s6200 + $0x290] sm:$0xff]
        %v6284 = vld [vmem:[%s6200 + $0x298] sm:$0xff]
        %v6285 = vld [vmem:[%s6200 + $0x2a0] sm:$0xff]
        %v6286 = vld [vmem:[%s6200 + $0x2a8] sm:$0xff]
        %v6287 = vld [vmem:[%s6200 + $0x2b0] sm:$0xff]
        %v6288 = vld [vmem:[%s6200 + $0x2b8] sm:$0xff]
        %v6289 = vld [vmem:[%s6200 + $0x2c0] sm:$0xff]
        %v6290 = vld [vmem:[%s6200 + $0x2c8] sm:$0xff]
        %v6291 = vld [vmem:[%s6200 + $0x2d0] sm:$0xff]
        %v6292 = vld [vmem:[%s6200 + $0x2d8] sm:$0xff]
        %v6293 = vld [vmem:[%s6200 + $0x2e0] sm:$0xff]
        %v6294 = vld [vmem:[%s6200 + $0x2e8] sm:$0xff]
        %v6295 = vld [vmem:[%s6200 + $0x2f0] sm:$0xff]
        %v6296 = vld [vmem:[%s6200 + $0x2f8] sm:$0xff]
        %v6297 = vld [vmem:[%s6200 + $0x300] sm:$0xff]
        %v6298 = vld [vmem:[%s6200 + $0x308] sm:$0xff]
        %v6299 = vld [vmem:[%s6200 + $0x310] sm:$0xff]
        %v6300 = vld [vmem:[%s6200 + $0x318] sm:$0xff]
        %v6301 = vld [vmem:[%s6200 + $0x320] sm:$0xff]
        %v6302 = vld [vmem:[%s6200 + $0x328] sm:$0xff]
        %v6303 = vld [vmem:[%s6200 + $0x330] sm:$0xff]
        %v6304 = vld [vmem:[%s6200 + $0x338] sm:$0xff]
        %v6305 = vld [vmem:[%s6200 + $0x340] sm:$0xff]
        %v6306 = vld [vmem:[%s6200 + $0x348] sm:$0xff]
        %v6307 = vld [vmem:[%s6200 + $0x350] sm:$0xff]
        %v6308 = vld [vmem:[%s6200 + $0x358] sm:$0xff]
        %v6309 = vld [vmem:[%s6200 + $0x360] sm:$0xff]
        %v6310 = vld [vmem:[%s6200 + $0x368] sm:$0xff]
        %v6311 = vld [vmem:[%s6200 + $0x370] sm:$0xff]
        %v6312 = vld [vmem:[%s6200 + $0x378] sm:$0xff]
        %v6313 = vld [vmem:[%s6200 + $0x380] sm:$0xff]
        %v6314 = vld [vmem:[%s6200 + $0x388] sm:$0xff]
        %v6315 = vld [vmem:[%s6200 + $0x390] sm:$0xff]
        %v6316 = vld [vmem:[%s6200 + $0x398] sm:$0xff]
        %v6317 = vld [vmem:[%s6200 + $0x3a0] sm:$0xff]
        %v6318 = vld [vmem:[%s6200 + $0x3a8] sm:$0xff]
        %v6319 = vld [vmem:[%s6200 + $0x3b0] sm:$0xff]
        %v6320 = vld [vmem:[%s6200 + $0x3b8] sm:$0xff]
        %v6321 = vld [vmem:[%s6200 + $0x3c0] sm:$0xff]
        %v6322 = vld [vmem:[%s6200 + $0x3c8] sm:$0xff]
        %v6323 = vld [vmem:[%s6200 + $0x3d0] sm:$0xff]
        %v6324 = vld [vmem:[%s6200 + $0x3d8] sm:$0xff]
        %v6325 = vld [vmem:[%s6200 + $0x3e0] sm:$0xff]
        %v6326 = vld [vmem:[%s6200 + $0x3e8] sm:$0xff]
        %v6327 = vld [vmem:[%s6200 + $0x3f0] sm:$0xff]
        %v6328 = vld [vmem:[%s6200 + $0x3f8] sm:$0xff]
        %v6329 = vld [vmem:[%s6200 + $0x400] sm:$0xff]
        %v6330 = vld [vmem:[%s6200 + $0x408] sm:$0xff]
        %v6331 = vld [vmem:[%s6200 + $0x410] sm:$0xff]
        %v6332 = vld [vmem:[%s6200 + $0x418] sm:$0xff]
        %v6333 = vld [vmem:[%s6200 + $0x420] sm:$0xff]
        %v6334 = vld [vmem:[%s6200 + $0x428] sm:$0xff]
        %v6335 = vld [vmem:[%s6200 + $0x430] sm:$0xff]
        %v6336 = vld [vmem:[%s6200 + $0x438] sm:$0xff]
        %v6337 = vld [vmem:[%s6200 + $0x440] sm:$0xff]
        %v6338 = vld [vmem:[%s6200 + $0x448] sm:$0xff]
        %v6339 = vld [vmem:[%s6200 + $0x450] sm:$0xff]
        %v6340 = vld [vmem:[%s6200 + $0x458] sm:$0xff]
        %v6341 = vld [vmem:[%s6200 + $0x460] sm:$0xff]
        %v6342 = vld [vmem:[%s6200 + $0x468] sm:$0xff]
        %v6343 = vld [vmem:[%s6200 + $0x470] sm:$0xff]
        %v6344 = vld [vmem:[%s6200 + $0x478] sm:$0xff]
        %v6345 = vld [vmem:[%s6200 + $0x480] sm:$0xff]
        %v6346 = vld [vmem:[%s6200 + $0x488] sm:$0xff]
        %v6347 = vld [vmem:[%s6200 + $0x490] sm:$0xff]
        %v6348 = vld [vmem:[%s6200 + $0x498] sm:$0xff]
        %v6349 = vld [vmem:[%s6200 + $0x4a0] sm:$0xff]
        %v6350 = vld [vmem:[%s6200 + $0x4a8] sm:$0xff]
        %v6351 = vld [vmem:[%s6200 + $0x4b0] sm:$0xff]
        %v6352 = vld [vmem:[%s6200 + $0x4b8] sm:$0xff]
        %v6353 = vld [vmem:[%s6200 + $0x4c0] sm:$0xff]
        %v6354 = vld [vmem:[%s6200 + $0x4c8] sm:$0xff]
        %v6355 = vld [vmem:[%s6200 + $0x4d0] sm:$0xff]
        %v6356 = vld [vmem:[%s6200 + $0x4d8] sm:$0xff]
        %v6357 = vld [vmem:[%s6200 + $0x4e0] sm:$0xff]
        %v6358 = vld [vmem:[%s6200 + $0x4e8] sm:$0xff]
        %v6359 = vld [vmem:[%s6200 + $0x4f0] sm:$0xff]
        %v6360 = vld [vmem:[%s6200 + $0x4f8] sm:$0xff]
        %v6361 = vld [vmem:[%s6200 + $0x500] sm:$0xff]
        %v6362 = vld [vmem:[%s6200 + $0x508] sm:$0xff]
        %v6363 = vld [vmem:[%s6200 + $0x510] sm:$0xff]
        %v6364 = vld [vmem:[%s6200 + $0x518] sm:$0xff]
        %v6365 = vld [vmem:[%s6200 + $0x520] sm:$0xff]
        %v6366 = vld [vmem:[%s6200 + $0x528] sm:$0xff]
        %v6367 = vld [vmem:[%s6200 + $0x530] sm:$0xff]
        %v6368 = vld [vmem:[%s6200 + $0x538] sm:$0xff]
        %v6369 = vld [vmem:[%s6200 + $0x540] sm:$0xff]
        %v6370 = vld [vmem:[%s6200 + $0x548] sm:$0xff]
        %v6371 = vld [vmem:[%s6200 + $0x550] sm:$0xff]
        %v6372 = vld [vmem:[%s6200 + $0x558] sm:$0xff]
        %v6373 = vld [vmem:[%s6200 + $0x560] sm:$0xff]
        %v6374 = vld [vmem:[%s6200 + $0x568] sm:$0xff]
        %v6375 = vld [vmem:[%s6200 + $0x570] sm:$0xff]
        %v6376 = vld [vmem:[%s6200 + $0x578] sm:$0xff]
        %v6377 = vld [vmem:[%s6200 + $0x580] sm:$0xff]
        %v6378 = vld [vmem:[%s6200 + $0x588] sm:$0xff]
        %v6379 = vld [vmem:[%s6200 + $0x590] sm:$0xff]
        %v6380 = vld [vmem:[%s6200 + $0x598] sm:$0xff]
        %v6381 = vld [vmem:[%s6200 + $0x5a0] sm:$0xff]
        %v6382 = vld [vmem:[%s6200 + $0x5a8] sm:$0xff]
        %v6383 = vld [vmem:[%s6200 + $0x5b0] sm:$0xff]
        %v6384 = vld [vmem:[%s6200 + $0x5b8] sm:$0xff]
        %v6385 = vld [vmem:[%s6200 + $0x5c0] sm:$0xff]
        %v6386 = vld [vmem:[%s6200 + $0x5c8] sm:$0xff]
        %v6387 = vld [vmem:[%s6200 + $0x5d0] sm:$0xff]
        %v6388 = vld [vmem:[%s6200 + $0x5d8] sm:$0xff]
        %v6389 = vld [vmem:[%s6200 + $0x5e0] sm:$0xff]
        %v6390 = vld [vmem:[%s6200 + $0x5e8] sm:$0xff]
        %v6391 = vld [vmem:[%s6200 + $0x5f0] sm:$0xff]
        %v6392 = vld [vmem:[%s6200 + $0x5f8] sm:$0xff]
        %v6393 = vld [vmem:[%s6200 + $0x600] sm:$0xff]
        %v6394 = vld [vmem:[%s6200 + $0x608] sm:$0xff]
        %v6395 = vld [vmem:[%s6200 + $0x610] sm:$0xff]
        %v6396 = vld [vmem:[%s6200 + $0x618] sm:$0xff]
        %v6397 = vld [vmem:[%s6200 + $0x620] sm:$0xff]
        %v6398 = vld [vmem:[%s6200 + $0x628] sm:$0xff]
        %v6399 = vld [vmem:[%s6200 + $0x630] sm:$0xff]
        %v6400 = vld [vmem:[%s6200 + $0x638] sm:$0xff]
        %v6401 = vld [vmem:[%s6200 + $0x640] sm:$0xff]
        %v6402 = vld [vmem:[%s6200 + $0x648] sm:$0xff]
        %v6403 = vld [vmem:[%s6200 + $0x650] sm:$0xff]
        %v6404 = vld [vmem:[%s6200 + $0x658] sm:$0xff]
        %v6405 = vld [vmem:[%s6200 + $0x660] sm:$0xff]
        %v6406 = vld [vmem:[%s6200 + $0x668] sm:$0xff]
        %v6407 = vld [vmem:[%s6200 + $0x670] sm:$0xff]
        %v6408 = vld [vmem:[%s6200 + $0x678] sm:$0xff]
        %v6409 = vld [vmem:[%s6200 + $0x680] sm:$0xff]
        %v6410 = vld [vmem:[%s6200 + $0x688] sm:$0xff]
        %v6411 = vld [vmem:[%s6200 + $0x690] sm:$0xff]
        %v6412 = vld [vmem:[%s6200 + $0x698] sm:$0xff]
        %v6413 = vld [vmem:[%s6200 + $0x6a0] sm:$0xff]
        %v6414 = vld [vmem:[%s6200 + $0x6a8] sm:$0xff]
        %v6415 = vld [vmem:[%s6200 + $0x6b0] sm:$0xff]
        %v6416 = vld [vmem:[%s6200 + $0x6b8] sm:$0xff]
        %v6417 = vld [vmem:[%s6200 + $0x6c0] sm:$0xff]
        %v6418 = vld [vmem:[%s6200 + $0x6c8] sm:$0xff]
        %v6419 = vld [vmem:[%s6200 + $0x6d0] sm:$0xff]
        %v6420 = vld [vmem:[%s6200 + $0x6d8] sm:$0xff]
        %v6421 = vld [vmem:[%s6200 + $0x6e0] sm:$0xff]
        %v6422 = vld [vmem:[%s6200 + $0x6e8] sm:$0xff]
        %v6423 = vld [vmem:[%s6200 + $0x6f0] sm:$0xff]
        %v6424 = vld [vmem:[%s6200 + $0x6f8] sm:$0xff]
        %v6425 = vld [vmem:[%s6200 + $0x700] sm:$0xff]
        %v6426 = vld [vmem:[%s6200 + $0x708] sm:$0xff]
        %v6427 = vld [vmem:[%s6200 + $0x710] sm:$0xff]
        %v6428 = vld [vmem:[%s6200 + $0x718] sm:$0xff]
        %v6429 = vld [vmem:[%s6200 + $0x720] sm:$0xff]
        %v6430 = vld [vmem:[%s6200 + $0x728] sm:$0xff]
        %v6431 = vld [vmem:[%s6200 + $0x730] sm:$0xff]
        %v6432 = vld [vmem:[%s6200 + $0x738] sm:$0xff]
        %v6433 = vld [vmem:[%s6200 + $0x740] sm:$0xff]
        %v6434 = vld [vmem:[%s6200 + $0x748] sm:$0xff]
        %v6435 = vld [vmem:[%s6200 + $0x750] sm:$0xff]
        %v6436 = vld [vmem:[%s6200 + $0x758] sm:$0xff]
        %v6437 = vld [vmem:[%s6200 + $0x760] sm:$0xff]
        %v6438 = vld [vmem:[%s6200 + $0x768] sm:$0xff]
        %v6439 = vld [vmem:[%s6200 + $0x770] sm:$0xff]
        %v6440 = vld [vmem:[%s6200 + $0x778] sm:$0xff]
        %v6441 = vld [vmem:[%s6200 + $0x780] sm:$0xff]
        %v6442 = vld [vmem:[%s6200 + $0x788] sm:$0xff]
        %v6443 = vld [vmem:[%s6200 + $0x790] sm:$0xff]
        %v6444 = vld [vmem:[%s6200 + $0x798] sm:$0xff]
        %v6445 = vld [vmem:[%s6200 + $0x7a0] sm:$0xff]
        %v6446 = vld [vmem:[%s6200 + $0x7a8] sm:$0xff]
        %v6447 = vld [vmem:[%s6200 + $0x7b0] sm:$0xff]
        %v6448 = vld [vmem:[%s6200 + $0x7b8] sm:$0xff]
        %v6449 = vld [vmem:[%s6200 + $0x7c0] sm:$0xff]
        %v6450 = vld [vmem:[%s6200 + $0x7c8] sm:$0xff]
        %v6451 = vld [vmem:[%s6200 + $0x7d0] sm:$0xff]
        %v6452 = vld [vmem:[%s6200 + $0x7d8] sm:$0xff]
        %v6453 = vld [vmem:[%s6200 + $0x7e0] sm:$0xff]
        %v6454 = vld [vmem:[%s6200 + $0x7e8] sm:$0xff]
        %v6455 = vld [vmem:[%s6200 + $0x7f0] sm:$0xff]
        %v6456 = vld [vmem:[%s6200 + $0x7f8] sm:$0xff]
        %6457 = vmatprep.subr.mxu0 %v6202
        %6458 = vmatpush1.msra.mxu0 %v6201
        %6459 = vmatprep.subr.mxu0 %v6206
        %6460 = vmatpush1.msra.mxu0 %v6205
        %6461 = vmatprep.subr.mxu0 %v6210
        %6462 = vmatpush1.msra.mxu0 %v6209
        %6463 = vmatprep.subr.mxu0 %v6214
        %6464 = vmatpush1.msra.mxu0 %v6213
        %6465 = vmatprep.subr.mxu0 %v6218
        %6466 = vmatpush1.msra.mxu0 %v6217
        %6467 = vmatprep.subr.mxu0 %v6222
        %6468 = vmatpush1.msra.mxu0 %v6221
        %6469 = vmatprep.subr.mxu0 %v6226
        %6470 = vmatpush1.msra.mxu0 %v6225
        %6471 = vmatprep.subr.mxu0 %v6230
        %6472 = vmatpush1.msra.mxu0 %v6229
        %6473 = vmatprep.subr.mxu0 %v6234
        %6474 = vmatpush1.msra.mxu0 %v6233
        %6475 = vmatprep.subr.mxu0 %v6238
        %6476 = vmatpush1.msra.mxu0 %v6237
        %6477 = vmatprep.subr.mxu0 %v6242
        %6478 = vmatpush1.msra.mxu0 %v6241
        %6479 = vmatprep.subr.mxu0 %v6246
        %6480 = vmatpush1.msra.mxu0 %v6245
        %6481 = vmatprep.subr.mxu0 %v6250
        %6482 = vmatpush1.msra.mxu0 %v6249
        %6483 = vmatprep.subr.mxu0 %v6254
        %6484 = vmatpush1.msra.mxu0 %v6253
        %6485 = vmatprep.subr.mxu0 %v6258
        %6486 = vmatpush1.msra.mxu0 %v6257
        %6487 = vmatprep.subr.mxu0 %v6262
        %6488 = vmatpush1.msra.mxu0 %v6261
        %6489 = vmatprep.subr.mxu0 %v6266
        %6490 = vmatpush1.msra.mxu0 %v6265
        %6491 = vmatprep.subr.mxu0 %v6270
        %6492 = vmatpush1.msra.mxu0 %v6269
        %6493 = vmatprep.subr.mxu0 %v6274
        %6494 = vmatpush1.msra.mxu0 %v6273
        %6495 = vmatprep.subr.mxu0 %v6278
        %6496 = vmatpush1.msra.mxu0 %v6277
        %6497 = vmatprep.subr.mxu0 %v6282
        %6498 = vmatpush1.msra.mxu0 %v6281
        %6499 = vmatprep.subr.mxu0 %v6286
        %6500 = vmatpush1.msra.mxu0 %v6285
        %6501 = vmatprep.subr.mxu0 %v6290
        %6502 = vmatpush1.msra.mxu0 %v6289
        %6503 = vmatprep.subr.mxu0 %v6294
        %6504 = vmatpush1.msra.mxu0 %v6293
        %6505 = vmatprep.subr.mxu0 %v6298
        %6506 = vmatpush1.msra.mxu0 %v6297
        %6507 = vmatprep.subr.mxu0 %v6302
        %6508 = vmatpush1.msra.mxu0 %v6301
        %6509 = vmatprep.subr.mxu0 %v6306
        %6510 = vmatpush1.msra.mxu0 %v6305
        %6511 = vmatprep.subr.mxu0 %v6310
        %6512 = vmatpush1.msra.mxu0 %v6309
        %6513 = vmatprep.subr.mxu0 %v6314
        %6514 = vmatpush1.msra.mxu0 %v6313
        %6515 = vmatprep.subr.mxu0 %v6318
        %6516 = vmatpush1.msra.mxu0 %v6317
        %6517 = vmatprep.subr.mxu0 %v6322
        %6518 = vmatpush1.msra.mxu0 %v6321
        %6519 = vmatprep.subr.mxu0 %v6326
        %6520 = vmatpush1.msra.mxu0 %v6325
        %6521 = vmatprep.mubr.f32.mxu0 %v4674
        %6522 = vmatmul.mubr.f32.gmra.mrb[0].mxu0 %v4673
        %v6523 = vpop.f32.mrb[0].mxu0
        %v6524 = vadd.f32 0.0, %v6523
        %v6525 = vpop.f32.mrb[0].mxu0
        %v6526 = vadd.f32 0.0, %v6525
        %6527 = vmatprep.mubr.f32.mxu0 %v4678
        %6528 = vmatmul.mubr.f32.gmra.mrb[0].mxu0 %v4677
        %v6529 = vpop.f32.mrb[0].mxu0
        %v6530 = vadd.f32 0.0, %v6529
        %v6531 = vpop.f32.mrb[0].mxu0
        %v6532 = vadd.f32 0.0, %v6531
        %6533 = vdwg.mxu0
        %6534 = vmatprep.subr.mxu0 %v6330
        %6535 = vmatpush1.msra.mxu0 %v6329
        %6536 = vmatprep.subr.mxu0 %v6334
        %6537 = vmatpush1.msra.mxu0 %v6333
        %6538 = vmatprep.subr.mxu0 %v6338
        %6539 = vmatpush1.msra.mxu0 %v6337
        %6540 = vmatprep.subr.mxu0 %v6342
        %6541 = vmatpush1.msra.mxu0 %v6341
        %6542 = vmatprep.subr.mxu0 %v6346
        %6543 = vmatpush1.msra.mxu0 %v6345
        %6544 = vmatprep.subr.mxu0 %v6350
        %6545 = vmatpush1.msra.mxu0 %v6349
        %6546 = vmatprep.subr.mxu0 %v6354
        %6547 = vmatpush1.msra.mxu0 %v6353
        %6548 = vmatprep.subr.mxu0 %v6358
        %6549 = vmatpush1.msra.mxu0 %v6357
        %6550 = vmatprep.subr.mxu0 %v6362
        %6551 = vmatpush1.msra.mxu0 %v6361
        %6552 = vmatprep.subr.mxu0 %v6366
        %6553 = vmatpush1.msra.mxu0 %v6365
        %6554 = vmatprep.subr.mxu0 %v6370
        %6555 = vmatpush1.msra.mxu0 %v6369
        %6556 = vmatprep.subr.mxu0 %v6374
        %6557 = vmatpush1.msra.mxu0 %v6373
        %6558 = vmatprep.subr.mxu0 %v6378
        %6559 = vmatpush1.msra.mxu0 %v6377
        %6560 = vmatprep.subr.mxu0 %v6382
        %6561 = vmatpush1.msra.mxu0 %v6381
        %6562 = vmatprep.subr.mxu0 %v6386
        %6563 = vmatpush1.msra.mxu0 %v6385
        %6564 = vmatprep.subr.mxu0 %v6390
        %6565 = vmatpush1.msra.mxu0 %v6389
        %6566 = vmatprep.subr.mxu0 %v6394
        %6567 = vmatpush1.msra.mxu0 %v6393
        %6568 = vmatprep.subr.mxu0 %v6398
        %6569 = vmatpush1.msra.mxu0 %v6397
        %6570 = vmatprep.subr.mxu0 %v6402
        %6571 = vmatpush1.msra.mxu0 %v6401
        %6572 = vmatprep.subr.mxu0 %v6406
        %6573 = vmatpush1.msra.mxu0 %v6405
        %6574 = vmatprep.subr.mxu0 %v6410
        %6575 = vmatpush1.msra.mxu0 %v6409
        %6576 = vmatprep.subr.mxu0 %v6414
        %6577 = vmatpush1.msra.mxu0 %v6413
        %6578 = vmatprep.subr.mxu0 %v6418
        %6579 = vmatpush1.msra.mxu0 %v6417
        %6580 = vmatprep.subr.mxu0 %v6422
        %6581 = vmatpush1.msra.mxu0 %v6421
        %6582 = vmatprep.subr.mxu0 %v6426
        %6583 = vmatpush1.msra.mxu0 %v6425
        %6584 = vmatprep.subr.mxu0 %v6430
        %6585 = vmatpush1.msra.mxu0 %v6429
        %6586 = vmatprep.subr.mxu0 %v6434
        %6587 = vmatpush1.msra.mxu0 %v6433
        %6588 = vmatprep.subr.mxu0 %v6438
        %6589 = vmatpush1.msra.mxu0 %v6437
        %6590 = vmatprep.subr.mxu0 %v6442
        %6591 = vmatpush1.msra.mxu0 %v6441
        %6592 = vmatprep.subr.mxu0 %v6446
        %6593 = vmatpush1.msra.mxu0 %v6445
        %6594 = vmatprep.subr.mxu0 %v6450
        %6595 = vmatpush1.msra.mxu0 %v6449
        %6596 = vmatprep.subr.mxu0 %v6454
        %6597 = vmatpush1.msra.mxu0 %v6453
        %6598 = vmatprep.mubr.f32.mxu0 %v4676
        %6599 = vmatmul.mubr.f32.gmra.mrb[0].mxu0 %v4675
        %v6600 = vpop.f32.mrb[0].mxu0
        %v6601 = vadd.f32 %v6524, %v6600
        %v6602 = vpop.f32.mrb[0].mxu0
        %v6603 = vadd.f32 %v6526, %v6602
        %6604 = vmatprep.mubr.f32.mxu0 %v4680
        %6605 = vmatmul.mubr.f32.gmra.mrb[0].mxu0 %v4679
        %v6606 = vpop.f32.mrb[0].mxu0
        %v6607 = vadd.f32 %v6530, %v6606
        %v6608 = vpop.f32.mrb[0].mxu0
        %v6609 = vadd.f32 %v6532, %v6608
        %6610 = vdwg.mxu0
        %6611 = vmatprep.subr.mxu0 %v6204
        %6612 = vmatpush1.msra.mxu0 %v6203
        %6613 = vmatprep.subr.mxu0 %v6208
        %6614 = vmatpush1.msra.mxu0 %v6207
        %6615 = vmatprep.subr.mxu0 %v6212
        %6616 = vmatpush1.msra.mxu0 %v6211
        %6617 = vmatprep.subr.mxu0 %v6216
        %6618 = vmatpush1.msra.mxu0 %v6215
        %6619 = vmatprep.subr.mxu0 %v6220
        %6620 = vmatpush1.msra.mxu0 %v6219
        %6621 = vmatprep.subr.mxu0 %v6224
        %6622 = vmatpush1.msra.mxu0 %v6223
        %6623 = vmatprep.subr.mxu0 %v6228
        %6624 = vmatpush1.msra.mxu0 %v6227
        %6625 = vmatprep.subr.mxu0 %v6232
        %6626 = vmatpush1.msra.mxu0 %v6231
        %6627 = vmatprep.subr.mxu0 %v6236
        %6628 = vmatpush1.msra.mxu0 %v6235
        %6629 = vmatprep.subr.mxu0 %v6240
        %6630 = vmatpush1.msra.mxu0 %v6239
        %6631 = vmatprep.subr.mxu0 %v6244
        %6632 = vmatpush1.msra.mxu0 %v6243
        %6633 = vmatprep.subr.mxu0 %v6248
        %6634 = vmatpush1.msra.mxu0 %v6247
        %6635 = vmatprep.subr.mxu0 %v6252
        %6636 = vmatpush1.msra.mxu0 %v6251
        %6637 = vmatprep.subr.mxu0 %v6256
        %6638 = vmatpush1.msra.mxu0 %v6255
        %6639 = vmatprep.subr.mxu0 %v6260
        %6640 = vmatpush1.msra.mxu0 %v6259
        %6641 = vmatprep.subr.mxu0 %v6264
        %6642 = vmatpush1.msra.mxu0 %v6263
        %6643 = vmatprep.subr.mxu0 %v6268
        %6644 = vmatpush1.msra.mxu0 %v6267
        %6645 = vmatprep.subr.mxu0 %v6272
        %6646 = vmatpush1.msra.mxu0 %v6271
        %6647 = vmatprep.subr.mxu0 %v6276
        %6648 = vmatpush1.msra.mxu0 %v6275
        %6649 = vmatprep.subr.mxu0 %v6280
        %6650 = vmatpush1.msra.mxu0 %v6279
        %6651 = vmatprep.subr.mxu0 %v6284
        %6652 = vmatpush1.msra.mxu0 %v6283
        %6653 = vmatprep.subr.mxu0 %v6288
        %6654 = vmatpush1.msra.mxu0 %v6287
        %6655 = vmatprep.subr.mxu0 %v6292
        %6656 = vmatpush1.msra.mxu0 %v6291
        %6657 = vmatprep.subr.mxu0 %v6296
        %6658 = vmatpush1.msra.mxu0 %v6295
        %6659 = vmatprep.subr.mxu0 %v6300
        %6660 = vmatpush1.msra.mxu0 %v6299
        %6661 = vmatprep.subr.mxu0 %v6304
        %6662 = vmatpush1.msra.mxu0 %v6303
        %6663 = vmatprep.subr.mxu0 %v6308
        %6664 = vmatpush1.msra.mxu0 %v6307
        %6665 = vmatprep.subr.mxu0 %v6312
        %6666 = vmatpush1.msra.mxu0 %v6311
        %6667 = vmatprep.subr.mxu0 %v6316
        %6668 = vmatpush1.msra.mxu0 %v6315
        %6669 = vmatprep.subr.mxu0 %v6320
        %6670 = vmatpush1.msra.mxu0 %v6319
        %6671 = vmatprep.subr.mxu0 %v6324
        %6672 = vmatpush1.msra.mxu0 %v6323
        %6673 = vmatprep.subr.mxu0 %v6328
        %6674 = vmatpush1.msra.mxu0 %v6327
        %6675 = vmatprep.mubr.f32.mxu0 %v4674
        %6676 = vmatmul.mubr.f32.gmra.mrb[0].mxu0 %v4673
        %v6677 = vpop.f32.mrb[0].mxu0
        %v6678 = vadd.f32 0.0, %v6677
        %v6679 = vpop.f32.mrb[0].mxu0
        %v6680 = vadd.f32 0.0, %v6679
        %6681 = vmatprep.mubr.f32.mxu0 %v4678
        %6682 = vmatmul.mubr.f32.gmra.mrb[0].mxu0 %v4677
        %v6683 = vpop.f32.mrb[0].mxu0
        %v6684 = vadd.f32 0.0, %v6683
        %v6685 = vpop.f32.mrb[0].mxu0
        %v6686 = vadd.f32 0.0, %v6685
        %6687 = vdwg.mxu0
        %6688 = vmatprep.subr.mxu0 %v6332
        %6689 = vmatpush1.msra.mxu0 %v6331
        %6690 = vmatprep.subr.mxu0 %v6336
        %6691 = vmatpush1.msra.mxu0 %v6335
        %6692 = vmatprep.subr.mxu0 %v6340
        %6693 = vmatpush1.msra.mxu0 %v6339
        %6694 = vmatprep.subr.mxu0 %v6344
        %6695 = vmatpush1.msra.mxu0 %v6343
        %6696 = vmatprep.subr.mxu0 %v6348
        %6697 = vmatpush1.msra.mxu0 %v6347
        %6698 = vmatprep.subr.mxu0 %v6352
        %6699 = vmatpush1.msra.mxu0 %v6351
        %6700 = vmatprep.subr.mxu0 %v6356
        %6701 = vmatpush1.msra.mxu0 %v6355
        %6702 = vmatprep.subr.mxu0 %v6360
        %6703 = vmatpush1.msra.mxu0 %v6359
        %6704 = vmatprep.subr.mxu0 %v6364
        %6705 = vmatpush1.msra.mxu0 %v6363
        %6706 = vmatprep.subr.mxu0 %v6368
        %6707 = vmatpush1.msra.mxu0 %v6367
        %6708 = vmatprep.subr.mxu0 %v6372
        %6709 = vmatpush1.msra.mxu0 %v6371
        %6710 = vmatprep.subr.mxu0 %v6376
        %6711 = vmatpush1.msra.mxu0 %v6375
        %6712 = vmatprep.subr.mxu0 %v6380
        %6713 = vmatpush1.msra.mxu0 %v6379
        %6714 = vmatprep.subr.mxu0 %v6384
        %6715 = vmatpush1.msra.mxu0 %v6383
        %6716 = vmatprep.subr.mxu0 %v6388
        %6717 = vmatpush1.msra.mxu0 %v6387
        %6718 = vmatprep.subr.mxu0 %v6392
        %6719 = vmatpush1.msra.mxu0 %v6391
        %6720 = vmatprep.subr.mxu0 %v6396
        %6721 = vmatpush1.msra.mxu0 %v6395
        %6722 = vmatprep.subr.mxu0 %v6400
        %6723 = vmatpush1.msra.mxu0 %v6399
        %6724 = vmatprep.subr.mxu0 %v6404
        %6725 = vmatpush1.msra.mxu0 %v6403
        %6726 = vmatprep.subr.mxu0 %v6408
        %6727 = vmatpush1.msra.mxu0 %v6407
        %6728 = vmatprep.subr.mxu0 %v6412
        %6729 = vmatpush1.msra.mxu0 %v6411
        %6730 = vmatprep.subr.mxu0 %v6416
        %6731 = vmatpush1.msra.mxu0 %v6415
        %6732 = vmatprep.subr.mxu0 %v6420
        %6733 = vmatpush1.msra.mxu0 %v6419
        %6734 = vmatprep.subr.mxu0 %v6424
        %6735 = vmatpush1.msra.mxu0 %v6423
        %6736 = vmatprep.subr.mxu0 %v6428
        %6737 = vmatpush1.msra.mxu0 %v6427
        %6738 = vmatprep.subr.mxu0 %v6432
        %6739 = vmatpush1.msra.mxu0 %v6431
        %6740 = vmatprep.subr.mxu0 %v6436
        %6741 = vmatpush1.msra.mxu0 %v6435
        %6742 = vmatprep.subr.mxu0 %v6440
        %6743 = vmatpush1.msra.mxu0 %v6439
        %6744 = vmatprep.subr.mxu0 %v6444
        %6745 = vmatpush1.msra.mxu0 %v6443
        %6746 = vmatprep.subr.mxu0 %v6448
        %6747 = vmatpush1.msra.mxu0 %v6447
        %6748 = vmatprep.subr.mxu0 %v6452
        %6749 = vmatpush1.msra.mxu0 %v6451
        %6750 = vmatprep.subr.mxu0 %v6456
        %6751 = vmatpush1.msra.mxu0 %v6455
        %6752 = vmatprep.mubr.f32.mxu0 %v4676
        %6753 = vmatmul.mubr.f32.gmra.mrb[0].mxu0 %v4675
        %v6754 = vpop.f32.mrb[0].mxu0
        %v6755 = vadd.f32 %v6678, %v6754
        %v6756 = vpop.f32.mrb[0].mxu0
        %v6757 = vadd.f32 %v6680, %v6756
        %6758 = vmatprep.mubr.f32.mxu0 %v4680
        %6759 = vmatmul.mubr.f32.gmra.mrb[0].mxu0 %v4679
        %v6760 = vpop.f32.mrb[0].mxu0
        %v6761 = vadd.f32 %v6684, %v6760
        %v6762 = vpop.f32.mrb[0].mxu0
        %v6763 = vadd.f32 %v6686, %v6762
        %6764 = vdwg.mxu0
        %s6765 = scalar_lea.vmem %s9, 64
        %v6766 = vld [vmem:[%s6765] sm:$0xff]
        %v6767 = vld [vmem:[%s6765 + $0x8] sm:$0xff]
        %v6768 = vld [vmem:[%s6765 + $0x10] sm:$0xff]
        %v6769 = vld [vmem:[%s6765 + $0x18] sm:$0xff]
        %v6771 = vsel %vm5819, %v6766, 0
        %v6774 = vsel %vm5819, %v6767, 0
        %v6777 = vsel %vm5819, %v6768, 0
        %v6780 = vsel %vm5819, %v6769, 0
        %6782 = vmatprep.subr.mxu0 %v6603
        %6783 = vmatpush1.msra.mxu0 %v6601
        %6784 = vmatprep.subr.mxu0 %v6609
        %6785 = vmatpush1.msra.mxu0 %v6607
        %6786 = vmatprep.subr.mxu0 0.0
        %6787 = vmatpush1.msra.mxu0 0.0
        %6788 = vmatprep.subr.mxu0 0.0
        %6789 = vmatpush1.msra.mxu0 0.0
        %6790 = vmatprep.subr.mxu0 0.0
        %6791 = vmatpush1.msra.mxu0 0.0
        %6792 = vmatprep.subr.mxu0 0.0
        %6793 = vmatpush1.msra.mxu0 0.0
        %6794 = vmatprep.subr.mxu0 0.0
        %6795 = vmatpush1.msra.mxu0 0.0
        %6796 = vmatprep.subr.mxu0 0.0
        %6797 = vmatpush1.msra.mxu0 0.0
        %6798 = vmatprep.subr.mxu0 0.0
        %6799 = vmatpush1.msra.mxu0 0.0
        %6800 = vmatprep.subr.mxu0 0.0
        %6801 = vmatpush1.msra.mxu0 0.0
        %6802 = vmatprep.subr.mxu0 0.0
        %6803 = vmatpush1.msra.mxu0 0.0
        %6804 = vmatprep.subr.mxu0 0.0
        %6805 = vmatpush1.msra.mxu0 0.0
        %6806 = vmatprep.subr.mxu0 0.0
        %6807 = vmatpush1.msra.mxu0 0.0
        %6808 = vmatprep.subr.mxu0 0.0
        %6809 = vmatpush1.msra.mxu0 0.0
        %6810 = vmatprep.subr.mxu0 0.0
        %6811 = vmatpush1.msra.mxu0 0.0
        %6812 = vmatprep.subr.mxu0 0.0
        %6813 = vmatpush1.msra.mxu0 0.0
        %6814 = vmatprep.subr.mxu0 0.0
        %6815 = vmatpush1.msra.mxu0 0.0
        %6816 = vmatprep.subr.mxu0 0.0
        %6817 = vmatpush1.msra.mxu0 0.0
        %6818 = vmatprep.subr.mxu0 0.0
        %6819 = vmatpush1.msra.mxu0 0.0
        %6820 = vmatprep.subr.mxu0 0.0
        %6821 = vmatpush1.msra.mxu0 0.0
        %6822 = vmatprep.subr.mxu0 0.0
        %6823 = vmatpush1.msra.mxu0 0.0
        %6824 = vmatprep.subr.mxu0 0.0
        %6825 = vmatpush1.msra.mxu0 0.0
        %6826 = vmatprep.subr.mxu0 0.0
        %6827 = vmatpush1.msra.mxu0 0.0
        %6828 = vmatprep.subr.mxu0 0.0
        %6829 = vmatpush1.msra.mxu0 0.0
        %6830 = vmatprep.subr.mxu0 0.0
        %6831 = vmatpush1.msra.mxu0 0.0
        %6832 = vmatprep.subr.mxu0 0.0
        %6833 = vmatpush1.msra.mxu0 0.0
        %6834 = vmatprep.subr.mxu0 0.0
        %6835 = vmatpush1.msra.mxu0 0.0
        %6836 = vmatprep.subr.mxu0 0.0
        %6837 = vmatpush1.msra.mxu0 0.0
        %6838 = vmatprep.subr.mxu0 0.0
        %6839 = vmatpush1.msra.mxu0 0.0
        %6840 = vmatprep.subr.mxu0 0.0
        %6841 = vmatpush1.msra.mxu0 0.0
        %6842 = vmatprep.subr.mxu0 0.0
        %6843 = vmatpush1.msra.mxu0 0.0
        %6844 = vmatprep.subr.mxu0 0.0
        %6845 = vmatpush1.msra.mxu0 0.0
        %6846 = vmatprep.mubr.f32.mxu0 0.0
        %6847 = vmatmul.mubr.f32.gmra.mrb[0].mxu0 %v6771
        %v6848 = vpop.f32.mrb[0].mxu0
        %v6849 = vadd.f32 0.0, %v6848
        %v6850 = vpop.f32.mrb[0].mxu0
        %v6851 = vadd.f32 0.0, %v6850
        %6852 = vmatprep.mubr.f32.mxu0 0.0
        %6853 = vmatmul.mubr.f32.gmra.mrb[0].mxu0 %v6774
        %v6854 = vpop.f32.mrb[0].mxu0
        %v6855 = vadd.f32 0.0, %v6854
        %v6856 = vpop.f32.mrb[0].mxu0
        %v6857 = vadd.f32 0.0, %v6856
        %6858 = vmatprep.mubr.f32.mxu0 0.0
        %6859 = vmatmul.mubr.f32.gmra.mrb[0].mxu0 %v6777
        %v6860 = vpop.f32.mrb[0].mxu0
        %v6861 = vadd.f32 0.0, %v6860
        %v6862 = vpop.f32.mrb[0].mxu0
        %v6863 = vadd.f32 0.0, %v6862
        %6864 = vmatprep.mubr.f32.mxu0 0.0
        %6865 = vmatmul.mubr.f32.gmra.mrb[0].mxu0 %v6780
        %v6866 = vpop.f32.mrb[0].mxu0
        %v6867 = vadd.f32 0.0, %v6866
        %v6868 = vpop.f32.mrb[0].mxu0
        %v6869 = vadd.f32 0.0, %v6868
        %6870 = vdwg.mxu0
        %6871 = vmatprep.subr.mxu0 %v6757
        %6872 = vmatpush1.msra.mxu0 %v6755
        %6873 = vmatprep.subr.mxu0 %v6763
        %6874 = vmatpush1.msra.mxu0 %v6761
        %6875 = vmatprep.subr.mxu0 0.0
        %6876 = vmatpush1.msra.mxu0 0.0
        %6877 = vmatprep.subr.mxu0 0.0
        %6878 = vmatpush1.msra.mxu0 0.0
        %6879 = vmatprep.subr.mxu0 0.0
        %6880 = vmatpush1.msra.mxu0 0.0
        %6881 = vmatprep.subr.mxu0 0.0
        %6882 = vmatpush1.msra.mxu0 0.0
        %6883 = vmatprep.subr.mxu0 0.0
        %6884 = vmatpush1.msra.mxu0 0.0
        %6885 = vmatprep.subr.mxu0 0.0
        %6886 = vmatpush1.msra.mxu0 0.0
        %6887 = vmatprep.subr.mxu0 0.0
        %6888 = vmatpush1.msra.mxu0 0.0
        %6889 = vmatprep.subr.mxu0 0.0
        %6890 = vmatpush1.msra.mxu0 0.0
        %6891 = vmatprep.subr.mxu0 0.0
        %6892 = vmatpush1.msra.mxu0 0.0
        %6893 = vmatprep.subr.mxu0 0.0
        %6894 = vmatpush1.msra.mxu0 0.0
        %6895 = vmatprep.subr.mxu0 0.0
        %6896 = vmatpush1.msra.mxu0 0.0
        %6897 = vmatprep.subr.mxu0 0.0
        %6898 = vmatpush1.msra.mxu0 0.0
        %6899 = vmatprep.subr.mxu0 0.0
        %6900 = vmatpush1.msra.mxu0 0.0
        %6901 = vmatprep.subr.mxu0 0.0
        %6902 = vmatpush1.msra.mxu0 0.0
        %6903 = vmatprep.subr.mxu0 0.0
        %6904 = vmatpush1.msra.mxu0 0.0
        %6905 = vmatprep.subr.mxu0 0.0
        %6906 = vmatpush1.msra.mxu0 0.0
        %6907 = vmatprep.subr.mxu0 0.0
        %6908 = vmatpush1.msra.mxu0 0.0
        %6909 = vmatprep.subr.mxu0 0.0
        %6910 = vmatpush1.msra.mxu0 0.0
        %6911 = vmatprep.subr.mxu0 0.0
        %6912 = vmatpush1.msra.mxu0 0.0
        %6913 = vmatprep.subr.mxu0 0.0
        %6914 = vmatpush1.msra.mxu0 0.0
        %6915 = vmatprep.subr.mxu0 0.0
        %6916 = vmatpush1.msra.mxu0 0.0
        %6917 = vmatprep.subr.mxu0 0.0
        %6918 = vmatpush1.msra.mxu0 0.0
        %6919 = vmatprep.subr.mxu0 0.0
        %6920 = vmatpush1.msra.mxu0 0.0
        %6921 = vmatprep.subr.mxu0 0.0
        %6922 = vmatpush1.msra.mxu0 0.0
        %6923 = vmatprep.subr.mxu0 0.0
        %6924 = vmatpush1.msra.mxu0 0.0
        %6925 = vmatprep.subr.mxu0 0.0
        %6926 = vmatpush1.msra.mxu0 0.0
        %6927 = vmatprep.subr.mxu0 0.0
        %6928 = vmatpush1.msra.mxu0 0.0
        %6929 = vmatprep.subr.mxu0 0.0
        %6930 = vmatpush1.msra.mxu0 0.0
        %6931 = vmatprep.subr.mxu0 0.0
        %6932 = vmatpush1.msra.mxu0 0.0
        %6933 = vmatprep.subr.mxu0 0.0
        %6934 = vmatpush1.msra.mxu0 0.0
        %6935 = vmatprep.mubr.f32.mxu0 0.0
        %6936 = vmatmul.mubr.f32.gmra.mrb[0].mxu0 %v6771
        %v6937 = vpop.f32.mrb[0].mxu0
        %v6938 = vadd.f32 0.0, %v6937
        %v6939 = vpop.f32.mrb[0].mxu0
        %v6940 = vadd.f32 0.0, %v6939
        %6941 = vmatprep.mubr.f32.mxu0 0.0
        %6942 = vmatmul.mubr.f32.gmra.mrb[0].mxu0 %v6774
        %v6943 = vpop.f32.mrb[0].mxu0
        %v6944 = vadd.f32 0.0, %v6943
        %v6945 = vpop.f32.mrb[0].mxu0
        %v6946 = vadd.f32 0.0, %v6945
        %6947 = vmatprep.mubr.f32.mxu0 0.0
        %6948 = vmatmul.mubr.f32.gmra.mrb[0].mxu0 %v6777
        %v6949 = vpop.f32.mrb[0].mxu0
        %v6950 = vadd.f32 0.0, %v6949
        %v6951 = vpop.f32.mrb[0].mxu0
        %v6952 = vadd.f32 0.0, %v6951
        %6953 = vmatprep.mubr.f32.mxu0 0.0
        %6954 = vmatmul.mubr.f32.gmra.mrb[0].mxu0 %v6780
        %v6955 = vpop.f32.mrb[0].mxu0
        %v6956 = vadd.f32 0.0, %v6955
        %v6957 = vpop.f32.mrb[0].mxu0
        %v6958 = vadd.f32 0.0, %v6957
        %6959 = vdwg.mxu0
        %v6960 = vadd.f32 %v6089, %v6849
        %v6961 = vadd.f32 %v6091, %v6851
        %v6962 = vadd.f32 %v6178, %v6938
        %v6963 = vadd.f32 %v6180, %v6940
        %v6964 = vadd.f32 %v6095, %v6855
        %v6965 = vadd.f32 %v6097, %v6857
        %v6966 = vadd.f32 %v6184, %v6944
        %v6967 = vadd.f32 %v6186, %v6946
        %v6968 = vadd.f32 %v6101, %v6861
        %v6969 = vadd.f32 %v6103, %v6863
        %v6970 = vadd.f32 %v6190, %v6950
        %v6971 = vadd.f32 %v6192, %v6952
        %v6972 = vadd.f32 %v6107, %v6867
        %v6973 = vadd.f32 %v6109, %v6869
        %v6974 = vadd.f32 %v6196, %v6956
        %v6975 = vadd.f32 %v6198, %v6958
        %v6976 = vld [vmem:[#allocation17] sm:$0xf]
        %v6978 = vlaneseq
        %v6979 = vshrl.u32 %v6978, 7
        %v6980 = vsub.s32 0, %v6979
        %v6981 = vrot.slane %v6976, %v6980
        %v6982 = vlaneseq
        %v6983 = vshrl.u32 %v6982, 7
        %v6984 = vsub.s32 1, %v6983
        %v6985 = vrot.slane %v6976, %v6984
        %v6986 = vlaneseq
        %v6987 = vshrl.u32 %v6986, 7
        %v6988 = vsub.s32 2, %v6987
        %v6989 = vrot.slane %v6976, %v6988
        %v6990 = vlaneseq
        %v6991 = vshrl.u32 %v6990, 7
        %v6992 = vsub.s32 3, %v6991
        %v6993 = vrot.slane %v6976, %v6992
        %v6998 = vadd.f32 %v6960, %v6981
        %v6999 = vadd.f32 %v6961, %v6985
        %v7000 = vadd.f32 %v6962, %v6989
        %v7001 = vadd.f32 %v6963, %v6993
        %v7002 = vadd.f32 %v6964, %v6981
        %v7003 = vadd.f32 %v6965, %v6985
        %v7004 = vadd.f32 %v6966, %v6989
        %v7005 = vadd.f32 %v6967, %v6993
        %v7006 = vadd.f32 %v6968, %v6981
        %v7007 = vadd.f32 %v6969, %v6985
        %v7008 = vadd.f32 %v6970, %v6989
        %v7009 = vadd.f32 %v6971, %v6993
        %v7010 = vadd.f32 %v6972, %v6981
        %v7011 = vadd.f32 %v6973, %v6985
        %v7012 = vadd.f32 %v6974, %v6989
        %v7013 = vadd.f32 %v6975, %v6993
        %v7014 = vmax.f32 %v6998, 0.0
        %v7015 = vmax.f32 %v6999, 0.0
        %v7016 = vmax.f32 %v7000, 0.0
        %v7017 = vmax.f32 %v7001, 0.0
        %v7018 = vmax.f32 %v7002, 0.0
        %v7019 = vmax.f32 %v7003, 0.0
        %v7020 = vmax.f32 %v7004, 0.0
        %v7021 = vmax.f32 %v7005, 0.0
        %v7022 = vmax.f32 %v7006, 0.0
        %v7023 = vmax.f32 %v7007, 0.0
        %v7024 = vmax.f32 %v7008, 0.0
        %v7025 = vmax.f32 %v7009, 0.0
        %v7026 = vmax.f32 %v7010, 0.0
        %v7027 = vmax.f32 %v7011, 0.0
        %v7028 = vmax.f32 %v7012, 0.0
        %v7029 = vmax.f32 %v7013, 0.0
        %v7030 = vld [vmem:[%s13] sm:$0xff]
        %v7031 = vld [vmem:[%s13 + $0x8] sm:$0xff]
        %v7032 = vld [vmem:[%s13 + $0x10] sm:$0xff]
        %v7033 = vld [vmem:[%s13 + $0x18] sm:$0xff]
        %v7034 = vld [vmem:[%s13 + $0x20] sm:$0xff]
        %v7035 = vld [vmem:[%s13 + $0x28] sm:$0xff]
        %v7036 = vld [vmem:[%s13 + $0x30] sm:$0xff]
        %v7037 = vld [vmem:[%s13 + $0x38] sm:$0xff]
        %v7038 = vld [vmem:[%s13 + $0x40] sm:$0xff]
        %v7039 = vld [vmem:[%s13 + $0x48] sm:$0xff]
        %v7040 = vld [vmem:[%s13 + $0x50] sm:$0xff]
        %v7041 = vld [vmem:[%s13 + $0x58] sm:$0xff]
        %v7042 = vld [vmem:[%s13 + $0x60] sm:$0xff]
        %v7043 = vld [vmem:[%s13 + $0x68] sm:$0xff]
        %v7044 = vld [vmem:[%s13 + $0x70] sm:$0xff]
        %v7045 = vld [vmem:[%s13 + $0x78] sm:$0xff]
        %v7046 = vld [vmem:[%s13 + $0x80] sm:$0xff]
        %v7047 = vld [vmem:[%s13 + $0x88] sm:$0xff]
        %v7048 = vld [vmem:[%s13 + $0x90] sm:$0xff]
        %v7049 = vld [vmem:[%s13 + $0x98] sm:$0xff]
        %v7050 = vld [vmem:[%s13 + $0xa0] sm:$0xff]
        %v7051 = vld [vmem:[%s13 + $0xa8] sm:$0xff]
        %v7052 = vld [vmem:[%s13 + $0xb0] sm:$0xff]
        %v7053 = vld [vmem:[%s13 + $0xb8] sm:$0xff]
        %v7054 = vld [vmem:[%s13 + $0xc0] sm:$0xff]
        %v7055 = vld [vmem:[%s13 + $0xc8] sm:$0xff]
        %v7056 = vld [vmem:[%s13 + $0xd0] sm:$0xff]
        %v7057 = vld [vmem:[%s13 + $0xd8] sm:$0xff]
        %v7058 = vld [vmem:[%s13 + $0xe0] sm:$0xff]
        %v7059 = vld [vmem:[%s13 + $0xe8] sm:$0xff]
        %v7060 = vld [vmem:[%s13 + $0xf0] sm:$0xff]
        %v7061 = vld [vmem:[%s13 + $0xf8] sm:$0xff]
        %v7062 = vld [vmem:[%s13 + $0x100] sm:$0xff]
        %v7063 = vld [vmem:[%s13 + $0x108] sm:$0xff]
        %v7064 = vld [vmem:[%s13 + $0x110] sm:$0xff]
        %v7065 = vld [vmem:[%s13 + $0x118] sm:$0xff]
        %v7066 = vld [vmem:[%s13 + $0x120] sm:$0xff]
        %v7067 = vld [vmem:[%s13 + $0x128] sm:$0xff]
        %v7068 = vld [vmem:[%s13 + $0x130] sm:$0xff]
        %v7069 = vld [vmem:[%s13 + $0x138] sm:$0xff]
        %v7070 = vld [vmem:[%s13 + $0x140] sm:$0xff]
        %v7071 = vld [vmem:[%s13 + $0x148] sm:$0xff]
        %v7072 = vld [vmem:[%s13 + $0x150] sm:$0xff]
        %v7073 = vld [vmem:[%s13 + $0x158] sm:$0xff]
        %v7074 = vld [vmem:[%s13 + $0x160] sm:$0xff]
        %v7075 = vld [vmem:[%s13 + $0x168] sm:$0xff]
        %v7076 = vld [vmem:[%s13 + $0x170] sm:$0xff]
        %v7077 = vld [vmem:[%s13 + $0x178] sm:$0xff]
        %v7078 = vld [vmem:[%s13 + $0x180] sm:$0xff]
        %v7079 = vld [vmem:[%s13 + $0x188] sm:$0xff]
        %v7080 = vld [vmem:[%s13 + $0x190] sm:$0xff]
        %v7081 = vld [vmem:[%s13 + $0x198] sm:$0xff]
        %v7082 = vld [vmem:[%s13 + $0x1a0] sm:$0xff]
        %v7083 = vld [vmem:[%s13 + $0x1a8] sm:$0xff]
        %v7084 = vld [vmem:[%s13 + $0x1b0] sm:$0xff]
        %v7085 = vld [vmem:[%s13 + $0x1b8] sm:$0xff]
        %v7086 = vld [vmem:[%s13 + $0x1c0] sm:$0xff]
        %v7087 = vld [vmem:[%s13 + $0x1c8] sm:$0xff]
        %v7088 = vld [vmem:[%s13 + $0x1d0] sm:$0xff]
        %v7089 = vld [vmem:[%s13 + $0x1d8] sm:$0xff]
        %v7090 = vld [vmem:[%s13 + $0x1e0] sm:$0xff]
        %v7091 = vld [vmem:[%s13 + $0x1e8] sm:$0xff]
        %v7092 = vld [vmem:[%s13 + $0x1f0] sm:$0xff]
        %v7093 = vld [vmem:[%s13 + $0x1f8] sm:$0xff]
        %7094 = vmatprep.subr.mxu0 0.0
        %7095 = vmatpush1.msra.mxu0 %v7030
        %7096 = vmatprep.subr.mxu0 0.0
        %7097 = vmatpush1.msra.mxu0 %v7031
        %7098 = vmatprep.subr.mxu0 0.0
        %7099 = vmatpush1.msra.mxu0 %v7032
        %7100 = vmatprep.subr.mxu0 0.0
        %7101 = vmatpush1.msra.mxu0 %v7033
        %7102 = vmatprep.subr.mxu0 0.0
        %7103 = vmatpush1.msra.mxu0 %v7034
        %7104 = vmatprep.subr.mxu0 0.0
        %7105 = vmatpush1.msra.mxu0 %v7035
        %7106 = vmatprep.subr.mxu0 0.0
        %7107 = vmatpush1.msra.mxu0 %v7036
        %7108 = vmatprep.subr.mxu0 0.0
        %7109 = vmatpush1.msra.mxu0 %v7037
        %7110 = vmatprep.subr.mxu0 0.0
        %7111 = vmatpush1.msra.mxu0 %v7038
        %7112 = vmatprep.subr.mxu0 0.0
        %7113 = vmatpush1.msra.mxu0 %v7039
        %7114 = vmatprep.subr.mxu0 0.0
        %7115 = vmatpush1.msra.mxu0 %v7040
        %7116 = vmatprep.subr.mxu0 0.0
        %7117 = vmatpush1.msra.mxu0 %v7041
        %7118 = vmatprep.subr.mxu0 0.0
        %7119 = vmatpush1.msra.mxu0 %v7042
        %7120 = vmatprep.subr.mxu0 0.0
        %7121 = vmatpush1.msra.mxu0 %v7043
        %7122 = vmatprep.subr.mxu0 0.0
        %7123 = vmatpush1.msra.mxu0 %v7044
        %7124 = vmatprep.subr.mxu0 0.0
        %7125 = vmatpush1.msra.mxu0 %v7045
        %7126 = vmatprep.subr.mxu0 0.0
        %7127 = vmatpush1.msra.mxu0 %v7046
        %7128 = vmatprep.subr.mxu0 0.0
        %7129 = vmatpush1.msra.mxu0 %v7047
        %7130 = vmatprep.subr.mxu0 0.0
        %7131 = vmatpush1.msra.mxu0 %v7048
        %7132 = vmatprep.subr.mxu0 0.0
        %7133 = vmatpush1.msra.mxu0 %v7049
        %7134 = vmatprep.subr.mxu0 0.0
        %7135 = vmatpush1.msra.mxu0 %v7050
        %7136 = vmatprep.subr.mxu0 0.0
        %7137 = vmatpush1.msra.mxu0 %v7051
        %7138 = vmatprep.subr.mxu0 0.0
        %7139 = vmatpush1.msra.mxu0 %v7052
        %7140 = vmatprep.subr.mxu0 0.0
        %7141 = vmatpush1.msra.mxu0 %v7053
        %7142 = vmatprep.subr.mxu0 0.0
        %7143 = vmatpush1.msra.mxu0 %v7054
        %7144 = vmatprep.subr.mxu0 0.0
        %7145 = vmatpush1.msra.mxu0 %v7055
        %7146 = vmatprep.subr.mxu0 0.0
        %7147 = vmatpush1.msra.mxu0 %v7056
        %7148 = vmatprep.subr.mxu0 0.0
        %7149 = vmatpush1.msra.mxu0 %v7057
        %7150 = vmatprep.subr.mxu0 0.0
        %7151 = vmatpush1.msra.mxu0 %v7058
        %7152 = vmatprep.subr.mxu0 0.0
        %7153 = vmatpush1.msra.mxu0 %v7059
        %7154 = vmatprep.subr.mxu0 0.0
        %7155 = vmatpush1.msra.mxu0 %v7060
        %7156 = vmatprep.subr.mxu0 0.0
        %7157 = vmatpush1.msra.mxu0 %v7061
        %7158 = vmatprep.mubr.f32.mxu0 %v7015
        %7159 = vmatmul.mubr.f32.gmra.mrb[0].mxu0 %v7014
        %v7160 = vpop.f32.mrb[0].mxu0
        %v7161 = vadd.f32 0.0, %v7160
        %v7162 = vpop.f32.mrb[0].mxu0
        %7163 = vmatprep.mubr.f32.mxu0 %v7019
        %7164 = vmatmul.mubr.f32.gmra.mrb[0].mxu0 %v7018
        %v7165 = vpop.f32.mrb[0].mxu0
        %v7166 = vadd.f32 0.0, %v7165
        %v7167 = vpop.f32.mrb[0].mxu0
        %7168 = vmatprep.mubr.f32.mxu0 %v7023
        %7169 = vmatmul.mubr.f32.gmra.mrb[0].mxu0 %v7022
        %v7170 = vpop.f32.mrb[0].mxu0
        %v7171 = vadd.f32 0.0, %v7170
        %v7172 = vpop.f32.mrb[0].mxu0
        %7173 = vmatprep.mubr.f32.mxu0 %v7027
        %7174 = vmatmul.mubr.f32.gmra.mrb[0].mxu0 %v7026
        %v7175 = vpop.f32.mrb[0].mxu0
        %v7176 = vadd.f32 0.0, %v7175
        %v7177 = vpop.f32.mrb[0].mxu0
        %7178 = vdwg.mxu0
        %7179 = vmatprep.subr.mxu0 0.0
        %7180 = vmatpush1.msra.mxu0 %v7062
        %7181 = vmatprep.subr.mxu0 0.0
        %7182 = vmatpush1.msra.mxu0 %v7063
        %7183 = vmatprep.subr.mxu0 0.0
        %7184 = vmatpush1.msra.mxu0 %v7064
        %7185 = vmatprep.subr.mxu0 0.0
        %7186 = vmatpush1.msra.mxu0 %v7065
        %7187 = vmatprep.subr.mxu0 0.0
        %7188 = vmatpush1.msra.mxu0 %v7066
        %7189 = vmatprep.subr.mxu0 0.0
        %7190 = vmatpush1.msra.mxu0 %v7067
        %7191 = vmatprep.subr.mxu0 0.0
        %7192 = vmatpush1.msra.mxu0 %v7068
        %7193 = vmatprep.subr.mxu0 0.0
        %7194 = vmatpush1.msra.mxu0 %v7069
        %7195 = vmatprep.subr.mxu0 0.0
        %7196 = vmatpush1.msra.mxu0 %v7070
        %7197 = vmatprep.subr.mxu0 0.0
        %7198 = vmatpush1.msra.mxu0 %v7071
        %7199 = vmatprep.subr.mxu0 0.0
        %7200 = vmatpush1.msra.mxu0 %v7072
        %7201 = vmatprep.subr.mxu0 0.0
        %7202 = vmatpush1.msra.mxu0 %v7073
        %7203 = vmatprep.subr.mxu0 0.0
        %7204 = vmatpush1.msra.mxu0 %v7074
        %7205 = vmatprep.subr.mxu0 0.0
        %7206 = vmatpush1.msra.mxu0 %v7075
        %7207 = vmatprep.subr.mxu0 0.0
        %7208 = vmatpush1.msra.mxu0 %v7076
        %7209 = vmatprep.subr.mxu0 0.0
        %7210 = vmatpush1.msra.mxu0 %v7077
        %7211 = vmatprep.subr.mxu0 0.0
        %7212 = vmatpush1.msra.mxu0 %v7078
        %7213 = vmatprep.subr.mxu0 0.0
        %7214 = vmatpush1.msra.mxu0 %v7079
        %7215 = vmatprep.subr.mxu0 0.0
        %7216 = vmatpush1.msra.mxu0 %v7080
        %7217 = vmatprep.subr.mxu0 0.0
        %7218 = vmatpush1.msra.mxu0 %v7081
        %7219 = vmatprep.subr.mxu0 0.0
        %7220 = vmatpush1.msra.mxu0 %v7082
        %7221 = vmatprep.subr.mxu0 0.0
        %7222 = vmatpush1.msra.mxu0 %v7083
        %7223 = vmatprep.subr.mxu0 0.0
        %7224 = vmatpush1.msra.mxu0 %v7084
        %7225 = vmatprep.subr.mxu0 0.0
        %7226 = vmatpush1.msra.mxu0 %v7085
        %7227 = vmatprep.subr.mxu0 0.0
        %7228 = vmatpush1.msra.mxu0 %v7086
        %7229 = vmatprep.subr.mxu0 0.0
        %7230 = vmatpush1.msra.mxu0 %v7087
        %7231 = vmatprep.subr.mxu0 0.0
        %7232 = vmatpush1.msra.mxu0 %v7088
        %7233 = vmatprep.subr.mxu0 0.0
        %7234 = vmatpush1.msra.mxu0 %v7089
        %7235 = vmatprep.subr.mxu0 0.0
        %7236 = vmatpush1.msra.mxu0 %v7090
        %7237 = vmatprep.subr.mxu0 0.0
        %7238 = vmatpush1.msra.mxu0 %v7091
        %7239 = vmatprep.subr.mxu0 0.0
        %7240 = vmatpush1.msra.mxu0 %v7092
        %7241 = vmatprep.subr.mxu0 0.0
        %7242 = vmatpush1.msra.mxu0 %v7093
        %7243 = vmatprep.mubr.f32.mxu0 %v7017
        %7244 = vmatmul.mubr.f32.gmra.mrb[0].mxu0 %v7016
        %v7245 = vpop.f32.mrb[0].mxu0
        %v7246 = vadd.f32 %v7161, %v7245
        %v7247 = vpop.f32.mrb[0].mxu0
        %7248 = vmatprep.mubr.f32.mxu0 %v7021
        %7249 = vmatmul.mubr.f32.gmra.mrb[0].mxu0 %v7020
        %v7250 = vpop.f32.mrb[0].mxu0
        %v7251 = vadd.f32 %v7166, %v7250
        %v7252 = vpop.f32.mrb[0].mxu0
        %7253 = vmatprep.mubr.f32.mxu0 %v7025
        %7254 = vmatmul.mubr.f32.gmra.mrb[0].mxu0 %v7024
        %v7255 = vpop.f32.mrb[0].mxu0
        %v7256 = vadd.f32 %v7171, %v7255
        %v7257 = vpop.f32.mrb[0].mxu0
        %7258 = vmatprep.mubr.f32.mxu0 %v7029
        %7259 = vmatmul.mubr.f32.gmra.mrb[0].mxu0 %v7028
        %v7260 = vpop.f32.mrb[0].mxu0
        %v7261 = vadd.f32 %v7176, %v7260
        %v7262 = vpop.f32.mrb[0].mxu0
        %7263 = vdwg.mxu0
        %v7264 = vld [vmem:[#allocation19] sm:$0xff]
        %v7265 = vld [vmem:[#allocation19 + $0x8] sm:$0xff]
        %v7266 = vld [vmem:[#allocation19 + $0x10] sm:$0xff]
        %v7267 = vld [vmem:[#allocation19 + $0x18] sm:$0xff]
        %s7268 = scalar_lea.vmem %s13, 512
        %v7269 = vld [vmem:[%s7268] sm:$0xff]
        %v7270 = vld [vmem:[%s7268 + $0x8] sm:$0xff]
        %v7271 = vld [vmem:[%s7268 + $0x10] sm:$0xff]
        %v7272 = vld [vmem:[%s7268 + $0x18] sm:$0xff]
        %v7273 = vld [vmem:[%s7268 + $0x20] sm:$0xff]
        %v7274 = vld [vmem:[%s7268 + $0x28] sm:$0xff]
        %v7275 = vld [vmem:[%s7268 + $0x30] sm:$0xff]
        %v7276 = vld [vmem:[%s7268 + $0x38] sm:$0xff]
        %v7277 = vld [vmem:[%s7268 + $0x40] sm:$0xff]
        %v7278 = vld [vmem:[%s7268 + $0x48] sm:$0xff]
        %v7279 = vld [vmem:[%s7268 + $0x50] sm:$0xff]
        %v7280 = vld [vmem:[%s7268 + $0x58] sm:$0xff]
        %v7281 = vld [vmem:[%s7268 + $0x60] sm:$0xff]
        %v7282 = vld [vmem:[%s7268 + $0x68] sm:$0xff]
        %v7283 = vld [vmem:[%s7268 + $0x70] sm:$0xff]
        %v7284 = vld [vmem:[%s7268 + $0x78] sm:$0xff]
        %v7285 = vld [vmem:[%s7268 + $0x80] sm:$0xff]
        %v7286 = vld [vmem:[%s7268 + $0x88] sm:$0xff]
        %v7287 = vld [vmem:[%s7268 + $0x90] sm:$0xff]
        %v7288 = vld [vmem:[%s7268 + $0x98] sm:$0xff]
        %v7289 = vld [vmem:[%s7268 + $0xa0] sm:$0xff]
        %v7290 = vld [vmem:[%s7268 + $0xa8] sm:$0xff]
        %v7291 = vld [vmem:[%s7268 + $0xb0] sm:$0xff]
        %v7292 = vld [vmem:[%s7268 + $0xb8] sm:$0xff]
        %v7293 = vld [vmem:[%s7268 + $0xc0] sm:$0xff]
        %v7294 = vld [vmem:[%s7268 + $0xc8] sm:$0xff]
        %v7295 = vld [vmem:[%s7268 + $0xd0] sm:$0xff]
        %v7296 = vld [vmem:[%s7268 + $0xd8] sm:$0xff]
        %v7297 = vld [vmem:[%s7268 + $0xe0] sm:$0xff]
        %v7298 = vld [vmem:[%s7268 + $0xe8] sm:$0xff]
        %v7299 = vld [vmem:[%s7268 + $0xf0] sm:$0xff]
        %v7300 = vld [vmem:[%s7268 + $0xf8] sm:$0xff]
        %v7301 = vld [vmem:[%s7268 + $0x100] sm:$0xff]
        %v7302 = vld [vmem:[%s7268 + $0x108] sm:$0xff]
        %v7303 = vld [vmem:[%s7268 + $0x110] sm:$0xff]
        %v7304 = vld [vmem:[%s7268 + $0x118] sm:$0xff]
        %v7305 = vld [vmem:[%s7268 + $0x120] sm:$0xff]
        %v7306 = vld [vmem:[%s7268 + $0x128] sm:$0xff]
        %v7307 = vld [vmem:[%s7268 + $0x130] sm:$0xff]
        %v7308 = vld [vmem:[%s7268 + $0x138] sm:$0xff]
        %v7309 = vld [vmem:[%s7268 + $0x140] sm:$0xff]
        %v7310 = vld [vmem:[%s7268 + $0x148] sm:$0xff]
        %v7311 = vld [vmem:[%s7268 + $0x150] sm:$0xff]
        %v7312 = vld [vmem:[%s7268 + $0x158] sm:$0xff]
        %v7313 = vld [vmem:[%s7268 + $0x160] sm:$0xff]
        %v7314 = vld [vmem:[%s7268 + $0x168] sm:$0xff]
        %v7315 = vld [vmem:[%s7268 + $0x170] sm:$0xff]
        %v7316 = vld [vmem:[%s7268 + $0x178] sm:$0xff]
        %v7317 = vld [vmem:[%s7268 + $0x180] sm:$0xff]
        %v7318 = vld [vmem:[%s7268 + $0x188] sm:$0xff]
        %v7319 = vld [vmem:[%s7268 + $0x190] sm:$0xff]
        %v7320 = vld [vmem:[%s7268 + $0x198] sm:$0xff]
        %v7321 = vld [vmem:[%s7268 + $0x1a0] sm:$0xff]
        %v7322 = vld [vmem:[%s7268 + $0x1a8] sm:$0xff]
        %v7323 = vld [vmem:[%s7268 + $0x1b0] sm:$0xff]
        %v7324 = vld [vmem:[%s7268 + $0x1b8] sm:$0xff]
        %v7325 = vld [vmem:[%s7268 + $0x1c0] sm:$0xff]
        %v7326 = vld [vmem:[%s7268 + $0x1c8] sm:$0xff]
        %v7327 = vld [vmem:[%s7268 + $0x1d0] sm:$0xff]
        %v7328 = vld [vmem:[%s7268 + $0x1d8] sm:$0xff]
        %v7329 = vld [vmem:[%s7268 + $0x1e0] sm:$0xff]
        %v7330 = vld [vmem:[%s7268 + $0x1e8] sm:$0xff]
        %v7331 = vld [vmem:[%s7268 + $0x1f0] sm:$0xff]
        %v7332 = vld [vmem:[%s7268 + $0x1f8] sm:$0xff]
        %7333 = vmatprep.subr.mxu0 0.0
        %7334 = vmatpush1.msra.mxu0 %v7269
        %7335 = vmatprep.subr.mxu0 0.0
        %7336 = vmatpush1.msra.mxu0 %v7270
        %7337 = vmatprep.subr.mxu0 0.0
        %7338 = vmatpush1.msra.mxu0 %v7271
        %7339 = vmatprep.subr.mxu0 0.0
        %7340 = vmatpush1.msra.mxu0 %v7272
        %7341 = vmatprep.subr.mxu0 0.0
        %7342 = vmatpush1.msra.mxu0 %v7273
        %7343 = vmatprep.subr.mxu0 0.0
        %7344 = vmatpush1.msra.mxu0 %v7274
        %7345 = vmatprep.subr.mxu0 0.0
        %7346 = vmatpush1.msra.mxu0 %v7275
        %7347 = vmatprep.subr.mxu0 0.0
        %7348 = vmatpush1.msra.mxu0 %v7276
        %7349 = vmatprep.subr.mxu0 0.0
        %7350 = vmatpush1.msra.mxu0 %v7277
        %7351 = vmatprep.subr.mxu0 0.0
        %7352 = vmatpush1.msra.mxu0 %v7278
        %7353 = vmatprep.subr.mxu0 0.0
        %7354 = vmatpush1.msra.mxu0 %v7279
        %7355 = vmatprep.subr.mxu0 0.0
        %7356 = vmatpush1.msra.mxu0 %v7280
        %7357 = vmatprep.subr.mxu0 0.0
        %7358 = vmatpush1.msra.mxu0 %v7281
        %7359 = vmatprep.subr.mxu0 0.0
        %7360 = vmatpush1.msra.mxu0 %v7282
        %7361 = vmatprep.subr.mxu0 0.0
        %7362 = vmatpush1.msra.mxu0 %v7283
        %7363 = vmatprep.subr.mxu0 0.0
        %7364 = vmatpush1.msra.mxu0 %v7284
        %7365 = vmatprep.subr.mxu0 0.0
        %7366 = vmatpush1.msra.mxu0 %v7285
        %7367 = vmatprep.subr.mxu0 0.0
        %7368 = vmatpush1.msra.mxu0 %v7286
        %7369 = vmatprep.subr.mxu0 0.0
        %7370 = vmatpush1.msra.mxu0 %v7287
        %7371 = vmatprep.subr.mxu0 0.0
        %7372 = vmatpush1.msra.mxu0 %v7288
        %7373 = vmatprep.subr.mxu0 0.0
        %7374 = vmatpush1.msra.mxu0 %v7289
        %7375 = vmatprep.subr.mxu0 0.0
        %7376 = vmatpush1.msra.mxu0 %v7290
        %7377 = vmatprep.subr.mxu0 0.0
        %7378 = vmatpush1.msra.mxu0 %v7291
        %7379 = vmatprep.subr.mxu0 0.0
        %7380 = vmatpush1.msra.mxu0 %v7292
        %7381 = vmatprep.subr.mxu0 0.0
        %7382 = vmatpush1.msra.mxu0 %v7293
        %7383 = vmatprep.subr.mxu0 0.0
        %7384 = vmatpush1.msra.mxu0 %v7294
        %7385 = vmatprep.subr.mxu0 0.0
        %7386 = vmatpush1.msra.mxu0 %v7295
        %7387 = vmatprep.subr.mxu0 0.0
        %7388 = vmatpush1.msra.mxu0 %v7296
        %7389 = vmatprep.subr.mxu0 0.0
        %7390 = vmatpush1.msra.mxu0 %v7297
        %7391 = vmatprep.subr.mxu0 0.0
        %7392 = vmatpush1.msra.mxu0 %v7298
        %7393 = vmatprep.subr.mxu0 0.0
        %7394 = vmatpush1.msra.mxu0 %v7299
        %7395 = vmatprep.subr.mxu0 0.0
        %7396 = vmatpush1.msra.mxu0 %v7300
        %7397 = vmatprep.mubr.f32.mxu0 %v7015
        %7398 = vmatmul.mubr.f32.gmra.mrb[0].mxu0 %v7014
        %v7399 = vpop.f32.mrb[0].mxu0
        %v7400 = vadd.f32 0.0, %v7399
        %v7401 = vpop.f32.mrb[0].mxu0
        %7402 = vmatprep.mubr.f32.mxu0 %v7019
        %7403 = vmatmul.mubr.f32.gmra.mrb[0].mxu0 %v7018
        %v7404 = vpop.f32.mrb[0].mxu0
        %v7405 = vadd.f32 0.0, %v7404
        %v7406 = vpop.f32.mrb[0].mxu0
        %7407 = vmatprep.mubr.f32.mxu0 %v7023
        %7408 = vmatmul.mubr.f32.gmra.mrb[0].mxu0 %v7022
        %v7409 = vpop.f32.mrb[0].mxu0
        %v7410 = vadd.f32 0.0, %v7409
        %v7411 = vpop.f32.mrb[0].mxu0
        %7412 = vmatprep.mubr.f32.mxu0 %v7027
        %7413 = vmatmul.mubr.f32.gmra.mrb[0].mxu0 %v7026
        %v7414 = vpop.f32.mrb[0].mxu0
        %v7415 = vadd.f32 0.0, %v7414
        %v7416 = vpop.f32.mrb[0].mxu0
        %7417 = vdwg.mxu0
        %7418 = vmatprep.subr.mxu0 0.0
        %7419 = vmatpush1.msra.mxu0 %v7301
        %7420 = vmatprep.subr.mxu0 0.0
        %7421 = vmatpush1.msra.mxu0 %v7302
        %7422 = vmatprep.subr.mxu0 0.0
        %7423 = vmatpush1.msra.mxu0 %v7303
        %7424 = vmatprep.subr.mxu0 0.0
        %7425 = vmatpush1.msra.mxu0 %v7304
        %7426 = vmatprep.subr.mxu0 0.0
        %7427 = vmatpush1.msra.mxu0 %v7305
        %7428 = vmatprep.subr.mxu0 0.0
        %7429 = vmatpush1.msra.mxu0 %v7306
        %7430 = vmatprep.subr.mxu0 0.0
        %7431 = vmatpush1.msra.mxu0 %v7307
        %7432 = vmatprep.subr.mxu0 0.0
        %7433 = vmatpush1.msra.mxu0 %v7308
        %7434 = vmatprep.subr.mxu0 0.0
        %7435 = vmatpush1.msra.mxu0 %v7309
        %7436 = vmatprep.subr.mxu0 0.0
        %7437 = vmatpush1.msra.mxu0 %v7310
        %7438 = vmatprep.subr.mxu0 0.0
        %7439 = vmatpush1.msra.mxu0 %v7311
        %7440 = vmatprep.subr.mxu0 0.0
        %7441 = vmatpush1.msra.mxu0 %v7312
        %7442 = vmatprep.subr.mxu0 0.0
        %7443 = vmatpush1.msra.mxu0 %v7313
        %7444 = vmatprep.subr.mxu0 0.0
        %7445 = vmatpush1.msra.mxu0 %v7314
        %7446 = vmatprep.subr.mxu0 0.0
        %7447 = vmatpush1.msra.mxu0 %v7315
        %7448 = vmatprep.subr.mxu0 0.0
        %7449 = vmatpush1.msra.mxu0 %v7316
        %7450 = vmatprep.subr.mxu0 0.0
        %7451 = vmatpush1.msra.mxu0 %v7317
        %7452 = vmatprep.subr.mxu0 0.0
        %7453 = vmatpush1.msra.mxu0 %v7318
        %7454 = vmatprep.subr.mxu0 0.0
        %7455 = vmatpush1.msra.mxu0 %v7319
        %7456 = vmatprep.subr.mxu0 0.0
        %7457 = vmatpush1.msra.mxu0 %v7320
        %7458 = vmatprep.subr.mxu0 0.0
        %7459 = vmatpush1.msra.mxu0 %v7321
        %7460 = vmatprep.subr.mxu0 0.0
        %7461 = vmatpush1.msra.mxu0 %v7322
        %7462 = vmatprep.subr.mxu0 0.0
        %7463 = vmatpush1.msra.mxu0 %v7323
        %7464 = vmatprep.subr.mxu0 0.0
        %7465 = vmatpush1.msra.mxu0 %v7324
        %7466 = vmatprep.subr.mxu0 0.0
        %7467 = vmatpush1.msra.mxu0 %v7325
        %7468 = vmatprep.subr.mxu0 0.0
        %7469 = vmatpush1.msra.mxu0 %v7326
        %7470 = vmatprep.subr.mxu0 0.0
        %7471 = vmatpush1.msra.mxu0 %v7327
        %7472 = vmatprep.subr.mxu0 0.0
        %7473 = vmatpush1.msra.mxu0 %v7328
        %7474 = vmatprep.subr.mxu0 0.0
        %7475 = vmatpush1.msra.mxu0 %v7329
        %7476 = vmatprep.subr.mxu0 0.0
        %7477 = vmatpush1.msra.mxu0 %v7330
        %7478 = vmatprep.subr.mxu0 0.0
        %7479 = vmatpush1.msra.mxu0 %v7331
        %7480 = vmatprep.subr.mxu0 0.0
        %7481 = vmatpush1.msra.mxu0 %v7332
        %7482 = vmatprep.mubr.f32.mxu0 %v7017
        %7483 = vmatmul.mubr.f32.gmra.mrb[0].mxu0 %v7016
        %v7484 = vpop.f32.mrb[0].mxu0
        %v7485 = vadd.f32 %v7400, %v7484
        %v7486 = vpop.f32.mrb[0].mxu0
        %7487 = vmatprep.mubr.f32.mxu0 %v7021
        %7488 = vmatmul.mubr.f32.gmra.mrb[0].mxu0 %v7020
        %v7489 = vpop.f32.mrb[0].mxu0
        %v7490 = vadd.f32 %v7405, %v7489
        %v7491 = vpop.f32.mrb[0].mxu0
        %7492 = vmatprep.mubr.f32.mxu0 %v7025
        %7493 = vmatmul.mubr.f32.gmra.mrb[0].mxu0 %v7024
        %v7494 = vpop.f32.mrb[0].mxu0
        %v7495 = vadd.f32 %v7410, %v7494
        %v7496 = vpop.f32.mrb[0].mxu0
        %7497 = vmatprep.mubr.f32.mxu0 %v7029
        %7498 = vmatmul.mubr.f32.gmra.mrb[0].mxu0 %v7028
        %v7499 = vpop.f32.mrb[0].mxu0
        %v7500 = vadd.f32 %v7415, %v7499
        %v7501 = vpop.f32.mrb[0].mxu0
        %7502 = vdwg.mxu0
        %s7503 = scalar_lea.vmem [#allocation19], 32
        %v7504 = vld [vmem:[%s7503] sm:$0xff]
        %v7505 = vld [vmem:[%s7503 + $0x8] sm:$0xff]
        %v7506 = vld [vmem:[%s7503 + $0x10] sm:$0xff]
        %v7507 = vld [vmem:[%s7503 + $0x18] sm:$0xff]
        %vm7508 = vcmask 261120
        %v7510 = vsel %vm7508, %v7504, 0
        %v7513 = vsel %vm7508, %v7505, 0
        %v7516 = vsel %vm7508, %v7506, 0
        %v7519 = vsel %vm7508, %v7507, 0
        %7521 = vmatprep.subr.mxu0 0.0
        %7522 = vmatpush1.msra.mxu0 %v7485
        %7523 = vmatprep.subr.mxu0 0.0
        %7524 = vmatpush1.msra.mxu0 %v7490
        %7525 = vmatprep.subr.mxu0 0.0
        %7526 = vmatpush1.msra.mxu0 %v7495
        %7527 = vmatprep.subr.mxu0 0.0
        %7528 = vmatpush1.msra.mxu0 %v7500
        %7529 = vmatprep.subr.mxu0 0.0
        %7530 = vmatpush1.msra.mxu0 0.0
        %7531 = vmatprep.subr.mxu0 0.0
        %7532 = vmatpush1.msra.mxu0 0.0
        %7533 = vmatprep.subr.mxu0 0.0
        %7534 = vmatpush1.msra.mxu0 0.0
        %7535 = vmatprep.subr.mxu0 0.0
        %7536 = vmatpush1.msra.mxu0 0.0
        %7537 = vmatprep.subr.mxu0 0.0
        %7538 = vmatpush1.msra.mxu0 0.0
        %7539 = vmatprep.subr.mxu0 0.0
        %7540 = vmatpush1.msra.mxu0 0.0
        %7541 = vmatprep.subr.mxu0 0.0
        %7542 = vmatpush1.msra.mxu0 0.0
        %7543 = vmatprep.subr.mxu0 0.0
        %7544 = vmatpush1.msra.mxu0 0.0
        %7545 = vmatprep.subr.mxu0 0.0
        %7546 = vmatpush1.msra.mxu0 0.0
        %7547 = vmatprep.subr.mxu0 0.0
        %7548 = vmatpush1.msra.mxu0 0.0
        %7549 = vmatprep.subr.mxu0 0.0
        %7550 = vmatpush1.msra.mxu0 0.0
        %7551 = vmatprep.subr.mxu0 0.0
        %7552 = vmatpush1.msra.mxu0 0.0
        %7553 = vmatprep.subr.mxu0 0.0
        %7554 = vmatpush1.msra.mxu0 0.0
        %7555 = vmatprep.subr.mxu0 0.0
        %7556 = vmatpush1.msra.mxu0 0.0
        %7557 = vmatprep.subr.mxu0 0.0
        %7558 = vmatpush1.msra.mxu0 0.0
        %7559 = vmatprep.subr.mxu0 0.0
        %7560 = vmatpush1.msra.mxu0 0.0
        %7561 = vmatprep.subr.mxu0 0.0
        %7562 = vmatpush1.msra.mxu0 0.0
        %7563 = vmatprep.subr.mxu0 0.0
        %7564 = vmatpush1.msra.mxu0 0.0
        %7565 = vmatprep.subr.mxu0 0.0
        %7566 = vmatpush1.msra.mxu0 0.0
        %7567 = vmatprep.subr.mxu0 0.0
        %7568 = vmatpush1.msra.mxu0 0.0
        %7569 = vmatprep.subr.mxu0 0.0
        %7570 = vmatpush1.msra.mxu0 0.0
        %7571 = vmatprep.subr.mxu0 0.0
        %7572 = vmatpush1.msra.mxu0 0.0
        %7573 = vmatprep.subr.mxu0 0.0
        %7574 = vmatpush1.msra.mxu0 0.0
        %7575 = vmatprep.subr.mxu0 0.0
        %7576 = vmatpush1.msra.mxu0 0.0
        %7577 = vmatprep.subr.mxu0 0.0
        %7578 = vmatpush1.msra.mxu0 0.0
        %7579 = vmatprep.subr.mxu0 0.0
        %7580 = vmatpush1.msra.mxu0 0.0
        %7581 = vmatprep.subr.mxu0 0.0
        %7582 = vmatpush1.msra.mxu0 0.0
        %7583 = vmatprep.subr.mxu0 0.0
        %7584 = vmatpush1.msra.mxu0 0.0
        %7585 = vmatprep.mubr.f32.mxu0 0.0
        %7586 = vmatmul.mubr.f32.gmra.mrb[0].mxu0 %v7510
        %v7587 = vpop.f32.mrb[0].mxu0
        %v7588 = vadd.f32 0.0, %v7587
        %v7589 = vpop.f32.mrb[0].mxu0
        %7590 = vmatprep.mubr.f32.mxu0 0.0
        %7591 = vmatmul.mubr.f32.gmra.mrb[0].mxu0 %v7513
        %v7592 = vpop.f32.mrb[0].mxu0
        %v7593 = vadd.f32 0.0, %v7592
        %v7594 = vpop.f32.mrb[0].mxu0
        %7595 = vmatprep.mubr.f32.mxu0 0.0
        %7596 = vmatmul.mubr.f32.gmra.mrb[0].mxu0 %v7516
        %v7597 = vpop.f32.mrb[0].mxu0
        %v7598 = vadd.f32 0.0, %v7597
        %v7599 = vpop.f32.mrb[0].mxu0
        %7600 = vmatprep.mubr.f32.mxu0 0.0
        %7601 = vmatmul.mubr.f32.gmra.mrb[0].mxu0 %v7519
        %v7602 = vpop.f32.mrb[0].mxu0
        %v7603 = vadd.f32 0.0, %v7602
        %v7604 = vpop.f32.mrb[0].mxu0
        %7605 = vdwg.mxu0
        %v7607 = vsel %vm7508, %v7264, 0
        %v7610 = vsel %vm7508, %v7265, 0
        %v7613 = vsel %vm7508, %v7266, 0
        %v7616 = vsel %vm7508, %v7267, 0
        %7618 = vmatprep.subr.mxu0 0.0
        %7619 = vmatpush1.msra.mxu0 %v7246
        %7620 = vmatprep.subr.mxu0 0.0
        %7621 = vmatpush1.msra.mxu0 %v7251
        %7622 = vmatprep.subr.mxu0 0.0
        %7623 = vmatpush1.msra.mxu0 %v7256
        %7624 = vmatprep.subr.mxu0 0.0
        %7625 = vmatpush1.msra.mxu0 %v7261
        %7626 = vmatprep.subr.mxu0 0.0
        %7627 = vmatpush1.msra.mxu0 0.0
        %7628 = vmatprep.subr.mxu0 0.0
        %7629 = vmatpush1.msra.mxu0 0.0
        %7630 = vmatprep.subr.mxu0 0.0
        %7631 = vmatpush1.msra.mxu0 0.0
        %7632 = vmatprep.subr.mxu0 0.0
        %7633 = vmatpush1.msra.mxu0 0.0
        %7634 = vmatprep.subr.mxu0 0.0
        %7635 = vmatpush1.msra.mxu0 0.0
        %7636 = vmatprep.subr.mxu0 0.0
        %7637 = vmatpush1.msra.mxu0 0.0
        %7638 = vmatprep.subr.mxu0 0.0
        %7639 = vmatpush1.msra.mxu0 0.0
        %7640 = vmatprep.subr.mxu0 0.0
        %7641 = vmatpush1.msra.mxu0 0.0
        %7642 = vmatprep.subr.mxu0 0.0
        %7643 = vmatpush1.msra.mxu0 0.0
        %7644 = vmatprep.subr.mxu0 0.0
        %7645 = vmatpush1.msra.mxu0 0.0
        %7646 = vmatprep.subr.mxu0 0.0
        %7647 = vmatpush1.msra.mxu0 0.0
        %7648 = vmatprep.subr.mxu0 0.0
        %7649 = vmatpush1.msra.mxu0 0.0
        %7650 = vmatprep.subr.mxu0 0.0
        %7651 = vmatpush1.msra.mxu0 0.0
        %7652 = vmatprep.subr.mxu0 0.0
        %7653 = vmatpush1.msra.mxu0 0.0
        %7654 = vmatprep.subr.mxu0 0.0
        %7655 = vmatpush1.msra.mxu0 0.0
        %7656 = vmatprep.subr.mxu0 0.0
        %7657 = vmatpush1.msra.mxu0 0.0
        %7658 = vmatprep.subr.mxu0 0.0
        %7659 = vmatpush1.msra.mxu0 0.0
        %7660 = vmatprep.subr.mxu0 0.0
        %7661 = vmatpush1.msra.mxu0 0.0
        %7662 = vmatprep.subr.mxu0 0.0
        %7663 = vmatpush1.msra.mxu0 0.0
        %7664 = vmatprep.subr.mxu0 0.0
        %7665 = vmatpush1.msra.mxu0 0.0
        %7666 = vmatprep.subr.mxu0 0.0
        %7667 = vmatpush1.msra.mxu0 0.0
        %7668 = vmatprep.subr.mxu0 0.0
        %7669 = vmatpush1.msra.mxu0 0.0
        %7670 = vmatprep.subr.mxu0 0.0
        %7671 = vmatpush1.msra.mxu0 0.0
        %7672 = vmatprep.subr.mxu0 0.0
        %7673 = vmatpush1.msra.mxu0 0.0
        %7674 = vmatprep.subr.mxu0 0.0
        %7675 = vmatpush1.msra.mxu0 0.0
        %7676 = vmatprep.subr.mxu0 0.0
        %7677 = vmatpush1.msra.mxu0 0.0
        %7678 = vmatprep.subr.mxu0 0.0
        %7679 = vmatpush1.msra.mxu0 0.0
        %7680 = vmatprep.subr.mxu0 0.0
        %7681 = vmatpush1.msra.mxu0 0.0
        %7682 = vmatprep.mubr.f32.mxu0 0.0
        %7683 = vmatmul.mubr.f32.gmra.mrb[0].mxu0 %v7607
        %v7684 = vpop.f32.mrb[0].mxu0
        %v7685 = vadd.f32 %v7588, %v7684
        %v7686 = vpop.f32.mrb[0].mxu0
        %7687 = vmatprep.mubr.f32.mxu0 0.0
        %7688 = vmatmul.mubr.f32.gmra.mrb[0].mxu0 %v7610
        %v7689 = vpop.f32.mrb[0].mxu0
        %v7690 = vadd.f32 %v7593, %v7689
        %v7691 = vpop.f32.mrb[0].mxu0
        %7692 = vmatprep.mubr.f32.mxu0 0.0
        %7693 = vmatmul.mubr.f32.gmra.mrb[0].mxu0 %v7613
        %v7694 = vpop.f32.mrb[0].mxu0
        %v7695 = vadd.f32 %v7598, %v7694
        %v7696 = vpop.f32.mrb[0].mxu0
        %7697 = vmatprep.mubr.f32.mxu0 0.0
        %7698 = vmatmul.mubr.f32.gmra.mrb[0].mxu0 %v7616
        %v7699 = vpop.f32.mrb[0].mxu0
        %v7700 = vadd.f32 %v7603, %v7699
        %v7701 = vpop.f32.mrb[0].mxu0
        %7702 = vdwg.mxu0
        %s7703 = scalar_lea.vmem %s13, 1024
        %v7704 = vld [vmem:[%s7703] sm:$0xff]
        %v7705 = vld [vmem:[%s7703 + $0x8] sm:$0xff]
        %v7706 = vld [vmem:[%s7703 + $0x10] sm:$0xff]
        %v7707 = vld [vmem:[%s7703 + $0x18] sm:$0xff]
        %v7708 = vld [vmem:[%s7703 + $0x20] sm:$0xff]
        %v7709 = vld [vmem:[%s7703 + $0x28] sm:$0xff]
        %v7710 = vld [vmem:[%s7703 + $0x30] sm:$0xff]
        %v7711 = vld [vmem:[%s7703 + $0x38] sm:$0xff]
        %v7712 = vld [vmem:[%s7703 + $0x40] sm:$0xff]
        %v7713 = vld [vmem:[%s7703 + $0x48] sm:$0xff]
        %v7714 = vld [vmem:[%s7703 + $0x50] sm:$0xff]
        %v7715 = vld [vmem:[%s7703 + $0x58] sm:$0xff]
        %v7716 = vld [vmem:[%s7703 + $0x60] sm:$0xff]
        %v7717 = vld [vmem:[%s7703 + $0x68] sm:$0xff]
        %v7718 = vld [vmem:[%s7703 + $0x70] sm:$0xff]
        %v7719 = vld [vmem:[%s7703 + $0x78] sm:$0xff]
        %v7720 = vld [vmem:[%s7703 + $0x80] sm:$0xff]
        %v7721 = vld [vmem:[%s7703 + $0x88] sm:$0xff]
        %v7722 = vld [vmem:[%s7703 + $0x90] sm:$0xff]
        %v7723 = vld [vmem:[%s7703 + $0x98] sm:$0xff]
        %v7724 = vld [vmem:[%s7703 + $0xa0] sm:$0xff]
        %v7725 = vld [vmem:[%s7703 + $0xa8] sm:$0xff]
        %v7726 = vld [vmem:[%s7703 + $0xb0] sm:$0xff]
        %v7727 = vld [vmem:[%s7703 + $0xb8] sm:$0xff]
        %v7728 = vld [vmem:[%s7703 + $0xc0] sm:$0xff]
        %v7729 = vld [vmem:[%s7703 + $0xc8] sm:$0xff]
        %v7730 = vld [vmem:[%s7703 + $0xd0] sm:$0xff]
        %v7731 = vld [vmem:[%s7703 + $0xd8] sm:$0xff]
        %v7732 = vld [vmem:[%s7703 + $0xe0] sm:$0xff]
        %v7733 = vld [vmem:[%s7703 + $0xe8] sm:$0xff]
        %v7734 = vld [vmem:[%s7703 + $0xf0] sm:$0xff]
        %v7735 = vld [vmem:[%s7703 + $0xf8] sm:$0xff]
        %v7736 = vld [vmem:[%s7703 + $0x100] sm:$0xff]
        %v7737 = vld [vmem:[%s7703 + $0x108] sm:$0xff]
        %v7738 = vld [vmem:[%s7703 + $0x110] sm:$0xff]
        %v7739 = vld [vmem:[%s7703 + $0x118] sm:$0xff]
        %v7740 = vld [vmem:[%s7703 + $0x120] sm:$0xff]
        %v7741 = vld [vmem:[%s7703 + $0x128] sm:$0xff]
        %v7742 = vld [vmem:[%s7703 + $0x130] sm:$0xff]
        %v7743 = vld [vmem:[%s7703 + $0x138] sm:$0xff]
        %v7744 = vld [vmem:[%s7703 + $0x140] sm:$0xff]
        %v7745 = vld [vmem:[%s7703 + $0x148] sm:$0xff]
        %v7746 = vld [vmem:[%s7703 + $0x150] sm:$0xff]
        %v7747 = vld [vmem:[%s7703 + $0x158] sm:$0xff]
        %v7748 = vld [vmem:[%s7703 + $0x160] sm:$0xff]
        %v7749 = vld [vmem:[%s7703 + $0x168] sm:$0xff]
        %v7750 = vld [vmem:[%s7703 + $0x170] sm:$0xff]
        %v7751 = vld [vmem:[%s7703 + $0x178] sm:$0xff]
        %v7752 = vld [vmem:[%s7703 + $0x180] sm:$0xff]
        %v7753 = vld [vmem:[%s7703 + $0x188] sm:$0xff]
        %v7754 = vld [vmem:[%s7703 + $0x190] sm:$0xff]
        %v7755 = vld [vmem:[%s7703 + $0x198] sm:$0xff]
        %v7756 = vld [vmem:[%s7703 + $0x1a0] sm:$0xff]
        %v7757 = vld [vmem:[%s7703 + $0x1a8] sm:$0xff]
        %v7758 = vld [vmem:[%s7703 + $0x1b0] sm:$0xff]
        %v7759 = vld [vmem:[%s7703 + $0x1b8] sm:$0xff]
        %v7760 = vld [vmem:[%s7703 + $0x1c0] sm:$0xff]
        %v7761 = vld [vmem:[%s7703 + $0x1c8] sm:$0xff]
        %v7762 = vld [vmem:[%s7703 + $0x1d0] sm:$0xff]
        %v7763 = vld [vmem:[%s7703 + $0x1d8] sm:$0xff]
        %v7764 = vld [vmem:[%s7703 + $0x1e0] sm:$0xff]
        %v7765 = vld [vmem:[%s7703 + $0x1e8] sm:$0xff]
        %v7766 = vld [vmem:[%s7703 + $0x1f0] sm:$0xff]
        %v7767 = vld [vmem:[%s7703 + $0x1f8] sm:$0xff]
        %7768 = vmatprep.subr.mxu0 0.0
        %7769 = vmatpush1.msra.mxu0 %v7704
        %7770 = vmatprep.subr.mxu0 0.0
        %7771 = vmatpush1.msra.mxu0 %v7705
        %7772 = vmatprep.subr.mxu0 0.0
        %7773 = vmatpush1.msra.mxu0 %v7706
        %7774 = vmatprep.subr.mxu0 0.0
        %7775 = vmatpush1.msra.mxu0 %v7707
        %7776 = vmatprep.subr.mxu0 0.0
        %7777 = vmatpush1.msra.mxu0 %v7708
        %7778 = vmatprep.subr.mxu0 0.0
        %7779 = vmatpush1.msra.mxu0 %v7709
        %7780 = vmatprep.subr.mxu0 0.0
        %7781 = vmatpush1.msra.mxu0 %v7710
        %7782 = vmatprep.subr.mxu0 0.0
        %7783 = vmatpush1.msra.mxu0 %v7711
        %7784 = vmatprep.subr.mxu0 0.0
        %7785 = vmatpush1.msra.mxu0 %v7712
        %7786 = vmatprep.subr.mxu0 0.0
        %7787 = vmatpush1.msra.mxu0 %v7713
        %7788 = vmatprep.subr.mxu0 0.0
        %7789 = vmatpush1.msra.mxu0 %v7714
        %7790 = vmatprep.subr.mxu0 0.0
        %7791 = vmatpush1.msra.mxu0 %v7715
        %7792 = vmatprep.subr.mxu0 0.0
        %7793 = vmatpush1.msra.mxu0 %v7716
        %7794 = vmatprep.subr.mxu0 0.0
        %7795 = vmatpush1.msra.mxu0 %v7717
        %7796 = vmatprep.subr.mxu0 0.0
        %7797 = vmatpush1.msra.mxu0 %v7718
        %7798 = vmatprep.subr.mxu0 0.0
        %7799 = vmatpush1.msra.mxu0 %v7719
        %7800 = vmatprep.subr.mxu0 0.0
        %7801 = vmatpush1.msra.mxu0 %v7720
        %7802 = vmatprep.subr.mxu0 0.0
        %7803 = vmatpush1.msra.mxu0 %v7721
        %7804 = vmatprep.subr.mxu0 0.0
        %7805 = vmatpush1.msra.mxu0 %v7722
        %7806 = vmatprep.subr.mxu0 0.0
        %7807 = vmatpush1.msra.mxu0 %v7723
        %7808 = vmatprep.subr.mxu0 0.0
        %7809 = vmatpush1.msra.mxu0 %v7724
        %7810 = vmatprep.subr.mxu0 0.0
        %7811 = vmatpush1.msra.mxu0 %v7725
        %7812 = vmatprep.subr.mxu0 0.0
        %7813 = vmatpush1.msra.mxu0 %v7726
        %7814 = vmatprep.subr.mxu0 0.0
        %7815 = vmatpush1.msra.mxu0 %v7727
        %7816 = vmatprep.subr.mxu0 0.0
        %7817 = vmatpush1.msra.mxu0 %v7728
        %7818 = vmatprep.subr.mxu0 0.0
        %7819 = vmatpush1.msra.mxu0 %v7729
        %7820 = vmatprep.subr.mxu0 0.0
        %7821 = vmatpush1.msra.mxu0 %v7730
        %7822 = vmatprep.subr.mxu0 0.0
        %7823 = vmatpush1.msra.mxu0 %v7731
        %7824 = vmatprep.subr.mxu0 0.0
        %7825 = vmatpush1.msra.mxu0 %v7732
        %7826 = vmatprep.subr.mxu0 0.0
        %7827 = vmatpush1.msra.mxu0 %v7733
        %7828 = vmatprep.subr.mxu0 0.0
        %7829 = vmatpush1.msra.mxu0 %v7734
        %7830 = vmatprep.subr.mxu0 0.0
        %7831 = vmatpush1.msra.mxu0 %v7735
        %7832 = vmatprep.mubr.f32.mxu0 %v7015
        %7833 = vmatmul.mubr.f32.gmra.mrb[0].mxu0 %v7014
        %v7834 = vpop.f32.mrb[0].mxu0
        %v7835 = vadd.f32 0.0, %v7834
        %v7836 = vpop.f32.mrb[0].mxu0
        %7837 = vmatprep.mubr.f32.mxu0 %v7019
        %7838 = vmatmul.mubr.f32.gmra.mrb[0].mxu0 %v7018
        %v7839 = vpop.f32.mrb[0].mxu0
        %v7840 = vadd.f32 0.0, %v7839
        %v7841 = vpop.f32.mrb[0].mxu0
        %7842 = vmatprep.mubr.f32.mxu0 %v7023
        %7843 = vmatmul.mubr.f32.gmra.mrb[0].mxu0 %v7022
        %v7844 = vpop.f32.mrb[0].mxu0
        %v7845 = vadd.f32 0.0, %v7844
        %v7846 = vpop.f32.mrb[0].mxu0
        %7847 = vmatprep.mubr.f32.mxu0 %v7027
        %7848 = vmatmul.mubr.f32.gmra.mrb[0].mxu0 %v7026
        %v7849 = vpop.f32.mrb[0].mxu0
        %v7850 = vadd.f32 0.0, %v7849
        %v7851 = vpop.f32.mrb[0].mxu0
        %7852 = vdwg.mxu0
        %7853 = vmatprep.subr.mxu0 0.0
        %7854 = vmatpush1.msra.mxu0 %v7736
        %7855 = vmatprep.subr.mxu0 0.0
        %7856 = vmatpush1.msra.mxu0 %v7737
        %7857 = vmatprep.subr.mxu0 0.0
        %7858 = vmatpush1.msra.mxu0 %v7738
        %7859 = vmatprep.subr.mxu0 0.0
        %7860 = vmatpush1.msra.mxu0 %v7739
        %7861 = vmatprep.subr.mxu0 0.0
        %7862 = vmatpush1.msra.mxu0 %v7740
        %7863 = vmatprep.subr.mxu0 0.0
        %7864 = vmatpush1.msra.mxu0 %v7741
        %7865 = vmatprep.subr.mxu0 0.0
        %7866 = vmatpush1.msra.mxu0 %v7742
        %7867 = vmatprep.subr.mxu0 0.0
        %7868 = vmatpush1.msra.mxu0 %v7743
        %7869 = vmatprep.subr.mxu0 0.0
        %7870 = vmatpush1.msra.mxu0 %v7744
        %7871 = vmatprep.subr.mxu0 0.0
        %7872 = vmatpush1.msra.mxu0 %v7745
        %7873 = vmatprep.subr.mxu0 0.0
        %7874 = vmatpush1.msra.mxu0 %v7746
        %7875 = vmatprep.subr.mxu0 0.0
        %7876 = vmatpush1.msra.mxu0 %v7747
        %7877 = vmatprep.subr.mxu0 0.0
        %7878 = vmatpush1.msra.mxu0 %v7748
        %7879 = vmatprep.subr.mxu0 0.0
        %7880 = vmatpush1.msra.mxu0 %v7749
        %7881 = vmatprep.subr.mxu0 0.0
        %7882 = vmatpush1.msra.mxu0 %v7750
        %7883 = vmatprep.subr.mxu0 0.0
        %7884 = vmatpush1.msra.mxu0 %v7751
        %7885 = vmatprep.subr.mxu0 0.0
        %7886 = vmatpush1.msra.mxu0 %v7752
        %7887 = vmatprep.subr.mxu0 0.0
        %7888 = vmatpush1.msra.mxu0 %v7753
        %7889 = vmatprep.subr.mxu0 0.0
        %7890 = vmatpush1.msra.mxu0 %v7754
        %7891 = vmatprep.subr.mxu0 0.0
        %7892 = vmatpush1.msra.mxu0 %v7755
        %7893 = vmatprep.subr.mxu0 0.0
        %7894 = vmatpush1.msra.mxu0 %v7756
        %7895 = vmatprep.subr.mxu0 0.0
        %7896 = vmatpush1.msra.mxu0 %v7757
        %7897 = vmatprep.subr.mxu0 0.0
        %7898 = vmatpush1.msra.mxu0 %v7758
        %7899 = vmatprep.subr.mxu0 0.0
        %7900 = vmatpush1.msra.mxu0 %v7759
        %7901 = vmatprep.subr.mxu0 0.0
        %7902 = vmatpush1.msra.mxu0 %v7760
        %7903 = vmatprep.subr.mxu0 0.0
        %7904 = vmatpush1.msra.mxu0 %v7761
        %7905 = vmatprep.subr.mxu0 0.0
        %7906 = vmatpush1.msra.mxu0 %v7762
        %7907 = vmatprep.subr.mxu0 0.0
        %7908 = vmatpush1.msra.mxu0 %v7763
        %7909 = vmatprep.subr.mxu0 0.0
        %7910 = vmatpush1.msra.mxu0 %v7764
        %7911 = vmatprep.subr.mxu0 0.0
        %7912 = vmatpush1.msra.mxu0 %v7765
        %7913 = vmatprep.subr.mxu0 0.0
        %7914 = vmatpush1.msra.mxu0 %v7766
        %7915 = vmatprep.subr.mxu0 0.0
        %7916 = vmatpush1.msra.mxu0 %v7767
        %7917 = vmatprep.mubr.f32.mxu0 %v7017
        %7918 = vmatmul.mubr.f32.gmra.mrb[0].mxu0 %v7016
        %v7919 = vpop.f32.mrb[0].mxu0
        %v7920 = vadd.f32 %v7835, %v7919
        %v7921 = vpop.f32.mrb[0].mxu0
        %7922 = vmatprep.mubr.f32.mxu0 %v7021
        %7923 = vmatmul.mubr.f32.gmra.mrb[0].mxu0 %v7020
        %v7924 = vpop.f32.mrb[0].mxu0
        %v7925 = vadd.f32 %v7840, %v7924
        %v7926 = vpop.f32.mrb[0].mxu0
        %7927 = vmatprep.mubr.f32.mxu0 %v7025
        %7928 = vmatmul.mubr.f32.gmra.mrb[0].mxu0 %v7024
        %v7929 = vpop.f32.mrb[0].mxu0
        %v7930 = vadd.f32 %v7845, %v7929
        %v7931 = vpop.f32.mrb[0].mxu0
        %7932 = vmatprep.mubr.f32.mxu0 %v7029
        %7933 = vmatmul.mubr.f32.gmra.mrb[0].mxu0 %v7028
        %v7934 = vpop.f32.mrb[0].mxu0
        %v7935 = vadd.f32 %v7850, %v7934
        %v7936 = vpop.f32.mrb[0].mxu0
        %7937 = vdwg.mxu0
        %s7938 = scalar_lea.vmem [#allocation19], 64
        %v7939 = vld [vmem:[%s7938] sm:$0xff]
        %v7940 = vld [vmem:[%s7938 + $0x8] sm:$0xff]
        %v7941 = vld [vmem:[%s7938 + $0x10] sm:$0xff]
        %v7942 = vld [vmem:[%s7938 + $0x18] sm:$0xff]
        %v7944 = vsel %vm7508, %v7939, 0
        %v7947 = vsel %vm7508, %v7940, 0
        %v7950 = vsel %vm7508, %v7941, 0
        %v7953 = vsel %vm7508, %v7942, 0
        %7955 = vmatprep.subr.mxu0 0.0
        %7956 = vmatpush1.msra.mxu0 %v7920
        %7957 = vmatprep.subr.mxu0 0.0
        %7958 = vmatpush1.msra.mxu0 %v7925
        %7959 = vmatprep.subr.mxu0 0.0
        %7960 = vmatpush1.msra.mxu0 %v7930
        %7961 = vmatprep.subr.mxu0 0.0
        %7962 = vmatpush1.msra.mxu0 %v7935
        %7963 = vmatprep.subr.mxu0 0.0
        %7964 = vmatpush1.msra.mxu0 0.0
        %7965 = vmatprep.subr.mxu0 0.0
        %7966 = vmatpush1.msra.mxu0 0.0
        %7967 = vmatprep.subr.mxu0 0.0
        %7968 = vmatpush1.msra.mxu0 0.0
        %7969 = vmatprep.subr.mxu0 0.0
        %7970 = vmatpush1.msra.mxu0 0.0
        %7971 = vmatprep.subr.mxu0 0.0
        %7972 = vmatpush1.msra.mxu0 0.0
        %7973 = vmatprep.subr.mxu0 0.0
        %7974 = vmatpush1.msra.mxu0 0.0
        %7975 = vmatprep.subr.mxu0 0.0
        %7976 = vmatpush1.msra.mxu0 0.0
        %7977 = vmatprep.subr.mxu0 0.0
        %7978 = vmatpush1.msra.mxu0 0.0
        %7979 = vmatprep.subr.mxu0 0.0
        %7980 = vmatpush1.msra.mxu0 0.0
        %7981 = vmatprep.subr.mxu0 0.0
        %7982 = vmatpush1.msra.mxu0 0.0
        %7983 = vmatprep.subr.mxu0 0.0
        %7984 = vmatpush1.msra.mxu0 0.0
        %7985 = vmatprep.subr.mxu0 0.0
        %7986 = vmatpush1.msra.mxu0 0.0
        %7987 = vmatprep.subr.mxu0 0.0
        %7988 = vmatpush1.msra.mxu0 0.0
        %7989 = vmatprep.subr.mxu0 0.0
        %7990 = vmatpush1.msra.mxu0 0.0
        %7991 = vmatprep.subr.mxu0 0.0
        %7992 = vmatpush1.msra.mxu0 0.0
        %7993 = vmatprep.subr.mxu0 0.0
        %7994 = vmatpush1.msra.mxu0 0.0
        %7995 = vmatprep.subr.mxu0 0.0
        %7996 = vmatpush1.msra.mxu0 0.0
        %7997 = vmatprep.subr.mxu0 0.0
        %7998 = vmatpush1.msra.mxu0 0.0
        %7999 = vmatprep.subr.mxu0 0.0
        %8000 = vmatpush1.msra.mxu0 0.0
        %8001 = vmatprep.subr.mxu0 0.0
        %8002 = vmatpush1.msra.mxu0 0.0
        %8003 = vmatprep.subr.mxu0 0.0
        %8004 = vmatpush1.msra.mxu0 0.0
        %8005 = vmatprep.subr.mxu0 0.0
        %8006 = vmatpush1.msra.mxu0 0.0
        %8007 = vmatprep.subr.mxu0 0.0
        %8008 = vmatpush1.msra.mxu0 0.0
        %8009 = vmatprep.subr.mxu0 0.0
        %8010 = vmatpush1.msra.mxu0 0.0
        %8011 = vmatprep.subr.mxu0 0.0
        %8012 = vmatpush1.msra.mxu0 0.0
        %8013 = vmatprep.subr.mxu0 0.0
        %8014 = vmatpush1.msra.mxu0 0.0
        %8015 = vmatprep.subr.mxu0 0.0
        %8016 = vmatpush1.msra.mxu0 0.0
        %8017 = vmatprep.subr.mxu0 0.0
        %8018 = vmatpush1.msra.mxu0 0.0
        %8019 = vmatprep.mubr.f32.mxu0 0.0
        %8020 = vmatmul.mubr.f32.gmra.mrb[0].mxu0 %v7944
        %v8021 = vpop.f32.mrb[0].mxu0
        %v8022 = vadd.f32 0.0, %v8021
        %v8023 = vpop.f32.mrb[0].mxu0
        %8024 = vmatprep.mubr.f32.mxu0 0.0
        %8025 = vmatmul.mubr.f32.gmra.mrb[0].mxu0 %v7947
        %v8026 = vpop.f32.mrb[0].mxu0
        %v8027 = vadd.f32 0.0, %v8026
        %v8028 = vpop.f32.mrb[0].mxu0
        %8029 = vmatprep.mubr.f32.mxu0 0.0
        %8030 = vmatmul.mubr.f32.gmra.mrb[0].mxu0 %v7950
        %v8031 = vpop.f32.mrb[0].mxu0
        %v8032 = vadd.f32 0.0, %v8031
        %v8033 = vpop.f32.mrb[0].mxu0
        %8034 = vmatprep.mubr.f32.mxu0 0.0
        %8035 = vmatmul.mubr.f32.gmra.mrb[0].mxu0 %v7953
        %v8036 = vpop.f32.mrb[0].mxu0
        %v8037 = vadd.f32 0.0, %v8036
        %v8038 = vpop.f32.mrb[0].mxu0
        %8039 = vdwg.mxu0
        %v8040 = vadd.f32 %v7685, %v8022
        %v8041 = vadd.f32 %v7690, %v8027
        %v8042 = vadd.f32 %v7695, %v8032
        %v8043 = vadd.f32 %v7700, %v8037
        %v8044 = vld [vmem:[#allocation20] sm:$0x1]
        %v8046 = vlaneseq
        %v8047 = vshrl.u32 %v8046, 7
        %v8048 = vsub.s32 0, %v8047
        %v8049 = vrot.slane %v8044, %v8048
        %v8051 = vadd.f32 %v8040, %v8049
        %v8052 = vadd.f32 %v8041, %v8049
        %v8053 = vadd.f32 %v8042, %v8049
        %v8054 = vadd.f32 %v8043, %v8049
        %v8055 = vxor.u32 %v8051, 2147483648
        %v8056 = vxor.u32 %v8052, 2147483648
        %v8057 = vxor.u32 %v8053, 2147483648
        %v8058 = vxor.u32 %v8054, 2147483648
        %v8059 = vmul.f32 %v8055, 1.442695
        %v8060 = vpow.pop %v8059
        %v8061 = vmul.f32 %v8056, 1.442695
        %v8062 = vpow.pop %v8061
        %v8063 = vmul.f32 %v8057, 1.442695
        %v8064 = vpow.pop %v8063
        %v8065 = vmul.f32 %v8058, 1.442695
        %v8066 = vpow.pop %v8065
        %v8067 = vadd.f32 %v8060, 1.0
        %v8068 = vadd.f32 %v8062, 1.0
        %v8069 = vadd.f32 %v8064, 1.0
        %v8070 = vadd.f32 %v8066, 1.0
        %v8071 = vrcp.pop %v8067
        %v8072 = vmul.f32 1.0, %v8071
        %v8073 = vrcp.pop %v8068
        %v8074 = vmul.f32 1.0, %v8073
        %v8075 = vrcp.pop %v8069
        %v8076 = vmul.f32 1.0, %v8075
        %v8077 = vrcp.pop %v8070
        %v8078 = vmul.f32 1.0, %v8077
        %v8079 = vld [vmem:[%s15] sm:$0xff]
        %v8080 = vld [vmem:[%s15 + $0x8] sm:$0xff]
        %v8081 = vld [vmem:[%s15 + $0x10] sm:$0xff]
        %v8082 = vld [vmem:[%s15 + $0x18] sm:$0xff]
        %v8083 = vld [vmem:[%s15 + $0x20] sm:$0x3]
        %v8085 = vsel %vm7508, %v8079, 0
        %v8088 = vsel %vm7508, %v8080, 0
        %v8091 = vsel %vm7508, %v8081, 0
        %v8094 = vsel %vm7508, %v8082, 0
        %v8097 = vsel %vm7508, %v8083, 0
        %8099 = vmatprep.subr.mxu0 0.0
        %8100 = vmatpush1.msra.mxu0 %v8072
        %8101 = vmatprep.subr.mxu0 0.0
        %8102 = vmatpush1.msra.mxu0 %v8074
        %8103 = vmatprep.subr.mxu0 0.0
        %8104 = vmatpush1.msra.mxu0 %v8076
        %8105 = vmatprep.subr.mxu0 0.0
        %8106 = vmatpush1.msra.mxu0 %v8078
        %8107 = vmatprep.subr.mxu0 0.0
        %8108 = vmatpush1.msra.mxu0 0.0
        %8109 = vmatprep.subr.mxu0 0.0
        %8110 = vmatpush1.msra.mxu0 0.0
        %8111 = vmatprep.subr.mxu0 0.0
        %8112 = vmatpush1.msra.mxu0 0.0
        %8113 = vmatprep.subr.mxu0 0.0
        %8114 = vmatpush1.msra.mxu0 0.0
        %8115 = vmatprep.subr.mxu0 0.0
        %8116 = vmatpush1.msra.mxu0 0.0
        %8117 = vmatprep.subr.mxu0 0.0
        %8118 = vmatpush1.msra.mxu0 0.0
        %8119 = vmatprep.subr.mxu0 0.0
        %8120 = vmatpush1.msra.mxu0 0.0
        %8121 = vmatprep.subr.mxu0 0.0
        %8122 = vmatpush1.msra.mxu0 0.0
        %8123 = vmatprep.subr.mxu0 0.0
        %8124 = vmatpush1.msra.mxu0 0.0
        %8125 = vmatprep.subr.mxu0 0.0
        %8126 = vmatpush1.msra.mxu0 0.0
        %8127 = vmatprep.subr.mxu0 0.0
        %8128 = vmatpush1.msra.mxu0 0.0
        %8129 = vmatprep.subr.mxu0 0.0
        %8130 = vmatpush1.msra.mxu0 0.0
        %8131 = vmatprep.subr.mxu0 0.0
        %8132 = vmatpush1.msra.mxu0 0.0
        %8133 = vmatprep.subr.mxu0 0.0
        %8134 = vmatpush1.msra.mxu0 0.0
        %8135 = vmatprep.subr.mxu0 0.0
        %8136 = vmatpush1.msra.mxu0 0.0
        %8137 = vmatprep.subr.mxu0 0.0
        %8138 = vmatpush1.msra.mxu0 0.0
        %8139 = vmatprep.subr.mxu0 0.0
        %8140 = vmatpush1.msra.mxu0 0.0
        %8141 = vmatprep.subr.mxu0 0.0
        %8142 = vmatpush1.msra.mxu0 0.0
        %8143 = vmatprep.subr.mxu0 0.0
        %8144 = vmatpush1.msra.mxu0 0.0
        %8145 = vmatprep.subr.mxu0 0.0
        %8146 = vmatpush1.msra.mxu0 0.0
        %8147 = vmatprep.subr.mxu0 0.0
        %8148 = vmatpush1.msra.mxu0 0.0
        %8149 = vmatprep.subr.mxu0 0.0
        %8150 = vmatpush1.msra.mxu0 0.0
        %8151 = vmatprep.subr.mxu0 0.0
        %8152 = vmatpush1.msra.mxu0 0.0
        %8153 = vmatprep.subr.mxu0 0.0
        %8154 = vmatpush1.msra.mxu0 0.0
        %8155 = vmatprep.subr.mxu0 0.0
        %8156 = vmatpush1.msra.mxu0 0.0
        %8157 = vmatprep.subr.mxu0 0.0
        %8158 = vmatpush1.msra.mxu0 0.0
        %8159 = vmatprep.subr.mxu0 0.0
        %8160 = vmatpush1.msra.mxu0 0.0
        %8161 = vmatprep.subr.mxu0 0.0
        %8162 = vmatpush1.msra.mxu0 0.0
        %8163 = vmatprep.mubr.f32.mxu0 0.0
        %8164 = vmatmul.mubr.f32.gmra.mrb[0].mxu0 %v8085
        %v8165 = vpop.f32.mrb[0].mxu0
        %v8166 = vadd.f32 0.0, %v8165
        %v8167 = vpop.f32.mrb[0].mxu0
        %8168 = vmatprep.mubr.f32.mxu0 0.0
        %8169 = vmatmul.mubr.f32.gmra.mrb[0].mxu0 %v8088
        %v8170 = vpop.f32.mrb[0].mxu0
        %v8171 = vadd.f32 0.0, %v8170
        %v8172 = vpop.f32.mrb[0].mxu0
        %8173 = vmatprep.mubr.f32.mxu0 0.0
        %8174 = vmatmul.mubr.f32.gmra.mrb[0].mxu0 %v8091
        %v8175 = vpop.f32.mrb[0].mxu0
        %v8176 = vadd.f32 0.0, %v8175
        %v8177 = vpop.f32.mrb[0].mxu0
        %8178 = vmatprep.mubr.f32.mxu0 0.0
        %8179 = vmatmul.mubr.f32.gmra.mrb[0].mxu0 %v8094
        %v8180 = vpop.f32.mrb[0].mxu0
        %v8181 = vadd.f32 0.0, %v8180
        %v8182 = vpop.f32.mrb[0].mxu0
        %8183 = vmatprep.mubr.f32.mxu0 0.0
        %8184 = vmatmul.mubr.f32.gmra.mrb[0].mxu0 %v8097
        %v8185 = vpop.f32.mrb[0].mxu0
        %v8186 = vadd.f32 0.0, %v8185
        %v8187 = vpop.f32.mrb[0].mxu0
        %8188 = vdwg.mxu0
        %v8189 = vld [vmem:[#allocation22] sm:$0xff]
        %v8190 = vld [vmem:[#allocation22 + $0x8] sm:$0xff]
        %v8191 = vld [vmem:[#allocation22 + $0x10] sm:$0xff]
        %v8192 = vld [vmem:[#allocation22 + $0x18] sm:$0xff]
        %v8194 = vsel %vm7508, %v8166, 0
        %v8197 = vsel %vm7508, %v8171, 0
        %v8200 = vsel %vm7508, %v8176, 0
        %v8203 = vsel %vm7508, %v8181, 0
        %v8206 = vsel %vm7508, %v8186, 0
        %8208 = vmatprep.subr.mxu0 0.0
        %8209 = vmatpush1.msra.mxu0 %v8189
        %8210 = vmatprep.subr.mxu0 0.0
        %8211 = vmatpush1.msra.mxu0 %v8190
        %8212 = vmatprep.subr.mxu0 0.0
        %8213 = vmatpush1.msra.mxu0 %v8191
        %8214 = vmatprep.subr.mxu0 0.0
        %8215 = vmatpush1.msra.mxu0 %v8192
        %8216 = vmatprep.subr.mxu0 0.0
        %8217 = vmatpush1.msra.mxu0 0.0
        %8218 = vmatprep.subr.mxu0 0.0
        %8219 = vmatpush1.msra.mxu0 0.0
        %8220 = vmatprep.subr.mxu0 0.0
        %8221 = vmatpush1.msra.mxu0 0.0
        %8222 = vmatprep.subr.mxu0 0.0
        %8223 = vmatpush1.msra.mxu0 0.0
        %8224 = vmatprep.subr.mxu0 0.0
        %8225 = vmatpush1.msra.mxu0 0.0
        %8226 = vmatprep.subr.mxu0 0.0
        %8227 = vmatpush1.msra.mxu0 0.0
        %8228 = vmatprep.subr.mxu0 0.0
        %8229 = vmatpush1.msra.mxu0 0.0
        %8230 = vmatprep.subr.mxu0 0.0
        %8231 = vmatpush1.msra.mxu0 0.0
        %8232 = vmatprep.subr.mxu0 0.0
        %8233 = vmatpush1.msra.mxu0 0.0
        %8234 = vmatprep.subr.mxu0 0.0
        %8235 = vmatpush1.msra.mxu0 0.0
        %8236 = vmatprep.subr.mxu0 0.0
        %8237 = vmatpush1.msra.mxu0 0.0
        %8238 = vmatprep.subr.mxu0 0.0
        %8239 = vmatpush1.msra.mxu0 0.0
        %8240 = vmatprep.subr.mxu0 0.0
        %8241 = vmatpush1.msra.mxu0 0.0
        %8242 = vmatprep.subr.mxu0 0.0
        %8243 = vmatpush1.msra.mxu0 0.0
        %8244 = vmatprep.subr.mxu0 0.0
        %8245 = vmatpush1.msra.mxu0 0.0
        %8246 = vmatprep.subr.mxu0 0.0
        %8247 = vmatpush1.msra.mxu0 0.0
        %8248 = vmatprep.subr.mxu0 0.0
        %8249 = vmatpush1.msra.mxu0 0.0
        %8250 = vmatprep.subr.mxu0 0.0
        %8251 = vmatpush1.msra.mxu0 0.0
        %8252 = vmatprep.subr.mxu0 0.0
        %8253 = vmatpush1.msra.mxu0 0.0
        %8254 = vmatprep.subr.mxu0 0.0
        %8255 = vmatpush1.msra.mxu0 0.0
        %8256 = vmatprep.subr.mxu0 0.0
        %8257 = vmatpush1.msra.mxu0 0.0
        %8258 = vmatprep.subr.mxu0 0.0
        %8259 = vmatpush1.msra.mxu0 0.0
        %8260 = vmatprep.subr.mxu0 0.0
        %8261 = vmatpush1.msra.mxu0 0.0
        %8262 = vmatprep.subr.mxu0 0.0
        %8263 = vmatpush1.msra.mxu0 0.0
        %8264 = vmatprep.subr.mxu0 0.0
        %8265 = vmatpush1.msra.mxu0 0.0
        %8266 = vmatprep.subr.mxu0 0.0
        %8267 = vmatpush1.msra.mxu0 0.0
        %8268 = vmatprep.subr.mxu0 0.0
        %8269 = vmatpush1.msra.mxu0 0.0
        %8270 = vmatprep.subr.mxu0 0.0
        %8271 = vmatpush1.msra.mxu0 0.0
        %8272 = vmatprep.mubr.f32.mxu0 0.0
        %8273 = vmatmul.mubr.f32.gmra.mrb[0].mxu0 %v8194
        %v8274 = vpop.f32.mrb[0].mxu0
        %v8275 = vadd.f32 0.0, %v8274
        %v8276 = vpop.f32.mrb[0].mxu0
        %8277 = vmatprep.mubr.f32.mxu0 0.0
        %8278 = vmatmul.mubr.f32.gmra.mrb[0].mxu0 %v8197
        %v8279 = vpop.f32.mrb[0].mxu0
        %v8280 = vadd.f32 0.0, %v8279
        %v8281 = vpop.f32.mrb[0].mxu0
        %8282 = vmatprep.mubr.f32.mxu0 0.0
        %8283 = vmatmul.mubr.f32.gmra.mrb[0].mxu0 %v8200
        %v8284 = vpop.f32.mrb[0].mxu0
        %v8285 = vadd.f32 0.0, %v8284
        %v8286 = vpop.f32.mrb[0].mxu0
        %8287 = vmatprep.mubr.f32.mxu0 0.0
        %8288 = vmatmul.mubr.f32.gmra.mrb[0].mxu0 %v8203
        %v8289 = vpop.f32.mrb[0].mxu0
        %v8290 = vadd.f32 0.0, %v8289
        %v8291 = vpop.f32.mrb[0].mxu0
        %8292 = vmatprep.mubr.f32.mxu0 0.0
        %8293 = vmatmul.mubr.f32.gmra.mrb[0].mxu0 %v8206
        %v8294 = vpop.f32.mrb[0].mxu0
        %v8295 = vadd.f32 0.0, %v8294
        %v8296 = vpop.f32.mrb[0].mxu0
        %8297 = vdwg.mxu0
        %vm8298 = vcmask 359424
        %8299 = vst.msk [vmem:[%s726] sm:$0xff] %vm8298, %v8275
        %8300 = vst.msk [vmem:[%s726 + $0x8] sm:$0xff] %vm8298, %v8280
        %8301 = vst.msk [vmem:[%s726 + $0x10] sm:$0xff] %vm8298, %v8285
        %8302 = vst.msk [vmem:[%s726 + $0x18] sm:$0xff] %vm8298, %v8290
        %vm8303 = vcmask 353280
        %8304 = vst.msk [vmem:[%s726 + $0x20] sm:$0x3] %vm8303, %v8295
        %p8305 = scmp.lt.s32.totalorder %s37, 1
        %s8306 = scalar_select %p8305, %s37, 1
        %s8307 = smul.addr %s8306, 5
        %s8308 = smul.addr %s8307, 8
        %s8309 = scalar_lea.vmem %s17, %s8308
        // Predicated region
        $region141: #{cnn_decoder_forward.1} parent=87 // pred_check
          %p8310 = pneg %p417
        $region142: #{cnn_decoder_forward.1} parent=87 // pred_check_branch
          %8312 = sbr.rel (%p8310) target = $region144
        $region143: #{cnn_decoder_forward.1} parent=87 // pred_region
          _
        $region144: #{cnn_decoder_forward.1} parent=87 // pred_fallthru
          _
      $region88: #{cnn_decoder_forward.1} parent=5 // pred_fallthru
        _
      %p8313 = scmp.le.s32.totalorder 2, %s32
      // Predicated region
      $region145: #{cnn_decoder_forward.1} parent=5 // pred_check
        %p8314 = pneg %p8313
      $region146: #{cnn_decoder_forward.1} parent=5 // pred_check_branch
        %8316 = sbr.rel (%p8314) target = $region148
      $region147: #{cnn_decoder_forward.1} parent=5 // pred_region
        %s8317 = ssub.s32 %s32, 2
        // Predicated region
        $region149: #{cnn_decoder_forward.1} parent=147 // pred_check
          %p8318 = pneg %p423
        $region150: #{cnn_decoder_forward.1} parent=147 // pred_check_branch
          %8320 = sbr.rel (%p8318) target = $region152
        $region151: #{cnn_decoder_forward.1} parent=147 // pred_region
          %p8321 = scmp.lt.s32.totalorder %s38, 1
          %s8322 = scalar_select %p8321, %s38, 1
          %s8323 = smul.addr %s8322, 5
          %s8324 = smul.addr %s8323, 8
          %s8325 = scalar_lea.vmem %s17, %s8324
        $region152: #{cnn_decoder_forward.1} parent=147 // pred_fallthru
          _
      $region148: #{cnn_decoder_forward.1} parent=5 // pred_fallthru
        _
    $region6: #{cnn_decoder_forward.1} parent=1 // loop_footer
      %s36 = sadd.s32 1, %s32
    $region7: #{cnn_decoder_forward.1} parent=1 // loop_footer_branch
      %31 = sbr.rel target = $region3
    $region8: #{cnn_decoder_forward.1} parent=1 // loop_exit
      _
    %8326 = vsyncpa [#allocation4], 1
    %s8327 = scalar_lea.sflag [#allocation4], 1
    %8328 = vsyncpa %s8327, 1
    %8329 = vsyncpa [#allocation6], 1
    %8330 = vsyncpa [#allocation9], 1
    %8331 = vsyncpa [#allocation12], 1
    %8332 = vsyncpa [#allocation15], 1
    %8333 = vsyncpa [#allocation18], 1
    %8334 = vsyncpa [#allocation21], 1

</llo_original>
